<compile_context>
chip_gen: v5e
topology: v5e:2x2
jax: 0.10.0
libtpu: 0.0.40
codegen_flags: <defaults>
</compile_context>

<pallas_src>
import numpy as np
import jax
import jax.numpy as jnp
from jax import lax
from jax.experimental import pallas as pl
from jax.experimental.pallas import tpu as pltpu

EPS = 1e-5  # nn.InstanceNorm3d default eps


# ----------------------------------------------------------------------------
# Fused Pallas kernel: Conv3d(k=5, p=2) + InstanceNorm3d + ReLU
# ----------------------------------------------------------------------------
def _make_luconv_kernel(*, HW, L):
    """One batch element per grid step; everything resident in VMEM."""
    inv_s = 1.0 / float(L)

    def kernel(x_ref, w_ref, o_ref):
        # x_ref : (1, 25*Cin, Dp*H*W) bf16  (kh,kw)-unfolded padded slab
        # w_ref : (5, Cout, 25*Cin)   bf16  one (Cout, 25*Cin) matrix per kd
        # o_ref : (1, Cout, L)        f32   normalized output (flat spatial)

        # 5 kd taps on the MXU; kw and kh are folded into K = 25*Cin.
        # Offsets kd*HW are lane-aligned (HW % 128 == 0 for the test shape),
        # so each slice is a true view of the slab (no shifted VMEM copies).
        acc = jnp.dot(w_ref[0], x_ref[0, :, 0:L],
                      preferred_element_type=jnp.float32)
        for kd in range(1, 5):
            off = kd * HW
            acc = acc + jnp.dot(w_ref[kd], x_ref[0, :, off:off + L],
                                preferred_element_type=jnp.float32)

        # Fused InstanceNorm3d (non-affine) + ReLU epilogue.
        # Conv bias omitted: it is exactly cancelled by the mean subtraction.
        mean = jnp.sum(acc, axis=1, keepdims=True) * inv_s      # (Cout, 1)
        cen = acc - mean
        var = jnp.sum(cen * cen, axis=1, keepdims=True) * inv_s  # two-pass var
        o_ref[0] = jnp.maximum(cen * lax.rsqrt(var + EPS), 0.0)

    return kernel


# ----------------------------------------------------------------------------
# Wrapper (cheap layout glue in plain JAX, all compute inside the kernel)
# ----------------------------------------------------------------------------
def lu_conv(x, w, b=None):
    """LUConv forward.

    x: (N, Cin, D, H, W) f32, w: (Cout, Cin, 5, 5, 5), b: (Cout,) (unused —
    a per-channel bias is a mathematical no-op under non-affine InstanceNorm).
    """
    del b
    N, Cin, D, H, W = x.shape
    Cout = w.shape[0]
    HW = H * W
    Dp = D + 4
    P = Dp * HW                 # flat slab spatial length (only d stays padded)
    L = D * HW                  # flat output spatial length (multiple of 128
                                # whenever HW % 128 == 0; e.g. H = W = 16)
    KC = 25 * Cin               # kh, kw folded into the contraction axis

    # (kh, kw)-unfold of the padded input: 25 shifted (Cin, Dp, H, W) views
    # stacked into the channel axis.  This is a 25x copy of the *small* input,
    # not a 125x im2col of the activation.
    xp = jnp.pad(x, ((0, 0), (0, 0), (2, 2), (2, 2), (2, 2)))
    xu = jnp.stack([xp[:, :, :, kh:kh + H, kw:kw + W]
                    for kh in range(5) for kw in range(5)], axis=1)
    xu = xu.reshape(N, KC, P).astype(jnp.bfloat16)

    # weights (Cout, Cin, kd, kh, kw) -> (5, Cout, 25*Cin); K-order (kh,kw,Cin)
    # matches the slab's channel order.
    wt = jnp.transpose(w, (2, 3, 4, 0, 1)).reshape(5, 25, Cout, Cin)
    wt = jnp.transpose(wt, (0, 2, 1, 3)).reshape(5, Cout, KC)
    wt = wt.astype(jnp.bfloat16)

    kernel = _make_luconv_kernel(HW=HW, L=L)
    out_flat = pl.pallas_call(
        kernel,
        out_shape=jax.ShapeDtypeStruct((N, Cout, L), jnp.float32),
        grid_spec=pltpu.PrefetchScalarGridSpec(
            num_scalar_prefetch=0,
            grid=(N,),
            in_specs=[
                pl.BlockSpec((1, KC, P), lambda n: (n, 0, 0)),
                pl.BlockSpec((5, Cout, KC), lambda n: (0, 0, 0)),
            ],
            out_specs=pl.BlockSpec((1, Cout, L), lambda n: (n, 0, 0)),
        ),
        compiler_params=pltpu.CompilerParams(
            dimension_semantics=("parallel",)),   # v7x: one batch elem per TC
    )(xu, wt)

    return out_flat.reshape(N, Cout, D, H, W)


# ----------------------------------------------------------------------------
# Plain-XLA reference (for a correctness self-check)
# ----------------------------------------------------------------------------
def lu_conv_reference(x, w, b):
    y = lax.conv_general_dilated(
        x, w, window_strides=(1, 1, 1),
        padding=((2, 2), (2, 2), (2, 2)),
        dimension_numbers=("NCDHW", "OIDHW", "NCDHW"),
        precision=lax.Precision.HIGHEST)
    y = y + b.reshape(1, -1, 1, 1, 1)
    m = jnp.mean(y, axis=(2, 3, 4), keepdims=True)
    v = jnp.mean(jnp.square(y - m), axis=(2, 3, 4), keepdims=True)
    return jnp.maximum((y - m) * lax.rsqrt(v + EPS), 0.0)


# ----------------------------------------------------------------------------
if __name__ == "__main__":
    key = jax.random.PRNGKey(0)
    k_w, k_b, k_x = jax.random.split(key, 3)

    # LUConv(in_channels=4, out_channels=8), spatial 16^3, batch 2 (NCDHW)
    N, Cin, Cout, D, H, W = 2, 4, 8, 16, 16, 16
    fan_in = Cin * 5 * 5 * 5
    w = jax.random.normal(k_w, (Cout, Cin, 5, 5, 5), jnp.float32) / np.sqrt(fan_in)
    b = 0.01 * jax.random.normal(k_b, (Cout,), jnp.float32)
    x = jax.random.normal(k_x, (N, Cin, D, H, W), jnp.float32)

    out = jax.block_until_ready(jax.jit(lu_conv)(x, w, b))
    assert out.shape == (N, Cout, D, H, W), out.shape
    assert bool(jnp.isfinite(out).all())

    # Compare against an XLA reference evaluated on the same bf16-rounded
    # operands (the kernel feeds the MXU bf16 with f32 accumulation).  The
    # reference applies the conv bias; it cancels under InstanceNorm, so the
    # outputs must still agree.
    xr = x.astype(jnp.bfloat16).astype(jnp.float32)
    wr = w.astype(jnp.bfloat16).astype(jnp.float32)
    ref = jax.block_until_ready(lu_conv_reference(xr, wr, b))
    np.testing.assert_allclose(np.asarray(out), np.asarray(ref),
                               atol=1e-2, rtol=1e-2)

    print("KERNEL_OK")
</pallas_src>

<mosaic_0001>
module attributes {stable_mosaic.version = 11 : i64} {
  func.func @kernel(%arg0: i32, %arg1: memref<1x100x5120xbf16, #tpu.memory_space<vmem>>, %arg2: memref<5x8x100xbf16, #tpu.memory_space<vmem>>, %arg3: memref<1x8x4096xf32, #tpu.memory_space<vmem>>) attributes {dimension_semantics = [#tpu.dimension_semantics<parallel>], iteration_bounds = array<i64: 2>, scalar_prefetch = 0 : i64, scratch_operands = 0 : i64, tpu.core_type = #tpu.core_type<tc>, window_params = [{transform_indices = @transform_0, window_bounds = array<i64: 1, 100, 5120>}, {pipeline_mode = #tpu.pipeline_mode<synchronous>, transform_indices = @transform_1, window_bounds = array<i64: 5, 8, 100>}, {transform_indices = @transform_2, window_bounds = array<i64: 1, 8, 4096>}]} {
    %c0 = arith.constant 0 : index
    %c0_0 = arith.constant 0 : index
    %c0_1 = arith.constant 0 : index
    %0 = vector.load %arg2[%c0, %c0_0, %c0_1] : memref<5x8x100xbf16, #tpu.memory_space<vmem>>, vector<1x8x100xbf16>
    %1 = vector.shape_cast %0 : vector<1x8x100xbf16> to vector<8x100xbf16>
    %c0_2 = arith.constant 0 : index
    %c0_3 = arith.constant 0 : index
    %c0_4 = arith.constant 0 : index
    %2 = vector.load %arg1[%c0_2, %c0_3, %c0_4] : memref<1x100x5120xbf16, #tpu.memory_space<vmem>>, vector<1x100x4096xbf16>
    %3 = vector.shape_cast %2 : vector<1x100x4096xbf16> to vector<100x4096xbf16>
    %cst = arith.constant dense<0.000000e+00> : vector<8x4096xf32>
    %4 = tpu.matmul %1, %3, %cst {dimension_numbers = #tpu.dot_dimension_numbers<[1], [0], [0], [1], [0, 0, 1, 1], [], []>} : vector<8x100xbf16>, vector<100x4096xbf16>, vector<8x4096xf32> -> vector<8x4096xf32>
    %c1 = arith.constant 1 : index
    %c0_5 = arith.constant 0 : index
    %c0_6 = arith.constant 0 : index
    %5 = vector.load %arg2[%c1, %c0_5, %c0_6] : memref<5x8x100xbf16, #tpu.memory_space<vmem>>, vector<1x8x100xbf16>
    %6 = vector.shape_cast %5 : vector<1x8x100xbf16> to vector<8x100xbf16>
    %c0_7 = arith.constant 0 : index
    %c0_8 = arith.constant 0 : index
    %c256 = arith.constant 256 : index
    %7 = vector.load %arg1[%c0_7, %c0_8, %c256] : memref<1x100x5120xbf16, #tpu.memory_space<vmem>>, vector<1x100x4096xbf16>
    %8 = vector.shape_cast %7 : vector<1x100x4096xbf16> to vector<100x4096xbf16>
    %cst_9 = arith.constant dense<0.000000e+00> : vector<8x4096xf32>
    %9 = tpu.matmul %6, %8, %cst_9 {dimension_numbers = #tpu.dot_dimension_numbers<[1], [0], [0], [1], [0, 0, 1, 1], [], []>} : vector<8x100xbf16>, vector<100x4096xbf16>, vector<8x4096xf32> -> vector<8x4096xf32>
    %10 = arith.addf %4, %9 : vector<8x4096xf32>
    %c2 = arith.constant 2 : index
    %c0_10 = arith.constant 0 : index
    %c0_11 = arith.constant 0 : index
    %11 = vector.load %arg2[%c2, %c0_10, %c0_11] : memref<5x8x100xbf16, #tpu.memory_space<vmem>>, vector<1x8x100xbf16>
    %12 = vector.shape_cast %11 : vector<1x8x100xbf16> to vector<8x100xbf16>
    %c0_12 = arith.constant 0 : index
    %c0_13 = arith.constant 0 : index
    %c512 = arith.constant 512 : index
    %13 = vector.load %arg1[%c0_12, %c0_13, %c512] : memref<1x100x5120xbf16, #tpu.memory_space<vmem>>, vector<1x100x4096xbf16>
    %14 = vector.shape_cast %13 : vector<1x100x4096xbf16> to vector<100x4096xbf16>
    %cst_14 = arith.constant dense<0.000000e+00> : vector<8x4096xf32>
    %15 = tpu.matmul %12, %14, %cst_14 {dimension_numbers = #tpu.dot_dimension_numbers<[1], [0], [0], [1], [0, 0, 1, 1], [], []>} : vector<8x100xbf16>, vector<100x4096xbf16>, vector<8x4096xf32> -> vector<8x4096xf32>
    %16 = arith.addf %10, %15 : vector<8x4096xf32>
    %c3 = arith.constant 3 : index
    %c0_15 = arith.constant 0 : index
    %c0_16 = arith.constant 0 : index
    %17 = vector.load %arg2[%c3, %c0_15, %c0_16] : memref<5x8x100xbf16, #tpu.memory_space<vmem>>, vector<1x8x100xbf16>
    %18 = vector.shape_cast %17 : vector<1x8x100xbf16> to vector<8x100xbf16>
    %c0_17 = arith.constant 0 : index
    %c0_18 = arith.constant 0 : index
    %c768 = arith.constant 768 : index
    %19 = vector.load %arg1[%c0_17, %c0_18, %c768] : memref<1x100x5120xbf16, #tpu.memory_space<vmem>>, vector<1x100x4096xbf16>
    %20 = vector.shape_cast %19 : vector<1x100x4096xbf16> to vector<100x4096xbf16>
    %cst_19 = arith.constant dense<0.000000e+00> : vector<8x4096xf32>
    %21 = tpu.matmul %18, %20, %cst_19 {dimension_numbers = #tpu.dot_dimension_numbers<[1], [0], [0], [1], [0, 0, 1, 1], [], []>} : vector<8x100xbf16>, vector<100x4096xbf16>, vector<8x4096xf32> -> vector<8x4096xf32>
    %22 = arith.addf %16, %21 : vector<8x4096xf32>
    %c4 = arith.constant 4 : index
    %c0_20 = arith.constant 0 : index
    %c0_21 = arith.constant 0 : index
    %23 = vector.load %arg2[%c4, %c0_20, %c0_21] : memref<5x8x100xbf16, #tpu.memory_space<vmem>>, vector<1x8x100xbf16>
    %24 = vector.shape_cast %23 : vector<1x8x100xbf16> to vector<8x100xbf16>
    %c0_22 = arith.constant 0 : index
    %c0_23 = arith.constant 0 : index
    %c1024 = arith.constant 1024 : index
    %25 = vector.load %arg1[%c0_22, %c0_23, %c1024] : memref<1x100x5120xbf16, #tpu.memory_space<vmem>>, vector<1x100x4096xbf16>
    %26 = vector.shape_cast %25 : vector<1x100x4096xbf16> to vector<100x4096xbf16>
    %cst_24 = arith.constant dense<0.000000e+00> : vector<8x4096xf32>
    %27 = tpu.matmul %24, %26, %cst_24 {dimension_numbers = #tpu.dot_dimension_numbers<[1], [0], [0], [1], [0, 0, 1, 1], [], []>} : vector<8x100xbf16>, vector<100x4096xbf16>, vector<8x4096xf32> -> vector<8x4096xf32>
    %28 = arith.addf %22, %27 : vector<8x4096xf32>
    %cst_25 = arith.constant dense<0.000000e+00> : vector<8xf32>
    %29 = vector.multi_reduction <add>, %28, %cst_25 [1] : vector<8x4096xf32> to vector<8xf32>
    %30 = vector.shape_cast %29 : vector<8xf32> to vector<8x1xf32>
    %cst_26 = arith.constant 2.44140625E-4 : f32
    %31 = vector.broadcast %cst_26 : f32 to vector<8x1xf32>
    %32 = arith.mulf %30, %31 : vector<8x1xf32>
    %33 = vector.broadcast %32 : vector<8x1xf32> to vector<8x4096xf32>
    %34 = arith.subf %28, %33 : vector<8x4096xf32>
    %35 = arith.mulf %34, %34 : vector<8x4096xf32>
    %cst_27 = arith.constant dense<0.000000e+00> : vector<8xf32>
    %36 = vector.multi_reduction <add>, %35, %cst_27 [1] : vector<8x4096xf32> to vector<8xf32>
    %37 = vector.shape_cast %36 : vector<8xf32> to vector<8x1xf32>
    %cst_28 = arith.constant 2.44140625E-4 : f32
    %38 = vector.broadcast %cst_28 : f32 to vector<8x1xf32>
    %39 = arith.mulf %37, %38 : vector<8x1xf32>
    %cst_29 = arith.constant 9.99999974E-6 : f32
    %40 = vector.broadcast %cst_29 : f32 to vector<8x1xf32>
    %41 = arith.addf %39, %40 : vector<8x1xf32>
    %42 = math.rsqrt %41 : vector<8x1xf32>
    %43 = vector.broadcast %42 : vector<8x1xf32> to vector<8x4096xf32>
    %44 = arith.mulf %34, %43 : vector<8x4096xf32>
    %cst_30 = arith.constant 0.000000e+00 : f32
    %45 = vector.broadcast %cst_30 : f32 to vector<8x4096xf32>
    %46 = arith.maximumf %44, %45 : vector<8x4096xf32>
    %c0_31 = arith.constant 0 : index
    %c0_32 = arith.constant 0 : index
    %c0_33 = arith.constant 0 : index
    %47 = vector.load %arg3[%c0_31, %c0_32, %c0_33] : memref<1x8x4096xf32, #tpu.memory_space<vmem>>, vector<1x8x4096xf32>
    %48 = vector.shape_cast %47 : vector<1x8x4096xf32> to vector<8x4096xf32>
    %49 = vector.shape_cast %46 : vector<8x4096xf32> to vector<1x8x4096xf32>
    tpu.vector_store %arg3[%c0_31, %c0_32, %c0_33], %49 {strides = array<i32>} : memref<1x8x4096xf32, #tpu.memory_space<vmem>>, vector<1x8x4096xf32>,
    return
  }
  func.func @transform_0(%arg0: i32) -> (i32, i32, i32) {
    %c0_i32 = arith.constant 0 : i32
    %c0_i32_0 = arith.constant 0 : i32
    %c0_i32_1 = arith.constant 0 : i32
    return %arg0, %c0_i32, %c0_i32_0 : i32, i32, i32
  }
  func.func @transform_1(%arg0: i32) -> (i32, i32, i32) {
    %c0_i32 = arith.constant 0 : i32
    %c0_i32_0 = arith.constant 0 : i32
    %c0_i32_1 = arith.constant 0 : i32
    %c0_i32_2 = arith.constant 0 : i32
    return %c0_i32, %c0_i32_0, %c0_i32_1 : i32, i32, i32
  }
  func.func @transform_2(%arg0: i32) -> (i32, i32, i32) {
    %c0_i32 = arith.constant 0 : i32
    %c0_i32_0 = arith.constant 0 : i32
    %c0_i32_1 = arith.constant 0 : i32
    return %arg0, %c0_i32, %c0_i32_0 : i32, i32, i32
  }
}

</mosaic_0001>

<llo_original>
// kernel: lu_conv.1
$region0: #{lu_conv.1}
  #allocation0 [shape = 'u32[]', space=smem, size = 0x4, offset = 0x4, fixed_abs, tag = 'smem constant byte address 0x4 - core index']
  #allocation1 [shape = 'u32[72,128]{1,0:T(1,128)}', space=vmem, size = 0x9000, scoped, tag = 'internal scratch']
  %s0 = inlined_call_operand.vmem [shape: bf16[2,100,5120], index: 0, kind: input, shape index: {}]
  %s1 = inlined_call_operand.vmem [shape: bf16[5,8,100], index: 1, kind: input, shape index: {}]
  %s2 = inlined_call_operand.vmem [shape: f32[2,8,4096], index: 2, kind: output, shape index: {}]
  %s3 = sld [smem:[#allocation0]]
  $region41: #{lu_conv.1} parent=0
    _
  %s5 = ssub.s32 1, %s3
  %s6 = scalar_select 0, %s5, %s3
  loop: start=0, step=1, limit=4
  $region2: #{lu_conv.1} parent=0 // loop_pre_header
    _
  $region3: #{lu_conv.1} parent=0 // loop_header
    %s8 = sphi 0, %s12
    %p9 = scmp.ge.s32.totalorder %s8, 4
    %s18 = sphi 0, %s20
    %s21 = sphi 0, %s18
    %s22 = sphi 0, %s21
    %s38 = sphi 0, %s22
    %s42 = sphi 0, %s42
    %s44 = sphi 0, %s42
    %s45 = sphi 0, %s44
    %s59 = sphi 0, %s45
    %s65 = sphi 0, %s67
    %s68 = sphi 0, %s65
    %s69 = sphi 0, %s68
    %s85 = sphi 0, %s69
  $region4: #{lu_conv.1} parent=0 // loop_header_branch
    %11 = sbr.rel (%p9) target = $region8
  $region5: #{lu_conv.1} parent=0 // loop_body
    %s13 = ssub.s32 %s8, 1
    %s14 = ssub.s32 %s8, 2
    %s15 = sadd.s32 %s8, 1
    %s16 = ssub.s32 %s8, %s15
    %p17 = scmp.eq.s32.totalorder %s16, 0
    %s19 = sadd.s32 %s18, 1
    %s20 = scalar_select %p17, %s18, %s19
    %p23 = pneg %p17
    %p24 = scmp.eq.s32.totalorder %s8, 1
    %p25 = por %p23, %p24
    %p26 = scmp.ne.s32.totalorder %s18, %s21
    %p27 = scmp.eq.s32.totalorder %s8, 0
    %p28 = por %p26, %p27
    %p29 = scmp.ne.s32.totalorder %s18, %s21
    %p30 = scmp.eq.s32.totalorder %s13, 1
    %p31 = por %p29, %p30
    %p32 = scmp.ne.s32.totalorder %s21, %s22
    %p33 = scmp.eq.s32.totalorder %s13, 0
    %p34 = por %p32, %p33
    %p35 = scmp.ne.s32.totalorder %s21, %s22
    %p36 = scmp.eq.s32.totalorder %s14, 1
    %p37 = por %p35, %p36
    %p39 = scmp.ne.s32.totalorder %s22, %s38
    %p40 = scmp.eq.s32.totalorder %s14, 0
    %p41 = por %p39, %p40
    %s43 = sadd.s32 %s42, 1
    %p46 = scmp.eq.s32.totalorder %s8, 1
    %p47 = scmp.ne.s32.totalorder %s42, %s44
    %p48 = scmp.eq.s32.totalorder %s8, 0
    %p49 = por %p47, %p48
    %p50 = scmp.ne.s32.totalorder %s42, %s44
    %p51 = scmp.eq.s32.totalorder %s13, 1
    %p52 = por %p50, %p51
    %p53 = scmp.ne.s32.totalorder %s44, %s45
    %p54 = scmp.eq.s32.totalorder %s13, 0
    %p55 = por %p53, %p54
    %p56 = scmp.ne.s32.totalorder %s44, %s45
    %p57 = scmp.eq.s32.totalorder %s14, 1
    %p58 = por %p56, %p57
    %p60 = scmp.ne.s32.totalorder %s45, %s59
    %p61 = scmp.eq.s32.totalorder %s14, 0
    %p62 = por %p60, %p61
    %s63 = ssub.s32 %s8, %s15
    %p64 = scmp.eq.s32.totalorder %s63, 0
    %s66 = sadd.s32 %s65, 1
    %s67 = scalar_select %p64, %s65, %s66
    %p70 = pneg %p64
    %p71 = scmp.eq.s32.totalorder %s8, 1
    %p72 = por %p70, %p71
    %p73 = scmp.ne.s32.totalorder %s65, %s68
    %p74 = scmp.eq.s32.totalorder %s8, 0
    %p75 = por %p73, %p74
    %p76 = scmp.ne.s32.totalorder %s65, %s68
    %p77 = scmp.eq.s32.totalorder %s13, 1
    %p78 = por %p76, %p77
    %p79 = scmp.ne.s32.totalorder %s68, %s69
    %p80 = scmp.eq.s32.totalorder %s13, 0
    %p81 = por %p79, %p80
    %p82 = scmp.ne.s32.totalorder %s68, %s69
    %p83 = scmp.eq.s32.totalorder %s14, 1
    %p84 = por %p82, %p83
    %p86 = scmp.ne.s32.totalorder %s69, %s85
    %p87 = scmp.eq.s32.totalorder %s14, 0
    %p88 = por %p86, %p87
    %p89 = scmp.le.s32.totalorder 1, %s8
    %p90 = scmp.lt.s32.totalorder %s8, 3
    %p91 = pnand %p89, %p90
    %p92 = pneg %p91
    // Predicated region
    $region9: #{lu_conv.1} parent=5 // pred_check
      _
    $region10: #{lu_conv.1} parent=5 // pred_check_branch
      %94 = sbr.rel (%p91) target = $region12
    $region11: #{lu_conv.1} parent=5 // pred_region
      %s95 = ssub.s32 %s8, 1
      // Predicated region
      $region13: #{lu_conv.1} parent=11 // pred_check
        %p96 = pneg %p55
      $region14: #{lu_conv.1} parent=11 // pred_check_branch
        %98 = sbr.rel (%p96) target = $region16
      $region15: #{lu_conv.1} parent=11 // pred_region
        _
      $region16: #{lu_conv.1} parent=11 // pred_fallthru
        _
    $region12: #{lu_conv.1} parent=5 // pred_fallthru
      _
    %p99 = scmp.lt.s32.totalorder %s8, 2
    // Predicated region
    $region17: #{lu_conv.1} parent=5 // pred_check
      %p100 = pneg %p99
    $region18: #{lu_conv.1} parent=5 // pred_check_branch
      %102 = sbr.rel (%p100) target = $region20
    $region19: #{lu_conv.1} parent=5 // pred_region
      // Predicated region
      $region21: #{lu_conv.1} parent=19 // pred_check
        %p103 = pneg %p28
      $region22: #{lu_conv.1} parent=19 // pred_check_branch
        %105 = sbr.rel (%p103) target = $region24
      $region23: #{lu_conv.1} parent=19 // pred_region
        %p106 = scmp.lt.s32.totalorder %s8, 1
        %s107 = scalar_select %p106, %s8, 1
        %s108 = smul.addr %s107, 520
        %s109 = smul.addr %s108, 4
        %s110 = scalar_lea.vmem %s0, %s109
      $region24: #{lu_conv.1} parent=19 // pred_fallthru
        _
    $region20: #{lu_conv.1} parent=5 // pred_fallthru
      _
    %p111 = scmp.le.s32.totalorder 1, %s8
    %p112 = scmp.lt.s32.totalorder %s8, 3
    %p113 = pnand %p111, %p112
    %p114 = pneg %p113
    // Predicated region
    $region25: #{lu_conv.1} parent=5 // pred_check
      _
    $region26: #{lu_conv.1} parent=5 // pred_check_branch
      %116 = sbr.rel (%p113) target = $region28
    $region27: #{lu_conv.1} parent=5 // pred_region
      %s117 = ssub.s32 %s8, 1
      %p118 = scmp.lt.s32.totalorder %s13, 1
      %s119 = scalar_select %p118, %s13, 1
      %s120 = smul.addr %s119, 520
      %s121 = smul.addr %s120, 4
      %s122 = scalar_lea.vmem %s0, %s121
      %p123 = pneg %p34
      %p124 = pneg %p31
      %p125 = pneg %p55
      %p126 = pneg %p52
      %p127 = pneg %p81
      %p128 = pneg %p78
      %p129 = scmp.lt.s32.totalorder %s13, 1
      %s130 = scalar_select %p129, %s13, 1
      %s131 = smul.addr %s130, 32
      %s132 = smul.addr %s131, 8
      %s133 = scalar_lea.vmem %s2, %s132
      %p134 = scmp.lt.s32.totalorder %s13, 1
      %s135 = scalar_select %p134, %s13, 1
      %s136 = smul.addr %s135, 520
      %s137 = smul.addr %s136, 4
      %s138 = scalar_lea.vmem %s0, %s137
      %p139 = scmp.lt.s32.totalorder %s13, 1
      %s140 = scalar_select %p139, %s13, 1
      %s141 = smul.addr %s140, 32
      %s142 = smul.addr %s141, 8
      %s143 = scalar_lea.vmem %s2, %s142
      %v145 = vld [vmem:[%s1] sm:$0xf]
      %v146 = vld [vmem:[%s138] sm:$0xff]
      %v147 = vld [vmem:[%s138 + $0x8] sm:$0xff]
      %v148 = vld [vmem:[%s138 + $0x10] sm:$0xff]
      %v149 = vld [vmem:[%s138 + $0x18] sm:$0xff]
      %v150 = vld [vmem:[%s138 + $0x20] sm:$0xff]
      %v151 = vld [vmem:[%s138 + $0x28] sm:$0xff]
      %v152 = vld [vmem:[%s138 + $0x30] sm:$0xff]
      %v153 = vld [vmem:[%s138 + $0x38] sm:$0xff]
      %v154 = vld [vmem:[%s138 + $0x40] sm:$0xff]
      %v155 = vld [vmem:[%s138 + $0x48] sm:$0xff]
      %v156 = vld [vmem:[%s138 + $0x50] sm:$0xff]
      %v157 = vld [vmem:[%s138 + $0x58] sm:$0xff]
      %v158 = vld [vmem:[%s138 + $0x60] sm:$0xff]
      %v159 = vld [vmem:[%s138 + $0x68] sm:$0xff]
      %v160 = vld [vmem:[%s138 + $0x70] sm:$0xff]
      %v161 = vld [vmem:[%s138 + $0x78] sm:$0xff]
      %v162 = vld [vmem:[%s138 + $0xa0] sm:$0xff]
      %v163 = vld [vmem:[%s138 + $0xa8] sm:$0xff]
      %v164 = vld [vmem:[%s138 + $0xb0] sm:$0xff]
      %v165 = vld [vmem:[%s138 + $0xb8] sm:$0xff]
      %v166 = vld [vmem:[%s138 + $0xc0] sm:$0xff]
      %v167 = vld [vmem:[%s138 + $0xc8] sm:$0xff]
      %v168 = vld [vmem:[%s138 + $0xd0] sm:$0xff]
      %v169 = vld [vmem:[%s138 + $0xd8] sm:$0xff]
      %v170 = vld [vmem:[%s138 + $0xe0] sm:$0xff]
      %v171 = vld [vmem:[%s138 + $0xe8] sm:$0xff]
      %v172 = vld [vmem:[%s138 + $0xf0] sm:$0xff]
      %v173 = vld [vmem:[%s138 + $0xf8] sm:$0xff]
      %v174 = vld [vmem:[%s138 + $0x100] sm:$0xff]
      %v175 = vld [vmem:[%s138 + $0x108] sm:$0xff]
      %v176 = vld [vmem:[%s138 + $0x110] sm:$0xff]
      %v177 = vld [vmem:[%s138 + $0x118] sm:$0xff]
      %v178 = vld [vmem:[%s138 + $0x140] sm:$0xff]
      %v179 = vld [vmem:[%s138 + $0x148] sm:$0xff]
      %v180 = vld [vmem:[%s138 + $0x150] sm:$0xff]
      %v181 = vld [vmem:[%s138 + $0x158] sm:$0xff]
      %v182 = vld [vmem:[%s138 + $0x160] sm:$0xff]
      %v183 = vld [vmem:[%s138 + $0x168] sm:$0xff]
      %v184 = vld [vmem:[%s138 + $0x170] sm:$0xff]
      %v185 = vld [vmem:[%s138 + $0x178] sm:$0xff]
      %v186 = vld [vmem:[%s138 + $0x180] sm:$0xff]
      %v187 = vld [vmem:[%s138 + $0x188] sm:$0xff]
      %v188 = vld [vmem:[%s138 + $0x190] sm:$0xff]
      %v189 = vld [vmem:[%s138 + $0x198] sm:$0xff]
      %v190 = vld [vmem:[%s138 + $0x1a0] sm:$0xff]
      %v191 = vld [vmem:[%s138 + $0x1a8] sm:$0xff]
      %v192 = vld [vmem:[%s138 + $0x1b0] sm:$0xff]
      %v193 = vld [vmem:[%s138 + $0x1b8] sm:$0xff]
      %v194 = vld [vmem:[%s138 + $0x1e0] sm:$0xff]
      %v195 = vld [vmem:[%s138 + $0x1e8] sm:$0xff]
      %v196 = vld [vmem:[%s138 + $0x1f0] sm:$0xff]
      %v197 = vld [vmem:[%s138 + $0x1f8] sm:$0xff]
      %v198 = vld [vmem:[%s138 + $0x200] sm:$0xff]
      %v199 = vld [vmem:[%s138 + $0x208] sm:$0xff]
      %v200 = vld [vmem:[%s138 + $0x210] sm:$0xff]
      %v201 = vld [vmem:[%s138 + $0x218] sm:$0xff]
      %v202 = vld [vmem:[%s138 + $0x220] sm:$0xff]
      %v203 = vld [vmem:[%s138 + $0x228] sm:$0xff]
      %v204 = vld [vmem:[%s138 + $0x230] sm:$0xff]
      %v205 = vld [vmem:[%s138 + $0x238] sm:$0xff]
      %v206 = vld [vmem:[%s138 + $0x240] sm:$0xff]
      %v207 = vld [vmem:[%s138 + $0x248] sm:$0xff]
      %v208 = vld [vmem:[%s138 + $0x250] sm:$0xff]
      %v209 = vld [vmem:[%s138 + $0x258] sm:$0xff]
      %v210 = vld [vmem:[%s138 + $0x280] sm:$0xff]
      %v211 = vld [vmem:[%s138 + $0x288] sm:$0xff]
      %v212 = vld [vmem:[%s138 + $0x290] sm:$0xff]
      %v213 = vld [vmem:[%s138 + $0x298] sm:$0xff]
      %v214 = vld [vmem:[%s138 + $0x2a0] sm:$0xff]
      %v215 = vld [vmem:[%s138 + $0x2a8] sm:$0xff]
      %v216 = vld [vmem:[%s138 + $0x2b0] sm:$0xff]
      %v217 = vld [vmem:[%s138 + $0x2b8] sm:$0xff]
      %v218 = vld [vmem:[%s138 + $0x2c0] sm:$0xff]
      %v219 = vld [vmem:[%s138 + $0x2c8] sm:$0xff]
      %v220 = vld [vmem:[%s138 + $0x2d0] sm:$0xff]
      %v221 = vld [vmem:[%s138 + $0x2d8] sm:$0xff]
      %v222 = vld [vmem:[%s138 + $0x2e0] sm:$0xff]
      %v223 = vld [vmem:[%s138 + $0x2e8] sm:$0xff]
      %v224 = vld [vmem:[%s138 + $0x2f0] sm:$0xff]
      %v225 = vld [vmem:[%s138 + $0x2f8] sm:$0xff]
      %v226 = vld [vmem:[%s138 + $0x320] sm:$0xff]
      %v227 = vld [vmem:[%s138 + $0x328] sm:$0xff]
      %v228 = vld [vmem:[%s138 + $0x330] sm:$0xff]
      %v229 = vld [vmem:[%s138 + $0x338] sm:$0xff]
      %v230 = vld [vmem:[%s138 + $0x340] sm:$0xff]
      %v231 = vld [vmem:[%s138 + $0x348] sm:$0xff]
      %v232 = vld [vmem:[%s138 + $0x350] sm:$0xff]
      %v233 = vld [vmem:[%s138 + $0x358] sm:$0xff]
      %v234 = vld [vmem:[%s138 + $0x360] sm:$0xff]
      %v235 = vld [vmem:[%s138 + $0x368] sm:$0xff]
      %v236 = vld [vmem:[%s138 + $0x370] sm:$0xff]
      %v237 = vld [vmem:[%s138 + $0x378] sm:$0xff]
      %v238 = vld [vmem:[%s138 + $0x380] sm:$0xff]
      %v239 = vld [vmem:[%s138 + $0x388] sm:$0xff]
      %v240 = vld [vmem:[%s138 + $0x390] sm:$0xff]
      %v241 = vld [vmem:[%s138 + $0x398] sm:$0xff]
      %v242 = vld [vmem:[%s138 + $0x3c0] sm:$0xff]
      %v243 = vld [vmem:[%s138 + $0x3c8] sm:$0xff]
      %v244 = vld [vmem:[%s138 + $0x3d0] sm:$0xff]
      %v245 = vld [vmem:[%s138 + $0x3d8] sm:$0xff]
      %v246 = vld [vmem:[%s138 + $0x3e0] sm:$0xff]
      %v247 = vld [vmem:[%s138 + $0x3e8] sm:$0xff]
      %v248 = vld [vmem:[%s138 + $0x3f0] sm:$0xff]
      %v249 = vld [vmem:[%s138 + $0x3f8] sm:$0xff]
      %v250 = vld [vmem:[%s138 + $0x400] sm:$0xff]
      %v251 = vld [vmem:[%s138 + $0x408] sm:$0xff]
      %v252 = vld [vmem:[%s138 + $0x410] sm:$0xff]
      %v253 = vld [vmem:[%s138 + $0x418] sm:$0xff]
      %v254 = vld [vmem:[%s138 + $0x420] sm:$0xff]
      %v255 = vld [vmem:[%s138 + $0x428] sm:$0xff]
      %v256 = vld [vmem:[%s138 + $0x430] sm:$0xff]
      %v257 = vld [vmem:[%s138 + $0x438] sm:$0xff]
      %v258 = vld [vmem:[%s138 + $0x460] sm:$0xff]
      %v259 = vld [vmem:[%s138 + $0x468] sm:$0xff]
      %v260 = vld [vmem:[%s138 + $0x470] sm:$0xff]
      %v261 = vld [vmem:[%s138 + $0x478] sm:$0xff]
      %v262 = vld [vmem:[%s138 + $0x480] sm:$0xff]
      %v263 = vld [vmem:[%s138 + $0x488] sm:$0xff]
      %v264 = vld [vmem:[%s138 + $0x490] sm:$0xff]
      %v265 = vld [vmem:[%s138 + $0x498] sm:$0xff]
      %v266 = vld [vmem:[%s138 + $0x4a0] sm:$0xff]
      %v267 = vld [vmem:[%s138 + $0x4a8] sm:$0xff]
      %v268 = vld [vmem:[%s138 + $0x4b0] sm:$0xff]
      %v269 = vld [vmem:[%s138 + $0x4b8] sm:$0xff]
      %v270 = vld [vmem:[%s138 + $0x4c0] sm:$0xff]
      %v271 = vld [vmem:[%s138 + $0x4c8] sm:$0xff]
      %v272 = vld [vmem:[%s138 + $0x4d0] sm:$0xff]
      %v273 = vld [vmem:[%s138 + $0x4d8] sm:$0xff]
      %v274 = vld [vmem:[%s138 + $0x500] sm:$0xff]
      %v275 = vld [vmem:[%s138 + $0x508] sm:$0xff]
      %v276 = vld [vmem:[%s138 + $0x510] sm:$0xff]
      %v277 = vld [vmem:[%s138 + $0x518] sm:$0xff]
      %v278 = vld [vmem:[%s138 + $0x520] sm:$0xff]
      %v279 = vld [vmem:[%s138 + $0x528] sm:$0xff]
      %v280 = vld [vmem:[%s138 + $0x530] sm:$0xff]
      %v281 = vld [vmem:[%s138 + $0x538] sm:$0xff]
      %v282 = vld [vmem:[%s138 + $0x540] sm:$0xff]
      %v283 = vld [vmem:[%s138 + $0x548] sm:$0xff]
      %v284 = vld [vmem:[%s138 + $0x550] sm:$0xff]
      %v285 = vld [vmem:[%s138 + $0x558] sm:$0xff]
      %v286 = vld [vmem:[%s138 + $0x560] sm:$0xff]
      %v287 = vld [vmem:[%s138 + $0x568] sm:$0xff]
      %v288 = vld [vmem:[%s138 + $0x570] sm:$0xff]
      %v289 = vld [vmem:[%s138 + $0x578] sm:$0xff]
      %v290 = vld [vmem:[%s138 + $0x5a0] sm:$0xff]
      %v291 = vld [vmem:[%s138 + $0x5a8] sm:$0xff]
      %v292 = vld [vmem:[%s138 + $0x5b0] sm:$0xff]
      %v293 = vld [vmem:[%s138 + $0x5b8] sm:$0xff]
      %v294 = vld [vmem:[%s138 + $0x5c0] sm:$0xff]
      %v295 = vld [vmem:[%s138 + $0x5c8] sm:$0xff]
      %v296 = vld [vmem:[%s138 + $0x5d0] sm:$0xff]
      %v297 = vld [vmem:[%s138 + $0x5d8] sm:$0xff]
      %v298 = vld [vmem:[%s138 + $0x5e0] sm:$0xff]
      %v299 = vld [vmem:[%s138 + $0x5e8] sm:$0xff]
      %v300 = vld [vmem:[%s138 + $0x5f0] sm:$0xff]
      %v301 = vld [vmem:[%s138 + $0x5f8] sm:$0xff]
      %v302 = vld [vmem:[%s138 + $0x600] sm:$0xff]
      %v303 = vld [vmem:[%s138 + $0x608] sm:$0xff]
      %v304 = vld [vmem:[%s138 + $0x610] sm:$0xff]
      %v305 = vld [vmem:[%s138 + $0x618] sm:$0xff]
      %v306 = vld [vmem:[%s138 + $0x640] sm:$0xff]
      %v307 = vld [vmem:[%s138 + $0x648] sm:$0xff]
      %v308 = vld [vmem:[%s138 + $0x650] sm:$0xff]
      %v309 = vld [vmem:[%s138 + $0x658] sm:$0xff]
      %v310 = vld [vmem:[%s138 + $0x660] sm:$0xff]
      %v311 = vld [vmem:[%s138 + $0x668] sm:$0xff]
      %v312 = vld [vmem:[%s138 + $0x670] sm:$0xff]
      %v313 = vld [vmem:[%s138 + $0x678] sm:$0xff]
      %v314 = vld [vmem:[%s138 + $0x680] sm:$0xff]
      %v315 = vld [vmem:[%s138 + $0x688] sm:$0xff]
      %v316 = vld [vmem:[%s138 + $0x690] sm:$0xff]
      %v317 = vld [vmem:[%s138 + $0x698] sm:$0xff]
      %v318 = vld [vmem:[%s138 + $0x6a0] sm:$0xff]
      %v319 = vld [vmem:[%s138 + $0x6a8] sm:$0xff]
      %v320 = vld [vmem:[%s138 + $0x6b0] sm:$0xff]
      %v321 = vld [vmem:[%s138 + $0x6b8] sm:$0xff]
      %v322 = vld [vmem:[%s138 + $0x6e0] sm:$0xff]
      %v323 = vld [vmem:[%s138 + $0x6e8] sm:$0xff]
      %v324 = vld [vmem:[%s138 + $0x6f0] sm:$0xff]
      %v325 = vld [vmem:[%s138 + $0x6f8] sm:$0xff]
      %v326 = vld [vmem:[%s138 + $0x700] sm:$0xff]
      %v327 = vld [vmem:[%s138 + $0x708] sm:$0xff]
      %v328 = vld [vmem:[%s138 + $0x710] sm:$0xff]
      %v329 = vld [vmem:[%s138 + $0x718] sm:$0xff]
      %v330 = vld [vmem:[%s138 + $0x720] sm:$0xff]
      %v331 = vld [vmem:[%s138 + $0x728] sm:$0xff]
      %v332 = vld [vmem:[%s138 + $0x730] sm:$0xff]
      %v333 = vld [vmem:[%s138 + $0x738] sm:$0xff]
      %v334 = vld [vmem:[%s138 + $0x740] sm:$0xff]
      %v335 = vld [vmem:[%s138 + $0x748] sm:$0xff]
      %v336 = vld [vmem:[%s138 + $0x750] sm:$0xff]
      %v337 = vld [vmem:[%s138 + $0x758] sm:$0xff]
      %v338 = vld [vmem:[%s138 + $0x780] sm:$0x33]
      %v339 = vld [vmem:[%s138 + $0x788] sm:$0x33]
      %v340 = vld [vmem:[%s138 + $0x790] sm:$0x33]
      %v341 = vld [vmem:[%s138 + $0x798] sm:$0x33]
      %v342 = vld [vmem:[%s138 + $0x7a0] sm:$0x33]
      %v343 = vld [vmem:[%s138 + $0x7a8] sm:$0x33]
      %v344 = vld [vmem:[%s138 + $0x7b0] sm:$0x33]
      %v345 = vld [vmem:[%s138 + $0x7b8] sm:$0x33]
      %v346 = vld [vmem:[%s138 + $0x7c0] sm:$0x33]
      %v347 = vld [vmem:[%s138 + $0x7c8] sm:$0x33]
      %v348 = vld [vmem:[%s138 + $0x7d0] sm:$0x33]
      %v349 = vld [vmem:[%s138 + $0x7d8] sm:$0x33]
      %v350 = vld [vmem:[%s138 + $0x7e0] sm:$0x33]
      %v351 = vld [vmem:[%s138 + $0x7e8] sm:$0x33]
      %v352 = vld [vmem:[%s138 + $0x7f0] sm:$0x33]
      %v353 = vld [vmem:[%s138 + $0x7f8] sm:$0x33]
      %s354 = scalar_lea.vmem %s1, 4
      %v355 = vld [vmem:[%s354] sm:$0xf]
      %v356 = vld [vmem:[%s138 + $0x80] sm:$0xff]
      %v357 = vld [vmem:[%s138 + $0x120] sm:$0xff]
      %v358 = vld [vmem:[%s138 + $0x1c0] sm:$0xff]
      %v359 = vld [vmem:[%s138 + $0x260] sm:$0xff]
      %v360 = vld [vmem:[%s138 + $0x300] sm:$0xff]
      %v361 = vld [vmem:[%s138 + $0x3a0] sm:$0xff]
      %v362 = vld [vmem:[%s138 + $0x440] sm:$0xff]
      %v363 = vld [vmem:[%s138 + $0x4e0] sm:$0xff]
      %v364 = vld [vmem:[%s138 + $0x580] sm:$0xff]
      %v365 = vld [vmem:[%s138 + $0x620] sm:$0xff]
      %v366 = vld [vmem:[%s138 + $0x6c0] sm:$0xff]
      %v367 = vld [vmem:[%s138 + $0x760] sm:$0xff]
      %v368 = vld [vmem:[%s138 + $0x800] sm:$0x33]
      %v577 = vunpack.c.l.b16 %v147
      %v578 = vunpack.c.h.b16 %v147
      %v579 = vunpack.c.l.b16 %v148
      %v580 = vunpack.c.h.b16 %v148
      %v581 = vunpack.c.l.b16 %v149
      %v582 = vunpack.c.h.b16 %v149
      %v583 = vunpack.c.l.b16 %v150
      %v584 = vunpack.c.h.b16 %v150
      %v585 = vunpack.c.l.b16 %v151
      %v586 = vunpack.c.h.b16 %v151
      %v587 = vunpack.c.l.b16 %v152
      %v588 = vunpack.c.h.b16 %v152
      %v589 = vunpack.c.l.b16 %v153
      %v590 = vunpack.c.h.b16 %v153
      %v591 = vunpack.c.l.b16 %v154
      %v592 = vunpack.c.h.b16 %v154
      %v593 = vunpack.c.l.b16 %v155
      %v594 = vunpack.c.h.b16 %v155
      %v595 = vunpack.c.l.b16 %v156
      %v596 = vunpack.c.h.b16 %v156
      %v597 = vunpack.c.l.b16 %v157
      %v598 = vunpack.c.h.b16 %v157
      %v599 = vunpack.c.l.b16 %v158
      %v600 = vunpack.c.h.b16 %v158
      %v601 = vunpack.c.l.b16 %v159
      %v602 = vunpack.c.h.b16 %v159
      %v603 = vunpack.c.l.b16 %v160
      %v604 = vunpack.c.h.b16 %v160
      %v605 = vunpack.c.l.b16 %v161
      %v606 = vunpack.c.h.b16 %v161
      %v607 = vunpack.c.l.b16 %v356
      %v608 = vunpack.c.h.b16 %v356
      %v609 = vunpack.c.l.b16 %v163
      %v610 = vunpack.c.h.b16 %v163
      %v611 = vunpack.c.l.b16 %v164
      %v612 = vunpack.c.h.b16 %v164
      %v613 = vunpack.c.l.b16 %v165
      %v614 = vunpack.c.h.b16 %v165
      %v615 = vunpack.c.l.b16 %v166
      %v616 = vunpack.c.h.b16 %v166
      %v617 = vunpack.c.l.b16 %v167
      %v618 = vunpack.c.h.b16 %v167
      %v619 = vunpack.c.l.b16 %v168
      %v620 = vunpack.c.h.b16 %v168
      %v621 = vunpack.c.l.b16 %v169
      %v622 = vunpack.c.h.b16 %v169
      %v623 = vunpack.c.l.b16 %v170
      %v624 = vunpack.c.h.b16 %v170
      %v625 = vunpack.c.l.b16 %v171
      %v626 = vunpack.c.h.b16 %v171
      %v627 = vunpack.c.l.b16 %v172
      %v628 = vunpack.c.h.b16 %v172
      %v629 = vunpack.c.l.b16 %v173
      %v630 = vunpack.c.h.b16 %v173
      %v631 = vunpack.c.l.b16 %v174
      %v632 = vunpack.c.h.b16 %v174
      %v633 = vunpack.c.l.b16 %v175
      %v634 = vunpack.c.h.b16 %v175
      %v635 = vunpack.c.l.b16 %v176
      %v636 = vunpack.c.h.b16 %v176
      %v637 = vunpack.c.l.b16 %v177
      %v638 = vunpack.c.h.b16 %v177
      %v639 = vunpack.c.l.b16 %v357
      %v640 = vunpack.c.h.b16 %v357
      %v641 = vunpack.c.l.b16 %v179
      %v642 = vunpack.c.h.b16 %v179
      %v643 = vunpack.c.l.b16 %v180
      %v644 = vunpack.c.h.b16 %v180
      %v645 = vunpack.c.l.b16 %v181
      %v646 = vunpack.c.h.b16 %v181
      %v647 = vunpack.c.l.b16 %v182
      %v648 = vunpack.c.h.b16 %v182
      %v649 = vunpack.c.l.b16 %v183
      %v650 = vunpack.c.h.b16 %v183
      %v651 = vunpack.c.l.b16 %v184
      %v652 = vunpack.c.h.b16 %v184
      %v653 = vunpack.c.l.b16 %v185
      %v654 = vunpack.c.h.b16 %v185
      %v655 = vunpack.c.l.b16 %v186
      %v656 = vunpack.c.h.b16 %v186
      %v657 = vunpack.c.l.b16 %v187
      %v658 = vunpack.c.h.b16 %v187
      %v659 = vunpack.c.l.b16 %v188
      %v660 = vunpack.c.h.b16 %v188
      %v661 = vunpack.c.l.b16 %v189
      %v662 = vunpack.c.h.b16 %v189
      %v663 = vunpack.c.l.b16 %v190
      %v664 = vunpack.c.h.b16 %v190
      %v665 = vunpack.c.l.b16 %v191
      %v666 = vunpack.c.h.b16 %v191
      %v667 = vunpack.c.l.b16 %v192
      %v668 = vunpack.c.h.b16 %v192
      %v669 = vunpack.c.l.b16 %v193
      %v670 = vunpack.c.h.b16 %v193
      %v671 = vunpack.c.l.b16 %v358
      %v672 = vunpack.c.h.b16 %v358
      %v673 = vunpack.c.l.b16 %v195
      %v674 = vunpack.c.h.b16 %v195
      %v675 = vunpack.c.l.b16 %v196
      %v676 = vunpack.c.h.b16 %v196
      %v677 = vunpack.c.l.b16 %v197
      %v678 = vunpack.c.h.b16 %v197
      %v679 = vunpack.c.l.b16 %v198
      %v680 = vunpack.c.h.b16 %v198
      %v681 = vunpack.c.l.b16 %v199
      %v682 = vunpack.c.h.b16 %v199
      %v683 = vunpack.c.l.b16 %v200
      %v684 = vunpack.c.h.b16 %v200
      %v685 = vunpack.c.l.b16 %v201
      %v686 = vunpack.c.h.b16 %v201
      %v687 = vunpack.c.l.b16 %v202
      %v688 = vunpack.c.h.b16 %v202
      %v689 = vunpack.c.l.b16 %v203
      %v690 = vunpack.c.h.b16 %v203
      %v691 = vunpack.c.l.b16 %v204
      %v692 = vunpack.c.h.b16 %v204
      %v693 = vunpack.c.l.b16 %v205
      %v694 = vunpack.c.h.b16 %v205
      %v695 = vunpack.c.l.b16 %v206
      %v696 = vunpack.c.h.b16 %v206
      %v697 = vunpack.c.l.b16 %v207
      %v698 = vunpack.c.h.b16 %v207
      %v699 = vunpack.c.l.b16 %v208
      %v700 = vunpack.c.h.b16 %v208
      %v701 = vunpack.c.l.b16 %v209
      %v702 = vunpack.c.h.b16 %v209
      %v703 = vunpack.c.l.b16 %v359
      %v704 = vunpack.c.h.b16 %v359
      %v705 = vunpack.c.l.b16 %v211
      %v706 = vunpack.c.h.b16 %v211
      %v707 = vunpack.c.l.b16 %v212
      %v708 = vunpack.c.h.b16 %v212
      %v709 = vunpack.c.l.b16 %v213
      %v710 = vunpack.c.h.b16 %v213
      %v711 = vunpack.c.l.b16 %v214
      %v712 = vunpack.c.h.b16 %v214
      %v713 = vunpack.c.l.b16 %v215
      %v714 = vunpack.c.h.b16 %v215
      %v715 = vunpack.c.l.b16 %v216
      %v716 = vunpack.c.h.b16 %v216
      %v717 = vunpack.c.l.b16 %v217
      %v718 = vunpack.c.h.b16 %v217
      %v719 = vunpack.c.l.b16 %v218
      %v720 = vunpack.c.h.b16 %v218
      %v721 = vunpack.c.l.b16 %v219
      %v722 = vunpack.c.h.b16 %v219
      %v723 = vunpack.c.l.b16 %v220
      %v724 = vunpack.c.h.b16 %v220
      %v725 = vunpack.c.l.b16 %v221
      %v726 = vunpack.c.h.b16 %v221
      %v727 = vunpack.c.l.b16 %v222
      %v728 = vunpack.c.h.b16 %v222
      %v729 = vunpack.c.l.b16 %v223
      %v730 = vunpack.c.h.b16 %v223
      %v731 = vunpack.c.l.b16 %v224
      %v732 = vunpack.c.h.b16 %v224
      %v733 = vunpack.c.l.b16 %v225
      %v734 = vunpack.c.h.b16 %v225
      %v735 = vunpack.c.l.b16 %v360
      %v736 = vunpack.c.h.b16 %v360
      %v737 = vunpack.c.l.b16 %v227
      %v738 = vunpack.c.h.b16 %v227
      %v739 = vunpack.c.l.b16 %v228
      %v740 = vunpack.c.h.b16 %v228
      %v741 = vunpack.c.l.b16 %v229
      %v742 = vunpack.c.h.b16 %v229
      %v743 = vunpack.c.l.b16 %v230
      %v744 = vunpack.c.h.b16 %v230
      %v745 = vunpack.c.l.b16 %v231
      %v746 = vunpack.c.h.b16 %v231
      %v747 = vunpack.c.l.b16 %v232
      %v748 = vunpack.c.h.b16 %v232
      %v749 = vunpack.c.l.b16 %v233
      %v750 = vunpack.c.h.b16 %v233
      %v751 = vunpack.c.l.b16 %v234
      %v752 = vunpack.c.h.b16 %v234
      %v753 = vunpack.c.l.b16 %v235
      %v754 = vunpack.c.h.b16 %v235
      %v755 = vunpack.c.l.b16 %v236
      %v756 = vunpack.c.h.b16 %v236
      %v757 = vunpack.c.l.b16 %v237
      %v758 = vunpack.c.h.b16 %v237
      %v759 = vunpack.c.l.b16 %v238
      %v760 = vunpack.c.h.b16 %v238
      %v761 = vunpack.c.l.b16 %v239
      %v762 = vunpack.c.h.b16 %v239
      %v763 = vunpack.c.l.b16 %v240
      %v764 = vunpack.c.h.b16 %v240
      %v765 = vunpack.c.l.b16 %v241
      %v766 = vunpack.c.h.b16 %v241
      %v767 = vunpack.c.l.b16 %v361
      %v768 = vunpack.c.h.b16 %v361
      %v769 = vunpack.c.l.b16 %v243
      %v770 = vunpack.c.h.b16 %v243
      %v771 = vunpack.c.l.b16 %v244
      %v772 = vunpack.c.h.b16 %v244
      %v773 = vunpack.c.l.b16 %v245
      %v774 = vunpack.c.h.b16 %v245
      %v775 = vunpack.c.l.b16 %v246
      %v776 = vunpack.c.h.b16 %v246
      %v777 = vunpack.c.l.b16 %v247
      %v778 = vunpack.c.h.b16 %v247
      %v779 = vunpack.c.l.b16 %v248
      %v780 = vunpack.c.h.b16 %v248
      %v781 = vunpack.c.l.b16 %v249
      %v782 = vunpack.c.h.b16 %v249
      %v783 = vunpack.c.l.b16 %v250
      %v784 = vunpack.c.h.b16 %v250
      %v785 = vunpack.c.l.b16 %v251
      %v786 = vunpack.c.h.b16 %v251
      %v787 = vunpack.c.l.b16 %v252
      %v788 = vunpack.c.h.b16 %v252
      %v789 = vunpack.c.l.b16 %v253
      %v790 = vunpack.c.h.b16 %v253
      %v791 = vunpack.c.l.b16 %v254
      %v792 = vunpack.c.h.b16 %v254
      %v793 = vunpack.c.l.b16 %v255
      %v794 = vunpack.c.h.b16 %v255
      %v795 = vunpack.c.l.b16 %v256
      %v796 = vunpack.c.h.b16 %v256
      %v797 = vunpack.c.l.b16 %v257
      %v798 = vunpack.c.h.b16 %v257
      %v799 = vunpack.c.l.b16 %v362
      %v800 = vunpack.c.h.b16 %v362
      %v801 = vunpack.c.l.b16 %v259
      %v802 = vunpack.c.h.b16 %v259
      %v803 = vunpack.c.l.b16 %v260
      %v804 = vunpack.c.h.b16 %v260
      %v805 = vunpack.c.l.b16 %v261
      %v806 = vunpack.c.h.b16 %v261
      %v807 = vunpack.c.l.b16 %v262
      %v808 = vunpack.c.h.b16 %v262
      %v809 = vunpack.c.l.b16 %v263
      %v810 = vunpack.c.h.b16 %v263
      %v811 = vunpack.c.l.b16 %v264
      %v812 = vunpack.c.h.b16 %v264
      %v813 = vunpack.c.l.b16 %v265
      %v814 = vunpack.c.h.b16 %v265
      %v815 = vunpack.c.l.b16 %v266
      %v816 = vunpack.c.h.b16 %v266
      %v817 = vunpack.c.l.b16 %v267
      %v818 = vunpack.c.h.b16 %v267
      %v819 = vunpack.c.l.b16 %v268
      %v820 = vunpack.c.h.b16 %v268
      %v821 = vunpack.c.l.b16 %v269
      %v822 = vunpack.c.h.b16 %v269
      %v823 = vunpack.c.l.b16 %v270
      %v824 = vunpack.c.h.b16 %v270
      %v825 = vunpack.c.l.b16 %v271
      %v826 = vunpack.c.h.b16 %v271
      %v827 = vunpack.c.l.b16 %v272
      %v828 = vunpack.c.h.b16 %v272
      %v829 = vunpack.c.l.b16 %v273
      %v830 = vunpack.c.h.b16 %v273
      %v831 = vunpack.c.l.b16 %v363
      %v832 = vunpack.c.h.b16 %v363
      %v833 = vunpack.c.l.b16 %v275
      %v834 = vunpack.c.h.b16 %v275
      %v835 = vunpack.c.l.b16 %v276
      %v836 = vunpack.c.h.b16 %v276
      %v837 = vunpack.c.l.b16 %v277
      %v838 = vunpack.c.h.b16 %v277
      %v839 = vunpack.c.l.b16 %v278
      %v840 = vunpack.c.h.b16 %v278
      %v841 = vunpack.c.l.b16 %v279
      %v842 = vunpack.c.h.b16 %v279
      %v843 = vunpack.c.l.b16 %v280
      %v844 = vunpack.c.h.b16 %v280
      %v845 = vunpack.c.l.b16 %v281
      %v846 = vunpack.c.h.b16 %v281
      %v847 = vunpack.c.l.b16 %v282
      %v848 = vunpack.c.h.b16 %v282
      %v849 = vunpack.c.l.b16 %v283
      %v850 = vunpack.c.h.b16 %v283
      %v851 = vunpack.c.l.b16 %v284
      %v852 = vunpack.c.h.b16 %v284
      %v853 = vunpack.c.l.b16 %v285
      %v854 = vunpack.c.h.b16 %v285
      %v855 = vunpack.c.l.b16 %v286
      %v856 = vunpack.c.h.b16 %v286
      %v857 = vunpack.c.l.b16 %v287
      %v858 = vunpack.c.h.b16 %v287
      %v859 = vunpack.c.l.b16 %v288
      %v860 = vunpack.c.h.b16 %v288
      %v861 = vunpack.c.l.b16 %v289
      %v862 = vunpack.c.h.b16 %v289
      %v863 = vunpack.c.l.b16 %v364
      %v864 = vunpack.c.h.b16 %v364
      %v865 = vunpack.c.l.b16 %v291
      %v866 = vunpack.c.h.b16 %v291
      %v867 = vunpack.c.l.b16 %v292
      %v868 = vunpack.c.h.b16 %v292
      %v869 = vunpack.c.l.b16 %v293
      %v870 = vunpack.c.h.b16 %v293
      %v871 = vunpack.c.l.b16 %v294
      %v872 = vunpack.c.h.b16 %v294
      %v873 = vunpack.c.l.b16 %v295
      %v874 = vunpack.c.h.b16 %v295
      %v875 = vunpack.c.l.b16 %v296
      %v876 = vunpack.c.h.b16 %v296
      %v877 = vunpack.c.l.b16 %v297
      %v878 = vunpack.c.h.b16 %v297
      %v879 = vunpack.c.l.b16 %v298
      %v880 = vunpack.c.h.b16 %v298
      %v881 = vunpack.c.l.b16 %v299
      %v882 = vunpack.c.h.b16 %v299
      %v883 = vunpack.c.l.b16 %v300
      %v884 = vunpack.c.h.b16 %v300
      %v885 = vunpack.c.l.b16 %v301
      %v886 = vunpack.c.h.b16 %v301
      %v887 = vunpack.c.l.b16 %v302
      %v888 = vunpack.c.h.b16 %v302
      %v889 = vunpack.c.l.b16 %v303
      %v890 = vunpack.c.h.b16 %v303
      %v891 = vunpack.c.l.b16 %v304
      %v892 = vunpack.c.h.b16 %v304
      %v893 = vunpack.c.l.b16 %v305
      %v894 = vunpack.c.h.b16 %v305
      %v895 = vunpack.c.l.b16 %v365
      %v896 = vunpack.c.h.b16 %v365
      %v897 = vunpack.c.l.b16 %v307
      %v898 = vunpack.c.h.b16 %v307
      %v899 = vunpack.c.l.b16 %v308
      %v900 = vunpack.c.h.b16 %v308
      %v901 = vunpack.c.l.b16 %v309
      %v902 = vunpack.c.h.b16 %v309
      %v903 = vunpack.c.l.b16 %v310
      %v904 = vunpack.c.h.b16 %v310
      %v905 = vunpack.c.l.b16 %v311
      %v906 = vunpack.c.h.b16 %v311
      %v907 = vunpack.c.l.b16 %v312
      %v908 = vunpack.c.h.b16 %v312
      %v909 = vunpack.c.l.b16 %v313
      %v910 = vunpack.c.h.b16 %v313
      %v911 = vunpack.c.l.b16 %v314
      %v912 = vunpack.c.h.b16 %v314
      %v913 = vunpack.c.l.b16 %v315
      %v914 = vunpack.c.h.b16 %v315
      %v915 = vunpack.c.l.b16 %v316
      %v916 = vunpack.c.h.b16 %v316
      %v917 = vunpack.c.l.b16 %v317
      %v918 = vunpack.c.h.b16 %v317
      %v919 = vunpack.c.l.b16 %v318
      %v920 = vunpack.c.h.b16 %v318
      %v921 = vunpack.c.l.b16 %v319
      %v922 = vunpack.c.h.b16 %v319
      %v923 = vunpack.c.l.b16 %v320
      %v924 = vunpack.c.h.b16 %v320
      %v925 = vunpack.c.l.b16 %v321
      %v926 = vunpack.c.h.b16 %v321
      %v927 = vunpack.c.l.b16 %v366
      %v928 = vunpack.c.h.b16 %v366
      %v929 = vunpack.c.l.b16 %v323
      %v930 = vunpack.c.h.b16 %v323
      %v931 = vunpack.c.l.b16 %v324
      %v932 = vunpack.c.h.b16 %v324
      %v933 = vunpack.c.l.b16 %v325
      %v934 = vunpack.c.h.b16 %v325
      %v935 = vunpack.c.l.b16 %v326
      %v936 = vunpack.c.h.b16 %v326
      %v937 = vunpack.c.l.b16 %v327
      %v938 = vunpack.c.h.b16 %v327
      %v939 = vunpack.c.l.b16 %v328
      %v940 = vunpack.c.h.b16 %v328
      %v941 = vunpack.c.l.b16 %v329
      %v942 = vunpack.c.h.b16 %v329
      %v943 = vunpack.c.l.b16 %v330
      %v944 = vunpack.c.h.b16 %v330
      %v945 = vunpack.c.l.b16 %v331
      %v946 = vunpack.c.h.b16 %v331
      %v947 = vunpack.c.l.b16 %v332
      %v948 = vunpack.c.h.b16 %v332
      %v949 = vunpack.c.l.b16 %v333
      %v950 = vunpack.c.h.b16 %v333
      %v951 = vunpack.c.l.b16 %v334
      %v952 = vunpack.c.h.b16 %v334
      %v953 = vunpack.c.l.b16 %v335
      %v954 = vunpack.c.h.b16 %v335
      %v955 = vunpack.c.l.b16 %v336
      %v956 = vunpack.c.h.b16 %v336
      %v957 = vunpack.c.l.b16 %v337
      %v958 = vunpack.c.h.b16 %v337
      %v959 = vunpack.c.l.b16 %v367
      %v960 = vunpack.c.h.b16 %v367
      %v961 = vunpack.c.l.b16 %v339
      %v962 = vunpack.c.h.b16 %v339
      %v963 = vunpack.c.l.b16 %v340
      %v964 = vunpack.c.h.b16 %v340
      %v965 = vunpack.c.l.b16 %v341
      %v966 = vunpack.c.h.b16 %v341
      %v967 = vunpack.c.l.b16 %v342
      %v968 = vunpack.c.h.b16 %v342
      %v969 = vunpack.c.l.b16 %v343
      %v970 = vunpack.c.h.b16 %v343
      %v971 = vunpack.c.l.b16 %v344
      %v972 = vunpack.c.h.b16 %v344
      %v973 = vunpack.c.l.b16 %v345
      %v974 = vunpack.c.h.b16 %v345
      %v975 = vunpack.c.l.b16 %v346
      %v976 = vunpack.c.h.b16 %v346
      %v977 = vunpack.c.l.b16 %v347
      %v978 = vunpack.c.h.b16 %v347
      %v979 = vunpack.c.l.b16 %v348
      %v980 = vunpack.c.h.b16 %v348
      %v981 = vunpack.c.l.b16 %v349
      %v982 = vunpack.c.h.b16 %v349
      %v983 = vunpack.c.l.b16 %v350
      %v984 = vunpack.c.h.b16 %v350
      %v985 = vunpack.c.l.b16 %v351
      %v986 = vunpack.c.h.b16 %v351
      %v987 = vunpack.c.l.b16 %v352
      %v988 = vunpack.c.h.b16 %v352
      %v989 = vunpack.c.l.b16 %v353
      %v990 = vunpack.c.h.b16 %v353
      %v991 = vunpack.c.l.b16 %v368
      %v992 = vunpack.c.h.b16 %v368
      %v993 = vpack.c.b16 %v609, %v577
      %v994 = vpack.c.b16 %v610, %v578
      %v995 = vpack.c.b16 %v611, %v579
      %v996 = vpack.c.b16 %v612, %v580
      %v997 = vpack.c.b16 %v613, %v581
      %v998 = vpack.c.b16 %v614, %v582
      %v999 = vpack.c.b16 %v615, %v583
      %v1000 = vpack.c.b16 %v616, %v584
      %v1001 = vpack.c.b16 %v617, %v585
      %v1002 = vpack.c.b16 %v618, %v586
      %v1003 = vpack.c.b16 %v619, %v587
      %v1004 = vpack.c.b16 %v620, %v588
      %v1005 = vpack.c.b16 %v621, %v589
      %v1006 = vpack.c.b16 %v622, %v590
      %v1007 = vpack.c.b16 %v623, %v591
      %v1008 = vpack.c.b16 %v624, %v592
      %v1009 = vpack.c.b16 %v625, %v593
      %v1010 = vpack.c.b16 %v626, %v594
      %v1011 = vpack.c.b16 %v627, %v595
      %v1012 = vpack.c.b16 %v628, %v596
      %v1013 = vpack.c.b16 %v629, %v597
      %v1014 = vpack.c.b16 %v630, %v598
      %v1015 = vpack.c.b16 %v631, %v599
      %v1016 = vpack.c.b16 %v632, %v600
      %v1017 = vpack.c.b16 %v633, %v601
      %v1018 = vpack.c.b16 %v634, %v602
      %v1019 = vpack.c.b16 %v635, %v603
      %v1020 = vpack.c.b16 %v636, %v604
      %v1021 = vpack.c.b16 %v637, %v605
      %v1022 = vpack.c.b16 %v638, %v606
      %v1023 = vpack.c.b16 %v639, %v607
      %v1024 = vpack.c.b16 %v640, %v608
      %v1025 = vpack.c.b16 %v673, %v641
      %v1026 = vpack.c.b16 %v674, %v642
      %v1027 = vpack.c.b16 %v675, %v643
      %v1028 = vpack.c.b16 %v676, %v644
      %v1029 = vpack.c.b16 %v677, %v645
      %v1030 = vpack.c.b16 %v678, %v646
      %v1031 = vpack.c.b16 %v679, %v647
      %v1032 = vpack.c.b16 %v680, %v648
      %v1033 = vpack.c.b16 %v681, %v649
      %v1034 = vpack.c.b16 %v682, %v650
      %v1035 = vpack.c.b16 %v683, %v651
      %v1036 = vpack.c.b16 %v684, %v652
      %v1037 = vpack.c.b16 %v685, %v653
      %v1038 = vpack.c.b16 %v686, %v654
      %v1039 = vpack.c.b16 %v687, %v655
      %v1040 = vpack.c.b16 %v688, %v656
      %v1041 = vpack.c.b16 %v689, %v657
      %v1042 = vpack.c.b16 %v690, %v658
      %v1043 = vpack.c.b16 %v691, %v659
      %v1044 = vpack.c.b16 %v692, %v660
      %v1045 = vpack.c.b16 %v693, %v661
      %v1046 = vpack.c.b16 %v694, %v662
      %v1047 = vpack.c.b16 %v695, %v663
      %v1048 = vpack.c.b16 %v696, %v664
      %v1049 = vpack.c.b16 %v697, %v665
      %v1050 = vpack.c.b16 %v698, %v666
      %v1051 = vpack.c.b16 %v699, %v667
      %v1052 = vpack.c.b16 %v700, %v668
      %v1053 = vpack.c.b16 %v701, %v669
      %v1054 = vpack.c.b16 %v702, %v670
      %v1055 = vpack.c.b16 %v703, %v671
      %v1056 = vpack.c.b16 %v704, %v672
      %v1057 = vpack.c.b16 %v737, %v705
      %v1058 = vpack.c.b16 %v738, %v706
      %v1059 = vpack.c.b16 %v739, %v707
      %v1060 = vpack.c.b16 %v740, %v708
      %v1061 = vpack.c.b16 %v741, %v709
      %v1062 = vpack.c.b16 %v742, %v710
      %v1063 = vpack.c.b16 %v743, %v711
      %v1064 = vpack.c.b16 %v744, %v712
      %v1065 = vpack.c.b16 %v745, %v713
      %v1066 = vpack.c.b16 %v746, %v714
      %v1067 = vpack.c.b16 %v747, %v715
      %v1068 = vpack.c.b16 %v748, %v716
      %v1069 = vpack.c.b16 %v749, %v717
      %v1070 = vpack.c.b16 %v750, %v718
      %v1071 = vpack.c.b16 %v751, %v719
      %v1072 = vpack.c.b16 %v752, %v720
      %v1073 = vpack.c.b16 %v753, %v721
      %v1074 = vpack.c.b16 %v754, %v722
      %v1075 = vpack.c.b16 %v755, %v723
      %v1076 = vpack.c.b16 %v756, %v724
      %v1077 = vpack.c.b16 %v757, %v725
      %v1078 = vpack.c.b16 %v758, %v726
      %v1079 = vpack.c.b16 %v759, %v727
      %v1080 = vpack.c.b16 %v760, %v728
      %v1081 = vpack.c.b16 %v761, %v729
      %v1082 = vpack.c.b16 %v762, %v730
      %v1083 = vpack.c.b16 %v763, %v731
      %v1084 = vpack.c.b16 %v764, %v732
      %v1085 = vpack.c.b16 %v765, %v733
      %v1086 = vpack.c.b16 %v766, %v734
      %v1087 = vpack.c.b16 %v767, %v735
      %v1088 = vpack.c.b16 %v768, %v736
      %v1089 = vpack.c.b16 %v801, %v769
      %v1090 = vpack.c.b16 %v802, %v770
      %v1091 = vpack.c.b16 %v803, %v771
      %v1092 = vpack.c.b16 %v804, %v772
      %v1093 = vpack.c.b16 %v805, %v773
      %v1094 = vpack.c.b16 %v806, %v774
      %v1095 = vpack.c.b16 %v807, %v775
      %v1096 = vpack.c.b16 %v808, %v776
      %v1097 = vpack.c.b16 %v809, %v777
      %v1098 = vpack.c.b16 %v810, %v778
      %v1099 = vpack.c.b16 %v811, %v779
      %v1100 = vpack.c.b16 %v812, %v780
      %v1101 = vpack.c.b16 %v813, %v781
      %v1102 = vpack.c.b16 %v814, %v782
      %v1103 = vpack.c.b16 %v815, %v783
      %v1104 = vpack.c.b16 %v816, %v784
      %v1105 = vpack.c.b16 %v817, %v785
      %v1106 = vpack.c.b16 %v818, %v786
      %v1107 = vpack.c.b16 %v819, %v787
      %v1108 = vpack.c.b16 %v820, %v788
      %v1109 = vpack.c.b16 %v821, %v789
      %v1110 = vpack.c.b16 %v822, %v790
      %v1111 = vpack.c.b16 %v823, %v791
      %v1112 = vpack.c.b16 %v824, %v792
      %v1113 = vpack.c.b16 %v825, %v793
      %v1114 = vpack.c.b16 %v826, %v794
      %v1115 = vpack.c.b16 %v827, %v795
      %v1116 = vpack.c.b16 %v828, %v796
      %v1117 = vpack.c.b16 %v829, %v797
      %v1118 = vpack.c.b16 %v830, %v798
      %v1119 = vpack.c.b16 %v831, %v799
      %v1120 = vpack.c.b16 %v832, %v800
      %v1121 = vpack.c.b16 %v865, %v833
      %v1122 = vpack.c.b16 %v866, %v834
      %v1123 = vpack.c.b16 %v867, %v835
      %v1124 = vpack.c.b16 %v868, %v836
      %v1125 = vpack.c.b16 %v869, %v837
      %v1126 = vpack.c.b16 %v870, %v838
      %v1127 = vpack.c.b16 %v871, %v839
      %v1128 = vpack.c.b16 %v872, %v840
      %v1129 = vpack.c.b16 %v873, %v841
      %v1130 = vpack.c.b16 %v874, %v842
      %v1131 = vpack.c.b16 %v875, %v843
      %v1132 = vpack.c.b16 %v876, %v844
      %v1133 = vpack.c.b16 %v877, %v845
      %v1134 = vpack.c.b16 %v878, %v846
      %v1135 = vpack.c.b16 %v879, %v847
      %v1136 = vpack.c.b16 %v880, %v848
      %v1137 = vpack.c.b16 %v881, %v849
      %v1138 = vpack.c.b16 %v882, %v850
      %v1139 = vpack.c.b16 %v883, %v851
      %v1140 = vpack.c.b16 %v884, %v852
      %v1141 = vpack.c.b16 %v885, %v853
      %v1142 = vpack.c.b16 %v886, %v854
      %v1143 = vpack.c.b16 %v887, %v855
      %v1144 = vpack.c.b16 %v888, %v856
      %v1145 = vpack.c.b16 %v889, %v857
      %v1146 = vpack.c.b16 %v890, %v858
      %v1147 = vpack.c.b16 %v891, %v859
      %v1148 = vpack.c.b16 %v892, %v860
      %v1149 = vpack.c.b16 %v893, %v861
      %v1150 = vpack.c.b16 %v894, %v862
      %v1151 = vpack.c.b16 %v895, %v863
      %v1152 = vpack.c.b16 %v896, %v864
      %v1153 = vpack.c.b16 %v929, %v897
      %v1154 = vpack.c.b16 %v930, %v898
      %v1155 = vpack.c.b16 %v931, %v899
      %v1156 = vpack.c.b16 %v932, %v900
      %v1157 = vpack.c.b16 %v933, %v901
      %v1158 = vpack.c.b16 %v934, %v902
      %v1159 = vpack.c.b16 %v935, %v903
      %v1160 = vpack.c.b16 %v936, %v904
      %v1161 = vpack.c.b16 %v937, %v905
      %v1162 = vpack.c.b16 %v938, %v906
      %v1163 = vpack.c.b16 %v939, %v907
      %v1164 = vpack.c.b16 %v940, %v908
      %v1165 = vpack.c.b16 %v941, %v909
      %v1166 = vpack.c.b16 %v942, %v910
      %v1167 = vpack.c.b16 %v943, %v911
      %v1168 = vpack.c.b16 %v944, %v912
      %v1169 = vpack.c.b16 %v945, %v913
      %v1170 = vpack.c.b16 %v946, %v914
      %v1171 = vpack.c.b16 %v947, %v915
      %v1172 = vpack.c.b16 %v948, %v916
      %v1173 = vpack.c.b16 %v949, %v917
      %v1174 = vpack.c.b16 %v950, %v918
      %v1175 = vpack.c.b16 %v951, %v919
      %v1176 = vpack.c.b16 %v952, %v920
      %v1177 = vpack.c.b16 %v953, %v921
      %v1178 = vpack.c.b16 %v954, %v922
      %v1179 = vpack.c.b16 %v955, %v923
      %v1180 = vpack.c.b16 %v956, %v924
      %v1181 = vpack.c.b16 %v957, %v925
      %v1182 = vpack.c.b16 %v958, %v926
      %v1183 = vpack.c.b16 %v959, %v927
      %v1184 = vpack.c.b16 %v960, %v928
      %v1185 = vpack.c.b16 %v961, %v961
      %v1186 = vpack.c.b16 %v962, %v962
      %v1187 = vpack.c.b16 %v963, %v963
      %v1188 = vpack.c.b16 %v964, %v964
      %v1189 = vpack.c.b16 %v965, %v965
      %v1190 = vpack.c.b16 %v966, %v966
      %v1191 = vpack.c.b16 %v967, %v967
      %v1192 = vpack.c.b16 %v968, %v968
      %v1193 = vpack.c.b16 %v969, %v969
      %v1194 = vpack.c.b16 %v970, %v970
      %v1195 = vpack.c.b16 %v971, %v971
      %v1196 = vpack.c.b16 %v972, %v972
      %v1197 = vpack.c.b16 %v973, %v973
      %v1198 = vpack.c.b16 %v974, %v974
      %v1199 = vpack.c.b16 %v975, %v975
      %v1200 = vpack.c.b16 %v976, %v976
      %v1201 = vpack.c.b16 %v977, %v977
      %v1202 = vpack.c.b16 %v978, %v978
      %v1203 = vpack.c.b16 %v979, %v979
      %v1204 = vpack.c.b16 %v980, %v980
      %v1205 = vpack.c.b16 %v981, %v981
      %v1206 = vpack.c.b16 %v982, %v982
      %v1207 = vpack.c.b16 %v983, %v983
      %v1208 = vpack.c.b16 %v984, %v984
      %v1209 = vpack.c.b16 %v985, %v985
      %v1210 = vpack.c.b16 %v986, %v986
      %v1211 = vpack.c.b16 %v987, %v987
      %v1212 = vpack.c.b16 %v988, %v988
      %v1213 = vpack.c.b16 %v989, %v989
      %v1214 = vpack.c.b16 %v990, %v990
      %v1215 = vpack.c.b16 %v991, %v991
      %v1216 = vpack.c.b16 %v992, %v992
      %vm1409 = vcmask 818176
      %v1411 = vsel %vm1409, %v355, 0
      %vm1413 = vcmask 1041408
      %v1415 = vsel %vm1413, %v1185, 0
      %v1418 = vsel %vm1413, %v1186, 0
      %v1421 = vsel %vm1413, %v1187, 0
      %v1424 = vsel %vm1413, %v1188, 0
      %v1427 = vsel %vm1413, %v1189, 0
      %v1430 = vsel %vm1413, %v1190, 0
      %v1433 = vsel %vm1413, %v1191, 0
      %v1436 = vsel %vm1413, %v1192, 0
      %v1439 = vsel %vm1413, %v1193, 0
      %v1442 = vsel %vm1413, %v1194, 0
      %v1445 = vsel %vm1413, %v1195, 0
      %v1448 = vsel %vm1413, %v1196, 0
      %v1451 = vsel %vm1413, %v1197, 0
      %v1454 = vsel %vm1413, %v1198, 0
      %v1457 = vsel %vm1413, %v1199, 0
      %v1460 = vsel %vm1413, %v1200, 0
      %v1463 = vsel %vm1413, %v1201, 0
      %v1466 = vsel %vm1413, %v1202, 0
      %v1469 = vsel %vm1413, %v1203, 0
      %v1472 = vsel %vm1413, %v1204, 0
      %v1475 = vsel %vm1413, %v1205, 0
      %v1478 = vsel %vm1413, %v1206, 0
      %v1481 = vsel %vm1413, %v1207, 0
      %v1484 = vsel %vm1413, %v1208, 0
      %v1487 = vsel %vm1413, %v1209, 0
      %v1490 = vsel %vm1413, %v1210, 0
      %v1493 = vsel %vm1413, %v1211, 0
      %v1496 = vsel %vm1413, %v1212, 0
      %v1499 = vsel %vm1413, %v1213, 0
      %v1502 = vsel %vm1413, %v1214, 0
      %v1505 = vsel %vm1413, %v1215, 0
      %v1508 = vsel %vm1413, %v1216, 0
      %1510 = vmatpush.bf16.msra.mxu0 0
      %1511 = vmatpush.bf16.msra.mxu0 %v1415
      %1512 = vmatpush.bf16.msra.mxu0 %v1153
      %1513 = vmatpush.bf16.msra.mxu0 %v1121
      %1514 = vmatpush.bf16.msra.mxu0 %v1089
      %1515 = vmatpush.bf16.msra.mxu0 %v1057
      %1516 = vmatpush.bf16.msra.mxu0 %v1025
      %1517 = vmatpush.bf16.msra.mxu0 %v993
      %1518 = vmatmul.bf16.gmra.mxu0 %v1411
      %v1519 = vpop.f32.mrf.mxu0
      %v1520 = vadd.f32 0.0, %v1519
      %v1521 = vpop.f32.mrf.mxu0
      %1522 = vdwg.mxu0
      %1523 = vmatpush.bf16.msra.mxu0 0
      %1524 = vmatpush.bf16.msra.mxu0 %v1418
      %1525 = vmatpush.bf16.msra.mxu0 %v1154
      %1526 = vmatpush.bf16.msra.mxu0 %v1122
      %1527 = vmatpush.bf16.msra.mxu0 %v1090
      %1528 = vmatpush.bf16.msra.mxu0 %v1058
      %1529 = vmatpush.bf16.msra.mxu0 %v1026
      %1530 = vmatpush.bf16.msra.mxu0 %v994
      %1531 = vmatmul.bf16.gmra.mxu0 %v1411
      %v1532 = vpop.f32.mrf.mxu0
      %v1533 = vadd.f32 0.0, %v1532
      %v1534 = vpop.f32.mrf.mxu0
      %1535 = vdwg.mxu0
      %1536 = vmatpush.bf16.msra.mxu0 0
      %1537 = vmatpush.bf16.msra.mxu0 %v1421
      %1538 = vmatpush.bf16.msra.mxu0 %v1155
      %1539 = vmatpush.bf16.msra.mxu0 %v1123
      %1540 = vmatpush.bf16.msra.mxu0 %v1091
      %1541 = vmatpush.bf16.msra.mxu0 %v1059
      %1542 = vmatpush.bf16.msra.mxu0 %v1027
      %1543 = vmatpush.bf16.msra.mxu0 %v995
      %1544 = vmatmul.bf16.gmra.mxu0 %v1411
      %v1545 = vpop.f32.mrf.mxu0
      %v1546 = vadd.f32 0.0, %v1545
      %v1547 = vpop.f32.mrf.mxu0
      %1548 = vdwg.mxu0
      %1549 = vmatpush.bf16.msra.mxu0 0
      %1550 = vmatpush.bf16.msra.mxu0 %v1424
      %1551 = vmatpush.bf16.msra.mxu0 %v1156
      %1552 = vmatpush.bf16.msra.mxu0 %v1124
      %1553 = vmatpush.bf16.msra.mxu0 %v1092
      %1554 = vmatpush.bf16.msra.mxu0 %v1060
      %1555 = vmatpush.bf16.msra.mxu0 %v1028
      %1556 = vmatpush.bf16.msra.mxu0 %v996
      %1557 = vmatmul.bf16.gmra.mxu0 %v1411
      %v1558 = vpop.f32.mrf.mxu0
      %v1559 = vadd.f32 0.0, %v1558
      %v1560 = vpop.f32.mrf.mxu0
      %1561 = vdwg.mxu0
      %1562 = vmatpush.bf16.msra.mxu0 0
      %1563 = vmatpush.bf16.msra.mxu0 %v1427
      %1564 = vmatpush.bf16.msra.mxu0 %v1157
      %1565 = vmatpush.bf16.msra.mxu0 %v1125
      %1566 = vmatpush.bf16.msra.mxu0 %v1093
      %1567 = vmatpush.bf16.msra.mxu0 %v1061
      %1568 = vmatpush.bf16.msra.mxu0 %v1029
      %1569 = vmatpush.bf16.msra.mxu0 %v997
      %1570 = vmatmul.bf16.gmra.mxu0 %v1411
      %v1571 = vpop.f32.mrf.mxu0
      %v1572 = vadd.f32 0.0, %v1571
      %v1573 = vpop.f32.mrf.mxu0
      %1574 = vdwg.mxu0
      %1575 = vmatpush.bf16.msra.mxu0 0
      %1576 = vmatpush.bf16.msra.mxu0 %v1430
      %1577 = vmatpush.bf16.msra.mxu0 %v1158
      %1578 = vmatpush.bf16.msra.mxu0 %v1126
      %1579 = vmatpush.bf16.msra.mxu0 %v1094
      %1580 = vmatpush.bf16.msra.mxu0 %v1062
      %1581 = vmatpush.bf16.msra.mxu0 %v1030
      %1582 = vmatpush.bf16.msra.mxu0 %v998
      %1583 = vmatmul.bf16.gmra.mxu0 %v1411
      %v1584 = vpop.f32.mrf.mxu0
      %v1585 = vadd.f32 0.0, %v1584
      %v1586 = vpop.f32.mrf.mxu0
      %1587 = vdwg.mxu0
      %1588 = vmatpush.bf16.msra.mxu0 0
      %1589 = vmatpush.bf16.msra.mxu0 %v1433
      %1590 = vmatpush.bf16.msra.mxu0 %v1159
      %1591 = vmatpush.bf16.msra.mxu0 %v1127
      %1592 = vmatpush.bf16.msra.mxu0 %v1095
      %1593 = vmatpush.bf16.msra.mxu0 %v1063
      %1594 = vmatpush.bf16.msra.mxu0 %v1031
      %1595 = vmatpush.bf16.msra.mxu0 %v999
      %1596 = vmatmul.bf16.gmra.mxu0 %v1411
      %v1597 = vpop.f32.mrf.mxu0
      %v1598 = vadd.f32 0.0, %v1597
      %v1599 = vpop.f32.mrf.mxu0
      %1600 = vdwg.mxu0
      %1601 = vmatpush.bf16.msra.mxu0 0
      %1602 = vmatpush.bf16.msra.mxu0 %v1436
      %1603 = vmatpush.bf16.msra.mxu0 %v1160
      %1604 = vmatpush.bf16.msra.mxu0 %v1128
      %1605 = vmatpush.bf16.msra.mxu0 %v1096
      %1606 = vmatpush.bf16.msra.mxu0 %v1064
      %1607 = vmatpush.bf16.msra.mxu0 %v1032
      %1608 = vmatpush.bf16.msra.mxu0 %v1000
      %1609 = vmatmul.bf16.gmra.mxu0 %v1411
      %v1610 = vpop.f32.mrf.mxu0
      %v1611 = vadd.f32 0.0, %v1610
      %v1612 = vpop.f32.mrf.mxu0
      %1613 = vdwg.mxu0
      %1614 = vmatpush.bf16.msra.mxu0 0
      %1615 = vmatpush.bf16.msra.mxu0 %v1439
      %1616 = vmatpush.bf16.msra.mxu0 %v1161
      %1617 = vmatpush.bf16.msra.mxu0 %v1129
      %1618 = vmatpush.bf16.msra.mxu0 %v1097
      %1619 = vmatpush.bf16.msra.mxu0 %v1065
      %1620 = vmatpush.bf16.msra.mxu0 %v1033
      %1621 = vmatpush.bf16.msra.mxu0 %v1001
      %1622 = vmatmul.bf16.gmra.mxu0 %v1411
      %v1623 = vpop.f32.mrf.mxu0
      %v1624 = vadd.f32 0.0, %v1623
      %v1625 = vpop.f32.mrf.mxu0
      %1626 = vdwg.mxu0
      %1627 = vmatpush.bf16.msra.mxu0 0
      %1628 = vmatpush.bf16.msra.mxu0 %v1442
      %1629 = vmatpush.bf16.msra.mxu0 %v1162
      %1630 = vmatpush.bf16.msra.mxu0 %v1130
      %1631 = vmatpush.bf16.msra.mxu0 %v1098
      %1632 = vmatpush.bf16.msra.mxu0 %v1066
      %1633 = vmatpush.bf16.msra.mxu0 %v1034
      %1634 = vmatpush.bf16.msra.mxu0 %v1002
      %1635 = vmatmul.bf16.gmra.mxu0 %v1411
      %v1636 = vpop.f32.mrf.mxu0
      %v1637 = vadd.f32 0.0, %v1636
      %v1638 = vpop.f32.mrf.mxu0
      %1639 = vdwg.mxu0
      %1640 = vmatpush.bf16.msra.mxu0 0
      %1641 = vmatpush.bf16.msra.mxu0 %v1445
      %1642 = vmatpush.bf16.msra.mxu0 %v1163
      %1643 = vmatpush.bf16.msra.mxu0 %v1131
      %1644 = vmatpush.bf16.msra.mxu0 %v1099
      %1645 = vmatpush.bf16.msra.mxu0 %v1067
      %1646 = vmatpush.bf16.msra.mxu0 %v1035
      %1647 = vmatpush.bf16.msra.mxu0 %v1003
      %1648 = vmatmul.bf16.gmra.mxu0 %v1411
      %v1649 = vpop.f32.mrf.mxu0
      %v1650 = vadd.f32 0.0, %v1649
      %v1651 = vpop.f32.mrf.mxu0
      %1652 = vdwg.mxu0
      %1653 = vmatpush.bf16.msra.mxu0 0
      %1654 = vmatpush.bf16.msra.mxu0 %v1448
      %1655 = vmatpush.bf16.msra.mxu0 %v1164
      %1656 = vmatpush.bf16.msra.mxu0 %v1132
      %1657 = vmatpush.bf16.msra.mxu0 %v1100
      %1658 = vmatpush.bf16.msra.mxu0 %v1068
      %1659 = vmatpush.bf16.msra.mxu0 %v1036
      %1660 = vmatpush.bf16.msra.mxu0 %v1004
      %1661 = vmatmul.bf16.gmra.mxu0 %v1411
      %v1662 = vpop.f32.mrf.mxu0
      %v1663 = vadd.f32 0.0, %v1662
      %v1664 = vpop.f32.mrf.mxu0
      %1665 = vdwg.mxu0
      %1666 = vmatpush.bf16.msra.mxu0 0
      %1667 = vmatpush.bf16.msra.mxu0 %v1451
      %1668 = vmatpush.bf16.msra.mxu0 %v1165
      %1669 = vmatpush.bf16.msra.mxu0 %v1133
      %1670 = vmatpush.bf16.msra.mxu0 %v1101
      %1671 = vmatpush.bf16.msra.mxu0 %v1069
      %1672 = vmatpush.bf16.msra.mxu0 %v1037
      %1673 = vmatpush.bf16.msra.mxu0 %v1005
      %1674 = vmatmul.bf16.gmra.mxu0 %v1411
      %v1675 = vpop.f32.mrf.mxu0
      %v1676 = vadd.f32 0.0, %v1675
      %v1677 = vpop.f32.mrf.mxu0
      %1678 = vdwg.mxu0
      %1679 = vmatpush.bf16.msra.mxu0 0
      %1680 = vmatpush.bf16.msra.mxu0 %v1454
      %1681 = vmatpush.bf16.msra.mxu0 %v1166
      %1682 = vmatpush.bf16.msra.mxu0 %v1134
      %1683 = vmatpush.bf16.msra.mxu0 %v1102
      %1684 = vmatpush.bf16.msra.mxu0 %v1070
      %1685 = vmatpush.bf16.msra.mxu0 %v1038
      %1686 = vmatpush.bf16.msra.mxu0 %v1006
      %1687 = vmatmul.bf16.gmra.mxu0 %v1411
      %v1688 = vpop.f32.mrf.mxu0
      %v1689 = vadd.f32 0.0, %v1688
      %v1690 = vpop.f32.mrf.mxu0
      %1691 = vdwg.mxu0
      %1692 = vmatpush.bf16.msra.mxu0 0
      %1693 = vmatpush.bf16.msra.mxu0 %v1457
      %1694 = vmatpush.bf16.msra.mxu0 %v1167
      %1695 = vmatpush.bf16.msra.mxu0 %v1135
      %1696 = vmatpush.bf16.msra.mxu0 %v1103
      %1697 = vmatpush.bf16.msra.mxu0 %v1071
      %1698 = vmatpush.bf16.msra.mxu0 %v1039
      %1699 = vmatpush.bf16.msra.mxu0 %v1007
      %1700 = vmatmul.bf16.gmra.mxu0 %v1411
      %v1701 = vpop.f32.mrf.mxu0
      %v1702 = vadd.f32 0.0, %v1701
      %v1703 = vpop.f32.mrf.mxu0
      %1704 = vdwg.mxu0
      %1705 = vmatpush.bf16.msra.mxu0 0
      %1706 = vmatpush.bf16.msra.mxu0 %v1460
      %1707 = vmatpush.bf16.msra.mxu0 %v1168
      %1708 = vmatpush.bf16.msra.mxu0 %v1136
      %1709 = vmatpush.bf16.msra.mxu0 %v1104
      %1710 = vmatpush.bf16.msra.mxu0 %v1072
      %1711 = vmatpush.bf16.msra.mxu0 %v1040
      %1712 = vmatpush.bf16.msra.mxu0 %v1008
      %1713 = vmatmul.bf16.gmra.mxu0 %v1411
      %v1714 = vpop.f32.mrf.mxu0
      %v1715 = vadd.f32 0.0, %v1714
      %v1716 = vpop.f32.mrf.mxu0
      %1717 = vdwg.mxu0
      %1718 = vmatpush.bf16.msra.mxu0 0
      %1719 = vmatpush.bf16.msra.mxu0 %v1463
      %1720 = vmatpush.bf16.msra.mxu0 %v1169
      %1721 = vmatpush.bf16.msra.mxu0 %v1137
      %1722 = vmatpush.bf16.msra.mxu0 %v1105
      %1723 = vmatpush.bf16.msra.mxu0 %v1073
      %1724 = vmatpush.bf16.msra.mxu0 %v1041
      %1725 = vmatpush.bf16.msra.mxu0 %v1009
      %1726 = vmatmul.bf16.gmra.mxu0 %v1411
      %v1727 = vpop.f32.mrf.mxu0
      %v1728 = vadd.f32 0.0, %v1727
      %v1729 = vpop.f32.mrf.mxu0
      %1730 = vdwg.mxu0
      %1731 = vmatpush.bf16.msra.mxu0 0
      %1732 = vmatpush.bf16.msra.mxu0 %v1466
      %1733 = vmatpush.bf16.msra.mxu0 %v1170
      %1734 = vmatpush.bf16.msra.mxu0 %v1138
      %1735 = vmatpush.bf16.msra.mxu0 %v1106
      %1736 = vmatpush.bf16.msra.mxu0 %v1074
      %1737 = vmatpush.bf16.msra.mxu0 %v1042
      %1738 = vmatpush.bf16.msra.mxu0 %v1010
      %1739 = vmatmul.bf16.gmra.mxu0 %v1411
      %v1740 = vpop.f32.mrf.mxu0
      %v1741 = vadd.f32 0.0, %v1740
      %v1742 = vpop.f32.mrf.mxu0
      %1743 = vdwg.mxu0
      %1744 = vmatpush.bf16.msra.mxu0 0
      %1745 = vmatpush.bf16.msra.mxu0 %v1469
      %1746 = vmatpush.bf16.msra.mxu0 %v1171
      %1747 = vmatpush.bf16.msra.mxu0 %v1139
      %1748 = vmatpush.bf16.msra.mxu0 %v1107
      %1749 = vmatpush.bf16.msra.mxu0 %v1075
      %1750 = vmatpush.bf16.msra.mxu0 %v1043
      %1751 = vmatpush.bf16.msra.mxu0 %v1011
      %1752 = vmatmul.bf16.gmra.mxu0 %v1411
      %v1753 = vpop.f32.mrf.mxu0
      %v1754 = vadd.f32 0.0, %v1753
      %v1755 = vpop.f32.mrf.mxu0
      %1756 = vdwg.mxu0
      %1757 = vmatpush.bf16.msra.mxu0 0
      %1758 = vmatpush.bf16.msra.mxu0 %v1472
      %1759 = vmatpush.bf16.msra.mxu0 %v1172
      %1760 = vmatpush.bf16.msra.mxu0 %v1140
      %1761 = vmatpush.bf16.msra.mxu0 %v1108
      %1762 = vmatpush.bf16.msra.mxu0 %v1076
      %1763 = vmatpush.bf16.msra.mxu0 %v1044
      %1764 = vmatpush.bf16.msra.mxu0 %v1012
      %1765 = vmatmul.bf16.gmra.mxu0 %v1411
      %v1766 = vpop.f32.mrf.mxu0
      %v1767 = vadd.f32 0.0, %v1766
      %v1768 = vpop.f32.mrf.mxu0
      %1769 = vdwg.mxu0
      %1770 = vmatpush.bf16.msra.mxu0 0
      %1771 = vmatpush.bf16.msra.mxu0 %v1475
      %1772 = vmatpush.bf16.msra.mxu0 %v1173
      %1773 = vmatpush.bf16.msra.mxu0 %v1141
      %1774 = vmatpush.bf16.msra.mxu0 %v1109
      %1775 = vmatpush.bf16.msra.mxu0 %v1077
      %1776 = vmatpush.bf16.msra.mxu0 %v1045
      %1777 = vmatpush.bf16.msra.mxu0 %v1013
      %1778 = vmatmul.bf16.gmra.mxu0 %v1411
      %v1779 = vpop.f32.mrf.mxu0
      %v1780 = vadd.f32 0.0, %v1779
      %v1781 = vpop.f32.mrf.mxu0
      %1782 = vdwg.mxu0
      %1783 = vmatpush.bf16.msra.mxu0 0
      %1784 = vmatpush.bf16.msra.mxu0 %v1478
      %1785 = vmatpush.bf16.msra.mxu0 %v1174
      %1786 = vmatpush.bf16.msra.mxu0 %v1142
      %1787 = vmatpush.bf16.msra.mxu0 %v1110
      %1788 = vmatpush.bf16.msra.mxu0 %v1078
      %1789 = vmatpush.bf16.msra.mxu0 %v1046
      %1790 = vmatpush.bf16.msra.mxu0 %v1014
      %1791 = vmatmul.bf16.gmra.mxu0 %v1411
      %v1792 = vpop.f32.mrf.mxu0
      %v1793 = vadd.f32 0.0, %v1792
      %v1794 = vpop.f32.mrf.mxu0
      %1795 = vdwg.mxu0
      %1796 = vmatpush.bf16.msra.mxu0 0
      %1797 = vmatpush.bf16.msra.mxu0 %v1481
      %1798 = vmatpush.bf16.msra.mxu0 %v1175
      %1799 = vmatpush.bf16.msra.mxu0 %v1143
      %1800 = vmatpush.bf16.msra.mxu0 %v1111
      %1801 = vmatpush.bf16.msra.mxu0 %v1079
      %1802 = vmatpush.bf16.msra.mxu0 %v1047
      %1803 = vmatpush.bf16.msra.mxu0 %v1015
      %1804 = vmatmul.bf16.gmra.mxu0 %v1411
      %v1805 = vpop.f32.mrf.mxu0
      %v1806 = vadd.f32 0.0, %v1805
      %v1807 = vpop.f32.mrf.mxu0
      %1808 = vdwg.mxu0
      %1809 = vmatpush.bf16.msra.mxu0 0
      %1810 = vmatpush.bf16.msra.mxu0 %v1484
      %1811 = vmatpush.bf16.msra.mxu0 %v1176
      %1812 = vmatpush.bf16.msra.mxu0 %v1144
      %1813 = vmatpush.bf16.msra.mxu0 %v1112
      %1814 = vmatpush.bf16.msra.mxu0 %v1080
      %1815 = vmatpush.bf16.msra.mxu0 %v1048
      %1816 = vmatpush.bf16.msra.mxu0 %v1016
      %1817 = vmatmul.bf16.gmra.mxu0 %v1411
      %v1818 = vpop.f32.mrf.mxu0
      %v1819 = vadd.f32 0.0, %v1818
      %v1820 = vpop.f32.mrf.mxu0
      %1821 = vdwg.mxu0
      %1822 = vmatpush.bf16.msra.mxu0 0
      %1823 = vmatpush.bf16.msra.mxu0 %v1487
      %1824 = vmatpush.bf16.msra.mxu0 %v1177
      %1825 = vmatpush.bf16.msra.mxu0 %v1145
      %1826 = vmatpush.bf16.msra.mxu0 %v1113
      %1827 = vmatpush.bf16.msra.mxu0 %v1081
      %1828 = vmatpush.bf16.msra.mxu0 %v1049
      %1829 = vmatpush.bf16.msra.mxu0 %v1017
      %1830 = vmatmul.bf16.gmra.mxu0 %v1411
      %v1831 = vpop.f32.mrf.mxu0
      %v1832 = vadd.f32 0.0, %v1831
      %v1833 = vpop.f32.mrf.mxu0
      %1834 = vdwg.mxu0
      %1835 = vmatpush.bf16.msra.mxu0 0
      %1836 = vmatpush.bf16.msra.mxu0 %v1490
      %1837 = vmatpush.bf16.msra.mxu0 %v1178
      %1838 = vmatpush.bf16.msra.mxu0 %v1146
      %1839 = vmatpush.bf16.msra.mxu0 %v1114
      %1840 = vmatpush.bf16.msra.mxu0 %v1082
      %1841 = vmatpush.bf16.msra.mxu0 %v1050
      %1842 = vmatpush.bf16.msra.mxu0 %v1018
      %1843 = vmatmul.bf16.gmra.mxu0 %v1411
      %v1844 = vpop.f32.mrf.mxu0
      %v1845 = vadd.f32 0.0, %v1844
      %v1846 = vpop.f32.mrf.mxu0
      %1847 = vdwg.mxu0
      %1848 = vmatpush.bf16.msra.mxu0 0
      %1849 = vmatpush.bf16.msra.mxu0 %v1493
      %1850 = vmatpush.bf16.msra.mxu0 %v1179
      %1851 = vmatpush.bf16.msra.mxu0 %v1147
      %1852 = vmatpush.bf16.msra.mxu0 %v1115
      %1853 = vmatpush.bf16.msra.mxu0 %v1083
      %1854 = vmatpush.bf16.msra.mxu0 %v1051
      %1855 = vmatpush.bf16.msra.mxu0 %v1019
      %1856 = vmatmul.bf16.gmra.mxu0 %v1411
      %v1857 = vpop.f32.mrf.mxu0
      %v1858 = vadd.f32 0.0, %v1857
      %v1859 = vpop.f32.mrf.mxu0
      %1860 = vdwg.mxu0
      %1861 = vmatpush.bf16.msra.mxu0 0
      %1862 = vmatpush.bf16.msra.mxu0 %v1496
      %1863 = vmatpush.bf16.msra.mxu0 %v1180
      %1864 = vmatpush.bf16.msra.mxu0 %v1148
      %1865 = vmatpush.bf16.msra.mxu0 %v1116
      %1866 = vmatpush.bf16.msra.mxu0 %v1084
      %1867 = vmatpush.bf16.msra.mxu0 %v1052
      %1868 = vmatpush.bf16.msra.mxu0 %v1020
      %1869 = vmatmul.bf16.gmra.mxu0 %v1411
      %v1870 = vpop.f32.mrf.mxu0
      %v1871 = vadd.f32 0.0, %v1870
      %v1872 = vpop.f32.mrf.mxu0
      %1873 = vdwg.mxu0
      %1874 = vmatpush.bf16.msra.mxu0 0
      %1875 = vmatpush.bf16.msra.mxu0 %v1499
      %1876 = vmatpush.bf16.msra.mxu0 %v1181
      %1877 = vmatpush.bf16.msra.mxu0 %v1149
      %1878 = vmatpush.bf16.msra.mxu0 %v1117
      %1879 = vmatpush.bf16.msra.mxu0 %v1085
      %1880 = vmatpush.bf16.msra.mxu0 %v1053
      %1881 = vmatpush.bf16.msra.mxu0 %v1021
      %1882 = vmatmul.bf16.gmra.mxu0 %v1411
      %v1883 = vpop.f32.mrf.mxu0
      %v1884 = vadd.f32 0.0, %v1883
      %v1885 = vpop.f32.mrf.mxu0
      %1886 = vdwg.mxu0
      %1887 = vmatpush.bf16.msra.mxu0 0
      %1888 = vmatpush.bf16.msra.mxu0 %v1502
      %1889 = vmatpush.bf16.msra.mxu0 %v1182
      %1890 = vmatpush.bf16.msra.mxu0 %v1150
      %1891 = vmatpush.bf16.msra.mxu0 %v1118
      %1892 = vmatpush.bf16.msra.mxu0 %v1086
      %1893 = vmatpush.bf16.msra.mxu0 %v1054
      %1894 = vmatpush.bf16.msra.mxu0 %v1022
      %1895 = vmatmul.bf16.gmra.mxu0 %v1411
      %v1896 = vpop.f32.mrf.mxu0
      %v1897 = vadd.f32 0.0, %v1896
      %v1898 = vpop.f32.mrf.mxu0
      %1899 = vdwg.mxu0
      %1900 = vmatpush.bf16.msra.mxu0 0
      %1901 = vmatpush.bf16.msra.mxu0 %v1505
      %1902 = vmatpush.bf16.msra.mxu0 %v1183
      %1903 = vmatpush.bf16.msra.mxu0 %v1151
      %1904 = vmatpush.bf16.msra.mxu0 %v1119
      %1905 = vmatpush.bf16.msra.mxu0 %v1087
      %1906 = vmatpush.bf16.msra.mxu0 %v1055
      %1907 = vmatpush.bf16.msra.mxu0 %v1023
      %1908 = vmatmul.bf16.gmra.mxu0 %v1411
      %v1909 = vpop.f32.mrf.mxu0
      %v1910 = vadd.f32 0.0, %v1909
      %v1911 = vpop.f32.mrf.mxu0
      %1912 = vdwg.mxu0
      %1913 = vmatpush.bf16.msra.mxu0 0
      %1914 = vmatpush.bf16.msra.mxu0 %v1508
      %1915 = vmatpush.bf16.msra.mxu0 %v1184
      %1916 = vmatpush.bf16.msra.mxu0 %v1152
      %1917 = vmatpush.bf16.msra.mxu0 %v1120
      %1918 = vmatpush.bf16.msra.mxu0 %v1088
      %1919 = vmatpush.bf16.msra.mxu0 %v1056
      %1920 = vmatpush.bf16.msra.mxu0 %v1024
      %1921 = vmatmul.bf16.gmra.mxu0 %v1411
      %v1922 = vpop.f32.mrf.mxu0
      %v1923 = vadd.f32 0.0, %v1922
      %v1924 = vpop.f32.mrf.mxu0
      %1925 = vdwg.mxu0
      %v1939 = vunpack.c.l.b16 %v146
      %v1940 = vunpack.c.h.b16 %v146
      %v1941 = vunpack.c.l.b16 %v162
      %v1942 = vunpack.c.h.b16 %v162
      %v1943 = vunpack.c.l.b16 %v178
      %v1944 = vunpack.c.h.b16 %v178
      %v1945 = vunpack.c.l.b16 %v194
      %v1946 = vunpack.c.h.b16 %v194
      %v1947 = vunpack.c.l.b16 %v210
      %v1948 = vunpack.c.h.b16 %v210
      %v1949 = vunpack.c.l.b16 %v226
      %v1950 = vunpack.c.h.b16 %v226
      %v1951 = vunpack.c.l.b16 %v242
      %v1952 = vunpack.c.h.b16 %v242
      %v1953 = vunpack.c.l.b16 %v258
      %v1954 = vunpack.c.h.b16 %v258
      %v1955 = vunpack.c.l.b16 %v274
      %v1956 = vunpack.c.h.b16 %v274
      %v1957 = vunpack.c.l.b16 %v290
      %v1958 = vunpack.c.h.b16 %v290
      %v1959 = vunpack.c.l.b16 %v306
      %v1960 = vunpack.c.h.b16 %v306
      %v1961 = vunpack.c.l.b16 %v322
      %v1962 = vunpack.c.h.b16 %v322
      %v1963 = vunpack.c.l.b16 %v338
      %v1964 = vunpack.c.h.b16 %v338
      %v1965 = vpack.c.b16 %v1941, %v1939
      %v1966 = vpack.c.b16 %v1942, %v1940
      %v1967 = vpack.c.b16 %v1945, %v1943
      %v1968 = vpack.c.b16 %v1946, %v1944
      %v1969 = vpack.c.b16 %v1949, %v1947
      %v1970 = vpack.c.b16 %v1950, %v1948
      %v1971 = vpack.c.b16 %v1953, %v1951
      %v1972 = vpack.c.b16 %v1954, %v1952
      %v1973 = vpack.c.b16 %v1957, %v1955
      %v1974 = vpack.c.b16 %v1958, %v1956
      %v1975 = vpack.c.b16 %v1961, %v1959
      %v1976 = vpack.c.b16 %v1962, %v1960
      %v1977 = vpack.c.b16 %v1963, %v1963
      %v1978 = vpack.c.b16 %v1964, %v1964
      %v1992 = vsel %vm1409, %v145, 0
      %v1995 = vsel %vm1413, %v1977, 0
      %v1998 = vsel %vm1413, %v1978, 0
      %2000 = vmatpush.bf16.msra.mxu0 0
      %2001 = vmatpush.bf16.msra.mxu0 %v1995
      %2002 = vmatpush.bf16.msra.mxu0 %v1975
      %2003 = vmatpush.bf16.msra.mxu0 %v1973
      %2004 = vmatpush.bf16.msra.mxu0 %v1971
      %2005 = vmatpush.bf16.msra.mxu0 %v1969
      %2006 = vmatpush.bf16.msra.mxu0 %v1967
      %2007 = vmatpush.bf16.msra.mxu0 %v1965
      %2008 = vmatmul.bf16.gmra.mxu0 %v1992
      %v2009 = vpop.f32.mrf.mxu0
      %v2010 = vadd.f32 %v1520, %v2009
      %v2011 = vpop.f32.mrf.mxu0
      %2012 = vdwg.mxu0
      %2013 = vmatpush.bf16.msra.mxu0 0
      %2014 = vmatpush.bf16.msra.mxu0 %v1998
      %2015 = vmatpush.bf16.msra.mxu0 %v1976
      %2016 = vmatpush.bf16.msra.mxu0 %v1974
      %2017 = vmatpush.bf16.msra.mxu0 %v1972
      %2018 = vmatpush.bf16.msra.mxu0 %v1970
      %2019 = vmatpush.bf16.msra.mxu0 %v1968
      %2020 = vmatpush.bf16.msra.mxu0 %v1966
      %2021 = vmatmul.bf16.gmra.mxu0 %v1992
      %v2022 = vpop.f32.mrf.mxu0
      %v2023 = vadd.f32 %v1533, %v2022
      %v2024 = vpop.f32.mrf.mxu0
      %2025 = vdwg.mxu0
      %2026 = vmatpush.bf16.msra.mxu0 0
      %2027 = vmatpush.bf16.msra.mxu0 %v1415
      %2028 = vmatpush.bf16.msra.mxu0 %v1153
      %2029 = vmatpush.bf16.msra.mxu0 %v1121
      %2030 = vmatpush.bf16.msra.mxu0 %v1089
      %2031 = vmatpush.bf16.msra.mxu0 %v1057
      %2032 = vmatpush.bf16.msra.mxu0 %v1025
      %2033 = vmatpush.bf16.msra.mxu0 %v993
      %2034 = vmatmul.bf16.gmra.mxu0 %v1992
      %v2035 = vpop.f32.mrf.mxu0
      %v2036 = vadd.f32 %v1546, %v2035
      %v2037 = vpop.f32.mrf.mxu0
      %2038 = vdwg.mxu0
      %2039 = vmatpush.bf16.msra.mxu0 0
      %2040 = vmatpush.bf16.msra.mxu0 %v1418
      %2041 = vmatpush.bf16.msra.mxu0 %v1154
      %2042 = vmatpush.bf16.msra.mxu0 %v1122
      %2043 = vmatpush.bf16.msra.mxu0 %v1090
      %2044 = vmatpush.bf16.msra.mxu0 %v1058
      %2045 = vmatpush.bf16.msra.mxu0 %v1026
      %2046 = vmatpush.bf16.msra.mxu0 %v994
      %2047 = vmatmul.bf16.gmra.mxu0 %v1992
      %v2048 = vpop.f32.mrf.mxu0
      %v2049 = vadd.f32 %v1559, %v2048
      %v2050 = vpop.f32.mrf.mxu0
      %2051 = vdwg.mxu0
      %2052 = vmatpush.bf16.msra.mxu0 0
      %2053 = vmatpush.bf16.msra.mxu0 %v1421
      %2054 = vmatpush.bf16.msra.mxu0 %v1155
      %2055 = vmatpush.bf16.msra.mxu0 %v1123
      %2056 = vmatpush.bf16.msra.mxu0 %v1091
      %2057 = vmatpush.bf16.msra.mxu0 %v1059
      %2058 = vmatpush.bf16.msra.mxu0 %v1027
      %2059 = vmatpush.bf16.msra.mxu0 %v995
      %2060 = vmatmul.bf16.gmra.mxu0 %v1992
      %v2061 = vpop.f32.mrf.mxu0
      %v2062 = vadd.f32 %v1572, %v2061
      %v2063 = vpop.f32.mrf.mxu0
      %2064 = vdwg.mxu0
      %2065 = vmatpush.bf16.msra.mxu0 0
      %2066 = vmatpush.bf16.msra.mxu0 %v1424
      %2067 = vmatpush.bf16.msra.mxu0 %v1156
      %2068 = vmatpush.bf16.msra.mxu0 %v1124
      %2069 = vmatpush.bf16.msra.mxu0 %v1092
      %2070 = vmatpush.bf16.msra.mxu0 %v1060
      %2071 = vmatpush.bf16.msra.mxu0 %v1028
      %2072 = vmatpush.bf16.msra.mxu0 %v996
      %2073 = vmatmul.bf16.gmra.mxu0 %v1992
      %v2074 = vpop.f32.mrf.mxu0
      %v2075 = vadd.f32 %v1585, %v2074
      %v2076 = vpop.f32.mrf.mxu0
      %2077 = vdwg.mxu0
      %2078 = vmatpush.bf16.msra.mxu0 0
      %2079 = vmatpush.bf16.msra.mxu0 %v1427
      %2080 = vmatpush.bf16.msra.mxu0 %v1157
      %2081 = vmatpush.bf16.msra.mxu0 %v1125
      %2082 = vmatpush.bf16.msra.mxu0 %v1093
      %2083 = vmatpush.bf16.msra.mxu0 %v1061
      %2084 = vmatpush.bf16.msra.mxu0 %v1029
      %2085 = vmatpush.bf16.msra.mxu0 %v997
      %2086 = vmatmul.bf16.gmra.mxu0 %v1992
      %v2087 = vpop.f32.mrf.mxu0
      %v2088 = vadd.f32 %v1598, %v2087
      %v2089 = vpop.f32.mrf.mxu0
      %2090 = vdwg.mxu0
      %2091 = vmatpush.bf16.msra.mxu0 0
      %2092 = vmatpush.bf16.msra.mxu0 %v1430
      %2093 = vmatpush.bf16.msra.mxu0 %v1158
      %2094 = vmatpush.bf16.msra.mxu0 %v1126
      %2095 = vmatpush.bf16.msra.mxu0 %v1094
      %2096 = vmatpush.bf16.msra.mxu0 %v1062
      %2097 = vmatpush.bf16.msra.mxu0 %v1030
      %2098 = vmatpush.bf16.msra.mxu0 %v998
      %2099 = vmatmul.bf16.gmra.mxu0 %v1992
      %v2100 = vpop.f32.mrf.mxu0
      %v2101 = vadd.f32 %v1611, %v2100
      %v2102 = vpop.f32.mrf.mxu0
      %2103 = vdwg.mxu0
      %2104 = vmatpush.bf16.msra.mxu0 0
      %2105 = vmatpush.bf16.msra.mxu0 %v1433
      %2106 = vmatpush.bf16.msra.mxu0 %v1159
      %2107 = vmatpush.bf16.msra.mxu0 %v1127
      %2108 = vmatpush.bf16.msra.mxu0 %v1095
      %2109 = vmatpush.bf16.msra.mxu0 %v1063
      %2110 = vmatpush.bf16.msra.mxu0 %v1031
      %2111 = vmatpush.bf16.msra.mxu0 %v999
      %2112 = vmatmul.bf16.gmra.mxu0 %v1992
      %v2113 = vpop.f32.mrf.mxu0
      %v2114 = vadd.f32 %v1624, %v2113
      %v2115 = vpop.f32.mrf.mxu0
      %2116 = vdwg.mxu0
      %2117 = vmatpush.bf16.msra.mxu0 0
      %2118 = vmatpush.bf16.msra.mxu0 %v1436
      %2119 = vmatpush.bf16.msra.mxu0 %v1160
      %2120 = vmatpush.bf16.msra.mxu0 %v1128
      %2121 = vmatpush.bf16.msra.mxu0 %v1096
      %2122 = vmatpush.bf16.msra.mxu0 %v1064
      %2123 = vmatpush.bf16.msra.mxu0 %v1032
      %2124 = vmatpush.bf16.msra.mxu0 %v1000
      %2125 = vmatmul.bf16.gmra.mxu0 %v1992
      %v2126 = vpop.f32.mrf.mxu0
      %v2127 = vadd.f32 %v1637, %v2126
      %v2128 = vpop.f32.mrf.mxu0
      %2129 = vdwg.mxu0
      %2130 = vmatpush.bf16.msra.mxu0 0
      %2131 = vmatpush.bf16.msra.mxu0 %v1439
      %2132 = vmatpush.bf16.msra.mxu0 %v1161
      %2133 = vmatpush.bf16.msra.mxu0 %v1129
      %2134 = vmatpush.bf16.msra.mxu0 %v1097
      %2135 = vmatpush.bf16.msra.mxu0 %v1065
      %2136 = vmatpush.bf16.msra.mxu0 %v1033
      %2137 = vmatpush.bf16.msra.mxu0 %v1001
      %2138 = vmatmul.bf16.gmra.mxu0 %v1992
      %v2139 = vpop.f32.mrf.mxu0
      %v2140 = vadd.f32 %v1650, %v2139
      %v2141 = vpop.f32.mrf.mxu0
      %2142 = vdwg.mxu0
      %2143 = vmatpush.bf16.msra.mxu0 0
      %2144 = vmatpush.bf16.msra.mxu0 %v1442
      %2145 = vmatpush.bf16.msra.mxu0 %v1162
      %2146 = vmatpush.bf16.msra.mxu0 %v1130
      %2147 = vmatpush.bf16.msra.mxu0 %v1098
      %2148 = vmatpush.bf16.msra.mxu0 %v1066
      %2149 = vmatpush.bf16.msra.mxu0 %v1034
      %2150 = vmatpush.bf16.msra.mxu0 %v1002
      %2151 = vmatmul.bf16.gmra.mxu0 %v1992
      %v2152 = vpop.f32.mrf.mxu0
      %v2153 = vadd.f32 %v1663, %v2152
      %v2154 = vpop.f32.mrf.mxu0
      %2155 = vdwg.mxu0
      %2156 = vmatpush.bf16.msra.mxu0 0
      %2157 = vmatpush.bf16.msra.mxu0 %v1445
      %2158 = vmatpush.bf16.msra.mxu0 %v1163
      %2159 = vmatpush.bf16.msra.mxu0 %v1131
      %2160 = vmatpush.bf16.msra.mxu0 %v1099
      %2161 = vmatpush.bf16.msra.mxu0 %v1067
      %2162 = vmatpush.bf16.msra.mxu0 %v1035
      %2163 = vmatpush.bf16.msra.mxu0 %v1003
      %2164 = vmatmul.bf16.gmra.mxu0 %v1992
      %v2165 = vpop.f32.mrf.mxu0
      %v2166 = vadd.f32 %v1676, %v2165
      %v2167 = vpop.f32.mrf.mxu0
      %2168 = vdwg.mxu0
      %2169 = vmatpush.bf16.msra.mxu0 0
      %2170 = vmatpush.bf16.msra.mxu0 %v1448
      %2171 = vmatpush.bf16.msra.mxu0 %v1164
      %2172 = vmatpush.bf16.msra.mxu0 %v1132
      %2173 = vmatpush.bf16.msra.mxu0 %v1100
      %2174 = vmatpush.bf16.msra.mxu0 %v1068
      %2175 = vmatpush.bf16.msra.mxu0 %v1036
      %2176 = vmatpush.bf16.msra.mxu0 %v1004
      %2177 = vmatmul.bf16.gmra.mxu0 %v1992
      %v2178 = vpop.f32.mrf.mxu0
      %v2179 = vadd.f32 %v1689, %v2178
      %v2180 = vpop.f32.mrf.mxu0
      %2181 = vdwg.mxu0
      %2182 = vmatpush.bf16.msra.mxu0 0
      %2183 = vmatpush.bf16.msra.mxu0 %v1451
      %2184 = vmatpush.bf16.msra.mxu0 %v1165
      %2185 = vmatpush.bf16.msra.mxu0 %v1133
      %2186 = vmatpush.bf16.msra.mxu0 %v1101
      %2187 = vmatpush.bf16.msra.mxu0 %v1069
      %2188 = vmatpush.bf16.msra.mxu0 %v1037
      %2189 = vmatpush.bf16.msra.mxu0 %v1005
      %2190 = vmatmul.bf16.gmra.mxu0 %v1992
      %v2191 = vpop.f32.mrf.mxu0
      %v2192 = vadd.f32 %v1702, %v2191
      %v2193 = vpop.f32.mrf.mxu0
      %2194 = vdwg.mxu0
      %2195 = vmatpush.bf16.msra.mxu0 0
      %2196 = vmatpush.bf16.msra.mxu0 %v1454
      %2197 = vmatpush.bf16.msra.mxu0 %v1166
      %2198 = vmatpush.bf16.msra.mxu0 %v1134
      %2199 = vmatpush.bf16.msra.mxu0 %v1102
      %2200 = vmatpush.bf16.msra.mxu0 %v1070
      %2201 = vmatpush.bf16.msra.mxu0 %v1038
      %2202 = vmatpush.bf16.msra.mxu0 %v1006
      %2203 = vmatmul.bf16.gmra.mxu0 %v1992
      %v2204 = vpop.f32.mrf.mxu0
      %v2205 = vadd.f32 %v1715, %v2204
      %v2206 = vpop.f32.mrf.mxu0
      %2207 = vdwg.mxu0
      %2208 = vmatpush.bf16.msra.mxu0 0
      %2209 = vmatpush.bf16.msra.mxu0 %v1457
      %2210 = vmatpush.bf16.msra.mxu0 %v1167
      %2211 = vmatpush.bf16.msra.mxu0 %v1135
      %2212 = vmatpush.bf16.msra.mxu0 %v1103
      %2213 = vmatpush.bf16.msra.mxu0 %v1071
      %2214 = vmatpush.bf16.msra.mxu0 %v1039
      %2215 = vmatpush.bf16.msra.mxu0 %v1007
      %2216 = vmatmul.bf16.gmra.mxu0 %v1992
      %v2217 = vpop.f32.mrf.mxu0
      %v2218 = vadd.f32 %v1728, %v2217
      %v2219 = vpop.f32.mrf.mxu0
      %2220 = vdwg.mxu0
      %2221 = vmatpush.bf16.msra.mxu0 0
      %2222 = vmatpush.bf16.msra.mxu0 %v1460
      %2223 = vmatpush.bf16.msra.mxu0 %v1168
      %2224 = vmatpush.bf16.msra.mxu0 %v1136
      %2225 = vmatpush.bf16.msra.mxu0 %v1104
      %2226 = vmatpush.bf16.msra.mxu0 %v1072
      %2227 = vmatpush.bf16.msra.mxu0 %v1040
      %2228 = vmatpush.bf16.msra.mxu0 %v1008
      %2229 = vmatmul.bf16.gmra.mxu0 %v1992
      %v2230 = vpop.f32.mrf.mxu0
      %v2231 = vadd.f32 %v1741, %v2230
      %v2232 = vpop.f32.mrf.mxu0
      %2233 = vdwg.mxu0
      %2234 = vmatpush.bf16.msra.mxu0 0
      %2235 = vmatpush.bf16.msra.mxu0 %v1463
      %2236 = vmatpush.bf16.msra.mxu0 %v1169
      %2237 = vmatpush.bf16.msra.mxu0 %v1137
      %2238 = vmatpush.bf16.msra.mxu0 %v1105
      %2239 = vmatpush.bf16.msra.mxu0 %v1073
      %2240 = vmatpush.bf16.msra.mxu0 %v1041
      %2241 = vmatpush.bf16.msra.mxu0 %v1009
      %2242 = vmatmul.bf16.gmra.mxu0 %v1992
      %v2243 = vpop.f32.mrf.mxu0
      %v2244 = vadd.f32 %v1754, %v2243
      %v2245 = vpop.f32.mrf.mxu0
      %2246 = vdwg.mxu0
      %2247 = vmatpush.bf16.msra.mxu0 0
      %2248 = vmatpush.bf16.msra.mxu0 %v1466
      %2249 = vmatpush.bf16.msra.mxu0 %v1170
      %2250 = vmatpush.bf16.msra.mxu0 %v1138
      %2251 = vmatpush.bf16.msra.mxu0 %v1106
      %2252 = vmatpush.bf16.msra.mxu0 %v1074
      %2253 = vmatpush.bf16.msra.mxu0 %v1042
      %2254 = vmatpush.bf16.msra.mxu0 %v1010
      %2255 = vmatmul.bf16.gmra.mxu0 %v1992
      %v2256 = vpop.f32.mrf.mxu0
      %v2257 = vadd.f32 %v1767, %v2256
      %v2258 = vpop.f32.mrf.mxu0
      %2259 = vdwg.mxu0
      %2260 = vmatpush.bf16.msra.mxu0 0
      %2261 = vmatpush.bf16.msra.mxu0 %v1469
      %2262 = vmatpush.bf16.msra.mxu0 %v1171
      %2263 = vmatpush.bf16.msra.mxu0 %v1139
      %2264 = vmatpush.bf16.msra.mxu0 %v1107
      %2265 = vmatpush.bf16.msra.mxu0 %v1075
      %2266 = vmatpush.bf16.msra.mxu0 %v1043
      %2267 = vmatpush.bf16.msra.mxu0 %v1011
      %2268 = vmatmul.bf16.gmra.mxu0 %v1992
      %v2269 = vpop.f32.mrf.mxu0
      %v2270 = vadd.f32 %v1780, %v2269
      %v2271 = vpop.f32.mrf.mxu0
      %2272 = vdwg.mxu0
      %2273 = vmatpush.bf16.msra.mxu0 0
      %2274 = vmatpush.bf16.msra.mxu0 %v1472
      %2275 = vmatpush.bf16.msra.mxu0 %v1172
      %2276 = vmatpush.bf16.msra.mxu0 %v1140
      %2277 = vmatpush.bf16.msra.mxu0 %v1108
      %2278 = vmatpush.bf16.msra.mxu0 %v1076
      %2279 = vmatpush.bf16.msra.mxu0 %v1044
      %2280 = vmatpush.bf16.msra.mxu0 %v1012
      %2281 = vmatmul.bf16.gmra.mxu0 %v1992
      %v2282 = vpop.f32.mrf.mxu0
      %v2283 = vadd.f32 %v1793, %v2282
      %v2284 = vpop.f32.mrf.mxu0
      %2285 = vdwg.mxu0
      %2286 = vmatpush.bf16.msra.mxu0 0
      %2287 = vmatpush.bf16.msra.mxu0 %v1475
      %2288 = vmatpush.bf16.msra.mxu0 %v1173
      %2289 = vmatpush.bf16.msra.mxu0 %v1141
      %2290 = vmatpush.bf16.msra.mxu0 %v1109
      %2291 = vmatpush.bf16.msra.mxu0 %v1077
      %2292 = vmatpush.bf16.msra.mxu0 %v1045
      %2293 = vmatpush.bf16.msra.mxu0 %v1013
      %2294 = vmatmul.bf16.gmra.mxu0 %v1992
      %v2295 = vpop.f32.mrf.mxu0
      %v2296 = vadd.f32 %v1806, %v2295
      %v2297 = vpop.f32.mrf.mxu0
      %2298 = vdwg.mxu0
      %2299 = vmatpush.bf16.msra.mxu0 0
      %2300 = vmatpush.bf16.msra.mxu0 %v1478
      %2301 = vmatpush.bf16.msra.mxu0 %v1174
      %2302 = vmatpush.bf16.msra.mxu0 %v1142
      %2303 = vmatpush.bf16.msra.mxu0 %v1110
      %2304 = vmatpush.bf16.msra.mxu0 %v1078
      %2305 = vmatpush.bf16.msra.mxu0 %v1046
      %2306 = vmatpush.bf16.msra.mxu0 %v1014
      %2307 = vmatmul.bf16.gmra.mxu0 %v1992
      %v2308 = vpop.f32.mrf.mxu0
      %v2309 = vadd.f32 %v1819, %v2308
      %v2310 = vpop.f32.mrf.mxu0
      %2311 = vdwg.mxu0
      %2312 = vmatpush.bf16.msra.mxu0 0
      %2313 = vmatpush.bf16.msra.mxu0 %v1481
      %2314 = vmatpush.bf16.msra.mxu0 %v1175
      %2315 = vmatpush.bf16.msra.mxu0 %v1143
      %2316 = vmatpush.bf16.msra.mxu0 %v1111
      %2317 = vmatpush.bf16.msra.mxu0 %v1079
      %2318 = vmatpush.bf16.msra.mxu0 %v1047
      %2319 = vmatpush.bf16.msra.mxu0 %v1015
      %2320 = vmatmul.bf16.gmra.mxu0 %v1992
      %v2321 = vpop.f32.mrf.mxu0
      %v2322 = vadd.f32 %v1832, %v2321
      %v2323 = vpop.f32.mrf.mxu0
      %2324 = vdwg.mxu0
      %2325 = vmatpush.bf16.msra.mxu0 0
      %2326 = vmatpush.bf16.msra.mxu0 %v1484
      %2327 = vmatpush.bf16.msra.mxu0 %v1176
      %2328 = vmatpush.bf16.msra.mxu0 %v1144
      %2329 = vmatpush.bf16.msra.mxu0 %v1112
      %2330 = vmatpush.bf16.msra.mxu0 %v1080
      %2331 = vmatpush.bf16.msra.mxu0 %v1048
      %2332 = vmatpush.bf16.msra.mxu0 %v1016
      %2333 = vmatmul.bf16.gmra.mxu0 %v1992
      %v2334 = vpop.f32.mrf.mxu0
      %v2335 = vadd.f32 %v1845, %v2334
      %v2336 = vpop.f32.mrf.mxu0
      %2337 = vdwg.mxu0
      %2338 = vmatpush.bf16.msra.mxu0 0
      %2339 = vmatpush.bf16.msra.mxu0 %v1487
      %2340 = vmatpush.bf16.msra.mxu0 %v1177
      %2341 = vmatpush.bf16.msra.mxu0 %v1145
      %2342 = vmatpush.bf16.msra.mxu0 %v1113
      %2343 = vmatpush.bf16.msra.mxu0 %v1081
      %2344 = vmatpush.bf16.msra.mxu0 %v1049
      %2345 = vmatpush.bf16.msra.mxu0 %v1017
      %2346 = vmatmul.bf16.gmra.mxu0 %v1992
      %v2347 = vpop.f32.mrf.mxu0
      %v2348 = vadd.f32 %v1858, %v2347
      %v2349 = vpop.f32.mrf.mxu0
      %2350 = vdwg.mxu0
      %2351 = vmatpush.bf16.msra.mxu0 0
      %2352 = vmatpush.bf16.msra.mxu0 %v1490
      %2353 = vmatpush.bf16.msra.mxu0 %v1178
      %2354 = vmatpush.bf16.msra.mxu0 %v1146
      %2355 = vmatpush.bf16.msra.mxu0 %v1114
      %2356 = vmatpush.bf16.msra.mxu0 %v1082
      %2357 = vmatpush.bf16.msra.mxu0 %v1050
      %2358 = vmatpush.bf16.msra.mxu0 %v1018
      %2359 = vmatmul.bf16.gmra.mxu0 %v1992
      %v2360 = vpop.f32.mrf.mxu0
      %v2361 = vadd.f32 %v1871, %v2360
      %v2362 = vpop.f32.mrf.mxu0
      %2363 = vdwg.mxu0
      %2364 = vmatpush.bf16.msra.mxu0 0
      %2365 = vmatpush.bf16.msra.mxu0 %v1493
      %2366 = vmatpush.bf16.msra.mxu0 %v1179
      %2367 = vmatpush.bf16.msra.mxu0 %v1147
      %2368 = vmatpush.bf16.msra.mxu0 %v1115
      %2369 = vmatpush.bf16.msra.mxu0 %v1083
      %2370 = vmatpush.bf16.msra.mxu0 %v1051
      %2371 = vmatpush.bf16.msra.mxu0 %v1019
      %2372 = vmatmul.bf16.gmra.mxu0 %v1992
      %v2373 = vpop.f32.mrf.mxu0
      %v2374 = vadd.f32 %v1884, %v2373
      %v2375 = vpop.f32.mrf.mxu0
      %2376 = vdwg.mxu0
      %2377 = vmatpush.bf16.msra.mxu0 0
      %2378 = vmatpush.bf16.msra.mxu0 %v1496
      %2379 = vmatpush.bf16.msra.mxu0 %v1180
      %2380 = vmatpush.bf16.msra.mxu0 %v1148
      %2381 = vmatpush.bf16.msra.mxu0 %v1116
      %2382 = vmatpush.bf16.msra.mxu0 %v1084
      %2383 = vmatpush.bf16.msra.mxu0 %v1052
      %2384 = vmatpush.bf16.msra.mxu0 %v1020
      %2385 = vmatmul.bf16.gmra.mxu0 %v1992
      %v2386 = vpop.f32.mrf.mxu0
      %v2387 = vadd.f32 %v1897, %v2386
      %v2388 = vpop.f32.mrf.mxu0
      %2389 = vdwg.mxu0
      %2390 = vmatpush.bf16.msra.mxu0 0
      %2391 = vmatpush.bf16.msra.mxu0 %v1499
      %2392 = vmatpush.bf16.msra.mxu0 %v1181
      %2393 = vmatpush.bf16.msra.mxu0 %v1149
      %2394 = vmatpush.bf16.msra.mxu0 %v1117
      %2395 = vmatpush.bf16.msra.mxu0 %v1085
      %2396 = vmatpush.bf16.msra.mxu0 %v1053
      %2397 = vmatpush.bf16.msra.mxu0 %v1021
      %2398 = vmatmul.bf16.gmra.mxu0 %v1992
      %v2399 = vpop.f32.mrf.mxu0
      %v2400 = vadd.f32 %v1910, %v2399
      %v2401 = vpop.f32.mrf.mxu0
      %2402 = vdwg.mxu0
      %2403 = vmatpush.bf16.msra.mxu0 0
      %2404 = vmatpush.bf16.msra.mxu0 %v1502
      %2405 = vmatpush.bf16.msra.mxu0 %v1182
      %2406 = vmatpush.bf16.msra.mxu0 %v1150
      %2407 = vmatpush.bf16.msra.mxu0 %v1118
      %2408 = vmatpush.bf16.msra.mxu0 %v1086
      %2409 = vmatpush.bf16.msra.mxu0 %v1054
      %2410 = vmatpush.bf16.msra.mxu0 %v1022
      %2411 = vmatmul.bf16.gmra.mxu0 %v1992
      %v2412 = vpop.f32.mrf.mxu0
      %v2413 = vadd.f32 %v1923, %v2412
      %v2414 = vpop.f32.mrf.mxu0
      %2415 = vdwg.mxu0
      %s2416 = scalar_lea.vmem %s1, 8
      %v2417 = vld [vmem:[%s2416] sm:$0xf]
      %v2418 = vld [vmem:[%s138 + $0x10] sm:$0xff]
      %v2419 = vld [vmem:[%s138 + $0x18] sm:$0xff]
      %v2420 = vld [vmem:[%s138 + $0x20] sm:$0xff]
      %v2421 = vld [vmem:[%s138 + $0x28] sm:$0xff]
      %v2422 = vld [vmem:[%s138 + $0x30] sm:$0xff]
      %v2423 = vld [vmem:[%s138 + $0x38] sm:$0xff]
      %v2424 = vld [vmem:[%s138 + $0x40] sm:$0xff]
      %v2425 = vld [vmem:[%s138 + $0x48] sm:$0xff]
      %v2426 = vld [vmem:[%s138 + $0x50] sm:$0xff]
      %v2427 = vld [vmem:[%s138 + $0x58] sm:$0xff]
      %v2428 = vld [vmem:[%s138 + $0x60] sm:$0xff]
      %v2429 = vld [vmem:[%s138 + $0x68] sm:$0xff]
      %v2430 = vld [vmem:[%s138 + $0x70] sm:$0xff]
      %v2431 = vld [vmem:[%s138 + $0x78] sm:$0xff]
      %v2432 = vld [vmem:[%s138 + $0x80] sm:$0xff]
      %v2433 = vld [vmem:[%s138 + $0x88] sm:$0xff]
      %v2434 = vld [vmem:[%s138 + $0xb0] sm:$0xff]
      %v2435 = vld [vmem:[%s138 + $0xb8] sm:$0xff]
      %v2436 = vld [vmem:[%s138 + $0xc0] sm:$0xff]
      %v2437 = vld [vmem:[%s138 + $0xc8] sm:$0xff]
      %v2438 = vld [vmem:[%s138 + $0xd0] sm:$0xff]
      %v2439 = vld [vmem:[%s138 + $0xd8] sm:$0xff]
      %v2440 = vld [vmem:[%s138 + $0xe0] sm:$0xff]
      %v2441 = vld [vmem:[%s138 + $0xe8] sm:$0xff]
      %v2442 = vld [vmem:[%s138 + $0xf0] sm:$0xff]
      %v2443 = vld [vmem:[%s138 + $0xf8] sm:$0xff]
      %v2444 = vld [vmem:[%s138 + $0x100] sm:$0xff]
      %v2445 = vld [vmem:[%s138 + $0x108] sm:$0xff]
      %v2446 = vld [vmem:[%s138 + $0x110] sm:$0xff]
      %v2447 = vld [vmem:[%s138 + $0x118] sm:$0xff]
      %v2448 = vld [vmem:[%s138 + $0x120] sm:$0xff]
      %v2449 = vld [vmem:[%s138 + $0x128] sm:$0xff]
      %v2450 = vld [vmem:[%s138 + $0x150] sm:$0xff]
      %v2451 = vld [vmem:[%s138 + $0x158] sm:$0xff]
      %v2452 = vld [vmem:[%s138 + $0x160] sm:$0xff]
      %v2453 = vld [vmem:[%s138 + $0x168] sm:$0xff]
      %v2454 = vld [vmem:[%s138 + $0x170] sm:$0xff]
      %v2455 = vld [vmem:[%s138 + $0x178] sm:$0xff]
      %v2456 = vld [vmem:[%s138 + $0x180] sm:$0xff]
      %v2457 = vld [vmem:[%s138 + $0x188] sm:$0xff]
      %v2458 = vld [vmem:[%s138 + $0x190] sm:$0xff]
      %v2459 = vld [vmem:[%s138 + $0x198] sm:$0xff]
      %v2460 = vld [vmem:[%s138 + $0x1a0] sm:$0xff]
      %v2461 = vld [vmem:[%s138 + $0x1a8] sm:$0xff]
      %v2462 = vld [vmem:[%s138 + $0x1b0] sm:$0xff]
      %v2463 = vld [vmem:[%s138 + $0x1b8] sm:$0xff]
      %v2464 = vld [vmem:[%s138 + $0x1c0] sm:$0xff]
      %v2465 = vld [vmem:[%s138 + $0x1c8] sm:$0xff]
      %v2466 = vld [vmem:[%s138 + $0x1f0] sm:$0xff]
      %v2467 = vld [vmem:[%s138 + $0x1f8] sm:$0xff]
      %v2468 = vld [vmem:[%s138 + $0x200] sm:$0xff]
      %v2469 = vld [vmem:[%s138 + $0x208] sm:$0xff]
      %v2470 = vld [vmem:[%s138 + $0x210] sm:$0xff]
      %v2471 = vld [vmem:[%s138 + $0x218] sm:$0xff]
      %v2472 = vld [vmem:[%s138 + $0x220] sm:$0xff]
      %v2473 = vld [vmem:[%s138 + $0x228] sm:$0xff]
      %v2474 = vld [vmem:[%s138 + $0x230] sm:$0xff]
      %v2475 = vld [vmem:[%s138 + $0x238] sm:$0xff]
      %v2476 = vld [vmem:[%s138 + $0x240] sm:$0xff]
      %v2477 = vld [vmem:[%s138 + $0x248] sm:$0xff]
      %v2478 = vld [vmem:[%s138 + $0x250] sm:$0xff]
      %v2479 = vld [vmem:[%s138 + $0x258] sm:$0xff]
      %v2480 = vld [vmem:[%s138 + $0x260] sm:$0xff]
      %v2481 = vld [vmem:[%s138 + $0x268] sm:$0xff]
      %v2482 = vld [vmem:[%s138 + $0x290] sm:$0xff]
      %v2483 = vld [vmem:[%s138 + $0x298] sm:$0xff]
      %v2484 = vld [vmem:[%s138 + $0x2a0] sm:$0xff]
      %v2485 = vld [vmem:[%s138 + $0x2a8] sm:$0xff]
      %v2486 = vld [vmem:[%s138 + $0x2b0] sm:$0xff]
      %v2487 = vld [vmem:[%s138 + $0x2b8] sm:$0xff]
      %v2488 = vld [vmem:[%s138 + $0x2c0] sm:$0xff]
      %v2489 = vld [vmem:[%s138 + $0x2c8] sm:$0xff]
      %v2490 = vld [vmem:[%s138 + $0x2d0] sm:$0xff]
      %v2491 = vld [vmem:[%s138 + $0x2d8] sm:$0xff]
      %v2492 = vld [vmem:[%s138 + $0x2e0] sm:$0xff]
      %v2493 = vld [vmem:[%s138 + $0x2e8] sm:$0xff]
      %v2494 = vld [vmem:[%s138 + $0x2f0] sm:$0xff]
      %v2495 = vld [vmem:[%s138 + $0x2f8] sm:$0xff]
      %v2496 = vld [vmem:[%s138 + $0x300] sm:$0xff]
      %v2497 = vld [vmem:[%s138 + $0x308] sm:$0xff]
      %v2498 = vld [vmem:[%s138 + $0x330] sm:$0xff]
      %v2499 = vld [vmem:[%s138 + $0x338] sm:$0xff]
      %v2500 = vld [vmem:[%s138 + $0x340] sm:$0xff]
      %v2501 = vld [vmem:[%s138 + $0x348] sm:$0xff]
      %v2502 = vld [vmem:[%s138 + $0x350] sm:$0xff]
      %v2503 = vld [vmem:[%s138 + $0x358] sm:$0xff]
      %v2504 = vld [vmem:[%s138 + $0x360] sm:$0xff]
      %v2505 = vld [vmem:[%s138 + $0x368] sm:$0xff]
      %v2506 = vld [vmem:[%s138 + $0x370] sm:$0xff]
      %v2507 = vld [vmem:[%s138 + $0x378] sm:$0xff]
      %v2508 = vld [vmem:[%s138 + $0x380] sm:$0xff]
      %v2509 = vld [vmem:[%s138 + $0x388] sm:$0xff]
      %v2510 = vld [vmem:[%s138 + $0x390] sm:$0xff]
      %v2511 = vld [vmem:[%s138 + $0x398] sm:$0xff]
      %v2512 = vld [vmem:[%s138 + $0x3a0] sm:$0xff]
      %v2513 = vld [vmem:[%s138 + $0x3a8] sm:$0xff]
      %v2514 = vld [vmem:[%s138 + $0x3d0] sm:$0xff]
      %v2515 = vld [vmem:[%s138 + $0x3d8] sm:$0xff]
      %v2516 = vld [vmem:[%s138 + $0x3e0] sm:$0xff]
      %v2517 = vld [vmem:[%s138 + $0x3e8] sm:$0xff]
      %v2518 = vld [vmem:[%s138 + $0x3f0] sm:$0xff]
      %v2519 = vld [vmem:[%s138 + $0x3f8] sm:$0xff]
      %v2520 = vld [vmem:[%s138 + $0x400] sm:$0xff]
      %v2521 = vld [vmem:[%s138 + $0x408] sm:$0xff]
      %v2522 = vld [vmem:[%s138 + $0x410] sm:$0xff]
      %v2523 = vld [vmem:[%s138 + $0x418] sm:$0xff]
      %v2524 = vld [vmem:[%s138 + $0x420] sm:$0xff]
      %v2525 = vld [vmem:[%s138 + $0x428] sm:$0xff]
      %v2526 = vld [vmem:[%s138 + $0x430] sm:$0xff]
      %v2527 = vld [vmem:[%s138 + $0x438] sm:$0xff]
      %v2528 = vld [vmem:[%s138 + $0x440] sm:$0xff]
      %v2529 = vld [vmem:[%s138 + $0x448] sm:$0xff]
      %v2530 = vld [vmem:[%s138 + $0x470] sm:$0xff]
      %v2531 = vld [vmem:[%s138 + $0x478] sm:$0xff]
      %v2532 = vld [vmem:[%s138 + $0x480] sm:$0xff]
      %v2533 = vld [vmem:[%s138 + $0x488] sm:$0xff]
      %v2534 = vld [vmem:[%s138 + $0x490] sm:$0xff]
      %v2535 = vld [vmem:[%s138 + $0x498] sm:$0xff]
      %v2536 = vld [vmem:[%s138 + $0x4a0] sm:$0xff]
      %v2537 = vld [vmem:[%s138 + $0x4a8] sm:$0xff]
      %v2538 = vld [vmem:[%s138 + $0x4b0] sm:$0xff]
      %v2539 = vld [vmem:[%s138 + $0x4b8] sm:$0xff]
      %v2540 = vld [vmem:[%s138 + $0x4c0] sm:$0xff]
      %v2541 = vld [vmem:[%s138 + $0x4c8] sm:$0xff]
      %v2542 = vld [vmem:[%s138 + $0x4d0] sm:$0xff]
      %v2543 = vld [vmem:[%s138 + $0x4d8] sm:$0xff]
      %v2544 = vld [vmem:[%s138 + $0x4e0] sm:$0xff]
      %v2545 = vld [vmem:[%s138 + $0x4e8] sm:$0xff]
      %v2546 = vld [vmem:[%s138 + $0x510] sm:$0xff]
      %v2547 = vld [vmem:[%s138 + $0x518] sm:$0xff]
      %v2548 = vld [vmem:[%s138 + $0x520] sm:$0xff]
      %v2549 = vld [vmem:[%s138 + $0x528] sm:$0xff]
      %v2550 = vld [vmem:[%s138 + $0x530] sm:$0xff]
      %v2551 = vld [vmem:[%s138 + $0x538] sm:$0xff]
      %v2552 = vld [vmem:[%s138 + $0x540] sm:$0xff]
      %v2553 = vld [vmem:[%s138 + $0x548] sm:$0xff]
      %v2554 = vld [vmem:[%s138 + $0x550] sm:$0xff]
      %v2555 = vld [vmem:[%s138 + $0x558] sm:$0xff]
      %v2556 = vld [vmem:[%s138 + $0x560] sm:$0xff]
      %v2557 = vld [vmem:[%s138 + $0x568] sm:$0xff]
      %v2558 = vld [vmem:[%s138 + $0x570] sm:$0xff]
      %v2559 = vld [vmem:[%s138 + $0x578] sm:$0xff]
      %v2560 = vld [vmem:[%s138 + $0x580] sm:$0xff]
      %v2561 = vld [vmem:[%s138 + $0x588] sm:$0xff]
      %v2562 = vld [vmem:[%s138 + $0x5b0] sm:$0xff]
      %v2563 = vld [vmem:[%s138 + $0x5b8] sm:$0xff]
      %v2564 = vld [vmem:[%s138 + $0x5c0] sm:$0xff]
      %v2565 = vld [vmem:[%s138 + $0x5c8] sm:$0xff]
      %v2566 = vld [vmem:[%s138 + $0x5d0] sm:$0xff]
      %v2567 = vld [vmem:[%s138 + $0x5d8] sm:$0xff]
      %v2568 = vld [vmem:[%s138 + $0x5e0] sm:$0xff]
      %v2569 = vld [vmem:[%s138 + $0x5e8] sm:$0xff]
      %v2570 = vld [vmem:[%s138 + $0x5f0] sm:$0xff]
      %v2571 = vld [vmem:[%s138 + $0x5f8] sm:$0xff]
      %v2572 = vld [vmem:[%s138 + $0x600] sm:$0xff]
      %v2573 = vld [vmem:[%s138 + $0x608] sm:$0xff]
      %v2574 = vld [vmem:[%s138 + $0x610] sm:$0xff]
      %v2575 = vld [vmem:[%s138 + $0x618] sm:$0xff]
      %v2576 = vld [vmem:[%s138 + $0x620] sm:$0xff]
      %v2577 = vld [vmem:[%s138 + $0x628] sm:$0xff]
      %v2578 = vld [vmem:[%s138 + $0x650] sm:$0xff]
      %v2579 = vld [vmem:[%s138 + $0x658] sm:$0xff]
      %v2580 = vld [vmem:[%s138 + $0x660] sm:$0xff]
      %v2581 = vld [vmem:[%s138 + $0x668] sm:$0xff]
      %v2582 = vld [vmem:[%s138 + $0x670] sm:$0xff]
      %v2583 = vld [vmem:[%s138 + $0x678] sm:$0xff]
      %v2584 = vld [vmem:[%s138 + $0x680] sm:$0xff]
      %v2585 = vld [vmem:[%s138 + $0x688] sm:$0xff]
      %v2586 = vld [vmem:[%s138 + $0x690] sm:$0xff]
      %v2587 = vld [vmem:[%s138 + $0x698] sm:$0xff]
      %v2588 = vld [vmem:[%s138 + $0x6a0] sm:$0xff]
      %v2589 = vld [vmem:[%s138 + $0x6a8] sm:$0xff]
      %v2590 = vld [vmem:[%s138 + $0x6b0] sm:$0xff]
      %v2591 = vld [vmem:[%s138 + $0x6b8] sm:$0xff]
      %v2592 = vld [vmem:[%s138 + $0x6c0] sm:$0xff]
      %v2593 = vld [vmem:[%s138 + $0x6c8] sm:$0xff]
      %v2594 = vld [vmem:[%s138 + $0x6f0] sm:$0xff]
      %v2595 = vld [vmem:[%s138 + $0x6f8] sm:$0xff]
      %v2596 = vld [vmem:[%s138 + $0x700] sm:$0xff]
      %v2597 = vld [vmem:[%s138 + $0x708] sm:$0xff]
      %v2598 = vld [vmem:[%s138 + $0x710] sm:$0xff]
      %v2599 = vld [vmem:[%s138 + $0x718] sm:$0xff]
      %v2600 = vld [vmem:[%s138 + $0x720] sm:$0xff]
      %v2601 = vld [vmem:[%s138 + $0x728] sm:$0xff]
      %v2602 = vld [vmem:[%s138 + $0x730] sm:$0xff]
      %v2603 = vld [vmem:[%s138 + $0x738] sm:$0xff]
      %v2604 = vld [vmem:[%s138 + $0x740] sm:$0xff]
      %v2605 = vld [vmem:[%s138 + $0x748] sm:$0xff]
      %v2606 = vld [vmem:[%s138 + $0x750] sm:$0xff]
      %v2607 = vld [vmem:[%s138 + $0x758] sm:$0xff]
      %v2608 = vld [vmem:[%s138 + $0x760] sm:$0xff]
      %v2609 = vld [vmem:[%s138 + $0x768] sm:$0xff]
      %v2610 = vld [vmem:[%s138 + $0x790] sm:$0x33]
      %v2611 = vld [vmem:[%s138 + $0x798] sm:$0x33]
      %v2612 = vld [vmem:[%s138 + $0x7a0] sm:$0x33]
      %v2613 = vld [vmem:[%s138 + $0x7a8] sm:$0x33]
      %v2614 = vld [vmem:[%s138 + $0x7b0] sm:$0x33]
      %v2615 = vld [vmem:[%s138 + $0x7b8] sm:$0x33]
      %v2616 = vld [vmem:[%s138 + $0x7c0] sm:$0x33]
      %v2617 = vld [vmem:[%s138 + $0x7c8] sm:$0x33]
      %v2618 = vld [vmem:[%s138 + $0x7d0] sm:$0x33]
      %v2619 = vld [vmem:[%s138 + $0x7d8] sm:$0x33]
      %v2620 = vld [vmem:[%s138 + $0x7e0] sm:$0x33]
      %v2621 = vld [vmem:[%s138 + $0x7e8] sm:$0x33]
      %v2622 = vld [vmem:[%s138 + $0x7f0] sm:$0x33]
      %v2623 = vld [vmem:[%s138 + $0x7f8] sm:$0x33]
      %v2624 = vld [vmem:[%s138 + $0x800] sm:$0x33]
      %v2625 = vld [vmem:[%s138 + $0x808] sm:$0x33]
      %v2834 = vunpack.c.l.b16 %v2418
      %v2835 = vunpack.c.h.b16 %v2418
      %v2836 = vunpack.c.l.b16 %v2419
      %v2837 = vunpack.c.h.b16 %v2419
      %v2838 = vunpack.c.l.b16 %v2420
      %v2839 = vunpack.c.h.b16 %v2420
      %v2840 = vunpack.c.l.b16 %v2421
      %v2841 = vunpack.c.h.b16 %v2421
      %v2842 = vunpack.c.l.b16 %v2422
      %v2843 = vunpack.c.h.b16 %v2422
      %v2844 = vunpack.c.l.b16 %v2423
      %v2845 = vunpack.c.h.b16 %v2423
      %v2846 = vunpack.c.l.b16 %v2424
      %v2847 = vunpack.c.h.b16 %v2424
      %v2848 = vunpack.c.l.b16 %v2425
      %v2849 = vunpack.c.h.b16 %v2425
      %v2850 = vunpack.c.l.b16 %v2426
      %v2851 = vunpack.c.h.b16 %v2426
      %v2852 = vunpack.c.l.b16 %v2427
      %v2853 = vunpack.c.h.b16 %v2427
      %v2854 = vunpack.c.l.b16 %v2428
      %v2855 = vunpack.c.h.b16 %v2428
      %v2856 = vunpack.c.l.b16 %v2429
      %v2857 = vunpack.c.h.b16 %v2429
      %v2858 = vunpack.c.l.b16 %v2430
      %v2859 = vunpack.c.h.b16 %v2430
      %v2860 = vunpack.c.l.b16 %v2431
      %v2861 = vunpack.c.h.b16 %v2431
      %v2862 = vunpack.c.l.b16 %v2432
      %v2863 = vunpack.c.h.b16 %v2432
      %v2864 = vunpack.c.l.b16 %v2433
      %v2865 = vunpack.c.h.b16 %v2433
      %v2866 = vunpack.c.l.b16 %v2434
      %v2867 = vunpack.c.h.b16 %v2434
      %v2868 = vunpack.c.l.b16 %v2435
      %v2869 = vunpack.c.h.b16 %v2435
      %v2870 = vunpack.c.l.b16 %v2436
      %v2871 = vunpack.c.h.b16 %v2436
      %v2872 = vunpack.c.l.b16 %v2437
      %v2873 = vunpack.c.h.b16 %v2437
      %v2874 = vunpack.c.l.b16 %v2438
      %v2875 = vunpack.c.h.b16 %v2438
      %v2876 = vunpack.c.l.b16 %v2439
      %v2877 = vunpack.c.h.b16 %v2439
      %v2878 = vunpack.c.l.b16 %v2440
      %v2879 = vunpack.c.h.b16 %v2440
      %v2880 = vunpack.c.l.b16 %v2441
      %v2881 = vunpack.c.h.b16 %v2441
      %v2882 = vunpack.c.l.b16 %v2442
      %v2883 = vunpack.c.h.b16 %v2442
      %v2884 = vunpack.c.l.b16 %v2443
      %v2885 = vunpack.c.h.b16 %v2443
      %v2886 = vunpack.c.l.b16 %v2444
      %v2887 = vunpack.c.h.b16 %v2444
      %v2888 = vunpack.c.l.b16 %v2445
      %v2889 = vunpack.c.h.b16 %v2445
      %v2890 = vunpack.c.l.b16 %v2446
      %v2891 = vunpack.c.h.b16 %v2446
      %v2892 = vunpack.c.l.b16 %v2447
      %v2893 = vunpack.c.h.b16 %v2447
      %v2894 = vunpack.c.l.b16 %v2448
      %v2895 = vunpack.c.h.b16 %v2448
      %v2896 = vunpack.c.l.b16 %v2449
      %v2897 = vunpack.c.h.b16 %v2449
      %v2898 = vunpack.c.l.b16 %v2450
      %v2899 = vunpack.c.h.b16 %v2450
      %v2900 = vunpack.c.l.b16 %v2451
      %v2901 = vunpack.c.h.b16 %v2451
      %v2902 = vunpack.c.l.b16 %v2452
      %v2903 = vunpack.c.h.b16 %v2452
      %v2904 = vunpack.c.l.b16 %v2453
      %v2905 = vunpack.c.h.b16 %v2453
      %v2906 = vunpack.c.l.b16 %v2454
      %v2907 = vunpack.c.h.b16 %v2454
      %v2908 = vunpack.c.l.b16 %v2455
      %v2909 = vunpack.c.h.b16 %v2455
      %v2910 = vunpack.c.l.b16 %v2456
      %v2911 = vunpack.c.h.b16 %v2456
      %v2912 = vunpack.c.l.b16 %v2457
      %v2913 = vunpack.c.h.b16 %v2457
      %v2914 = vunpack.c.l.b16 %v2458
      %v2915 = vunpack.c.h.b16 %v2458
      %v2916 = vunpack.c.l.b16 %v2459
      %v2917 = vunpack.c.h.b16 %v2459
      %v2918 = vunpack.c.l.b16 %v2460
      %v2919 = vunpack.c.h.b16 %v2460
      %v2920 = vunpack.c.l.b16 %v2461
      %v2921 = vunpack.c.h.b16 %v2461
      %v2922 = vunpack.c.l.b16 %v2462
      %v2923 = vunpack.c.h.b16 %v2462
      %v2924 = vunpack.c.l.b16 %v2463
      %v2925 = vunpack.c.h.b16 %v2463
      %v2926 = vunpack.c.l.b16 %v2464
      %v2927 = vunpack.c.h.b16 %v2464
      %v2928 = vunpack.c.l.b16 %v2465
      %v2929 = vunpack.c.h.b16 %v2465
      %v2930 = vunpack.c.l.b16 %v2466
      %v2931 = vunpack.c.h.b16 %v2466
      %v2932 = vunpack.c.l.b16 %v2467
      %v2933 = vunpack.c.h.b16 %v2467
      %v2934 = vunpack.c.l.b16 %v2468
      %v2935 = vunpack.c.h.b16 %v2468
      %v2936 = vunpack.c.l.b16 %v2469
      %v2937 = vunpack.c.h.b16 %v2469
      %v2938 = vunpack.c.l.b16 %v2470
      %v2939 = vunpack.c.h.b16 %v2470
      %v2940 = vunpack.c.l.b16 %v2471
      %v2941 = vunpack.c.h.b16 %v2471
      %v2942 = vunpack.c.l.b16 %v2472
      %v2943 = vunpack.c.h.b16 %v2472
      %v2944 = vunpack.c.l.b16 %v2473
      %v2945 = vunpack.c.h.b16 %v2473
      %v2946 = vunpack.c.l.b16 %v2474
      %v2947 = vunpack.c.h.b16 %v2474
      %v2948 = vunpack.c.l.b16 %v2475
      %v2949 = vunpack.c.h.b16 %v2475
      %v2950 = vunpack.c.l.b16 %v2476
      %v2951 = vunpack.c.h.b16 %v2476
      %v2952 = vunpack.c.l.b16 %v2477
      %v2953 = vunpack.c.h.b16 %v2477
      %v2954 = vunpack.c.l.b16 %v2478
      %v2955 = vunpack.c.h.b16 %v2478
      %v2956 = vunpack.c.l.b16 %v2479
      %v2957 = vunpack.c.h.b16 %v2479
      %v2958 = vunpack.c.l.b16 %v2480
      %v2959 = vunpack.c.h.b16 %v2480
      %v2960 = vunpack.c.l.b16 %v2481
      %v2961 = vunpack.c.h.b16 %v2481
      %v2962 = vunpack.c.l.b16 %v2482
      %v2963 = vunpack.c.h.b16 %v2482
      %v2964 = vunpack.c.l.b16 %v2483
      %v2965 = vunpack.c.h.b16 %v2483
      %v2966 = vunpack.c.l.b16 %v2484
      %v2967 = vunpack.c.h.b16 %v2484
      %v2968 = vunpack.c.l.b16 %v2485
      %v2969 = vunpack.c.h.b16 %v2485
      %v2970 = vunpack.c.l.b16 %v2486
      %v2971 = vunpack.c.h.b16 %v2486
      %v2972 = vunpack.c.l.b16 %v2487
      %v2973 = vunpack.c.h.b16 %v2487
      %v2974 = vunpack.c.l.b16 %v2488
      %v2975 = vunpack.c.h.b16 %v2488
      %v2976 = vunpack.c.l.b16 %v2489
      %v2977 = vunpack.c.h.b16 %v2489
      %v2978 = vunpack.c.l.b16 %v2490
      %v2979 = vunpack.c.h.b16 %v2490
      %v2980 = vunpack.c.l.b16 %v2491
      %v2981 = vunpack.c.h.b16 %v2491
      %v2982 = vunpack.c.l.b16 %v2492
      %v2983 = vunpack.c.h.b16 %v2492
      %v2984 = vunpack.c.l.b16 %v2493
      %v2985 = vunpack.c.h.b16 %v2493
      %v2986 = vunpack.c.l.b16 %v2494
      %v2987 = vunpack.c.h.b16 %v2494
      %v2988 = vunpack.c.l.b16 %v2495
      %v2989 = vunpack.c.h.b16 %v2495
      %v2990 = vunpack.c.l.b16 %v2496
      %v2991 = vunpack.c.h.b16 %v2496
      %v2992 = vunpack.c.l.b16 %v2497
      %v2993 = vunpack.c.h.b16 %v2497
      %v2994 = vunpack.c.l.b16 %v2498
      %v2995 = vunpack.c.h.b16 %v2498
      %v2996 = vunpack.c.l.b16 %v2499
      %v2997 = vunpack.c.h.b16 %v2499
      %v2998 = vunpack.c.l.b16 %v2500
      %v2999 = vunpack.c.h.b16 %v2500
      %v3000 = vunpack.c.l.b16 %v2501
      %v3001 = vunpack.c.h.b16 %v2501
      %v3002 = vunpack.c.l.b16 %v2502
      %v3003 = vunpack.c.h.b16 %v2502
      %v3004 = vunpack.c.l.b16 %v2503
      %v3005 = vunpack.c.h.b16 %v2503
      %v3006 = vunpack.c.l.b16 %v2504
      %v3007 = vunpack.c.h.b16 %v2504
      %v3008 = vunpack.c.l.b16 %v2505
      %v3009 = vunpack.c.h.b16 %v2505
      %v3010 = vunpack.c.l.b16 %v2506
      %v3011 = vunpack.c.h.b16 %v2506
      %v3012 = vunpack.c.l.b16 %v2507
      %v3013 = vunpack.c.h.b16 %v2507
      %v3014 = vunpack.c.l.b16 %v2508
      %v3015 = vunpack.c.h.b16 %v2508
      %v3016 = vunpack.c.l.b16 %v2509
      %v3017 = vunpack.c.h.b16 %v2509
      %v3018 = vunpack.c.l.b16 %v2510
      %v3019 = vunpack.c.h.b16 %v2510
      %v3020 = vunpack.c.l.b16 %v2511
      %v3021 = vunpack.c.h.b16 %v2511
      %v3022 = vunpack.c.l.b16 %v2512
      %v3023 = vunpack.c.h.b16 %v2512
      %v3024 = vunpack.c.l.b16 %v2513
      %v3025 = vunpack.c.h.b16 %v2513
      %v3026 = vunpack.c.l.b16 %v2514
      %v3027 = vunpack.c.h.b16 %v2514
      %v3028 = vunpack.c.l.b16 %v2515
      %v3029 = vunpack.c.h.b16 %v2515
      %v3030 = vunpack.c.l.b16 %v2516
      %v3031 = vunpack.c.h.b16 %v2516
      %v3032 = vunpack.c.l.b16 %v2517
      %v3033 = vunpack.c.h.b16 %v2517
      %v3034 = vunpack.c.l.b16 %v2518
      %v3035 = vunpack.c.h.b16 %v2518
      %v3036 = vunpack.c.l.b16 %v2519
      %v3037 = vunpack.c.h.b16 %v2519
      %v3038 = vunpack.c.l.b16 %v2520
      %v3039 = vunpack.c.h.b16 %v2520
      %v3040 = vunpack.c.l.b16 %v2521
      %v3041 = vunpack.c.h.b16 %v2521
      %v3042 = vunpack.c.l.b16 %v2522
      %v3043 = vunpack.c.h.b16 %v2522
      %v3044 = vunpack.c.l.b16 %v2523
      %v3045 = vunpack.c.h.b16 %v2523
      %v3046 = vunpack.c.l.b16 %v2524
      %v3047 = vunpack.c.h.b16 %v2524
      %v3048 = vunpack.c.l.b16 %v2525
      %v3049 = vunpack.c.h.b16 %v2525
      %v3050 = vunpack.c.l.b16 %v2526
      %v3051 = vunpack.c.h.b16 %v2526
      %v3052 = vunpack.c.l.b16 %v2527
      %v3053 = vunpack.c.h.b16 %v2527
      %v3054 = vunpack.c.l.b16 %v2528
      %v3055 = vunpack.c.h.b16 %v2528
      %v3056 = vunpack.c.l.b16 %v2529
      %v3057 = vunpack.c.h.b16 %v2529
      %v3058 = vunpack.c.l.b16 %v2530
      %v3059 = vunpack.c.h.b16 %v2530
      %v3060 = vunpack.c.l.b16 %v2531
      %v3061 = vunpack.c.h.b16 %v2531
      %v3062 = vunpack.c.l.b16 %v2532
      %v3063 = vunpack.c.h.b16 %v2532
      %v3064 = vunpack.c.l.b16 %v2533
      %v3065 = vunpack.c.h.b16 %v2533
      %v3066 = vunpack.c.l.b16 %v2534
      %v3067 = vunpack.c.h.b16 %v2534
      %v3068 = vunpack.c.l.b16 %v2535
      %v3069 = vunpack.c.h.b16 %v2535
      %v3070 = vunpack.c.l.b16 %v2536
      %v3071 = vunpack.c.h.b16 %v2536
      %v3072 = vunpack.c.l.b16 %v2537
      %v3073 = vunpack.c.h.b16 %v2537
      %v3074 = vunpack.c.l.b16 %v2538
      %v3075 = vunpack.c.h.b16 %v2538
      %v3076 = vunpack.c.l.b16 %v2539
      %v3077 = vunpack.c.h.b16 %v2539
      %v3078 = vunpack.c.l.b16 %v2540
      %v3079 = vunpack.c.h.b16 %v2540
      %v3080 = vunpack.c.l.b16 %v2541
      %v3081 = vunpack.c.h.b16 %v2541
      %v3082 = vunpack.c.l.b16 %v2542
      %v3083 = vunpack.c.h.b16 %v2542
      %v3084 = vunpack.c.l.b16 %v2543
      %v3085 = vunpack.c.h.b16 %v2543
      %v3086 = vunpack.c.l.b16 %v2544
      %v3087 = vunpack.c.h.b16 %v2544
      %v3088 = vunpack.c.l.b16 %v2545
      %v3089 = vunpack.c.h.b16 %v2545
      %v3090 = vunpack.c.l.b16 %v2546
      %v3091 = vunpack.c.h.b16 %v2546
      %v3092 = vunpack.c.l.b16 %v2547
      %v3093 = vunpack.c.h.b16 %v2547
      %v3094 = vunpack.c.l.b16 %v2548
      %v3095 = vunpack.c.h.b16 %v2548
      %v3096 = vunpack.c.l.b16 %v2549
      %v3097 = vunpack.c.h.b16 %v2549
      %v3098 = vunpack.c.l.b16 %v2550
      %v3099 = vunpack.c.h.b16 %v2550
      %v3100 = vunpack.c.l.b16 %v2551
      %v3101 = vunpack.c.h.b16 %v2551
      %v3102 = vunpack.c.l.b16 %v2552
      %v3103 = vunpack.c.h.b16 %v2552
      %v3104 = vunpack.c.l.b16 %v2553
      %v3105 = vunpack.c.h.b16 %v2553
      %v3106 = vunpack.c.l.b16 %v2554
      %v3107 = vunpack.c.h.b16 %v2554
      %v3108 = vunpack.c.l.b16 %v2555
      %v3109 = vunpack.c.h.b16 %v2555
      %v3110 = vunpack.c.l.b16 %v2556
      %v3111 = vunpack.c.h.b16 %v2556
      %v3112 = vunpack.c.l.b16 %v2557
      %v3113 = vunpack.c.h.b16 %v2557
      %v3114 = vunpack.c.l.b16 %v2558
      %v3115 = vunpack.c.h.b16 %v2558
      %v3116 = vunpack.c.l.b16 %v2559
      %v3117 = vunpack.c.h.b16 %v2559
      %v3118 = vunpack.c.l.b16 %v2560
      %v3119 = vunpack.c.h.b16 %v2560
      %v3120 = vunpack.c.l.b16 %v2561
      %v3121 = vunpack.c.h.b16 %v2561
      %v3122 = vunpack.c.l.b16 %v2562
      %v3123 = vunpack.c.h.b16 %v2562
      %v3124 = vunpack.c.l.b16 %v2563
      %v3125 = vunpack.c.h.b16 %v2563
      %v3126 = vunpack.c.l.b16 %v2564
      %v3127 = vunpack.c.h.b16 %v2564
      %v3128 = vunpack.c.l.b16 %v2565
      %v3129 = vunpack.c.h.b16 %v2565
      %v3130 = vunpack.c.l.b16 %v2566
      %v3131 = vunpack.c.h.b16 %v2566
      %v3132 = vunpack.c.l.b16 %v2567
      %v3133 = vunpack.c.h.b16 %v2567
      %v3134 = vunpack.c.l.b16 %v2568
      %v3135 = vunpack.c.h.b16 %v2568
      %v3136 = vunpack.c.l.b16 %v2569
      %v3137 = vunpack.c.h.b16 %v2569
      %v3138 = vunpack.c.l.b16 %v2570
      %v3139 = vunpack.c.h.b16 %v2570
      %v3140 = vunpack.c.l.b16 %v2571
      %v3141 = vunpack.c.h.b16 %v2571
      %v3142 = vunpack.c.l.b16 %v2572
      %v3143 = vunpack.c.h.b16 %v2572
      %v3144 = vunpack.c.l.b16 %v2573
      %v3145 = vunpack.c.h.b16 %v2573
      %v3146 = vunpack.c.l.b16 %v2574
      %v3147 = vunpack.c.h.b16 %v2574
      %v3148 = vunpack.c.l.b16 %v2575
      %v3149 = vunpack.c.h.b16 %v2575
      %v3150 = vunpack.c.l.b16 %v2576
      %v3151 = vunpack.c.h.b16 %v2576
      %v3152 = vunpack.c.l.b16 %v2577
      %v3153 = vunpack.c.h.b16 %v2577
      %v3154 = vunpack.c.l.b16 %v2578
      %v3155 = vunpack.c.h.b16 %v2578
      %v3156 = vunpack.c.l.b16 %v2579
      %v3157 = vunpack.c.h.b16 %v2579
      %v3158 = vunpack.c.l.b16 %v2580
      %v3159 = vunpack.c.h.b16 %v2580
      %v3160 = vunpack.c.l.b16 %v2581
      %v3161 = vunpack.c.h.b16 %v2581
      %v3162 = vunpack.c.l.b16 %v2582
      %v3163 = vunpack.c.h.b16 %v2582
      %v3164 = vunpack.c.l.b16 %v2583
      %v3165 = vunpack.c.h.b16 %v2583
      %v3166 = vunpack.c.l.b16 %v2584
      %v3167 = vunpack.c.h.b16 %v2584
      %v3168 = vunpack.c.l.b16 %v2585
      %v3169 = vunpack.c.h.b16 %v2585
      %v3170 = vunpack.c.l.b16 %v2586
      %v3171 = vunpack.c.h.b16 %v2586
      %v3172 = vunpack.c.l.b16 %v2587
      %v3173 = vunpack.c.h.b16 %v2587
      %v3174 = vunpack.c.l.b16 %v2588
      %v3175 = vunpack.c.h.b16 %v2588
      %v3176 = vunpack.c.l.b16 %v2589
      %v3177 = vunpack.c.h.b16 %v2589
      %v3178 = vunpack.c.l.b16 %v2590
      %v3179 = vunpack.c.h.b16 %v2590
      %v3180 = vunpack.c.l.b16 %v2591
      %v3181 = vunpack.c.h.b16 %v2591
      %v3182 = vunpack.c.l.b16 %v2592
      %v3183 = vunpack.c.h.b16 %v2592
      %v3184 = vunpack.c.l.b16 %v2593
      %v3185 = vunpack.c.h.b16 %v2593
      %v3186 = vunpack.c.l.b16 %v2594
      %v3187 = vunpack.c.h.b16 %v2594
      %v3188 = vunpack.c.l.b16 %v2595
      %v3189 = vunpack.c.h.b16 %v2595
      %v3190 = vunpack.c.l.b16 %v2596
      %v3191 = vunpack.c.h.b16 %v2596
      %v3192 = vunpack.c.l.b16 %v2597
      %v3193 = vunpack.c.h.b16 %v2597
      %v3194 = vunpack.c.l.b16 %v2598
      %v3195 = vunpack.c.h.b16 %v2598
      %v3196 = vunpack.c.l.b16 %v2599
      %v3197 = vunpack.c.h.b16 %v2599
      %v3198 = vunpack.c.l.b16 %v2600
      %v3199 = vunpack.c.h.b16 %v2600
      %v3200 = vunpack.c.l.b16 %v2601
      %v3201 = vunpack.c.h.b16 %v2601
      %v3202 = vunpack.c.l.b16 %v2602
      %v3203 = vunpack.c.h.b16 %v2602
      %v3204 = vunpack.c.l.b16 %v2603
      %v3205 = vunpack.c.h.b16 %v2603
      %v3206 = vunpack.c.l.b16 %v2604
      %v3207 = vunpack.c.h.b16 %v2604
      %v3208 = vunpack.c.l.b16 %v2605
      %v3209 = vunpack.c.h.b16 %v2605
      %v3210 = vunpack.c.l.b16 %v2606
      %v3211 = vunpack.c.h.b16 %v2606
      %v3212 = vunpack.c.l.b16 %v2607
      %v3213 = vunpack.c.h.b16 %v2607
      %v3214 = vunpack.c.l.b16 %v2608
      %v3215 = vunpack.c.h.b16 %v2608
      %v3216 = vunpack.c.l.b16 %v2609
      %v3217 = vunpack.c.h.b16 %v2609
      %v3218 = vunpack.c.l.b16 %v2610
      %v3219 = vunpack.c.h.b16 %v2610
      %v3220 = vunpack.c.l.b16 %v2611
      %v3221 = vunpack.c.h.b16 %v2611
      %v3222 = vunpack.c.l.b16 %v2612
      %v3223 = vunpack.c.h.b16 %v2612
      %v3224 = vunpack.c.l.b16 %v2613
      %v3225 = vunpack.c.h.b16 %v2613
      %v3226 = vunpack.c.l.b16 %v2614
      %v3227 = vunpack.c.h.b16 %v2614
      %v3228 = vunpack.c.l.b16 %v2615
      %v3229 = vunpack.c.h.b16 %v2615
      %v3230 = vunpack.c.l.b16 %v2616
      %v3231 = vunpack.c.h.b16 %v2616
      %v3232 = vunpack.c.l.b16 %v2617
      %v3233 = vunpack.c.h.b16 %v2617
      %v3234 = vunpack.c.l.b16 %v2618
      %v3235 = vunpack.c.h.b16 %v2618
      %v3236 = vunpack.c.l.b16 %v2619
      %v3237 = vunpack.c.h.b16 %v2619
      %v3238 = vunpack.c.l.b16 %v2620
      %v3239 = vunpack.c.h.b16 %v2620
      %v3240 = vunpack.c.l.b16 %v2621
      %v3241 = vunpack.c.h.b16 %v2621
      %v3242 = vunpack.c.l.b16 %v2622
      %v3243 = vunpack.c.h.b16 %v2622
      %v3244 = vunpack.c.l.b16 %v2623
      %v3245 = vunpack.c.h.b16 %v2623
      %v3246 = vunpack.c.l.b16 %v2624
      %v3247 = vunpack.c.h.b16 %v2624
      %v3248 = vunpack.c.l.b16 %v2625
      %v3249 = vunpack.c.h.b16 %v2625
      %v3250 = vpack.c.b16 %v2866, %v2834
      %v3251 = vpack.c.b16 %v2867, %v2835
      %v3252 = vpack.c.b16 %v2868, %v2836
      %v3253 = vpack.c.b16 %v2869, %v2837
      %v3254 = vpack.c.b16 %v2870, %v2838
      %v3255 = vpack.c.b16 %v2871, %v2839
      %v3256 = vpack.c.b16 %v2872, %v2840
      %v3257 = vpack.c.b16 %v2873, %v2841
      %v3258 = vpack.c.b16 %v2874, %v2842
      %v3259 = vpack.c.b16 %v2875, %v2843
      %v3260 = vpack.c.b16 %v2876, %v2844
      %v3261 = vpack.c.b16 %v2877, %v2845
      %v3262 = vpack.c.b16 %v2878, %v2846
      %v3263 = vpack.c.b16 %v2879, %v2847
      %v3264 = vpack.c.b16 %v2880, %v2848
      %v3265 = vpack.c.b16 %v2881, %v2849
      %v3266 = vpack.c.b16 %v2882, %v2850
      %v3267 = vpack.c.b16 %v2883, %v2851
      %v3268 = vpack.c.b16 %v2884, %v2852
      %v3269 = vpack.c.b16 %v2885, %v2853
      %v3270 = vpack.c.b16 %v2886, %v2854
      %v3271 = vpack.c.b16 %v2887, %v2855
      %v3272 = vpack.c.b16 %v2888, %v2856
      %v3273 = vpack.c.b16 %v2889, %v2857
      %v3274 = vpack.c.b16 %v2890, %v2858
      %v3275 = vpack.c.b16 %v2891, %v2859
      %v3276 = vpack.c.b16 %v2892, %v2860
      %v3277 = vpack.c.b16 %v2893, %v2861
      %v3278 = vpack.c.b16 %v2894, %v2862
      %v3279 = vpack.c.b16 %v2895, %v2863
      %v3280 = vpack.c.b16 %v2896, %v2864
      %v3281 = vpack.c.b16 %v2897, %v2865
      %v3282 = vpack.c.b16 %v2930, %v2898
      %v3283 = vpack.c.b16 %v2931, %v2899
      %v3284 = vpack.c.b16 %v2932, %v2900
      %v3285 = vpack.c.b16 %v2933, %v2901
      %v3286 = vpack.c.b16 %v2934, %v2902
      %v3287 = vpack.c.b16 %v2935, %v2903
      %v3288 = vpack.c.b16 %v2936, %v2904
      %v3289 = vpack.c.b16 %v2937, %v2905
      %v3290 = vpack.c.b16 %v2938, %v2906
      %v3291 = vpack.c.b16 %v2939, %v2907
      %v3292 = vpack.c.b16 %v2940, %v2908
      %v3293 = vpack.c.b16 %v2941, %v2909
      %v3294 = vpack.c.b16 %v2942, %v2910
      %v3295 = vpack.c.b16 %v2943, %v2911
      %v3296 = vpack.c.b16 %v2944, %v2912
      %v3297 = vpack.c.b16 %v2945, %v2913
      %v3298 = vpack.c.b16 %v2946, %v2914
      %v3299 = vpack.c.b16 %v2947, %v2915
      %v3300 = vpack.c.b16 %v2948, %v2916
      %v3301 = vpack.c.b16 %v2949, %v2917
      %v3302 = vpack.c.b16 %v2950, %v2918
      %v3303 = vpack.c.b16 %v2951, %v2919
      %v3304 = vpack.c.b16 %v2952, %v2920
      %v3305 = vpack.c.b16 %v2953, %v2921
      %v3306 = vpack.c.b16 %v2954, %v2922
      %v3307 = vpack.c.b16 %v2955, %v2923
      %v3308 = vpack.c.b16 %v2956, %v2924
      %v3309 = vpack.c.b16 %v2957, %v2925
      %v3310 = vpack.c.b16 %v2958, %v2926
      %v3311 = vpack.c.b16 %v2959, %v2927
      %v3312 = vpack.c.b16 %v2960, %v2928
      %v3313 = vpack.c.b16 %v2961, %v2929
      %v3314 = vpack.c.b16 %v2994, %v2962
      %v3315 = vpack.c.b16 %v2995, %v2963
      %v3316 = vpack.c.b16 %v2996, %v2964
      %v3317 = vpack.c.b16 %v2997, %v2965
      %v3318 = vpack.c.b16 %v2998, %v2966
      %v3319 = vpack.c.b16 %v2999, %v2967
      %v3320 = vpack.c.b16 %v3000, %v2968
      %v3321 = vpack.c.b16 %v3001, %v2969
      %v3322 = vpack.c.b16 %v3002, %v2970
      %v3323 = vpack.c.b16 %v3003, %v2971
      %v3324 = vpack.c.b16 %v3004, %v2972
      %v3325 = vpack.c.b16 %v3005, %v2973
      %v3326 = vpack.c.b16 %v3006, %v2974
      %v3327 = vpack.c.b16 %v3007, %v2975
      %v3328 = vpack.c.b16 %v3008, %v2976
      %v3329 = vpack.c.b16 %v3009, %v2977
      %v3330 = vpack.c.b16 %v3010, %v2978
      %v3331 = vpack.c.b16 %v3011, %v2979
      %v3332 = vpack.c.b16 %v3012, %v2980
      %v3333 = vpack.c.b16 %v3013, %v2981
      %v3334 = vpack.c.b16 %v3014, %v2982
      %v3335 = vpack.c.b16 %v3015, %v2983
      %v3336 = vpack.c.b16 %v3016, %v2984
      %v3337 = vpack.c.b16 %v3017, %v2985
      %v3338 = vpack.c.b16 %v3018, %v2986
      %v3339 = vpack.c.b16 %v3019, %v2987
      %v3340 = vpack.c.b16 %v3020, %v2988
      %v3341 = vpack.c.b16 %v3021, %v2989
      %v3342 = vpack.c.b16 %v3022, %v2990
      %v3343 = vpack.c.b16 %v3023, %v2991
      %v3344 = vpack.c.b16 %v3024, %v2992
      %v3345 = vpack.c.b16 %v3025, %v2993
      %v3346 = vpack.c.b16 %v3058, %v3026
      %v3347 = vpack.c.b16 %v3059, %v3027
      %v3348 = vpack.c.b16 %v3060, %v3028
      %v3349 = vpack.c.b16 %v3061, %v3029
      %v3350 = vpack.c.b16 %v3062, %v3030
      %v3351 = vpack.c.b16 %v3063, %v3031
      %v3352 = vpack.c.b16 %v3064, %v3032
      %v3353 = vpack.c.b16 %v3065, %v3033
      %v3354 = vpack.c.b16 %v3066, %v3034
      %v3355 = vpack.c.b16 %v3067, %v3035
      %v3356 = vpack.c.b16 %v3068, %v3036
      %v3357 = vpack.c.b16 %v3069, %v3037
      %v3358 = vpack.c.b16 %v3070, %v3038
      %v3359 = vpack.c.b16 %v3071, %v3039
      %v3360 = vpack.c.b16 %v3072, %v3040
      %v3361 = vpack.c.b16 %v3073, %v3041
      %v3362 = vpack.c.b16 %v3074, %v3042
      %v3363 = vpack.c.b16 %v3075, %v3043
      %v3364 = vpack.c.b16 %v3076, %v3044
      %v3365 = vpack.c.b16 %v3077, %v3045
      %v3366 = vpack.c.b16 %v3078, %v3046
      %v3367 = vpack.c.b16 %v3079, %v3047
      %v3368 = vpack.c.b16 %v3080, %v3048
      %v3369 = vpack.c.b16 %v3081, %v3049
      %v3370 = vpack.c.b16 %v3082, %v3050
      %v3371 = vpack.c.b16 %v3083, %v3051
      %v3372 = vpack.c.b16 %v3084, %v3052
      %v3373 = vpack.c.b16 %v3085, %v3053
      %v3374 = vpack.c.b16 %v3086, %v3054
      %v3375 = vpack.c.b16 %v3087, %v3055
      %v3376 = vpack.c.b16 %v3088, %v3056
      %v3377 = vpack.c.b16 %v3089, %v3057
      %v3378 = vpack.c.b16 %v3122, %v3090
      %v3379 = vpack.c.b16 %v3123, %v3091
      %v3380 = vpack.c.b16 %v3124, %v3092
      %v3381 = vpack.c.b16 %v3125, %v3093
      %v3382 = vpack.c.b16 %v3126, %v3094
      %v3383 = vpack.c.b16 %v3127, %v3095
      %v3384 = vpack.c.b16 %v3128, %v3096
      %v3385 = vpack.c.b16 %v3129, %v3097
      %v3386 = vpack.c.b16 %v3130, %v3098
      %v3387 = vpack.c.b16 %v3131, %v3099
      %v3388 = vpack.c.b16 %v3132, %v3100
      %v3389 = vpack.c.b16 %v3133, %v3101
      %v3390 = vpack.c.b16 %v3134, %v3102
      %v3391 = vpack.c.b16 %v3135, %v3103
      %v3392 = vpack.c.b16 %v3136, %v3104
      %v3393 = vpack.c.b16 %v3137, %v3105
      %v3394 = vpack.c.b16 %v3138, %v3106
      %v3395 = vpack.c.b16 %v3139, %v3107
      %v3396 = vpack.c.b16 %v3140, %v3108
      %v3397 = vpack.c.b16 %v3141, %v3109
      %v3398 = vpack.c.b16 %v3142, %v3110
      %v3399 = vpack.c.b16 %v3143, %v3111
      %v3400 = vpack.c.b16 %v3144, %v3112
      %v3401 = vpack.c.b16 %v3145, %v3113
      %v3402 = vpack.c.b16 %v3146, %v3114
      %v3403 = vpack.c.b16 %v3147, %v3115
      %v3404 = vpack.c.b16 %v3148, %v3116
      %v3405 = vpack.c.b16 %v3149, %v3117
      %v3406 = vpack.c.b16 %v3150, %v3118
      %v3407 = vpack.c.b16 %v3151, %v3119
      %v3408 = vpack.c.b16 %v3152, %v3120
      %v3409 = vpack.c.b16 %v3153, %v3121
      %v3410 = vpack.c.b16 %v3186, %v3154
      %v3411 = vpack.c.b16 %v3187, %v3155
      %v3412 = vpack.c.b16 %v3188, %v3156
      %v3413 = vpack.c.b16 %v3189, %v3157
      %v3414 = vpack.c.b16 %v3190, %v3158
      %v3415 = vpack.c.b16 %v3191, %v3159
      %v3416 = vpack.c.b16 %v3192, %v3160
      %v3417 = vpack.c.b16 %v3193, %v3161
      %v3418 = vpack.c.b16 %v3194, %v3162
      %v3419 = vpack.c.b16 %v3195, %v3163
      %v3420 = vpack.c.b16 %v3196, %v3164
      %v3421 = vpack.c.b16 %v3197, %v3165
      %v3422 = vpack.c.b16 %v3198, %v3166
      %v3423 = vpack.c.b16 %v3199, %v3167
      %v3424 = vpack.c.b16 %v3200, %v3168
      %v3425 = vpack.c.b16 %v3201, %v3169
      %v3426 = vpack.c.b16 %v3202, %v3170
      %v3427 = vpack.c.b16 %v3203, %v3171
      %v3428 = vpack.c.b16 %v3204, %v3172
      %v3429 = vpack.c.b16 %v3205, %v3173
      %v3430 = vpack.c.b16 %v3206, %v3174
      %v3431 = vpack.c.b16 %v3207, %v3175
      %v3432 = vpack.c.b16 %v3208, %v3176
      %v3433 = vpack.c.b16 %v3209, %v3177
      %v3434 = vpack.c.b16 %v3210, %v3178
      %v3435 = vpack.c.b16 %v3211, %v3179
      %v3436 = vpack.c.b16 %v3212, %v3180
      %v3437 = vpack.c.b16 %v3213, %v3181
      %v3438 = vpack.c.b16 %v3214, %v3182
      %v3439 = vpack.c.b16 %v3215, %v3183
      %v3440 = vpack.c.b16 %v3216, %v3184
      %v3441 = vpack.c.b16 %v3217, %v3185
      %v3442 = vpack.c.b16 %v3218, %v3218
      %v3443 = vpack.c.b16 %v3219, %v3219
      %v3444 = vpack.c.b16 %v3220, %v3220
      %v3445 = vpack.c.b16 %v3221, %v3221
      %v3446 = vpack.c.b16 %v3222, %v3222
      %v3447 = vpack.c.b16 %v3223, %v3223
      %v3448 = vpack.c.b16 %v3224, %v3224
      %v3449 = vpack.c.b16 %v3225, %v3225
      %v3450 = vpack.c.b16 %v3226, %v3226
      %v3451 = vpack.c.b16 %v3227, %v3227
      %v3452 = vpack.c.b16 %v3228, %v3228
      %v3453 = vpack.c.b16 %v3229, %v3229
      %v3454 = vpack.c.b16 %v3230, %v3230
      %v3455 = vpack.c.b16 %v3231, %v3231
      %v3456 = vpack.c.b16 %v3232, %v3232
      %v3457 = vpack.c.b16 %v3233, %v3233
      %v3458 = vpack.c.b16 %v3234, %v3234
      %v3459 = vpack.c.b16 %v3235, %v3235
      %v3460 = vpack.c.b16 %v3236, %v3236
      %v3461 = vpack.c.b16 %v3237, %v3237
      %v3462 = vpack.c.b16 %v3238, %v3238
      %v3463 = vpack.c.b16 %v3239, %v3239
      %v3464 = vpack.c.b16 %v3240, %v3240
      %v3465 = vpack.c.b16 %v3241, %v3241
      %v3466 = vpack.c.b16 %v3242, %v3242
      %v3467 = vpack.c.b16 %v3243, %v3243
      %v3468 = vpack.c.b16 %v3244, %v3244
      %v3469 = vpack.c.b16 %v3245, %v3245
      %v3470 = vpack.c.b16 %v3246, %v3246
      %v3471 = vpack.c.b16 %v3247, %v3247
      %v3472 = vpack.c.b16 %v3248, %v3248
      %v3473 = vpack.c.b16 %v3249, %v3249
      %v3667 = vsel %vm1409, %v2417, 0
      %v3670 = vsel %vm1413, %v3442, 0
      %v3673 = vsel %vm1413, %v3443, 0
      %v3676 = vsel %vm1413, %v3444, 0
      %v3679 = vsel %vm1413, %v3445, 0
      %v3682 = vsel %vm1413, %v3446, 0
      %v3685 = vsel %vm1413, %v3447, 0
      %v3688 = vsel %vm1413, %v3448, 0
      %v3691 = vsel %vm1413, %v3449, 0
      %v3694 = vsel %vm1413, %v3450, 0
      %v3697 = vsel %vm1413, %v3451, 0
      %v3700 = vsel %vm1413, %v3452, 0
      %v3703 = vsel %vm1413, %v3453, 0
      %v3706 = vsel %vm1413, %v3454, 0
      %v3709 = vsel %vm1413, %v3455, 0
      %v3712 = vsel %vm1413, %v3456, 0
      %v3715 = vsel %vm1413, %v3457, 0
      %v3718 = vsel %vm1413, %v3458, 0
      %v3721 = vsel %vm1413, %v3459, 0
      %v3724 = vsel %vm1413, %v3460, 0
      %v3727 = vsel %vm1413, %v3461, 0
      %v3730 = vsel %vm1413, %v3462, 0
      %v3733 = vsel %vm1413, %v3463, 0
      %v3736 = vsel %vm1413, %v3464, 0
      %v3739 = vsel %vm1413, %v3465, 0
      %v3742 = vsel %vm1413, %v3466, 0
      %v3745 = vsel %vm1413, %v3467, 0
      %v3748 = vsel %vm1413, %v3468, 0
      %v3751 = vsel %vm1413, %v3469, 0
      %v3754 = vsel %vm1413, %v3470, 0
      %v3757 = vsel %vm1413, %v3471, 0
      %v3760 = vsel %vm1413, %v3472, 0
      %v3763 = vsel %vm1413, %v3473, 0
      %3765 = vmatpush.bf16.msra.mxu0 0
      %3766 = vmatpush.bf16.msra.mxu0 %v3670
      %3767 = vmatpush.bf16.msra.mxu0 %v3410
      %3768 = vmatpush.bf16.msra.mxu0 %v3378
      %3769 = vmatpush.bf16.msra.mxu0 %v3346
      %3770 = vmatpush.bf16.msra.mxu0 %v3314
      %3771 = vmatpush.bf16.msra.mxu0 %v3282
      %3772 = vmatpush.bf16.msra.mxu0 %v3250
      %3773 = vmatmul.bf16.gmra.mxu0 %v3667
      %v3774 = vpop.f32.mrf.mxu0
      %v3775 = vadd.f32 0.0, %v3774
      %v3776 = vpop.f32.mrf.mxu0
      %3777 = vdwg.mxu0
      %3778 = vmatpush.bf16.msra.mxu0 0
      %3779 = vmatpush.bf16.msra.mxu0 %v3673
      %3780 = vmatpush.bf16.msra.mxu0 %v3411
      %3781 = vmatpush.bf16.msra.mxu0 %v3379
      %3782 = vmatpush.bf16.msra.mxu0 %v3347
      %3783 = vmatpush.bf16.msra.mxu0 %v3315
      %3784 = vmatpush.bf16.msra.mxu0 %v3283
      %3785 = vmatpush.bf16.msra.mxu0 %v3251
      %3786 = vmatmul.bf16.gmra.mxu0 %v3667
      %v3787 = vpop.f32.mrf.mxu0
      %v3788 = vadd.f32 0.0, %v3787
      %v3789 = vpop.f32.mrf.mxu0
      %3790 = vdwg.mxu0
      %3791 = vmatpush.bf16.msra.mxu0 0
      %3792 = vmatpush.bf16.msra.mxu0 %v3676
      %3793 = vmatpush.bf16.msra.mxu0 %v3412
      %3794 = vmatpush.bf16.msra.mxu0 %v3380
      %3795 = vmatpush.bf16.msra.mxu0 %v3348
      %3796 = vmatpush.bf16.msra.mxu0 %v3316
      %3797 = vmatpush.bf16.msra.mxu0 %v3284
      %3798 = vmatpush.bf16.msra.mxu0 %v3252
      %3799 = vmatmul.bf16.gmra.mxu0 %v3667
      %v3800 = vpop.f32.mrf.mxu0
      %v3801 = vadd.f32 0.0, %v3800
      %v3802 = vpop.f32.mrf.mxu0
      %3803 = vdwg.mxu0
      %3804 = vmatpush.bf16.msra.mxu0 0
      %3805 = vmatpush.bf16.msra.mxu0 %v3679
      %3806 = vmatpush.bf16.msra.mxu0 %v3413
      %3807 = vmatpush.bf16.msra.mxu0 %v3381
      %3808 = vmatpush.bf16.msra.mxu0 %v3349
      %3809 = vmatpush.bf16.msra.mxu0 %v3317
      %3810 = vmatpush.bf16.msra.mxu0 %v3285
      %3811 = vmatpush.bf16.msra.mxu0 %v3253
      %3812 = vmatmul.bf16.gmra.mxu0 %v3667
      %v3813 = vpop.f32.mrf.mxu0
      %v3814 = vadd.f32 0.0, %v3813
      %v3815 = vpop.f32.mrf.mxu0
      %3816 = vdwg.mxu0
      %3817 = vmatpush.bf16.msra.mxu0 0
      %3818 = vmatpush.bf16.msra.mxu0 %v3682
      %3819 = vmatpush.bf16.msra.mxu0 %v3414
      %3820 = vmatpush.bf16.msra.mxu0 %v3382
      %3821 = vmatpush.bf16.msra.mxu0 %v3350
      %3822 = vmatpush.bf16.msra.mxu0 %v3318
      %3823 = vmatpush.bf16.msra.mxu0 %v3286
      %3824 = vmatpush.bf16.msra.mxu0 %v3254
      %3825 = vmatmul.bf16.gmra.mxu0 %v3667
      %v3826 = vpop.f32.mrf.mxu0
      %v3827 = vadd.f32 0.0, %v3826
      %v3828 = vpop.f32.mrf.mxu0
      %3829 = vdwg.mxu0
      %3830 = vmatpush.bf16.msra.mxu0 0
      %3831 = vmatpush.bf16.msra.mxu0 %v3685
      %3832 = vmatpush.bf16.msra.mxu0 %v3415
      %3833 = vmatpush.bf16.msra.mxu0 %v3383
      %3834 = vmatpush.bf16.msra.mxu0 %v3351
      %3835 = vmatpush.bf16.msra.mxu0 %v3319
      %3836 = vmatpush.bf16.msra.mxu0 %v3287
      %3837 = vmatpush.bf16.msra.mxu0 %v3255
      %3838 = vmatmul.bf16.gmra.mxu0 %v3667
      %v3839 = vpop.f32.mrf.mxu0
      %v3840 = vadd.f32 0.0, %v3839
      %v3841 = vpop.f32.mrf.mxu0
      %3842 = vdwg.mxu0
      %3843 = vmatpush.bf16.msra.mxu0 0
      %3844 = vmatpush.bf16.msra.mxu0 %v3688
      %3845 = vmatpush.bf16.msra.mxu0 %v3416
      %3846 = vmatpush.bf16.msra.mxu0 %v3384
      %3847 = vmatpush.bf16.msra.mxu0 %v3352
      %3848 = vmatpush.bf16.msra.mxu0 %v3320
      %3849 = vmatpush.bf16.msra.mxu0 %v3288
      %3850 = vmatpush.bf16.msra.mxu0 %v3256
      %3851 = vmatmul.bf16.gmra.mxu0 %v3667
      %v3852 = vpop.f32.mrf.mxu0
      %v3853 = vadd.f32 0.0, %v3852
      %v3854 = vpop.f32.mrf.mxu0
      %3855 = vdwg.mxu0
      %3856 = vmatpush.bf16.msra.mxu0 0
      %3857 = vmatpush.bf16.msra.mxu0 %v3691
      %3858 = vmatpush.bf16.msra.mxu0 %v3417
      %3859 = vmatpush.bf16.msra.mxu0 %v3385
      %3860 = vmatpush.bf16.msra.mxu0 %v3353
      %3861 = vmatpush.bf16.msra.mxu0 %v3321
      %3862 = vmatpush.bf16.msra.mxu0 %v3289
      %3863 = vmatpush.bf16.msra.mxu0 %v3257
      %3864 = vmatmul.bf16.gmra.mxu0 %v3667
      %v3865 = vpop.f32.mrf.mxu0
      %v3866 = vadd.f32 0.0, %v3865
      %v3867 = vpop.f32.mrf.mxu0
      %3868 = vdwg.mxu0
      %3869 = vmatpush.bf16.msra.mxu0 0
      %3870 = vmatpush.bf16.msra.mxu0 %v3694
      %3871 = vmatpush.bf16.msra.mxu0 %v3418
      %3872 = vmatpush.bf16.msra.mxu0 %v3386
      %3873 = vmatpush.bf16.msra.mxu0 %v3354
      %3874 = vmatpush.bf16.msra.mxu0 %v3322
      %3875 = vmatpush.bf16.msra.mxu0 %v3290
      %3876 = vmatpush.bf16.msra.mxu0 %v3258
      %3877 = vmatmul.bf16.gmra.mxu0 %v3667
      %v3878 = vpop.f32.mrf.mxu0
      %v3879 = vadd.f32 0.0, %v3878
      %v3880 = vpop.f32.mrf.mxu0
      %3881 = vdwg.mxu0
      %3882 = vmatpush.bf16.msra.mxu0 0
      %3883 = vmatpush.bf16.msra.mxu0 %v3697
      %3884 = vmatpush.bf16.msra.mxu0 %v3419
      %3885 = vmatpush.bf16.msra.mxu0 %v3387
      %3886 = vmatpush.bf16.msra.mxu0 %v3355
      %3887 = vmatpush.bf16.msra.mxu0 %v3323
      %3888 = vmatpush.bf16.msra.mxu0 %v3291
      %3889 = vmatpush.bf16.msra.mxu0 %v3259
      %3890 = vmatmul.bf16.gmra.mxu0 %v3667
      %v3891 = vpop.f32.mrf.mxu0
      %v3892 = vadd.f32 0.0, %v3891
      %v3893 = vpop.f32.mrf.mxu0
      %3894 = vdwg.mxu0
      %3895 = vmatpush.bf16.msra.mxu0 0
      %3896 = vmatpush.bf16.msra.mxu0 %v3700
      %3897 = vmatpush.bf16.msra.mxu0 %v3420
      %3898 = vmatpush.bf16.msra.mxu0 %v3388
      %3899 = vmatpush.bf16.msra.mxu0 %v3356
      %3900 = vmatpush.bf16.msra.mxu0 %v3324
      %3901 = vmatpush.bf16.msra.mxu0 %v3292
      %3902 = vmatpush.bf16.msra.mxu0 %v3260
      %3903 = vmatmul.bf16.gmra.mxu0 %v3667
      %v3904 = vpop.f32.mrf.mxu0
      %v3905 = vadd.f32 0.0, %v3904
      %v3906 = vpop.f32.mrf.mxu0
      %3907 = vdwg.mxu0
      %3908 = vmatpush.bf16.msra.mxu0 0
      %3909 = vmatpush.bf16.msra.mxu0 %v3703
      %3910 = vmatpush.bf16.msra.mxu0 %v3421
      %3911 = vmatpush.bf16.msra.mxu0 %v3389
      %3912 = vmatpush.bf16.msra.mxu0 %v3357
      %3913 = vmatpush.bf16.msra.mxu0 %v3325
      %3914 = vmatpush.bf16.msra.mxu0 %v3293
      %3915 = vmatpush.bf16.msra.mxu0 %v3261
      %3916 = vmatmul.bf16.gmra.mxu0 %v3667
      %v3917 = vpop.f32.mrf.mxu0
      %v3918 = vadd.f32 0.0, %v3917
      %v3919 = vpop.f32.mrf.mxu0
      %3920 = vdwg.mxu0
      %3921 = vmatpush.bf16.msra.mxu0 0
      %3922 = vmatpush.bf16.msra.mxu0 %v3706
      %3923 = vmatpush.bf16.msra.mxu0 %v3422
      %3924 = vmatpush.bf16.msra.mxu0 %v3390
      %3925 = vmatpush.bf16.msra.mxu0 %v3358
      %3926 = vmatpush.bf16.msra.mxu0 %v3326
      %3927 = vmatpush.bf16.msra.mxu0 %v3294
      %3928 = vmatpush.bf16.msra.mxu0 %v3262
      %3929 = vmatmul.bf16.gmra.mxu0 %v3667
      %v3930 = vpop.f32.mrf.mxu0
      %v3931 = vadd.f32 0.0, %v3930
      %v3932 = vpop.f32.mrf.mxu0
      %3933 = vdwg.mxu0
      %3934 = vmatpush.bf16.msra.mxu0 0
      %3935 = vmatpush.bf16.msra.mxu0 %v3709
      %3936 = vmatpush.bf16.msra.mxu0 %v3423
      %3937 = vmatpush.bf16.msra.mxu0 %v3391
      %3938 = vmatpush.bf16.msra.mxu0 %v3359
      %3939 = vmatpush.bf16.msra.mxu0 %v3327
      %3940 = vmatpush.bf16.msra.mxu0 %v3295
      %3941 = vmatpush.bf16.msra.mxu0 %v3263
      %3942 = vmatmul.bf16.gmra.mxu0 %v3667
      %v3943 = vpop.f32.mrf.mxu0
      %v3944 = vadd.f32 0.0, %v3943
      %v3945 = vpop.f32.mrf.mxu0
      %3946 = vdwg.mxu0
      %3947 = vmatpush.bf16.msra.mxu0 0
      %3948 = vmatpush.bf16.msra.mxu0 %v3712
      %3949 = vmatpush.bf16.msra.mxu0 %v3424
      %3950 = vmatpush.bf16.msra.mxu0 %v3392
      %3951 = vmatpush.bf16.msra.mxu0 %v3360
      %3952 = vmatpush.bf16.msra.mxu0 %v3328
      %3953 = vmatpush.bf16.msra.mxu0 %v3296
      %3954 = vmatpush.bf16.msra.mxu0 %v3264
      %3955 = vmatmul.bf16.gmra.mxu0 %v3667
      %v3956 = vpop.f32.mrf.mxu0
      %v3957 = vadd.f32 0.0, %v3956
      %v3958 = vpop.f32.mrf.mxu0
      %3959 = vdwg.mxu0
      %3960 = vmatpush.bf16.msra.mxu0 0
      %3961 = vmatpush.bf16.msra.mxu0 %v3715
      %3962 = vmatpush.bf16.msra.mxu0 %v3425
      %3963 = vmatpush.bf16.msra.mxu0 %v3393
      %3964 = vmatpush.bf16.msra.mxu0 %v3361
      %3965 = vmatpush.bf16.msra.mxu0 %v3329
      %3966 = vmatpush.bf16.msra.mxu0 %v3297
      %3967 = vmatpush.bf16.msra.mxu0 %v3265
      %3968 = vmatmul.bf16.gmra.mxu0 %v3667
      %v3969 = vpop.f32.mrf.mxu0
      %v3970 = vadd.f32 0.0, %v3969
      %v3971 = vpop.f32.mrf.mxu0
      %3972 = vdwg.mxu0
      %3973 = vmatpush.bf16.msra.mxu0 0
      %3974 = vmatpush.bf16.msra.mxu0 %v3718
      %3975 = vmatpush.bf16.msra.mxu0 %v3426
      %3976 = vmatpush.bf16.msra.mxu0 %v3394
      %3977 = vmatpush.bf16.msra.mxu0 %v3362
      %3978 = vmatpush.bf16.msra.mxu0 %v3330
      %3979 = vmatpush.bf16.msra.mxu0 %v3298
      %3980 = vmatpush.bf16.msra.mxu0 %v3266
      %3981 = vmatmul.bf16.gmra.mxu0 %v3667
      %v3982 = vpop.f32.mrf.mxu0
      %v3983 = vadd.f32 0.0, %v3982
      %v3984 = vpop.f32.mrf.mxu0
      %3985 = vdwg.mxu0
      %3986 = vmatpush.bf16.msra.mxu0 0
      %3987 = vmatpush.bf16.msra.mxu0 %v3721
      %3988 = vmatpush.bf16.msra.mxu0 %v3427
      %3989 = vmatpush.bf16.msra.mxu0 %v3395
      %3990 = vmatpush.bf16.msra.mxu0 %v3363
      %3991 = vmatpush.bf16.msra.mxu0 %v3331
      %3992 = vmatpush.bf16.msra.mxu0 %v3299
      %3993 = vmatpush.bf16.msra.mxu0 %v3267
      %3994 = vmatmul.bf16.gmra.mxu0 %v3667
      %v3995 = vpop.f32.mrf.mxu0
      %v3996 = vadd.f32 0.0, %v3995
      %v3997 = vpop.f32.mrf.mxu0
      %3998 = vdwg.mxu0
      %3999 = vmatpush.bf16.msra.mxu0 0
      %4000 = vmatpush.bf16.msra.mxu0 %v3724
      %4001 = vmatpush.bf16.msra.mxu0 %v3428
      %4002 = vmatpush.bf16.msra.mxu0 %v3396
      %4003 = vmatpush.bf16.msra.mxu0 %v3364
      %4004 = vmatpush.bf16.msra.mxu0 %v3332
      %4005 = vmatpush.bf16.msra.mxu0 %v3300
      %4006 = vmatpush.bf16.msra.mxu0 %v3268
      %4007 = vmatmul.bf16.gmra.mxu0 %v3667
      %v4008 = vpop.f32.mrf.mxu0
      %v4009 = vadd.f32 0.0, %v4008
      %v4010 = vpop.f32.mrf.mxu0
      %4011 = vdwg.mxu0
      %4012 = vmatpush.bf16.msra.mxu0 0
      %4013 = vmatpush.bf16.msra.mxu0 %v3727
      %4014 = vmatpush.bf16.msra.mxu0 %v3429
      %4015 = vmatpush.bf16.msra.mxu0 %v3397
      %4016 = vmatpush.bf16.msra.mxu0 %v3365
      %4017 = vmatpush.bf16.msra.mxu0 %v3333
      %4018 = vmatpush.bf16.msra.mxu0 %v3301
      %4019 = vmatpush.bf16.msra.mxu0 %v3269
      %4020 = vmatmul.bf16.gmra.mxu0 %v3667
      %v4021 = vpop.f32.mrf.mxu0
      %v4022 = vadd.f32 0.0, %v4021
      %v4023 = vpop.f32.mrf.mxu0
      %4024 = vdwg.mxu0
      %4025 = vmatpush.bf16.msra.mxu0 0
      %4026 = vmatpush.bf16.msra.mxu0 %v3730
      %4027 = vmatpush.bf16.msra.mxu0 %v3430
      %4028 = vmatpush.bf16.msra.mxu0 %v3398
      %4029 = vmatpush.bf16.msra.mxu0 %v3366
      %4030 = vmatpush.bf16.msra.mxu0 %v3334
      %4031 = vmatpush.bf16.msra.mxu0 %v3302
      %4032 = vmatpush.bf16.msra.mxu0 %v3270
      %4033 = vmatmul.bf16.gmra.mxu0 %v3667
      %v4034 = vpop.f32.mrf.mxu0
      %v4035 = vadd.f32 0.0, %v4034
      %v4036 = vpop.f32.mrf.mxu0
      %4037 = vdwg.mxu0
      %4038 = vmatpush.bf16.msra.mxu0 0
      %4039 = vmatpush.bf16.msra.mxu0 %v3733
      %4040 = vmatpush.bf16.msra.mxu0 %v3431
      %4041 = vmatpush.bf16.msra.mxu0 %v3399
      %4042 = vmatpush.bf16.msra.mxu0 %v3367
      %4043 = vmatpush.bf16.msra.mxu0 %v3335
      %4044 = vmatpush.bf16.msra.mxu0 %v3303
      %4045 = vmatpush.bf16.msra.mxu0 %v3271
      %4046 = vmatmul.bf16.gmra.mxu0 %v3667
      %v4047 = vpop.f32.mrf.mxu0
      %v4048 = vadd.f32 0.0, %v4047
      %v4049 = vpop.f32.mrf.mxu0
      %4050 = vdwg.mxu0
      %4051 = vmatpush.bf16.msra.mxu0 0
      %4052 = vmatpush.bf16.msra.mxu0 %v3736
      %4053 = vmatpush.bf16.msra.mxu0 %v3432
      %4054 = vmatpush.bf16.msra.mxu0 %v3400
      %4055 = vmatpush.bf16.msra.mxu0 %v3368
      %4056 = vmatpush.bf16.msra.mxu0 %v3336
      %4057 = vmatpush.bf16.msra.mxu0 %v3304
      %4058 = vmatpush.bf16.msra.mxu0 %v3272
      %4059 = vmatmul.bf16.gmra.mxu0 %v3667
      %v4060 = vpop.f32.mrf.mxu0
      %v4061 = vadd.f32 0.0, %v4060
      %v4062 = vpop.f32.mrf.mxu0
      %4063 = vdwg.mxu0
      %4064 = vmatpush.bf16.msra.mxu0 0
      %4065 = vmatpush.bf16.msra.mxu0 %v3739
      %4066 = vmatpush.bf16.msra.mxu0 %v3433
      %4067 = vmatpush.bf16.msra.mxu0 %v3401
      %4068 = vmatpush.bf16.msra.mxu0 %v3369
      %4069 = vmatpush.bf16.msra.mxu0 %v3337
      %4070 = vmatpush.bf16.msra.mxu0 %v3305
      %4071 = vmatpush.bf16.msra.mxu0 %v3273
      %4072 = vmatmul.bf16.gmra.mxu0 %v3667
      %v4073 = vpop.f32.mrf.mxu0
      %v4074 = vadd.f32 0.0, %v4073
      %v4075 = vpop.f32.mrf.mxu0
      %4076 = vdwg.mxu0
      %4077 = vmatpush.bf16.msra.mxu0 0
      %4078 = vmatpush.bf16.msra.mxu0 %v3742
      %4079 = vmatpush.bf16.msra.mxu0 %v3434
      %4080 = vmatpush.bf16.msra.mxu0 %v3402
      %4081 = vmatpush.bf16.msra.mxu0 %v3370
      %4082 = vmatpush.bf16.msra.mxu0 %v3338
      %4083 = vmatpush.bf16.msra.mxu0 %v3306
      %4084 = vmatpush.bf16.msra.mxu0 %v3274
      %4085 = vmatmul.bf16.gmra.mxu0 %v3667
      %v4086 = vpop.f32.mrf.mxu0
      %v4087 = vadd.f32 0.0, %v4086
      %v4088 = vpop.f32.mrf.mxu0
      %4089 = vdwg.mxu0
      %4090 = vmatpush.bf16.msra.mxu0 0
      %4091 = vmatpush.bf16.msra.mxu0 %v3745
      %4092 = vmatpush.bf16.msra.mxu0 %v3435
      %4093 = vmatpush.bf16.msra.mxu0 %v3403
      %4094 = vmatpush.bf16.msra.mxu0 %v3371
      %4095 = vmatpush.bf16.msra.mxu0 %v3339
      %4096 = vmatpush.bf16.msra.mxu0 %v3307
      %4097 = vmatpush.bf16.msra.mxu0 %v3275
      %4098 = vmatmul.bf16.gmra.mxu0 %v3667
      %v4099 = vpop.f32.mrf.mxu0
      %v4100 = vadd.f32 0.0, %v4099
      %v4101 = vpop.f32.mrf.mxu0
      %4102 = vdwg.mxu0
      %4103 = vmatpush.bf16.msra.mxu0 0
      %4104 = vmatpush.bf16.msra.mxu0 %v3748
      %4105 = vmatpush.bf16.msra.mxu0 %v3436
      %4106 = vmatpush.bf16.msra.mxu0 %v3404
      %4107 = vmatpush.bf16.msra.mxu0 %v3372
      %4108 = vmatpush.bf16.msra.mxu0 %v3340
      %4109 = vmatpush.bf16.msra.mxu0 %v3308
      %4110 = vmatpush.bf16.msra.mxu0 %v3276
      %4111 = vmatmul.bf16.gmra.mxu0 %v3667
      %v4112 = vpop.f32.mrf.mxu0
      %v4113 = vadd.f32 0.0, %v4112
      %v4114 = vpop.f32.mrf.mxu0
      %4115 = vdwg.mxu0
      %4116 = vmatpush.bf16.msra.mxu0 0
      %4117 = vmatpush.bf16.msra.mxu0 %v3751
      %4118 = vmatpush.bf16.msra.mxu0 %v3437
      %4119 = vmatpush.bf16.msra.mxu0 %v3405
      %4120 = vmatpush.bf16.msra.mxu0 %v3373
      %4121 = vmatpush.bf16.msra.mxu0 %v3341
      %4122 = vmatpush.bf16.msra.mxu0 %v3309
      %4123 = vmatpush.bf16.msra.mxu0 %v3277
      %4124 = vmatmul.bf16.gmra.mxu0 %v3667
      %v4125 = vpop.f32.mrf.mxu0
      %v4126 = vadd.f32 0.0, %v4125
      %v4127 = vpop.f32.mrf.mxu0
      %4128 = vdwg.mxu0
      %4129 = vmatpush.bf16.msra.mxu0 0
      %4130 = vmatpush.bf16.msra.mxu0 %v3754
      %4131 = vmatpush.bf16.msra.mxu0 %v3438
      %4132 = vmatpush.bf16.msra.mxu0 %v3406
      %4133 = vmatpush.bf16.msra.mxu0 %v3374
      %4134 = vmatpush.bf16.msra.mxu0 %v3342
      %4135 = vmatpush.bf16.msra.mxu0 %v3310
      %4136 = vmatpush.bf16.msra.mxu0 %v3278
      %4137 = vmatmul.bf16.gmra.mxu0 %v3667
      %v4138 = vpop.f32.mrf.mxu0
      %v4139 = vadd.f32 0.0, %v4138
      %v4140 = vpop.f32.mrf.mxu0
      %4141 = vdwg.mxu0
      %4142 = vmatpush.bf16.msra.mxu0 0
      %4143 = vmatpush.bf16.msra.mxu0 %v3757
      %4144 = vmatpush.bf16.msra.mxu0 %v3439
      %4145 = vmatpush.bf16.msra.mxu0 %v3407
      %4146 = vmatpush.bf16.msra.mxu0 %v3375
      %4147 = vmatpush.bf16.msra.mxu0 %v3343
      %4148 = vmatpush.bf16.msra.mxu0 %v3311
      %4149 = vmatpush.bf16.msra.mxu0 %v3279
      %4150 = vmatmul.bf16.gmra.mxu0 %v3667
      %v4151 = vpop.f32.mrf.mxu0
      %v4152 = vadd.f32 0.0, %v4151
      %v4153 = vpop.f32.mrf.mxu0
      %4154 = vdwg.mxu0
      %4155 = vmatpush.bf16.msra.mxu0 0
      %4156 = vmatpush.bf16.msra.mxu0 %v3760
      %4157 = vmatpush.bf16.msra.mxu0 %v3440
      %4158 = vmatpush.bf16.msra.mxu0 %v3408
      %4159 = vmatpush.bf16.msra.mxu0 %v3376
      %4160 = vmatpush.bf16.msra.mxu0 %v3344
      %4161 = vmatpush.bf16.msra.mxu0 %v3312
      %4162 = vmatpush.bf16.msra.mxu0 %v3280
      %4163 = vmatmul.bf16.gmra.mxu0 %v3667
      %v4164 = vpop.f32.mrf.mxu0
      %v4165 = vadd.f32 0.0, %v4164
      %v4166 = vpop.f32.mrf.mxu0
      %4167 = vdwg.mxu0
      %4168 = vmatpush.bf16.msra.mxu0 0
      %4169 = vmatpush.bf16.msra.mxu0 %v3763
      %4170 = vmatpush.bf16.msra.mxu0 %v3441
      %4171 = vmatpush.bf16.msra.mxu0 %v3409
      %4172 = vmatpush.bf16.msra.mxu0 %v3377
      %4173 = vmatpush.bf16.msra.mxu0 %v3345
      %4174 = vmatpush.bf16.msra.mxu0 %v3313
      %4175 = vmatpush.bf16.msra.mxu0 %v3281
      %4176 = vmatmul.bf16.gmra.mxu0 %v3667
      %v4177 = vpop.f32.mrf.mxu0
      %v4178 = vadd.f32 0.0, %v4177
      %v4179 = vpop.f32.mrf.mxu0
      %4180 = vdwg.mxu0
      %v4181 = vadd.f32 %v2010, %v3775
      %v4182 = vadd.f32 %v2023, %v3788
      %v4183 = vadd.f32 %v2036, %v3801
      %v4184 = vadd.f32 %v2049, %v3814
      %v4185 = vadd.f32 %v2062, %v3827
      %v4186 = vadd.f32 %v2075, %v3840
      %v4187 = vadd.f32 %v2088, %v3853
      %v4188 = vadd.f32 %v2101, %v3866
      %v4189 = vadd.f32 %v2114, %v3879
      %v4190 = vadd.f32 %v2127, %v3892
      %v4191 = vadd.f32 %v2140, %v3905
      %v4192 = vadd.f32 %v2153, %v3918
      %v4193 = vadd.f32 %v2166, %v3931
      %v4194 = vadd.f32 %v2179, %v3944
      %v4195 = vadd.f32 %v2192, %v3957
      %v4196 = vadd.f32 %v2205, %v3970
      %v4197 = vadd.f32 %v2218, %v3983
      %v4198 = vadd.f32 %v2231, %v3996
      %v4199 = vadd.f32 %v2244, %v4009
      %v4200 = vadd.f32 %v2257, %v4022
      %v4201 = vadd.f32 %v2270, %v4035
      %v4202 = vadd.f32 %v2283, %v4048
      %v4203 = vadd.f32 %v2296, %v4061
      %v4204 = vadd.f32 %v2309, %v4074
      %v4205 = vadd.f32 %v2322, %v4087
      %v4206 = vadd.f32 %v2335, %v4100
      %v4207 = vadd.f32 %v2348, %v4113
      %v4208 = vadd.f32 %v2361, %v4126
      %v4209 = vadd.f32 %v2374, %v4139
      %v4210 = vadd.f32 %v2387, %v4152
      %v4211 = vadd.f32 %v2400, %v4165
      %v4212 = vadd.f32 %v2413, %v4178
      %s4213 = scalar_lea.vmem %s1, 12
      %v4214 = vld [vmem:[%s4213] sm:$0xf]
      %v4215 = vld [vmem:[%s138 + $0x18] sm:$0xff]
      %v4216 = vld [vmem:[%s138 + $0x20] sm:$0xff]
      %v4217 = vld [vmem:[%s138 + $0x28] sm:$0xff]
      %v4218 = vld [vmem:[%s138 + $0x30] sm:$0xff]
      %v4219 = vld [vmem:[%s138 + $0x38] sm:$0xff]
      %v4220 = vld [vmem:[%s138 + $0x40] sm:$0xff]
      %v4221 = vld [vmem:[%s138 + $0x48] sm:$0xff]
      %v4222 = vld [vmem:[%s138 + $0x50] sm:$0xff]
      %v4223 = vld [vmem:[%s138 + $0x58] sm:$0xff]
      %v4224 = vld [vmem:[%s138 + $0x60] sm:$0xff]
      %v4225 = vld [vmem:[%s138 + $0x68] sm:$0xff]
      %v4226 = vld [vmem:[%s138 + $0x70] sm:$0xff]
      %v4227 = vld [vmem:[%s138 + $0x78] sm:$0xff]
      %v4228 = vld [vmem:[%s138 + $0x80] sm:$0xff]
      %v4229 = vld [vmem:[%s138 + $0x88] sm:$0xff]
      %v4230 = vld [vmem:[%s138 + $0x90] sm:$0xff]
      %v4231 = vld [vmem:[%s138 + $0xb8] sm:$0xff]
      %v4232 = vld [vmem:[%s138 + $0xc0] sm:$0xff]
      %v4233 = vld [vmem:[%s138 + $0xc8] sm:$0xff]
      %v4234 = vld [vmem:[%s138 + $0xd0] sm:$0xff]
      %v4235 = vld [vmem:[%s138 + $0xd8] sm:$0xff]
      %v4236 = vld [vmem:[%s138 + $0xe0] sm:$0xff]
      %v4237 = vld [vmem:[%s138 + $0xe8] sm:$0xff]
      %v4238 = vld [vmem:[%s138 + $0xf0] sm:$0xff]
      %v4239 = vld [vmem:[%s138 + $0xf8] sm:$0xff]
      %v4240 = vld [vmem:[%s138 + $0x100] sm:$0xff]
      %v4241 = vld [vmem:[%s138 + $0x108] sm:$0xff]
      %v4242 = vld [vmem:[%s138 + $0x110] sm:$0xff]
      %v4243 = vld [vmem:[%s138 + $0x118] sm:$0xff]
      %v4244 = vld [vmem:[%s138 + $0x120] sm:$0xff]
      %v4245 = vld [vmem:[%s138 + $0x128] sm:$0xff]
      %v4246 = vld [vmem:[%s138 + $0x130] sm:$0xff]
      %v4247 = vld [vmem:[%s138 + $0x158] sm:$0xff]
      %v4248 = vld [vmem:[%s138 + $0x160] sm:$0xff]
      %v4249 = vld [vmem:[%s138 + $0x168] sm:$0xff]
      %v4250 = vld [vmem:[%s138 + $0x170] sm:$0xff]
      %v4251 = vld [vmem:[%s138 + $0x178] sm:$0xff]
      %v4252 = vld [vmem:[%s138 + $0x180] sm:$0xff]
      %v4253 = vld [vmem:[%s138 + $0x188] sm:$0xff]
      %v4254 = vld [vmem:[%s138 + $0x190] sm:$0xff]
      %v4255 = vld [vmem:[%s138 + $0x198] sm:$0xff]
      %v4256 = vld [vmem:[%s138 + $0x1a0] sm:$0xff]
      %v4257 = vld [vmem:[%s138 + $0x1a8] sm:$0xff]
      %v4258 = vld [vmem:[%s138 + $0x1b0] sm:$0xff]
      %v4259 = vld [vmem:[%s138 + $0x1b8] sm:$0xff]
      %v4260 = vld [vmem:[%s138 + $0x1c0] sm:$0xff]
      %v4261 = vld [vmem:[%s138 + $0x1c8] sm:$0xff]
      %v4262 = vld [vmem:[%s138 + $0x1d0] sm:$0xff]
      %v4263 = vld [vmem:[%s138 + $0x1f8] sm:$0xff]
      %v4264 = vld [vmem:[%s138 + $0x200] sm:$0xff]
      %v4265 = vld [vmem:[%s138 + $0x208] sm:$0xff]
      %v4266 = vld [vmem:[%s138 + $0x210] sm:$0xff]
      %v4267 = vld [vmem:[%s138 + $0x218] sm:$0xff]
      %v4268 = vld [vmem:[%s138 + $0x220] sm:$0xff]
      %v4269 = vld [vmem:[%s138 + $0x228] sm:$0xff]
      %v4270 = vld [vmem:[%s138 + $0x230] sm:$0xff]
      %v4271 = vld [vmem:[%s138 + $0x238] sm:$0xff]
      %v4272 = vld [vmem:[%s138 + $0x240] sm:$0xff]
      %v4273 = vld [vmem:[%s138 + $0x248] sm:$0xff]
      %v4274 = vld [vmem:[%s138 + $0x250] sm:$0xff]
      %v4275 = vld [vmem:[%s138 + $0x258] sm:$0xff]
      %v4276 = vld [vmem:[%s138 + $0x260] sm:$0xff]
      %v4277 = vld [vmem:[%s138 + $0x268] sm:$0xff]
      %v4278 = vld [vmem:[%s138 + $0x270] sm:$0xff]
      %v4279 = vld [vmem:[%s138 + $0x298] sm:$0xff]
      %v4280 = vld [vmem:[%s138 + $0x2a0] sm:$0xff]
      %v4281 = vld [vmem:[%s138 + $0x2a8] sm:$0xff]
      %v4282 = vld [vmem:[%s138 + $0x2b0] sm:$0xff]
      %v4283 = vld [vmem:[%s138 + $0x2b8] sm:$0xff]
      %v4284 = vld [vmem:[%s138 + $0x2c0] sm:$0xff]
      %v4285 = vld [vmem:[%s138 + $0x2c8] sm:$0xff]
      %v4286 = vld [vmem:[%s138 + $0x2d0] sm:$0xff]
      %v4287 = vld [vmem:[%s138 + $0x2d8] sm:$0xff]
      %v4288 = vld [vmem:[%s138 + $0x2e0] sm:$0xff]
      %v4289 = vld [vmem:[%s138 + $0x2e8] sm:$0xff]
      %v4290 = vld [vmem:[%s138 + $0x2f0] sm:$0xff]
      %v4291 = vld [vmem:[%s138 + $0x2f8] sm:$0xff]
      %v4292 = vld [vmem:[%s138 + $0x300] sm:$0xff]
      %v4293 = vld [vmem:[%s138 + $0x308] sm:$0xff]
      %v4294 = vld [vmem:[%s138 + $0x310] sm:$0xff]
      %v4295 = vld [vmem:[%s138 + $0x338] sm:$0xff]
      %v4296 = vld [vmem:[%s138 + $0x340] sm:$0xff]
      %v4297 = vld [vmem:[%s138 + $0x348] sm:$0xff]
      %v4298 = vld [vmem:[%s138 + $0x350] sm:$0xff]
      %v4299 = vld [vmem:[%s138 + $0x358] sm:$0xff]
      %v4300 = vld [vmem:[%s138 + $0x360] sm:$0xff]
      %v4301 = vld [vmem:[%s138 + $0x368] sm:$0xff]
      %v4302 = vld [vmem:[%s138 + $0x370] sm:$0xff]
      %v4303 = vld [vmem:[%s138 + $0x378] sm:$0xff]
      %v4304 = vld [vmem:[%s138 + $0x380] sm:$0xff]
      %v4305 = vld [vmem:[%s138 + $0x388] sm:$0xff]
      %v4306 = vld [vmem:[%s138 + $0x390] sm:$0xff]
      %v4307 = vld [vmem:[%s138 + $0x398] sm:$0xff]
      %v4308 = vld [vmem:[%s138 + $0x3a0] sm:$0xff]
      %v4309 = vld [vmem:[%s138 + $0x3a8] sm:$0xff]
      %v4310 = vld [vmem:[%s138 + $0x3b0] sm:$0xff]
      %v4311 = vld [vmem:[%s138 + $0x3d8] sm:$0xff]
      %v4312 = vld [vmem:[%s138 + $0x3e0] sm:$0xff]
      %v4313 = vld [vmem:[%s138 + $0x3e8] sm:$0xff]
      %v4314 = vld [vmem:[%s138 + $0x3f0] sm:$0xff]
      %v4315 = vld [vmem:[%s138 + $0x3f8] sm:$0xff]
      %v4316 = vld [vmem:[%s138 + $0x400] sm:$0xff]
      %v4317 = vld [vmem:[%s138 + $0x408] sm:$0xff]
      %v4318 = vld [vmem:[%s138 + $0x410] sm:$0xff]
      %v4319 = vld [vmem:[%s138 + $0x418] sm:$0xff]
      %v4320 = vld [vmem:[%s138 + $0x420] sm:$0xff]
      %v4321 = vld [vmem:[%s138 + $0x428] sm:$0xff]
      %v4322 = vld [vmem:[%s138 + $0x430] sm:$0xff]
      %v4323 = vld [vmem:[%s138 + $0x438] sm:$0xff]
      %v4324 = vld [vmem:[%s138 + $0x440] sm:$0xff]
      %v4325 = vld [vmem:[%s138 + $0x448] sm:$0xff]
      %v4326 = vld [vmem:[%s138 + $0x450] sm:$0xff]
      %v4327 = vld [vmem:[%s138 + $0x478] sm:$0xff]
      %v4328 = vld [vmem:[%s138 + $0x480] sm:$0xff]
      %v4329 = vld [vmem:[%s138 + $0x488] sm:$0xff]
      %v4330 = vld [vmem:[%s138 + $0x490] sm:$0xff]
      %v4331 = vld [vmem:[%s138 + $0x498] sm:$0xff]
      %v4332 = vld [vmem:[%s138 + $0x4a0] sm:$0xff]
      %v4333 = vld [vmem:[%s138 + $0x4a8] sm:$0xff]
      %v4334 = vld [vmem:[%s138 + $0x4b0] sm:$0xff]
      %v4335 = vld [vmem:[%s138 + $0x4b8] sm:$0xff]
      %v4336 = vld [vmem:[%s138 + $0x4c0] sm:$0xff]
      %v4337 = vld [vmem:[%s138 + $0x4c8] sm:$0xff]
      %v4338 = vld [vmem:[%s138 + $0x4d0] sm:$0xff]
      %v4339 = vld [vmem:[%s138 + $0x4d8] sm:$0xff]
      %v4340 = vld [vmem:[%s138 + $0x4e0] sm:$0xff]
      %v4341 = vld [vmem:[%s138 + $0x4e8] sm:$0xff]
      %v4342 = vld [vmem:[%s138 + $0x4f0] sm:$0xff]
      %v4343 = vld [vmem:[%s138 + $0x518] sm:$0xff]
      %v4344 = vld [vmem:[%s138 + $0x520] sm:$0xff]
      %v4345 = vld [vmem:[%s138 + $0x528] sm:$0xff]
      %v4346 = vld [vmem:[%s138 + $0x530] sm:$0xff]
      %v4347 = vld [vmem:[%s138 + $0x538] sm:$0xff]
      %v4348 = vld [vmem:[%s138 + $0x540] sm:$0xff]
      %v4349 = vld [vmem:[%s138 + $0x548] sm:$0xff]
      %v4350 = vld [vmem:[%s138 + $0x550] sm:$0xff]
      %v4351 = vld [vmem:[%s138 + $0x558] sm:$0xff]
      %v4352 = vld [vmem:[%s138 + $0x560] sm:$0xff]
      %v4353 = vld [vmem:[%s138 + $0x568] sm:$0xff]
      %v4354 = vld [vmem:[%s138 + $0x570] sm:$0xff]
      %v4355 = vld [vmem:[%s138 + $0x578] sm:$0xff]
      %v4356 = vld [vmem:[%s138 + $0x580] sm:$0xff]
      %v4357 = vld [vmem:[%s138 + $0x588] sm:$0xff]
      %v4358 = vld [vmem:[%s138 + $0x590] sm:$0xff]
      %v4359 = vld [vmem:[%s138 + $0x5b8] sm:$0xff]
      %v4360 = vld [vmem:[%s138 + $0x5c0] sm:$0xff]
      %v4361 = vld [vmem:[%s138 + $0x5c8] sm:$0xff]
      %v4362 = vld [vmem:[%s138 + $0x5d0] sm:$0xff]
      %v4363 = vld [vmem:[%s138 + $0x5d8] sm:$0xff]
      %v4364 = vld [vmem:[%s138 + $0x5e0] sm:$0xff]
      %v4365 = vld [vmem:[%s138 + $0x5e8] sm:$0xff]
      %v4366 = vld [vmem:[%s138 + $0x5f0] sm:$0xff]
      %v4367 = vld [vmem:[%s138 + $0x5f8] sm:$0xff]
      %v4368 = vld [vmem:[%s138 + $0x600] sm:$0xff]
      %v4369 = vld [vmem:[%s138 + $0x608] sm:$0xff]
      %v4370 = vld [vmem:[%s138 + $0x610] sm:$0xff]
      %v4371 = vld [vmem:[%s138 + $0x618] sm:$0xff]
      %v4372 = vld [vmem:[%s138 + $0x620] sm:$0xff]
      %v4373 = vld [vmem:[%s138 + $0x628] sm:$0xff]
      %v4374 = vld [vmem:[%s138 + $0x630] sm:$0xff]
      %v4375 = vld [vmem:[%s138 + $0x658] sm:$0xff]
      %v4376 = vld [vmem:[%s138 + $0x660] sm:$0xff]
      %v4377 = vld [vmem:[%s138 + $0x668] sm:$0xff]
      %v4378 = vld [vmem:[%s138 + $0x670] sm:$0xff]
      %v4379 = vld [vmem:[%s138 + $0x678] sm:$0xff]
      %v4380 = vld [vmem:[%s138 + $0x680] sm:$0xff]
      %v4381 = vld [vmem:[%s138 + $0x688] sm:$0xff]
      %v4382 = vld [vmem:[%s138 + $0x690] sm:$0xff]
      %v4383 = vld [vmem:[%s138 + $0x698] sm:$0xff]
      %v4384 = vld [vmem:[%s138 + $0x6a0] sm:$0xff]
      %v4385 = vld [vmem:[%s138 + $0x6a8] sm:$0xff]
      %v4386 = vld [vmem:[%s138 + $0x6b0] sm:$0xff]
      %v4387 = vld [vmem:[%s138 + $0x6b8] sm:$0xff]
      %v4388 = vld [vmem:[%s138 + $0x6c0] sm:$0xff]
      %v4389 = vld [vmem:[%s138 + $0x6c8] sm:$0xff]
      %v4390 = vld [vmem:[%s138 + $0x6d0] sm:$0xff]
      %v4391 = vld [vmem:[%s138 + $0x6f8] sm:$0xff]
      %v4392 = vld [vmem:[%s138 + $0x700] sm:$0xff]
      %v4393 = vld [vmem:[%s138 + $0x708] sm:$0xff]
      %v4394 = vld [vmem:[%s138 + $0x710] sm:$0xff]
      %v4395 = vld [vmem:[%s138 + $0x718] sm:$0xff]
      %v4396 = vld [vmem:[%s138 + $0x720] sm:$0xff]
      %v4397 = vld [vmem:[%s138 + $0x728] sm:$0xff]
      %v4398 = vld [vmem:[%s138 + $0x730] sm:$0xff]
      %v4399 = vld [vmem:[%s138 + $0x738] sm:$0xff]
      %v4400 = vld [vmem:[%s138 + $0x740] sm:$0xff]
      %v4401 = vld [vmem:[%s138 + $0x748] sm:$0xff]
      %v4402 = vld [vmem:[%s138 + $0x750] sm:$0xff]
      %v4403 = vld [vmem:[%s138 + $0x758] sm:$0xff]
      %v4404 = vld [vmem:[%s138 + $0x760] sm:$0xff]
      %v4405 = vld [vmem:[%s138 + $0x768] sm:$0xff]
      %v4406 = vld [vmem:[%s138 + $0x770] sm:$0xff]
      %v4407 = vld [vmem:[%s138 + $0x798] sm:$0x33]
      %v4408 = vld [vmem:[%s138 + $0x7a0] sm:$0x33]
      %v4409 = vld [vmem:[%s138 + $0x7a8] sm:$0x33]
      %v4410 = vld [vmem:[%s138 + $0x7b0] sm:$0x33]
      %v4411 = vld [vmem:[%s138 + $0x7b8] sm:$0x33]
      %v4412 = vld [vmem:[%s138 + $0x7c0] sm:$0x33]
      %v4413 = vld [vmem:[%s138 + $0x7c8] sm:$0x33]
      %v4414 = vld [vmem:[%s138 + $0x7d0] sm:$0x33]
      %v4415 = vld [vmem:[%s138 + $0x7d8] sm:$0x33]
      %v4416 = vld [vmem:[%s138 + $0x7e0] sm:$0x33]
      %v4417 = vld [vmem:[%s138 + $0x7e8] sm:$0x33]
      %v4418 = vld [vmem:[%s138 + $0x7f0] sm:$0x33]
      %v4419 = vld [vmem:[%s138 + $0x7f8] sm:$0x33]
      %v4420 = vld [vmem:[%s138 + $0x800] sm:$0x33]
      %v4421 = vld [vmem:[%s138 + $0x808] sm:$0x33]
      %v4422 = vld [vmem:[%s138 + $0x810] sm:$0x33]
      %v4631 = vunpack.c.l.b16 %v4215
      %v4632 = vunpack.c.h.b16 %v4215
      %v4633 = vunpack.c.l.b16 %v4216
      %v4634 = vunpack.c.h.b16 %v4216
      %v4635 = vunpack.c.l.b16 %v4217
      %v4636 = vunpack.c.h.b16 %v4217
      %v4637 = vunpack.c.l.b16 %v4218
      %v4638 = vunpack.c.h.b16 %v4218
      %v4639 = vunpack.c.l.b16 %v4219
      %v4640 = vunpack.c.h.b16 %v4219
      %v4641 = vunpack.c.l.b16 %v4220
      %v4642 = vunpack.c.h.b16 %v4220
      %v4643 = vunpack.c.l.b16 %v4221
      %v4644 = vunpack.c.h.b16 %v4221
      %v4645 = vunpack.c.l.b16 %v4222
      %v4646 = vunpack.c.h.b16 %v4222
      %v4647 = vunpack.c.l.b16 %v4223
      %v4648 = vunpack.c.h.b16 %v4223
      %v4649 = vunpack.c.l.b16 %v4224
      %v4650 = vunpack.c.h.b16 %v4224
      %v4651 = vunpack.c.l.b16 %v4225
      %v4652 = vunpack.c.h.b16 %v4225
      %v4653 = vunpack.c.l.b16 %v4226
      %v4654 = vunpack.c.h.b16 %v4226
      %v4655 = vunpack.c.l.b16 %v4227
      %v4656 = vunpack.c.h.b16 %v4227
      %v4657 = vunpack.c.l.b16 %v4228
      %v4658 = vunpack.c.h.b16 %v4228
      %v4659 = vunpack.c.l.b16 %v4229
      %v4660 = vunpack.c.h.b16 %v4229
      %v4661 = vunpack.c.l.b16 %v4230
      %v4662 = vunpack.c.h.b16 %v4230
      %v4663 = vunpack.c.l.b16 %v4231
      %v4664 = vunpack.c.h.b16 %v4231
      %v4665 = vunpack.c.l.b16 %v4232
      %v4666 = vunpack.c.h.b16 %v4232
      %v4667 = vunpack.c.l.b16 %v4233
      %v4668 = vunpack.c.h.b16 %v4233
      %v4669 = vunpack.c.l.b16 %v4234
      %v4670 = vunpack.c.h.b16 %v4234
      %v4671 = vunpack.c.l.b16 %v4235
      %v4672 = vunpack.c.h.b16 %v4235
      %v4673 = vunpack.c.l.b16 %v4236
      %v4674 = vunpack.c.h.b16 %v4236
      %v4675 = vunpack.c.l.b16 %v4237
      %v4676 = vunpack.c.h.b16 %v4237
      %v4677 = vunpack.c.l.b16 %v4238
      %v4678 = vunpack.c.h.b16 %v4238
      %v4679 = vunpack.c.l.b16 %v4239
      %v4680 = vunpack.c.h.b16 %v4239
      %v4681 = vunpack.c.l.b16 %v4240
      %v4682 = vunpack.c.h.b16 %v4240
      %v4683 = vunpack.c.l.b16 %v4241
      %v4684 = vunpack.c.h.b16 %v4241
      %v4685 = vunpack.c.l.b16 %v4242
      %v4686 = vunpack.c.h.b16 %v4242
      %v4687 = vunpack.c.l.b16 %v4243
      %v4688 = vunpack.c.h.b16 %v4243
      %v4689 = vunpack.c.l.b16 %v4244
      %v4690 = vunpack.c.h.b16 %v4244
      %v4691 = vunpack.c.l.b16 %v4245
      %v4692 = vunpack.c.h.b16 %v4245
      %v4693 = vunpack.c.l.b16 %v4246
      %v4694 = vunpack.c.h.b16 %v4246
      %v4695 = vunpack.c.l.b16 %v4247
      %v4696 = vunpack.c.h.b16 %v4247
      %v4697 = vunpack.c.l.b16 %v4248
      %v4698 = vunpack.c.h.b16 %v4248
      %v4699 = vunpack.c.l.b16 %v4249
      %v4700 = vunpack.c.h.b16 %v4249
      %v4701 = vunpack.c.l.b16 %v4250
      %v4702 = vunpack.c.h.b16 %v4250
      %v4703 = vunpack.c.l.b16 %v4251
      %v4704 = vunpack.c.h.b16 %v4251
      %v4705 = vunpack.c.l.b16 %v4252
      %v4706 = vunpack.c.h.b16 %v4252
      %v4707 = vunpack.c.l.b16 %v4253
      %v4708 = vunpack.c.h.b16 %v4253
      %v4709 = vunpack.c.l.b16 %v4254
      %v4710 = vunpack.c.h.b16 %v4254
      %v4711 = vunpack.c.l.b16 %v4255
      %v4712 = vunpack.c.h.b16 %v4255
      %v4713 = vunpack.c.l.b16 %v4256
      %v4714 = vunpack.c.h.b16 %v4256
      %v4715 = vunpack.c.l.b16 %v4257
      %v4716 = vunpack.c.h.b16 %v4257
      %v4717 = vunpack.c.l.b16 %v4258
      %v4718 = vunpack.c.h.b16 %v4258
      %v4719 = vunpack.c.l.b16 %v4259
      %v4720 = vunpack.c.h.b16 %v4259
      %v4721 = vunpack.c.l.b16 %v4260
      %v4722 = vunpack.c.h.b16 %v4260
      %v4723 = vunpack.c.l.b16 %v4261
      %v4724 = vunpack.c.h.b16 %v4261
      %v4725 = vunpack.c.l.b16 %v4262
      %v4726 = vunpack.c.h.b16 %v4262
      %v4727 = vunpack.c.l.b16 %v4263
      %v4728 = vunpack.c.h.b16 %v4263
      %v4729 = vunpack.c.l.b16 %v4264
      %v4730 = vunpack.c.h.b16 %v4264
      %v4731 = vunpack.c.l.b16 %v4265
      %v4732 = vunpack.c.h.b16 %v4265
      %v4733 = vunpack.c.l.b16 %v4266
      %v4734 = vunpack.c.h.b16 %v4266
      %v4735 = vunpack.c.l.b16 %v4267
      %v4736 = vunpack.c.h.b16 %v4267
      %v4737 = vunpack.c.l.b16 %v4268
      %v4738 = vunpack.c.h.b16 %v4268
      %v4739 = vunpack.c.l.b16 %v4269
      %v4740 = vunpack.c.h.b16 %v4269
      %v4741 = vunpack.c.l.b16 %v4270
      %v4742 = vunpack.c.h.b16 %v4270
      %v4743 = vunpack.c.l.b16 %v4271
      %v4744 = vunpack.c.h.b16 %v4271
      %v4745 = vunpack.c.l.b16 %v4272
      %v4746 = vunpack.c.h.b16 %v4272
      %v4747 = vunpack.c.l.b16 %v4273
      %v4748 = vunpack.c.h.b16 %v4273
      %v4749 = vunpack.c.l.b16 %v4274
      %v4750 = vunpack.c.h.b16 %v4274
      %v4751 = vunpack.c.l.b16 %v4275
      %v4752 = vunpack.c.h.b16 %v4275
      %v4753 = vunpack.c.l.b16 %v4276
      %v4754 = vunpack.c.h.b16 %v4276
      %v4755 = vunpack.c.l.b16 %v4277
      %v4756 = vunpack.c.h.b16 %v4277
      %v4757 = vunpack.c.l.b16 %v4278
      %v4758 = vunpack.c.h.b16 %v4278
      %v4759 = vunpack.c.l.b16 %v4279
      %v4760 = vunpack.c.h.b16 %v4279
      %v4761 = vunpack.c.l.b16 %v4280
      %v4762 = vunpack.c.h.b16 %v4280
      %v4763 = vunpack.c.l.b16 %v4281
      %v4764 = vunpack.c.h.b16 %v4281
      %v4765 = vunpack.c.l.b16 %v4282
      %v4766 = vunpack.c.h.b16 %v4282
      %v4767 = vunpack.c.l.b16 %v4283
      %v4768 = vunpack.c.h.b16 %v4283
      %v4769 = vunpack.c.l.b16 %v4284
      %v4770 = vunpack.c.h.b16 %v4284
      %v4771 = vunpack.c.l.b16 %v4285
      %v4772 = vunpack.c.h.b16 %v4285
      %v4773 = vunpack.c.l.b16 %v4286
      %v4774 = vunpack.c.h.b16 %v4286
      %v4775 = vunpack.c.l.b16 %v4287
      %v4776 = vunpack.c.h.b16 %v4287
      %v4777 = vunpack.c.l.b16 %v4288
      %v4778 = vunpack.c.h.b16 %v4288
      %v4779 = vunpack.c.l.b16 %v4289
      %v4780 = vunpack.c.h.b16 %v4289
      %v4781 = vunpack.c.l.b16 %v4290
      %v4782 = vunpack.c.h.b16 %v4290
      %v4783 = vunpack.c.l.b16 %v4291
      %v4784 = vunpack.c.h.b16 %v4291
      %v4785 = vunpack.c.l.b16 %v4292
      %v4786 = vunpack.c.h.b16 %v4292
      %v4787 = vunpack.c.l.b16 %v4293
      %v4788 = vunpack.c.h.b16 %v4293
      %v4789 = vunpack.c.l.b16 %v4294
      %v4790 = vunpack.c.h.b16 %v4294
      %v4791 = vunpack.c.l.b16 %v4295
      %v4792 = vunpack.c.h.b16 %v4295
      %v4793 = vunpack.c.l.b16 %v4296
      %v4794 = vunpack.c.h.b16 %v4296
      %v4795 = vunpack.c.l.b16 %v4297
      %v4796 = vunpack.c.h.b16 %v4297
      %v4797 = vunpack.c.l.b16 %v4298
      %v4798 = vunpack.c.h.b16 %v4298
      %v4799 = vunpack.c.l.b16 %v4299
      %v4800 = vunpack.c.h.b16 %v4299
      %v4801 = vunpack.c.l.b16 %v4300
      %v4802 = vunpack.c.h.b16 %v4300
      %v4803 = vunpack.c.l.b16 %v4301
      %v4804 = vunpack.c.h.b16 %v4301
      %v4805 = vunpack.c.l.b16 %v4302
      %v4806 = vunpack.c.h.b16 %v4302
      %v4807 = vunpack.c.l.b16 %v4303
      %v4808 = vunpack.c.h.b16 %v4303
      %v4809 = vunpack.c.l.b16 %v4304
      %v4810 = vunpack.c.h.b16 %v4304
      %v4811 = vunpack.c.l.b16 %v4305
      %v4812 = vunpack.c.h.b16 %v4305
      %v4813 = vunpack.c.l.b16 %v4306
      %v4814 = vunpack.c.h.b16 %v4306
      %v4815 = vunpack.c.l.b16 %v4307
      %v4816 = vunpack.c.h.b16 %v4307
      %v4817 = vunpack.c.l.b16 %v4308
      %v4818 = vunpack.c.h.b16 %v4308
      %v4819 = vunpack.c.l.b16 %v4309
      %v4820 = vunpack.c.h.b16 %v4309
      %v4821 = vunpack.c.l.b16 %v4310
      %v4822 = vunpack.c.h.b16 %v4310
      %v4823 = vunpack.c.l.b16 %v4311
      %v4824 = vunpack.c.h.b16 %v4311
      %v4825 = vunpack.c.l.b16 %v4312
      %v4826 = vunpack.c.h.b16 %v4312
      %v4827 = vunpack.c.l.b16 %v4313
      %v4828 = vunpack.c.h.b16 %v4313
      %v4829 = vunpack.c.l.b16 %v4314
      %v4830 = vunpack.c.h.b16 %v4314
      %v4831 = vunpack.c.l.b16 %v4315
      %v4832 = vunpack.c.h.b16 %v4315
      %v4833 = vunpack.c.l.b16 %v4316
      %v4834 = vunpack.c.h.b16 %v4316
      %v4835 = vunpack.c.l.b16 %v4317
      %v4836 = vunpack.c.h.b16 %v4317
      %v4837 = vunpack.c.l.b16 %v4318
      %v4838 = vunpack.c.h.b16 %v4318
      %v4839 = vunpack.c.l.b16 %v4319
      %v4840 = vunpack.c.h.b16 %v4319
      %v4841 = vunpack.c.l.b16 %v4320
      %v4842 = vunpack.c.h.b16 %v4320
      %v4843 = vunpack.c.l.b16 %v4321
      %v4844 = vunpack.c.h.b16 %v4321
      %v4845 = vunpack.c.l.b16 %v4322
      %v4846 = vunpack.c.h.b16 %v4322
      %v4847 = vunpack.c.l.b16 %v4323
      %v4848 = vunpack.c.h.b16 %v4323
      %v4849 = vunpack.c.l.b16 %v4324
      %v4850 = vunpack.c.h.b16 %v4324
      %v4851 = vunpack.c.l.b16 %v4325
      %v4852 = vunpack.c.h.b16 %v4325
      %v4853 = vunpack.c.l.b16 %v4326
      %v4854 = vunpack.c.h.b16 %v4326
      %v4855 = vunpack.c.l.b16 %v4327
      %v4856 = vunpack.c.h.b16 %v4327
      %v4857 = vunpack.c.l.b16 %v4328
      %v4858 = vunpack.c.h.b16 %v4328
      %v4859 = vunpack.c.l.b16 %v4329
      %v4860 = vunpack.c.h.b16 %v4329
      %v4861 = vunpack.c.l.b16 %v4330
      %v4862 = vunpack.c.h.b16 %v4330
      %v4863 = vunpack.c.l.b16 %v4331
      %v4864 = vunpack.c.h.b16 %v4331
      %v4865 = vunpack.c.l.b16 %v4332
      %v4866 = vunpack.c.h.b16 %v4332
      %v4867 = vunpack.c.l.b16 %v4333
      %v4868 = vunpack.c.h.b16 %v4333
      %v4869 = vunpack.c.l.b16 %v4334
      %v4870 = vunpack.c.h.b16 %v4334
      %v4871 = vunpack.c.l.b16 %v4335
      %v4872 = vunpack.c.h.b16 %v4335
      %v4873 = vunpack.c.l.b16 %v4336
      %v4874 = vunpack.c.h.b16 %v4336
      %v4875 = vunpack.c.l.b16 %v4337
      %v4876 = vunpack.c.h.b16 %v4337
      %v4877 = vunpack.c.l.b16 %v4338
      %v4878 = vunpack.c.h.b16 %v4338
      %v4879 = vunpack.c.l.b16 %v4339
      %v4880 = vunpack.c.h.b16 %v4339
      %v4881 = vunpack.c.l.b16 %v4340
      %v4882 = vunpack.c.h.b16 %v4340
      %v4883 = vunpack.c.l.b16 %v4341
      %v4884 = vunpack.c.h.b16 %v4341
      %v4885 = vunpack.c.l.b16 %v4342
      %v4886 = vunpack.c.h.b16 %v4342
      %v4887 = vunpack.c.l.b16 %v4343
      %v4888 = vunpack.c.h.b16 %v4343
      %v4889 = vunpack.c.l.b16 %v4344
      %v4890 = vunpack.c.h.b16 %v4344
      %v4891 = vunpack.c.l.b16 %v4345
      %v4892 = vunpack.c.h.b16 %v4345
      %v4893 = vunpack.c.l.b16 %v4346
      %v4894 = vunpack.c.h.b16 %v4346
      %v4895 = vunpack.c.l.b16 %v4347
      %v4896 = vunpack.c.h.b16 %v4347
      %v4897 = vunpack.c.l.b16 %v4348
      %v4898 = vunpack.c.h.b16 %v4348
      %v4899 = vunpack.c.l.b16 %v4349
      %v4900 = vunpack.c.h.b16 %v4349
      %v4901 = vunpack.c.l.b16 %v4350
      %v4902 = vunpack.c.h.b16 %v4350
      %v4903 = vunpack.c.l.b16 %v4351
      %v4904 = vunpack.c.h.b16 %v4351
      %v4905 = vunpack.c.l.b16 %v4352
      %v4906 = vunpack.c.h.b16 %v4352
      %v4907 = vunpack.c.l.b16 %v4353
      %v4908 = vunpack.c.h.b16 %v4353
      %v4909 = vunpack.c.l.b16 %v4354
      %v4910 = vunpack.c.h.b16 %v4354
      %v4911 = vunpack.c.l.b16 %v4355
      %v4912 = vunpack.c.h.b16 %v4355
      %v4913 = vunpack.c.l.b16 %v4356
      %v4914 = vunpack.c.h.b16 %v4356
      %v4915 = vunpack.c.l.b16 %v4357
      %v4916 = vunpack.c.h.b16 %v4357
      %v4917 = vunpack.c.l.b16 %v4358
      %v4918 = vunpack.c.h.b16 %v4358
      %v4919 = vunpack.c.l.b16 %v4359
      %v4920 = vunpack.c.h.b16 %v4359
      %v4921 = vunpack.c.l.b16 %v4360
      %v4922 = vunpack.c.h.b16 %v4360
      %v4923 = vunpack.c.l.b16 %v4361
      %v4924 = vunpack.c.h.b16 %v4361
      %v4925 = vunpack.c.l.b16 %v4362
      %v4926 = vunpack.c.h.b16 %v4362
      %v4927 = vunpack.c.l.b16 %v4363
      %v4928 = vunpack.c.h.b16 %v4363
      %v4929 = vunpack.c.l.b16 %v4364
      %v4930 = vunpack.c.h.b16 %v4364
      %v4931 = vunpack.c.l.b16 %v4365
      %v4932 = vunpack.c.h.b16 %v4365
      %v4933 = vunpack.c.l.b16 %v4366
      %v4934 = vunpack.c.h.b16 %v4366
      %v4935 = vunpack.c.l.b16 %v4367
      %v4936 = vunpack.c.h.b16 %v4367
      %v4937 = vunpack.c.l.b16 %v4368
      %v4938 = vunpack.c.h.b16 %v4368
      %v4939 = vunpack.c.l.b16 %v4369
      %v4940 = vunpack.c.h.b16 %v4369
      %v4941 = vunpack.c.l.b16 %v4370
      %v4942 = vunpack.c.h.b16 %v4370
      %v4943 = vunpack.c.l.b16 %v4371
      %v4944 = vunpack.c.h.b16 %v4371
      %v4945 = vunpack.c.l.b16 %v4372
      %v4946 = vunpack.c.h.b16 %v4372
      %v4947 = vunpack.c.l.b16 %v4373
      %v4948 = vunpack.c.h.b16 %v4373
      %v4949 = vunpack.c.l.b16 %v4374
      %v4950 = vunpack.c.h.b16 %v4374
      %v4951 = vunpack.c.l.b16 %v4375
      %v4952 = vunpack.c.h.b16 %v4375
      %v4953 = vunpack.c.l.b16 %v4376
      %v4954 = vunpack.c.h.b16 %v4376
      %v4955 = vunpack.c.l.b16 %v4377
      %v4956 = vunpack.c.h.b16 %v4377
      %v4957 = vunpack.c.l.b16 %v4378
      %v4958 = vunpack.c.h.b16 %v4378
      %v4959 = vunpack.c.l.b16 %v4379
      %v4960 = vunpack.c.h.b16 %v4379
      %v4961 = vunpack.c.l.b16 %v4380
      %v4962 = vunpack.c.h.b16 %v4380
      %v4963 = vunpack.c.l.b16 %v4381
      %v4964 = vunpack.c.h.b16 %v4381
      %v4965 = vunpack.c.l.b16 %v4382
      %v4966 = vunpack.c.h.b16 %v4382
      %v4967 = vunpack.c.l.b16 %v4383
      %v4968 = vunpack.c.h.b16 %v4383
      %v4969 = vunpack.c.l.b16 %v4384
      %v4970 = vunpack.c.h.b16 %v4384
      %v4971 = vunpack.c.l.b16 %v4385
      %v4972 = vunpack.c.h.b16 %v4385
      %v4973 = vunpack.c.l.b16 %v4386
      %v4974 = vunpack.c.h.b16 %v4386
      %v4975 = vunpack.c.l.b16 %v4387
      %v4976 = vunpack.c.h.b16 %v4387
      %v4977 = vunpack.c.l.b16 %v4388
      %v4978 = vunpack.c.h.b16 %v4388
      %v4979 = vunpack.c.l.b16 %v4389
      %v4980 = vunpack.c.h.b16 %v4389
      %v4981 = vunpack.c.l.b16 %v4390
      %v4982 = vunpack.c.h.b16 %v4390
      %v4983 = vunpack.c.l.b16 %v4391
      %v4984 = vunpack.c.h.b16 %v4391
      %v4985 = vunpack.c.l.b16 %v4392
      %v4986 = vunpack.c.h.b16 %v4392
      %v4987 = vunpack.c.l.b16 %v4393
      %v4988 = vunpack.c.h.b16 %v4393
      %v4989 = vunpack.c.l.b16 %v4394
      %v4990 = vunpack.c.h.b16 %v4394
      %v4991 = vunpack.c.l.b16 %v4395
      %v4992 = vunpack.c.h.b16 %v4395
      %v4993 = vunpack.c.l.b16 %v4396
      %v4994 = vunpack.c.h.b16 %v4396
      %v4995 = vunpack.c.l.b16 %v4397
      %v4996 = vunpack.c.h.b16 %v4397
      %v4997 = vunpack.c.l.b16 %v4398
      %v4998 = vunpack.c.h.b16 %v4398
      %v4999 = vunpack.c.l.b16 %v4399
      %v5000 = vunpack.c.h.b16 %v4399
      %v5001 = vunpack.c.l.b16 %v4400
      %v5002 = vunpack.c.h.b16 %v4400
      %v5003 = vunpack.c.l.b16 %v4401
      %v5004 = vunpack.c.h.b16 %v4401
      %v5005 = vunpack.c.l.b16 %v4402
      %v5006 = vunpack.c.h.b16 %v4402
      %v5007 = vunpack.c.l.b16 %v4403
      %v5008 = vunpack.c.h.b16 %v4403
      %v5009 = vunpack.c.l.b16 %v4404
      %v5010 = vunpack.c.h.b16 %v4404
      %v5011 = vunpack.c.l.b16 %v4405
      %v5012 = vunpack.c.h.b16 %v4405
      %v5013 = vunpack.c.l.b16 %v4406
      %v5014 = vunpack.c.h.b16 %v4406
      %v5015 = vunpack.c.l.b16 %v4407
      %v5016 = vunpack.c.h.b16 %v4407
      %v5017 = vunpack.c.l.b16 %v4408
      %v5018 = vunpack.c.h.b16 %v4408
      %v5019 = vunpack.c.l.b16 %v4409
      %v5020 = vunpack.c.h.b16 %v4409
      %v5021 = vunpack.c.l.b16 %v4410
      %v5022 = vunpack.c.h.b16 %v4410
      %v5023 = vunpack.c.l.b16 %v4411
      %v5024 = vunpack.c.h.b16 %v4411
      %v5025 = vunpack.c.l.b16 %v4412
      %v5026 = vunpack.c.h.b16 %v4412
      %v5027 = vunpack.c.l.b16 %v4413
      %v5028 = vunpack.c.h.b16 %v4413
      %v5029 = vunpack.c.l.b16 %v4414
      %v5030 = vunpack.c.h.b16 %v4414
      %v5031 = vunpack.c.l.b16 %v4415
      %v5032 = vunpack.c.h.b16 %v4415
      %v5033 = vunpack.c.l.b16 %v4416
      %v5034 = vunpack.c.h.b16 %v4416
      %v5035 = vunpack.c.l.b16 %v4417
      %v5036 = vunpack.c.h.b16 %v4417
      %v5037 = vunpack.c.l.b16 %v4418
      %v5038 = vunpack.c.h.b16 %v4418
      %v5039 = vunpack.c.l.b16 %v4419
      %v5040 = vunpack.c.h.b16 %v4419
      %v5041 = vunpack.c.l.b16 %v4420
      %v5042 = vunpack.c.h.b16 %v4420
      %v5043 = vunpack.c.l.b16 %v4421
      %v5044 = vunpack.c.h.b16 %v4421
      %v5045 = vunpack.c.l.b16 %v4422
      %v5046 = vunpack.c.h.b16 %v4422
      %v5047 = vpack.c.b16 %v4663, %v4631
      %v5048 = vpack.c.b16 %v4664, %v4632
      %v5049 = vpack.c.b16 %v4665, %v4633
      %v5050 = vpack.c.b16 %v4666, %v4634
      %v5051 = vpack.c.b16 %v4667, %v4635
      %v5052 = vpack.c.b16 %v4668, %v4636
      %v5053 = vpack.c.b16 %v4669, %v4637
      %v5054 = vpack.c.b16 %v4670, %v4638
      %v5055 = vpack.c.b16 %v4671, %v4639
      %v5056 = vpack.c.b16 %v4672, %v4640
      %v5057 = vpack.c.b16 %v4673, %v4641
      %v5058 = vpack.c.b16 %v4674, %v4642
      %v5059 = vpack.c.b16 %v4675, %v4643
      %v5060 = vpack.c.b16 %v4676, %v4644
      %v5061 = vpack.c.b16 %v4677, %v4645
      %v5062 = vpack.c.b16 %v4678, %v4646
      %v5063 = vpack.c.b16 %v4679, %v4647
      %v5064 = vpack.c.b16 %v4680, %v4648
      %v5065 = vpack.c.b16 %v4681, %v4649
      %v5066 = vpack.c.b16 %v4682, %v4650
      %v5067 = vpack.c.b16 %v4683, %v4651
      %v5068 = vpack.c.b16 %v4684, %v4652
      %v5069 = vpack.c.b16 %v4685, %v4653
      %v5070 = vpack.c.b16 %v4686, %v4654
      %v5071 = vpack.c.b16 %v4687, %v4655
      %v5072 = vpack.c.b16 %v4688, %v4656
      %v5073 = vpack.c.b16 %v4689, %v4657
      %v5074 = vpack.c.b16 %v4690, %v4658
      %v5075 = vpack.c.b16 %v4691, %v4659
      %v5076 = vpack.c.b16 %v4692, %v4660
      %v5077 = vpack.c.b16 %v4693, %v4661
      %v5078 = vpack.c.b16 %v4694, %v4662
      %v5079 = vpack.c.b16 %v4727, %v4695
      %v5080 = vpack.c.b16 %v4728, %v4696
      %v5081 = vpack.c.b16 %v4729, %v4697
      %v5082 = vpack.c.b16 %v4730, %v4698
      %v5083 = vpack.c.b16 %v4731, %v4699
      %v5084 = vpack.c.b16 %v4732, %v4700
      %v5085 = vpack.c.b16 %v4733, %v4701
      %v5086 = vpack.c.b16 %v4734, %v4702
      %v5087 = vpack.c.b16 %v4735, %v4703
      %v5088 = vpack.c.b16 %v4736, %v4704
      %v5089 = vpack.c.b16 %v4737, %v4705
      %v5090 = vpack.c.b16 %v4738, %v4706
      %v5091 = vpack.c.b16 %v4739, %v4707
      %v5092 = vpack.c.b16 %v4740, %v4708
      %v5093 = vpack.c.b16 %v4741, %v4709
      %v5094 = vpack.c.b16 %v4742, %v4710
      %v5095 = vpack.c.b16 %v4743, %v4711
      %v5096 = vpack.c.b16 %v4744, %v4712
      %v5097 = vpack.c.b16 %v4745, %v4713
      %v5098 = vpack.c.b16 %v4746, %v4714
      %v5099 = vpack.c.b16 %v4747, %v4715
      %v5100 = vpack.c.b16 %v4748, %v4716
      %v5101 = vpack.c.b16 %v4749, %v4717
      %v5102 = vpack.c.b16 %v4750, %v4718
      %v5103 = vpack.c.b16 %v4751, %v4719
      %v5104 = vpack.c.b16 %v4752, %v4720
      %v5105 = vpack.c.b16 %v4753, %v4721
      %v5106 = vpack.c.b16 %v4754, %v4722
      %v5107 = vpack.c.b16 %v4755, %v4723
      %v5108 = vpack.c.b16 %v4756, %v4724
      %v5109 = vpack.c.b16 %v4757, %v4725
      %v5110 = vpack.c.b16 %v4758, %v4726
      %v5111 = vpack.c.b16 %v4791, %v4759
      %v5112 = vpack.c.b16 %v4792, %v4760
      %v5113 = vpack.c.b16 %v4793, %v4761
      %v5114 = vpack.c.b16 %v4794, %v4762
      %v5115 = vpack.c.b16 %v4795, %v4763
      %v5116 = vpack.c.b16 %v4796, %v4764
      %v5117 = vpack.c.b16 %v4797, %v4765
      %v5118 = vpack.c.b16 %v4798, %v4766
      %v5119 = vpack.c.b16 %v4799, %v4767
      %v5120 = vpack.c.b16 %v4800, %v4768
      %v5121 = vpack.c.b16 %v4801, %v4769
      %v5122 = vpack.c.b16 %v4802, %v4770
      %v5123 = vpack.c.b16 %v4803, %v4771
      %v5124 = vpack.c.b16 %v4804, %v4772
      %v5125 = vpack.c.b16 %v4805, %v4773
      %v5126 = vpack.c.b16 %v4806, %v4774
      %v5127 = vpack.c.b16 %v4807, %v4775
      %v5128 = vpack.c.b16 %v4808, %v4776
      %v5129 = vpack.c.b16 %v4809, %v4777
      %v5130 = vpack.c.b16 %v4810, %v4778
      %v5131 = vpack.c.b16 %v4811, %v4779
      %v5132 = vpack.c.b16 %v4812, %v4780
      %v5133 = vpack.c.b16 %v4813, %v4781
      %v5134 = vpack.c.b16 %v4814, %v4782
      %v5135 = vpack.c.b16 %v4815, %v4783
      %v5136 = vpack.c.b16 %v4816, %v4784
      %v5137 = vpack.c.b16 %v4817, %v4785
      %v5138 = vpack.c.b16 %v4818, %v4786
      %v5139 = vpack.c.b16 %v4819, %v4787
      %v5140 = vpack.c.b16 %v4820, %v4788
      %v5141 = vpack.c.b16 %v4821, %v4789
      %v5142 = vpack.c.b16 %v4822, %v4790
      %v5143 = vpack.c.b16 %v4855, %v4823
      %v5144 = vpack.c.b16 %v4856, %v4824
      %v5145 = vpack.c.b16 %v4857, %v4825
      %v5146 = vpack.c.b16 %v4858, %v4826
      %v5147 = vpack.c.b16 %v4859, %v4827
      %v5148 = vpack.c.b16 %v4860, %v4828
      %v5149 = vpack.c.b16 %v4861, %v4829
      %v5150 = vpack.c.b16 %v4862, %v4830
      %v5151 = vpack.c.b16 %v4863, %v4831
      %v5152 = vpack.c.b16 %v4864, %v4832
      %v5153 = vpack.c.b16 %v4865, %v4833
      %v5154 = vpack.c.b16 %v4866, %v4834
      %v5155 = vpack.c.b16 %v4867, %v4835
      %v5156 = vpack.c.b16 %v4868, %v4836
      %v5157 = vpack.c.b16 %v4869, %v4837
      %v5158 = vpack.c.b16 %v4870, %v4838
      %v5159 = vpack.c.b16 %v4871, %v4839
      %v5160 = vpack.c.b16 %v4872, %v4840
      %v5161 = vpack.c.b16 %v4873, %v4841
      %v5162 = vpack.c.b16 %v4874, %v4842
      %v5163 = vpack.c.b16 %v4875, %v4843
      %v5164 = vpack.c.b16 %v4876, %v4844
      %v5165 = vpack.c.b16 %v4877, %v4845
      %v5166 = vpack.c.b16 %v4878, %v4846
      %v5167 = vpack.c.b16 %v4879, %v4847
      %v5168 = vpack.c.b16 %v4880, %v4848
      %v5169 = vpack.c.b16 %v4881, %v4849
      %v5170 = vpack.c.b16 %v4882, %v4850
      %v5171 = vpack.c.b16 %v4883, %v4851
      %v5172 = vpack.c.b16 %v4884, %v4852
      %v5173 = vpack.c.b16 %v4885, %v4853
      %v5174 = vpack.c.b16 %v4886, %v4854
      %v5175 = vpack.c.b16 %v4919, %v4887
      %v5176 = vpack.c.b16 %v4920, %v4888
      %v5177 = vpack.c.b16 %v4921, %v4889
      %v5178 = vpack.c.b16 %v4922, %v4890
      %v5179 = vpack.c.b16 %v4923, %v4891
      %v5180 = vpack.c.b16 %v4924, %v4892
      %v5181 = vpack.c.b16 %v4925, %v4893
      %v5182 = vpack.c.b16 %v4926, %v4894
      %v5183 = vpack.c.b16 %v4927, %v4895
      %v5184 = vpack.c.b16 %v4928, %v4896
      %v5185 = vpack.c.b16 %v4929, %v4897
      %v5186 = vpack.c.b16 %v4930, %v4898
      %v5187 = vpack.c.b16 %v4931, %v4899
      %v5188 = vpack.c.b16 %v4932, %v4900
      %v5189 = vpack.c.b16 %v4933, %v4901
      %v5190 = vpack.c.b16 %v4934, %v4902
      %v5191 = vpack.c.b16 %v4935, %v4903
      %v5192 = vpack.c.b16 %v4936, %v4904
      %v5193 = vpack.c.b16 %v4937, %v4905
      %v5194 = vpack.c.b16 %v4938, %v4906
      %v5195 = vpack.c.b16 %v4939, %v4907
      %v5196 = vpack.c.b16 %v4940, %v4908
      %v5197 = vpack.c.b16 %v4941, %v4909
      %v5198 = vpack.c.b16 %v4942, %v4910
      %v5199 = vpack.c.b16 %v4943, %v4911
      %v5200 = vpack.c.b16 %v4944, %v4912
      %v5201 = vpack.c.b16 %v4945, %v4913
      %v5202 = vpack.c.b16 %v4946, %v4914
      %v5203 = vpack.c.b16 %v4947, %v4915
      %v5204 = vpack.c.b16 %v4948, %v4916
      %v5205 = vpack.c.b16 %v4949, %v4917
      %v5206 = vpack.c.b16 %v4950, %v4918
      %v5207 = vpack.c.b16 %v4983, %v4951
      %v5208 = vpack.c.b16 %v4984, %v4952
      %v5209 = vpack.c.b16 %v4985, %v4953
      %v5210 = vpack.c.b16 %v4986, %v4954
      %v5211 = vpack.c.b16 %v4987, %v4955
      %v5212 = vpack.c.b16 %v4988, %v4956
      %v5213 = vpack.c.b16 %v4989, %v4957
      %v5214 = vpack.c.b16 %v4990, %v4958
      %v5215 = vpack.c.b16 %v4991, %v4959
      %v5216 = vpack.c.b16 %v4992, %v4960
      %v5217 = vpack.c.b16 %v4993, %v4961
      %v5218 = vpack.c.b16 %v4994, %v4962
      %v5219 = vpack.c.b16 %v4995, %v4963
      %v5220 = vpack.c.b16 %v4996, %v4964
      %v5221 = vpack.c.b16 %v4997, %v4965
      %v5222 = vpack.c.b16 %v4998, %v4966
      %v5223 = vpack.c.b16 %v4999, %v4967
      %v5224 = vpack.c.b16 %v5000, %v4968
      %v5225 = vpack.c.b16 %v5001, %v4969
      %v5226 = vpack.c.b16 %v5002, %v4970
      %v5227 = vpack.c.b16 %v5003, %v4971
      %v5228 = vpack.c.b16 %v5004, %v4972
      %v5229 = vpack.c.b16 %v5005, %v4973
      %v5230 = vpack.c.b16 %v5006, %v4974
      %v5231 = vpack.c.b16 %v5007, %v4975
      %v5232 = vpack.c.b16 %v5008, %v4976
      %v5233 = vpack.c.b16 %v5009, %v4977
      %v5234 = vpack.c.b16 %v5010, %v4978
      %v5235 = vpack.c.b16 %v5011, %v4979
      %v5236 = vpack.c.b16 %v5012, %v4980
      %v5237 = vpack.c.b16 %v5013, %v4981
      %v5238 = vpack.c.b16 %v5014, %v4982
      %v5239 = vpack.c.b16 %v5015, %v5015
      %v5240 = vpack.c.b16 %v5016, %v5016
      %v5241 = vpack.c.b16 %v5017, %v5017
      %v5242 = vpack.c.b16 %v5018, %v5018
      %v5243 = vpack.c.b16 %v5019, %v5019
      %v5244 = vpack.c.b16 %v5020, %v5020
      %v5245 = vpack.c.b16 %v5021, %v5021
      %v5246 = vpack.c.b16 %v5022, %v5022
      %v5247 = vpack.c.b16 %v5023, %v5023
      %v5248 = vpack.c.b16 %v5024, %v5024
      %v5249 = vpack.c.b16 %v5025, %v5025
      %v5250 = vpack.c.b16 %v5026, %v5026
      %v5251 = vpack.c.b16 %v5027, %v5027
      %v5252 = vpack.c.b16 %v5028, %v5028
      %v5253 = vpack.c.b16 %v5029, %v5029
      %v5254 = vpack.c.b16 %v5030, %v5030
      %v5255 = vpack.c.b16 %v5031, %v5031
      %v5256 = vpack.c.b16 %v5032, %v5032
      %v5257 = vpack.c.b16 %v5033, %v5033
      %v5258 = vpack.c.b16 %v5034, %v5034
      %v5259 = vpack.c.b16 %v5035, %v5035
      %v5260 = vpack.c.b16 %v5036, %v5036
      %v5261 = vpack.c.b16 %v5037, %v5037
      %v5262 = vpack.c.b16 %v5038, %v5038
      %v5263 = vpack.c.b16 %v5039, %v5039
      %v5264 = vpack.c.b16 %v5040, %v5040
      %v5265 = vpack.c.b16 %v5041, %v5041
      %v5266 = vpack.c.b16 %v5042, %v5042
      %v5267 = vpack.c.b16 %v5043, %v5043
      %v5268 = vpack.c.b16 %v5044, %v5044
      %v5269 = vpack.c.b16 %v5045, %v5045
      %v5270 = vpack.c.b16 %v5046, %v5046
      %v5464 = vsel %vm1409, %v4214, 0
      %v5467 = vsel %vm1413, %v5239, 0
      %v5470 = vsel %vm1413, %v5240, 0
      %v5473 = vsel %vm1413, %v5241, 0
      %v5476 = vsel %vm1413, %v5242, 0
      %v5479 = vsel %vm1413, %v5243, 0
      %v5482 = vsel %vm1413, %v5244, 0
      %v5485 = vsel %vm1413, %v5245, 0
      %v5488 = vsel %vm1413, %v5246, 0
      %v5491 = vsel %vm1413, %v5247, 0
      %v5494 = vsel %vm1413, %v5248, 0
      %v5497 = vsel %vm1413, %v5249, 0
      %v5500 = vsel %vm1413, %v5250, 0
      %v5503 = vsel %vm1413, %v5251, 0
      %v5506 = vsel %vm1413, %v5252, 0
      %v5509 = vsel %vm1413, %v5253, 0
      %v5512 = vsel %vm1413, %v5254, 0
      %v5515 = vsel %vm1413, %v5255, 0
      %v5518 = vsel %vm1413, %v5256, 0
      %v5521 = vsel %vm1413, %v5257, 0
      %v5524 = vsel %vm1413, %v5258, 0
      %v5527 = vsel %vm1413, %v5259, 0
      %v5530 = vsel %vm1413, %v5260, 0
      %v5533 = vsel %vm1413, %v5261, 0
      %v5536 = vsel %vm1413, %v5262, 0
      %v5539 = vsel %vm1413, %v5263, 0
      %v5542 = vsel %vm1413, %v5264, 0
      %v5545 = vsel %vm1413, %v5265, 0
      %v5548 = vsel %vm1413, %v5266, 0
      %v5551 = vsel %vm1413, %v5267, 0
      %v5554 = vsel %vm1413, %v5268, 0
      %v5557 = vsel %vm1413, %v5269, 0
      %v5560 = vsel %vm1413, %v5270, 0
      %5562 = vmatpush.bf16.msra.mxu0 0
      %5563 = vmatpush.bf16.msra.mxu0 %v5467
      %5564 = vmatpush.bf16.msra.mxu0 %v5207
      %5565 = vmatpush.bf16.msra.mxu0 %v5175
      %5566 = vmatpush.bf16.msra.mxu0 %v5143
      %5567 = vmatpush.bf16.msra.mxu0 %v5111
      %5568 = vmatpush.bf16.msra.mxu0 %v5079
      %5569 = vmatpush.bf16.msra.mxu0 %v5047
      %5570 = vmatmul.bf16.gmra.mxu0 %v5464
      %v5571 = vpop.f32.mrf.mxu0
      %v5572 = vadd.f32 0.0, %v5571
      %v5573 = vpop.f32.mrf.mxu0
      %5574 = vdwg.mxu0
      %5575 = vmatpush.bf16.msra.mxu0 0
      %5576 = vmatpush.bf16.msra.mxu0 %v5470
      %5577 = vmatpush.bf16.msra.mxu0 %v5208
      %5578 = vmatpush.bf16.msra.mxu0 %v5176
      %5579 = vmatpush.bf16.msra.mxu0 %v5144
      %5580 = vmatpush.bf16.msra.mxu0 %v5112
      %5581 = vmatpush.bf16.msra.mxu0 %v5080
      %5582 = vmatpush.bf16.msra.mxu0 %v5048
      %5583 = vmatmul.bf16.gmra.mxu0 %v5464
      %v5584 = vpop.f32.mrf.mxu0
      %v5585 = vadd.f32 0.0, %v5584
      %v5586 = vpop.f32.mrf.mxu0
      %5587 = vdwg.mxu0
      %5588 = vmatpush.bf16.msra.mxu0 0
      %5589 = vmatpush.bf16.msra.mxu0 %v5473
      %5590 = vmatpush.bf16.msra.mxu0 %v5209
      %5591 = vmatpush.bf16.msra.mxu0 %v5177
      %5592 = vmatpush.bf16.msra.mxu0 %v5145
      %5593 = vmatpush.bf16.msra.mxu0 %v5113
      %5594 = vmatpush.bf16.msra.mxu0 %v5081
      %5595 = vmatpush.bf16.msra.mxu0 %v5049
      %5596 = vmatmul.bf16.gmra.mxu0 %v5464
      %v5597 = vpop.f32.mrf.mxu0
      %v5598 = vadd.f32 0.0, %v5597
      %v5599 = vpop.f32.mrf.mxu0
      %5600 = vdwg.mxu0
      %5601 = vmatpush.bf16.msra.mxu0 0
      %5602 = vmatpush.bf16.msra.mxu0 %v5476
      %5603 = vmatpush.bf16.msra.mxu0 %v5210
      %5604 = vmatpush.bf16.msra.mxu0 %v5178
      %5605 = vmatpush.bf16.msra.mxu0 %v5146
      %5606 = vmatpush.bf16.msra.mxu0 %v5114
      %5607 = vmatpush.bf16.msra.mxu0 %v5082
      %5608 = vmatpush.bf16.msra.mxu0 %v5050
      %5609 = vmatmul.bf16.gmra.mxu0 %v5464
      %v5610 = vpop.f32.mrf.mxu0
      %v5611 = vadd.f32 0.0, %v5610
      %v5612 = vpop.f32.mrf.mxu0
      %5613 = vdwg.mxu0
      %5614 = vmatpush.bf16.msra.mxu0 0
      %5615 = vmatpush.bf16.msra.mxu0 %v5479
      %5616 = vmatpush.bf16.msra.mxu0 %v5211
      %5617 = vmatpush.bf16.msra.mxu0 %v5179
      %5618 = vmatpush.bf16.msra.mxu0 %v5147
      %5619 = vmatpush.bf16.msra.mxu0 %v5115
      %5620 = vmatpush.bf16.msra.mxu0 %v5083
      %5621 = vmatpush.bf16.msra.mxu0 %v5051
      %5622 = vmatmul.bf16.gmra.mxu0 %v5464
      %v5623 = vpop.f32.mrf.mxu0
      %v5624 = vadd.f32 0.0, %v5623
      %v5625 = vpop.f32.mrf.mxu0
      %5626 = vdwg.mxu0
      %5627 = vmatpush.bf16.msra.mxu0 0
      %5628 = vmatpush.bf16.msra.mxu0 %v5482
      %5629 = vmatpush.bf16.msra.mxu0 %v5212
      %5630 = vmatpush.bf16.msra.mxu0 %v5180
      %5631 = vmatpush.bf16.msra.mxu0 %v5148
      %5632 = vmatpush.bf16.msra.mxu0 %v5116
      %5633 = vmatpush.bf16.msra.mxu0 %v5084
      %5634 = vmatpush.bf16.msra.mxu0 %v5052
      %5635 = vmatmul.bf16.gmra.mxu0 %v5464
      %v5636 = vpop.f32.mrf.mxu0
      %v5637 = vadd.f32 0.0, %v5636
      %v5638 = vpop.f32.mrf.mxu0
      %5639 = vdwg.mxu0
      %5640 = vmatpush.bf16.msra.mxu0 0
      %5641 = vmatpush.bf16.msra.mxu0 %v5485
      %5642 = vmatpush.bf16.msra.mxu0 %v5213
      %5643 = vmatpush.bf16.msra.mxu0 %v5181
      %5644 = vmatpush.bf16.msra.mxu0 %v5149
      %5645 = vmatpush.bf16.msra.mxu0 %v5117
      %5646 = vmatpush.bf16.msra.mxu0 %v5085
      %5647 = vmatpush.bf16.msra.mxu0 %v5053
      %5648 = vmatmul.bf16.gmra.mxu0 %v5464
      %v5649 = vpop.f32.mrf.mxu0
      %v5650 = vadd.f32 0.0, %v5649
      %v5651 = vpop.f32.mrf.mxu0
      %5652 = vdwg.mxu0
      %5653 = vmatpush.bf16.msra.mxu0 0
      %5654 = vmatpush.bf16.msra.mxu0 %v5488
      %5655 = vmatpush.bf16.msra.mxu0 %v5214
      %5656 = vmatpush.bf16.msra.mxu0 %v5182
      %5657 = vmatpush.bf16.msra.mxu0 %v5150
      %5658 = vmatpush.bf16.msra.mxu0 %v5118
      %5659 = vmatpush.bf16.msra.mxu0 %v5086
      %5660 = vmatpush.bf16.msra.mxu0 %v5054
      %5661 = vmatmul.bf16.gmra.mxu0 %v5464
      %v5662 = vpop.f32.mrf.mxu0
      %v5663 = vadd.f32 0.0, %v5662
      %v5664 = vpop.f32.mrf.mxu0
      %5665 = vdwg.mxu0
      %5666 = vmatpush.bf16.msra.mxu0 0
      %5667 = vmatpush.bf16.msra.mxu0 %v5491
      %5668 = vmatpush.bf16.msra.mxu0 %v5215
      %5669 = vmatpush.bf16.msra.mxu0 %v5183
      %5670 = vmatpush.bf16.msra.mxu0 %v5151
      %5671 = vmatpush.bf16.msra.mxu0 %v5119
      %5672 = vmatpush.bf16.msra.mxu0 %v5087
      %5673 = vmatpush.bf16.msra.mxu0 %v5055
      %5674 = vmatmul.bf16.gmra.mxu0 %v5464
      %v5675 = vpop.f32.mrf.mxu0
      %v5676 = vadd.f32 0.0, %v5675
      %v5677 = vpop.f32.mrf.mxu0
      %5678 = vdwg.mxu0
      %5679 = vmatpush.bf16.msra.mxu0 0
      %5680 = vmatpush.bf16.msra.mxu0 %v5494
      %5681 = vmatpush.bf16.msra.mxu0 %v5216
      %5682 = vmatpush.bf16.msra.mxu0 %v5184
      %5683 = vmatpush.bf16.msra.mxu0 %v5152
      %5684 = vmatpush.bf16.msra.mxu0 %v5120
      %5685 = vmatpush.bf16.msra.mxu0 %v5088
      %5686 = vmatpush.bf16.msra.mxu0 %v5056
      %5687 = vmatmul.bf16.gmra.mxu0 %v5464
      %v5688 = vpop.f32.mrf.mxu0
      %v5689 = vadd.f32 0.0, %v5688
      %v5690 = vpop.f32.mrf.mxu0
      %5691 = vdwg.mxu0
      %5692 = vmatpush.bf16.msra.mxu0 0
      %5693 = vmatpush.bf16.msra.mxu0 %v5497
      %5694 = vmatpush.bf16.msra.mxu0 %v5217
      %5695 = vmatpush.bf16.msra.mxu0 %v5185
      %5696 = vmatpush.bf16.msra.mxu0 %v5153
      %5697 = vmatpush.bf16.msra.mxu0 %v5121
      %5698 = vmatpush.bf16.msra.mxu0 %v5089
      %5699 = vmatpush.bf16.msra.mxu0 %v5057
      %5700 = vmatmul.bf16.gmra.mxu0 %v5464
      %v5701 = vpop.f32.mrf.mxu0
      %v5702 = vadd.f32 0.0, %v5701
      %v5703 = vpop.f32.mrf.mxu0
      %5704 = vdwg.mxu0
      %5705 = vmatpush.bf16.msra.mxu0 0
      %5706 = vmatpush.bf16.msra.mxu0 %v5500
      %5707 = vmatpush.bf16.msra.mxu0 %v5218
      %5708 = vmatpush.bf16.msra.mxu0 %v5186
      %5709 = vmatpush.bf16.msra.mxu0 %v5154
      %5710 = vmatpush.bf16.msra.mxu0 %v5122
      %5711 = vmatpush.bf16.msra.mxu0 %v5090
      %5712 = vmatpush.bf16.msra.mxu0 %v5058
      %5713 = vmatmul.bf16.gmra.mxu0 %v5464
      %v5714 = vpop.f32.mrf.mxu0
      %v5715 = vadd.f32 0.0, %v5714
      %v5716 = vpop.f32.mrf.mxu0
      %5717 = vdwg.mxu0
      %5718 = vmatpush.bf16.msra.mxu0 0
      %5719 = vmatpush.bf16.msra.mxu0 %v5503
      %5720 = vmatpush.bf16.msra.mxu0 %v5219
      %5721 = vmatpush.bf16.msra.mxu0 %v5187
      %5722 = vmatpush.bf16.msra.mxu0 %v5155
      %5723 = vmatpush.bf16.msra.mxu0 %v5123
      %5724 = vmatpush.bf16.msra.mxu0 %v5091
      %5725 = vmatpush.bf16.msra.mxu0 %v5059
      %5726 = vmatmul.bf16.gmra.mxu0 %v5464
      %v5727 = vpop.f32.mrf.mxu0
      %v5728 = vadd.f32 0.0, %v5727
      %v5729 = vpop.f32.mrf.mxu0
      %5730 = vdwg.mxu0
      %5731 = vmatpush.bf16.msra.mxu0 0
      %5732 = vmatpush.bf16.msra.mxu0 %v5506
      %5733 = vmatpush.bf16.msra.mxu0 %v5220
      %5734 = vmatpush.bf16.msra.mxu0 %v5188
      %5735 = vmatpush.bf16.msra.mxu0 %v5156
      %5736 = vmatpush.bf16.msra.mxu0 %v5124
      %5737 = vmatpush.bf16.msra.mxu0 %v5092
      %5738 = vmatpush.bf16.msra.mxu0 %v5060
      %5739 = vmatmul.bf16.gmra.mxu0 %v5464
      %v5740 = vpop.f32.mrf.mxu0
      %v5741 = vadd.f32 0.0, %v5740
      %v5742 = vpop.f32.mrf.mxu0
      %5743 = vdwg.mxu0
      %5744 = vmatpush.bf16.msra.mxu0 0
      %5745 = vmatpush.bf16.msra.mxu0 %v5509
      %5746 = vmatpush.bf16.msra.mxu0 %v5221
      %5747 = vmatpush.bf16.msra.mxu0 %v5189
      %5748 = vmatpush.bf16.msra.mxu0 %v5157
      %5749 = vmatpush.bf16.msra.mxu0 %v5125
      %5750 = vmatpush.bf16.msra.mxu0 %v5093
      %5751 = vmatpush.bf16.msra.mxu0 %v5061
      %5752 = vmatmul.bf16.gmra.mxu0 %v5464
      %v5753 = vpop.f32.mrf.mxu0
      %v5754 = vadd.f32 0.0, %v5753
      %v5755 = vpop.f32.mrf.mxu0
      %5756 = vdwg.mxu0
      %5757 = vmatpush.bf16.msra.mxu0 0
      %5758 = vmatpush.bf16.msra.mxu0 %v5512
      %5759 = vmatpush.bf16.msra.mxu0 %v5222
      %5760 = vmatpush.bf16.msra.mxu0 %v5190
      %5761 = vmatpush.bf16.msra.mxu0 %v5158
      %5762 = vmatpush.bf16.msra.mxu0 %v5126
      %5763 = vmatpush.bf16.msra.mxu0 %v5094
      %5764 = vmatpush.bf16.msra.mxu0 %v5062
      %5765 = vmatmul.bf16.gmra.mxu0 %v5464
      %v5766 = vpop.f32.mrf.mxu0
      %v5767 = vadd.f32 0.0, %v5766
      %v5768 = vpop.f32.mrf.mxu0
      %5769 = vdwg.mxu0
      %5770 = vmatpush.bf16.msra.mxu0 0
      %5771 = vmatpush.bf16.msra.mxu0 %v5515
      %5772 = vmatpush.bf16.msra.mxu0 %v5223
      %5773 = vmatpush.bf16.msra.mxu0 %v5191
      %5774 = vmatpush.bf16.msra.mxu0 %v5159
      %5775 = vmatpush.bf16.msra.mxu0 %v5127
      %5776 = vmatpush.bf16.msra.mxu0 %v5095
      %5777 = vmatpush.bf16.msra.mxu0 %v5063
      %5778 = vmatmul.bf16.gmra.mxu0 %v5464
      %v5779 = vpop.f32.mrf.mxu0
      %v5780 = vadd.f32 0.0, %v5779
      %v5781 = vpop.f32.mrf.mxu0
      %5782 = vdwg.mxu0
      %5783 = vmatpush.bf16.msra.mxu0 0
      %5784 = vmatpush.bf16.msra.mxu0 %v5518
      %5785 = vmatpush.bf16.msra.mxu0 %v5224
      %5786 = vmatpush.bf16.msra.mxu0 %v5192
      %5787 = vmatpush.bf16.msra.mxu0 %v5160
      %5788 = vmatpush.bf16.msra.mxu0 %v5128
      %5789 = vmatpush.bf16.msra.mxu0 %v5096
      %5790 = vmatpush.bf16.msra.mxu0 %v5064
      %5791 = vmatmul.bf16.gmra.mxu0 %v5464
      %v5792 = vpop.f32.mrf.mxu0
      %v5793 = vadd.f32 0.0, %v5792
      %v5794 = vpop.f32.mrf.mxu0
      %5795 = vdwg.mxu0
      %5796 = vmatpush.bf16.msra.mxu0 0
      %5797 = vmatpush.bf16.msra.mxu0 %v5521
      %5798 = vmatpush.bf16.msra.mxu0 %v5225
      %5799 = vmatpush.bf16.msra.mxu0 %v5193
      %5800 = vmatpush.bf16.msra.mxu0 %v5161
      %5801 = vmatpush.bf16.msra.mxu0 %v5129
      %5802 = vmatpush.bf16.msra.mxu0 %v5097
      %5803 = vmatpush.bf16.msra.mxu0 %v5065
      %5804 = vmatmul.bf16.gmra.mxu0 %v5464
      %v5805 = vpop.f32.mrf.mxu0
      %v5806 = vadd.f32 0.0, %v5805
      %v5807 = vpop.f32.mrf.mxu0
      %5808 = vdwg.mxu0
      %5809 = vmatpush.bf16.msra.mxu0 0
      %5810 = vmatpush.bf16.msra.mxu0 %v5524
      %5811 = vmatpush.bf16.msra.mxu0 %v5226
      %5812 = vmatpush.bf16.msra.mxu0 %v5194
      %5813 = vmatpush.bf16.msra.mxu0 %v5162
      %5814 = vmatpush.bf16.msra.mxu0 %v5130
      %5815 = vmatpush.bf16.msra.mxu0 %v5098
      %5816 = vmatpush.bf16.msra.mxu0 %v5066
      %5817 = vmatmul.bf16.gmra.mxu0 %v5464
      %v5818 = vpop.f32.mrf.mxu0
      %v5819 = vadd.f32 0.0, %v5818
      %v5820 = vpop.f32.mrf.mxu0
      %5821 = vdwg.mxu0
      %5822 = vmatpush.bf16.msra.mxu0 0
      %5823 = vmatpush.bf16.msra.mxu0 %v5527
      %5824 = vmatpush.bf16.msra.mxu0 %v5227
      %5825 = vmatpush.bf16.msra.mxu0 %v5195
      %5826 = vmatpush.bf16.msra.mxu0 %v5163
      %5827 = vmatpush.bf16.msra.mxu0 %v5131
      %5828 = vmatpush.bf16.msra.mxu0 %v5099
      %5829 = vmatpush.bf16.msra.mxu0 %v5067
      %5830 = vmatmul.bf16.gmra.mxu0 %v5464
      %v5831 = vpop.f32.mrf.mxu0
      %v5832 = vadd.f32 0.0, %v5831
      %v5833 = vpop.f32.mrf.mxu0
      %5834 = vdwg.mxu0
      %5835 = vmatpush.bf16.msra.mxu0 0
      %5836 = vmatpush.bf16.msra.mxu0 %v5530
      %5837 = vmatpush.bf16.msra.mxu0 %v5228
      %5838 = vmatpush.bf16.msra.mxu0 %v5196
      %5839 = vmatpush.bf16.msra.mxu0 %v5164
      %5840 = vmatpush.bf16.msra.mxu0 %v5132
      %5841 = vmatpush.bf16.msra.mxu0 %v5100
      %5842 = vmatpush.bf16.msra.mxu0 %v5068
      %5843 = vmatmul.bf16.gmra.mxu0 %v5464
      %v5844 = vpop.f32.mrf.mxu0
      %v5845 = vadd.f32 0.0, %v5844
      %v5846 = vpop.f32.mrf.mxu0
      %5847 = vdwg.mxu0
      %5848 = vmatpush.bf16.msra.mxu0 0
      %5849 = vmatpush.bf16.msra.mxu0 %v5533
      %5850 = vmatpush.bf16.msra.mxu0 %v5229
      %5851 = vmatpush.bf16.msra.mxu0 %v5197
      %5852 = vmatpush.bf16.msra.mxu0 %v5165
      %5853 = vmatpush.bf16.msra.mxu0 %v5133
      %5854 = vmatpush.bf16.msra.mxu0 %v5101
      %5855 = vmatpush.bf16.msra.mxu0 %v5069
      %5856 = vmatmul.bf16.gmra.mxu0 %v5464
      %v5857 = vpop.f32.mrf.mxu0
      %v5858 = vadd.f32 0.0, %v5857
      %v5859 = vpop.f32.mrf.mxu0
      %5860 = vdwg.mxu0
      %5861 = vmatpush.bf16.msra.mxu0 0
      %5862 = vmatpush.bf16.msra.mxu0 %v5536
      %5863 = vmatpush.bf16.msra.mxu0 %v5230
      %5864 = vmatpush.bf16.msra.mxu0 %v5198
      %5865 = vmatpush.bf16.msra.mxu0 %v5166
      %5866 = vmatpush.bf16.msra.mxu0 %v5134
      %5867 = vmatpush.bf16.msra.mxu0 %v5102
      %5868 = vmatpush.bf16.msra.mxu0 %v5070
      %5869 = vmatmul.bf16.gmra.mxu0 %v5464
      %v5870 = vpop.f32.mrf.mxu0
      %v5871 = vadd.f32 0.0, %v5870
      %v5872 = vpop.f32.mrf.mxu0
      %5873 = vdwg.mxu0
      %5874 = vmatpush.bf16.msra.mxu0 0
      %5875 = vmatpush.bf16.msra.mxu0 %v5539
      %5876 = vmatpush.bf16.msra.mxu0 %v5231
      %5877 = vmatpush.bf16.msra.mxu0 %v5199
      %5878 = vmatpush.bf16.msra.mxu0 %v5167
      %5879 = vmatpush.bf16.msra.mxu0 %v5135
      %5880 = vmatpush.bf16.msra.mxu0 %v5103
      %5881 = vmatpush.bf16.msra.mxu0 %v5071
      %5882 = vmatmul.bf16.gmra.mxu0 %v5464
      %v5883 = vpop.f32.mrf.mxu0
      %v5884 = vadd.f32 0.0, %v5883
      %v5885 = vpop.f32.mrf.mxu0
      %5886 = vdwg.mxu0
      %5887 = vmatpush.bf16.msra.mxu0 0
      %5888 = vmatpush.bf16.msra.mxu0 %v5542
      %5889 = vmatpush.bf16.msra.mxu0 %v5232
      %5890 = vmatpush.bf16.msra.mxu0 %v5200
      %5891 = vmatpush.bf16.msra.mxu0 %v5168
      %5892 = vmatpush.bf16.msra.mxu0 %v5136
      %5893 = vmatpush.bf16.msra.mxu0 %v5104
      %5894 = vmatpush.bf16.msra.mxu0 %v5072
      %5895 = vmatmul.bf16.gmra.mxu0 %v5464
      %v5896 = vpop.f32.mrf.mxu0
      %v5897 = vadd.f32 0.0, %v5896
      %v5898 = vpop.f32.mrf.mxu0
      %5899 = vdwg.mxu0
      %5900 = vmatpush.bf16.msra.mxu0 0
      %5901 = vmatpush.bf16.msra.mxu0 %v5545
      %5902 = vmatpush.bf16.msra.mxu0 %v5233
      %5903 = vmatpush.bf16.msra.mxu0 %v5201
      %5904 = vmatpush.bf16.msra.mxu0 %v5169
      %5905 = vmatpush.bf16.msra.mxu0 %v5137
      %5906 = vmatpush.bf16.msra.mxu0 %v5105
      %5907 = vmatpush.bf16.msra.mxu0 %v5073
      %5908 = vmatmul.bf16.gmra.mxu0 %v5464
      %v5909 = vpop.f32.mrf.mxu0
      %v5910 = vadd.f32 0.0, %v5909
      %v5911 = vpop.f32.mrf.mxu0
      %5912 = vdwg.mxu0
      %5913 = vmatpush.bf16.msra.mxu0 0
      %5914 = vmatpush.bf16.msra.mxu0 %v5548
      %5915 = vmatpush.bf16.msra.mxu0 %v5234
      %5916 = vmatpush.bf16.msra.mxu0 %v5202
      %5917 = vmatpush.bf16.msra.mxu0 %v5170
      %5918 = vmatpush.bf16.msra.mxu0 %v5138
      %5919 = vmatpush.bf16.msra.mxu0 %v5106
      %5920 = vmatpush.bf16.msra.mxu0 %v5074
      %5921 = vmatmul.bf16.gmra.mxu0 %v5464
      %v5922 = vpop.f32.mrf.mxu0
      %v5923 = vadd.f32 0.0, %v5922
      %v5924 = vpop.f32.mrf.mxu0
      %5925 = vdwg.mxu0
      %5926 = vmatpush.bf16.msra.mxu0 0
      %5927 = vmatpush.bf16.msra.mxu0 %v5551
      %5928 = vmatpush.bf16.msra.mxu0 %v5235
      %5929 = vmatpush.bf16.msra.mxu0 %v5203
      %5930 = vmatpush.bf16.msra.mxu0 %v5171
      %5931 = vmatpush.bf16.msra.mxu0 %v5139
      %5932 = vmatpush.bf16.msra.mxu0 %v5107
      %5933 = vmatpush.bf16.msra.mxu0 %v5075
      %5934 = vmatmul.bf16.gmra.mxu0 %v5464
      %v5935 = vpop.f32.mrf.mxu0
      %v5936 = vadd.f32 0.0, %v5935
      %v5937 = vpop.f32.mrf.mxu0
      %5938 = vdwg.mxu0
      %5939 = vmatpush.bf16.msra.mxu0 0
      %5940 = vmatpush.bf16.msra.mxu0 %v5554
      %5941 = vmatpush.bf16.msra.mxu0 %v5236
      %5942 = vmatpush.bf16.msra.mxu0 %v5204
      %5943 = vmatpush.bf16.msra.mxu0 %v5172
      %5944 = vmatpush.bf16.msra.mxu0 %v5140
      %5945 = vmatpush.bf16.msra.mxu0 %v5108
      %5946 = vmatpush.bf16.msra.mxu0 %v5076
      %5947 = vmatmul.bf16.gmra.mxu0 %v5464
      %v5948 = vpop.f32.mrf.mxu0
      %v5949 = vadd.f32 0.0, %v5948
      %v5950 = vpop.f32.mrf.mxu0
      %5951 = vdwg.mxu0
      %5952 = vmatpush.bf16.msra.mxu0 0
      %5953 = vmatpush.bf16.msra.mxu0 %v5557
      %5954 = vmatpush.bf16.msra.mxu0 %v5237
      %5955 = vmatpush.bf16.msra.mxu0 %v5205
      %5956 = vmatpush.bf16.msra.mxu0 %v5173
      %5957 = vmatpush.bf16.msra.mxu0 %v5141
      %5958 = vmatpush.bf16.msra.mxu0 %v5109
      %5959 = vmatpush.bf16.msra.mxu0 %v5077
      %5960 = vmatmul.bf16.gmra.mxu0 %v5464
      %v5961 = vpop.f32.mrf.mxu0
      %v5962 = vadd.f32 0.0, %v5961
      %v5963 = vpop.f32.mrf.mxu0
      %5964 = vdwg.mxu0
      %5965 = vmatpush.bf16.msra.mxu0 0
      %5966 = vmatpush.bf16.msra.mxu0 %v5560
      %5967 = vmatpush.bf16.msra.mxu0 %v5238
      %5968 = vmatpush.bf16.msra.mxu0 %v5206
      %5969 = vmatpush.bf16.msra.mxu0 %v5174
      %5970 = vmatpush.bf16.msra.mxu0 %v5142
      %5971 = vmatpush.bf16.msra.mxu0 %v5110
      %5972 = vmatpush.bf16.msra.mxu0 %v5078
      %5973 = vmatmul.bf16.gmra.mxu0 %v5464
      %v5974 = vpop.f32.mrf.mxu0
      %v5975 = vadd.f32 0.0, %v5974
      %v5976 = vpop.f32.mrf.mxu0
      %5977 = vdwg.mxu0
      %v5978 = vadd.f32 %v4181, %v5572
      %v5979 = vadd.f32 %v4182, %v5585
      %v5980 = vadd.f32 %v4183, %v5598
      %v5981 = vadd.f32 %v4184, %v5611
      %v5982 = vadd.f32 %v4185, %v5624
      %v5983 = vadd.f32 %v4186, %v5637
      %v5984 = vadd.f32 %v4187, %v5650
      %v5985 = vadd.f32 %v4188, %v5663
      %v5986 = vadd.f32 %v4189, %v5676
      %v5987 = vadd.f32 %v4190, %v5689
      %v5988 = vadd.f32 %v4191, %v5702
      %v5989 = vadd.f32 %v4192, %v5715
      %v5990 = vadd.f32 %v4193, %v5728
      %v5991 = vadd.f32 %v4194, %v5741
      %v5992 = vadd.f32 %v4195, %v5754
      %v5993 = vadd.f32 %v4196, %v5767
      %v5994 = vadd.f32 %v4197, %v5780
      %v5995 = vadd.f32 %v4198, %v5793
      %v5996 = vadd.f32 %v4199, %v5806
      %v5997 = vadd.f32 %v4200, %v5819
      %v5998 = vadd.f32 %v4201, %v5832
      %v5999 = vadd.f32 %v4202, %v5845
      %v6000 = vadd.f32 %v4203, %v5858
      %v6001 = vadd.f32 %v4204, %v5871
      %v6002 = vadd.f32 %v4205, %v5884
      %v6003 = vadd.f32 %v4206, %v5897
      %v6004 = vadd.f32 %v4207, %v5910
      %v6005 = vadd.f32 %v4208, %v5923
      %v6006 = vadd.f32 %v4209, %v5936
      %v6007 = vadd.f32 %v4210, %v5949
      %v6008 = vadd.f32 %v4211, %v5962
      %v6009 = vadd.f32 %v4212, %v5975
      %s6010 = scalar_lea.vmem %s1, 16
      %v6011 = vld [vmem:[%s6010] sm:$0xf]
      %v6012 = vld [vmem:[%s138 + $0x20] sm:$0xff]
      %v6013 = vld [vmem:[%s138 + $0x28] sm:$0xff]
      %v6014 = vld [vmem:[%s138 + $0x30] sm:$0xff]
      %v6015 = vld [vmem:[%s138 + $0x38] sm:$0xff]
      %v6016 = vld [vmem:[%s138 + $0x40] sm:$0xff]
      %v6017 = vld [vmem:[%s138 + $0x48] sm:$0xff]
      %v6018 = vld [vmem:[%s138 + $0x50] sm:$0xff]
      %v6019 = vld [vmem:[%s138 + $0x58] sm:$0xff]
      %v6020 = vld [vmem:[%s138 + $0x60] sm:$0xff]
      %v6021 = vld [vmem:[%s138 + $0x68] sm:$0xff]
      %v6022 = vld [vmem:[%s138 + $0x70] sm:$0xff]
      %v6023 = vld [vmem:[%s138 + $0x78] sm:$0xff]
      %v6024 = vld [vmem:[%s138 + $0x80] sm:$0xff]
      %v6025 = vld [vmem:[%s138 + $0x88] sm:$0xff]
      %v6026 = vld [vmem:[%s138 + $0x90] sm:$0xff]
      %v6027 = vld [vmem:[%s138 + $0x98] sm:$0xff]
      %v6028 = vld [vmem:[%s138 + $0xc0] sm:$0xff]
      %v6029 = vld [vmem:[%s138 + $0xc8] sm:$0xff]
      %v6030 = vld [vmem:[%s138 + $0xd0] sm:$0xff]
      %v6031 = vld [vmem:[%s138 + $0xd8] sm:$0xff]
      %v6032 = vld [vmem:[%s138 + $0xe0] sm:$0xff]
      %v6033 = vld [vmem:[%s138 + $0xe8] sm:$0xff]
      %v6034 = vld [vmem:[%s138 + $0xf0] sm:$0xff]
      %v6035 = vld [vmem:[%s138 + $0xf8] sm:$0xff]
      %v6036 = vld [vmem:[%s138 + $0x100] sm:$0xff]
      %v6037 = vld [vmem:[%s138 + $0x108] sm:$0xff]
      %v6038 = vld [vmem:[%s138 + $0x110] sm:$0xff]
      %v6039 = vld [vmem:[%s138 + $0x118] sm:$0xff]
      %v6040 = vld [vmem:[%s138 + $0x120] sm:$0xff]
      %v6041 = vld [vmem:[%s138 + $0x128] sm:$0xff]
      %v6042 = vld [vmem:[%s138 + $0x130] sm:$0xff]
      %v6043 = vld [vmem:[%s138 + $0x138] sm:$0xff]
      %v6044 = vld [vmem:[%s138 + $0x160] sm:$0xff]
      %v6045 = vld [vmem:[%s138 + $0x168] sm:$0xff]
      %v6046 = vld [vmem:[%s138 + $0x170] sm:$0xff]
      %v6047 = vld [vmem:[%s138 + $0x178] sm:$0xff]
      %v6048 = vld [vmem:[%s138 + $0x180] sm:$0xff]
      %v6049 = vld [vmem:[%s138 + $0x188] sm:$0xff]
      %v6050 = vld [vmem:[%s138 + $0x190] sm:$0xff]
      %v6051 = vld [vmem:[%s138 + $0x198] sm:$0xff]
      %v6052 = vld [vmem:[%s138 + $0x1a0] sm:$0xff]
      %v6053 = vld [vmem:[%s138 + $0x1a8] sm:$0xff]
      %v6054 = vld [vmem:[%s138 + $0x1b0] sm:$0xff]
      %v6055 = vld [vmem:[%s138 + $0x1b8] sm:$0xff]
      %v6056 = vld [vmem:[%s138 + $0x1c0] sm:$0xff]
      %v6057 = vld [vmem:[%s138 + $0x1c8] sm:$0xff]
      %v6058 = vld [vmem:[%s138 + $0x1d0] sm:$0xff]
      %v6059 = vld [vmem:[%s138 + $0x1d8] sm:$0xff]
      %v6060 = vld [vmem:[%s138 + $0x200] sm:$0xff]
      %v6061 = vld [vmem:[%s138 + $0x208] sm:$0xff]
      %v6062 = vld [vmem:[%s138 + $0x210] sm:$0xff]
      %v6063 = vld [vmem:[%s138 + $0x218] sm:$0xff]
      %v6064 = vld [vmem:[%s138 + $0x220] sm:$0xff]
      %v6065 = vld [vmem:[%s138 + $0x228] sm:$0xff]
      %v6066 = vld [vmem:[%s138 + $0x230] sm:$0xff]
      %v6067 = vld [vmem:[%s138 + $0x238] sm:$0xff]
      %v6068 = vld [vmem:[%s138 + $0x240] sm:$0xff]
      %v6069 = vld [vmem:[%s138 + $0x248] sm:$0xff]
      %v6070 = vld [vmem:[%s138 + $0x250] sm:$0xff]
      %v6071 = vld [vmem:[%s138 + $0x258] sm:$0xff]
      %v6072 = vld [vmem:[%s138 + $0x260] sm:$0xff]
      %v6073 = vld [vmem:[%s138 + $0x268] sm:$0xff]
      %v6074 = vld [vmem:[%s138 + $0x270] sm:$0xff]
      %v6075 = vld [vmem:[%s138 + $0x278] sm:$0xff]
      %v6076 = vld [vmem:[%s138 + $0x2a0] sm:$0xff]
      %v6077 = vld [vmem:[%s138 + $0x2a8] sm:$0xff]
      %v6078 = vld [vmem:[%s138 + $0x2b0] sm:$0xff]
      %v6079 = vld [vmem:[%s138 + $0x2b8] sm:$0xff]
      %v6080 = vld [vmem:[%s138 + $0x2c0] sm:$0xff]
      %v6081 = vld [vmem:[%s138 + $0x2c8] sm:$0xff]
      %v6082 = vld [vmem:[%s138 + $0x2d0] sm:$0xff]
      %v6083 = vld [vmem:[%s138 + $0x2d8] sm:$0xff]
      %v6084 = vld [vmem:[%s138 + $0x2e0] sm:$0xff]
      %v6085 = vld [vmem:[%s138 + $0x2e8] sm:$0xff]
      %v6086 = vld [vmem:[%s138 + $0x2f0] sm:$0xff]
      %v6087 = vld [vmem:[%s138 + $0x2f8] sm:$0xff]
      %v6088 = vld [vmem:[%s138 + $0x300] sm:$0xff]
      %v6089 = vld [vmem:[%s138 + $0x308] sm:$0xff]
      %v6090 = vld [vmem:[%s138 + $0x310] sm:$0xff]
      %v6091 = vld [vmem:[%s138 + $0x318] sm:$0xff]
      %v6092 = vld [vmem:[%s138 + $0x340] sm:$0xff]
      %v6093 = vld [vmem:[%s138 + $0x348] sm:$0xff]
      %v6094 = vld [vmem:[%s138 + $0x350] sm:$0xff]
      %v6095 = vld [vmem:[%s138 + $0x358] sm:$0xff]
      %v6096 = vld [vmem:[%s138 + $0x360] sm:$0xff]
      %v6097 = vld [vmem:[%s138 + $0x368] sm:$0xff]
      %v6098 = vld [vmem:[%s138 + $0x370] sm:$0xff]
      %v6099 = vld [vmem:[%s138 + $0x378] sm:$0xff]
      %v6100 = vld [vmem:[%s138 + $0x380] sm:$0xff]
      %v6101 = vld [vmem:[%s138 + $0x388] sm:$0xff]
      %v6102 = vld [vmem:[%s138 + $0x390] sm:$0xff]
      %v6103 = vld [vmem:[%s138 + $0x398] sm:$0xff]
      %v6104 = vld [vmem:[%s138 + $0x3a0] sm:$0xff]
      %v6105 = vld [vmem:[%s138 + $0x3a8] sm:$0xff]
      %v6106 = vld [vmem:[%s138 + $0x3b0] sm:$0xff]
      %v6107 = vld [vmem:[%s138 + $0x3b8] sm:$0xff]
      %v6108 = vld [vmem:[%s138 + $0x3e0] sm:$0xff]
      %v6109 = vld [vmem:[%s138 + $0x3e8] sm:$0xff]
      %v6110 = vld [vmem:[%s138 + $0x3f0] sm:$0xff]
      %v6111 = vld [vmem:[%s138 + $0x3f8] sm:$0xff]
      %v6112 = vld [vmem:[%s138 + $0x400] sm:$0xff]
      %v6113 = vld [vmem:[%s138 + $0x408] sm:$0xff]
      %v6114 = vld [vmem:[%s138 + $0x410] sm:$0xff]
      %v6115 = vld [vmem:[%s138 + $0x418] sm:$0xff]
      %v6116 = vld [vmem:[%s138 + $0x420] sm:$0xff]
      %v6117 = vld [vmem:[%s138 + $0x428] sm:$0xff]
      %v6118 = vld [vmem:[%s138 + $0x430] sm:$0xff]
      %v6119 = vld [vmem:[%s138 + $0x438] sm:$0xff]
      %v6120 = vld [vmem:[%s138 + $0x440] sm:$0xff]
      %v6121 = vld [vmem:[%s138 + $0x448] sm:$0xff]
      %v6122 = vld [vmem:[%s138 + $0x450] sm:$0xff]
      %v6123 = vld [vmem:[%s138 + $0x458] sm:$0xff]
      %v6124 = vld [vmem:[%s138 + $0x480] sm:$0xff]
      %v6125 = vld [vmem:[%s138 + $0x488] sm:$0xff]
      %v6126 = vld [vmem:[%s138 + $0x490] sm:$0xff]
      %v6127 = vld [vmem:[%s138 + $0x498] sm:$0xff]
      %v6128 = vld [vmem:[%s138 + $0x4a0] sm:$0xff]
      %v6129 = vld [vmem:[%s138 + $0x4a8] sm:$0xff]
      %v6130 = vld [vmem:[%s138 + $0x4b0] sm:$0xff]
      %v6131 = vld [vmem:[%s138 + $0x4b8] sm:$0xff]
      %v6132 = vld [vmem:[%s138 + $0x4c0] sm:$0xff]
      %v6133 = vld [vmem:[%s138 + $0x4c8] sm:$0xff]
      %v6134 = vld [vmem:[%s138 + $0x4d0] sm:$0xff]
      %v6135 = vld [vmem:[%s138 + $0x4d8] sm:$0xff]
      %v6136 = vld [vmem:[%s138 + $0x4e0] sm:$0xff]
      %v6137 = vld [vmem:[%s138 + $0x4e8] sm:$0xff]
      %v6138 = vld [vmem:[%s138 + $0x4f0] sm:$0xff]
      %v6139 = vld [vmem:[%s138 + $0x4f8] sm:$0xff]
      %v6140 = vld [vmem:[%s138 + $0x520] sm:$0xff]
      %v6141 = vld [vmem:[%s138 + $0x528] sm:$0xff]
      %v6142 = vld [vmem:[%s138 + $0x530] sm:$0xff]
      %v6143 = vld [vmem:[%s138 + $0x538] sm:$0xff]
      %v6144 = vld [vmem:[%s138 + $0x540] sm:$0xff]
      %v6145 = vld [vmem:[%s138 + $0x548] sm:$0xff]
      %v6146 = vld [vmem:[%s138 + $0x550] sm:$0xff]
      %v6147 = vld [vmem:[%s138 + $0x558] sm:$0xff]
      %v6148 = vld [vmem:[%s138 + $0x560] sm:$0xff]
      %v6149 = vld [vmem:[%s138 + $0x568] sm:$0xff]
      %v6150 = vld [vmem:[%s138 + $0x570] sm:$0xff]
      %v6151 = vld [vmem:[%s138 + $0x578] sm:$0xff]
      %v6152 = vld [vmem:[%s138 + $0x580] sm:$0xff]
      %v6153 = vld [vmem:[%s138 + $0x588] sm:$0xff]
      %v6154 = vld [vmem:[%s138 + $0x590] sm:$0xff]
      %v6155 = vld [vmem:[%s138 + $0x598] sm:$0xff]
      %v6156 = vld [vmem:[%s138 + $0x5c0] sm:$0xff]
      %v6157 = vld [vmem:[%s138 + $0x5c8] sm:$0xff]
      %v6158 = vld [vmem:[%s138 + $0x5d0] sm:$0xff]
      %v6159 = vld [vmem:[%s138 + $0x5d8] sm:$0xff]
      %v6160 = vld [vmem:[%s138 + $0x5e0] sm:$0xff]
      %v6161 = vld [vmem:[%s138 + $0x5e8] sm:$0xff]
      %v6162 = vld [vmem:[%s138 + $0x5f0] sm:$0xff]
      %v6163 = vld [vmem:[%s138 + $0x5f8] sm:$0xff]
      %v6164 = vld [vmem:[%s138 + $0x600] sm:$0xff]
      %v6165 = vld [vmem:[%s138 + $0x608] sm:$0xff]
      %v6166 = vld [vmem:[%s138 + $0x610] sm:$0xff]
      %v6167 = vld [vmem:[%s138 + $0x618] sm:$0xff]
      %v6168 = vld [vmem:[%s138 + $0x620] sm:$0xff]
      %v6169 = vld [vmem:[%s138 + $0x628] sm:$0xff]
      %v6170 = vld [vmem:[%s138 + $0x630] sm:$0xff]
      %v6171 = vld [vmem:[%s138 + $0x638] sm:$0xff]
      %v6172 = vld [vmem:[%s138 + $0x660] sm:$0xff]
      %v6173 = vld [vmem:[%s138 + $0x668] sm:$0xff]
      %v6174 = vld [vmem:[%s138 + $0x670] sm:$0xff]
      %v6175 = vld [vmem:[%s138 + $0x678] sm:$0xff]
      %v6176 = vld [vmem:[%s138 + $0x680] sm:$0xff]
      %v6177 = vld [vmem:[%s138 + $0x688] sm:$0xff]
      %v6178 = vld [vmem:[%s138 + $0x690] sm:$0xff]
      %v6179 = vld [vmem:[%s138 + $0x698] sm:$0xff]
      %v6180 = vld [vmem:[%s138 + $0x6a0] sm:$0xff]
      %v6181 = vld [vmem:[%s138 + $0x6a8] sm:$0xff]
      %v6182 = vld [vmem:[%s138 + $0x6b0] sm:$0xff]
      %v6183 = vld [vmem:[%s138 + $0x6b8] sm:$0xff]
      %v6184 = vld [vmem:[%s138 + $0x6c0] sm:$0xff]
      %v6185 = vld [vmem:[%s138 + $0x6c8] sm:$0xff]
      %v6186 = vld [vmem:[%s138 + $0x6d0] sm:$0xff]
      %v6187 = vld [vmem:[%s138 + $0x6d8] sm:$0xff]
      %v6188 = vld [vmem:[%s138 + $0x700] sm:$0xff]
      %v6189 = vld [vmem:[%s138 + $0x708] sm:$0xff]
      %v6190 = vld [vmem:[%s138 + $0x710] sm:$0xff]
      %v6191 = vld [vmem:[%s138 + $0x718] sm:$0xff]
      %v6192 = vld [vmem:[%s138 + $0x720] sm:$0xff]
      %v6193 = vld [vmem:[%s138 + $0x728] sm:$0xff]
      %v6194 = vld [vmem:[%s138 + $0x730] sm:$0xff]
      %v6195 = vld [vmem:[%s138 + $0x738] sm:$0xff]
      %v6196 = vld [vmem:[%s138 + $0x740] sm:$0xff]
      %v6197 = vld [vmem:[%s138 + $0x748] sm:$0xff]
      %v6198 = vld [vmem:[%s138 + $0x750] sm:$0xff]
      %v6199 = vld [vmem:[%s138 + $0x758] sm:$0xff]
      %v6200 = vld [vmem:[%s138 + $0x760] sm:$0xff]
      %v6201 = vld [vmem:[%s138 + $0x768] sm:$0xff]
      %v6202 = vld [vmem:[%s138 + $0x770] sm:$0xff]
      %v6203 = vld [vmem:[%s138 + $0x778] sm:$0xff]
      %v6204 = vld [vmem:[%s138 + $0x7a0] sm:$0x33]
      %v6205 = vld [vmem:[%s138 + $0x7a8] sm:$0x33]
      %v6206 = vld [vmem:[%s138 + $0x7b0] sm:$0x33]
      %v6207 = vld [vmem:[%s138 + $0x7b8] sm:$0x33]
      %v6208 = vld [vmem:[%s138 + $0x7c0] sm:$0x33]
      %v6209 = vld [vmem:[%s138 + $0x7c8] sm:$0x33]
      %v6210 = vld [vmem:[%s138 + $0x7d0] sm:$0x33]
      %v6211 = vld [vmem:[%s138 + $0x7d8] sm:$0x33]
      %v6212 = vld [vmem:[%s138 + $0x7e0] sm:$0x33]
      %v6213 = vld [vmem:[%s138 + $0x7e8] sm:$0x33]
      %v6214 = vld [vmem:[%s138 + $0x7f0] sm:$0x33]
      %v6215 = vld [vmem:[%s138 + $0x7f8] sm:$0x33]
      %v6216 = vld [vmem:[%s138 + $0x800] sm:$0x33]
      %v6217 = vld [vmem:[%s138 + $0x808] sm:$0x33]
      %v6218 = vld [vmem:[%s138 + $0x810] sm:$0x33]
      %v6219 = vld [vmem:[%s138 + $0x818] sm:$0x33]
      %v6428 = vunpack.c.l.b16 %v6012
      %v6429 = vunpack.c.h.b16 %v6012
      %v6430 = vunpack.c.l.b16 %v6013
      %v6431 = vunpack.c.h.b16 %v6013
      %v6432 = vunpack.c.l.b16 %v6014
      %v6433 = vunpack.c.h.b16 %v6014
      %v6434 = vunpack.c.l.b16 %v6015
      %v6435 = vunpack.c.h.b16 %v6015
      %v6436 = vunpack.c.l.b16 %v6016
      %v6437 = vunpack.c.h.b16 %v6016
      %v6438 = vunpack.c.l.b16 %v6017
      %v6439 = vunpack.c.h.b16 %v6017
      %v6440 = vunpack.c.l.b16 %v6018
      %v6441 = vunpack.c.h.b16 %v6018
      %v6442 = vunpack.c.l.b16 %v6019
      %v6443 = vunpack.c.h.b16 %v6019
      %v6444 = vunpack.c.l.b16 %v6020
      %v6445 = vunpack.c.h.b16 %v6020
      %v6446 = vunpack.c.l.b16 %v6021
      %v6447 = vunpack.c.h.b16 %v6021
      %v6448 = vunpack.c.l.b16 %v6022
      %v6449 = vunpack.c.h.b16 %v6022
      %v6450 = vunpack.c.l.b16 %v6023
      %v6451 = vunpack.c.h.b16 %v6023
      %v6452 = vunpack.c.l.b16 %v6024
      %v6453 = vunpack.c.h.b16 %v6024
      %v6454 = vunpack.c.l.b16 %v6025
      %v6455 = vunpack.c.h.b16 %v6025
      %v6456 = vunpack.c.l.b16 %v6026
      %v6457 = vunpack.c.h.b16 %v6026
      %v6458 = vunpack.c.l.b16 %v6027
      %v6459 = vunpack.c.h.b16 %v6027
      %v6460 = vunpack.c.l.b16 %v6028
      %v6461 = vunpack.c.h.b16 %v6028
      %v6462 = vunpack.c.l.b16 %v6029
      %v6463 = vunpack.c.h.b16 %v6029
      %v6464 = vunpack.c.l.b16 %v6030
      %v6465 = vunpack.c.h.b16 %v6030
      %v6466 = vunpack.c.l.b16 %v6031
      %v6467 = vunpack.c.h.b16 %v6031
      %v6468 = vunpack.c.l.b16 %v6032
      %v6469 = vunpack.c.h.b16 %v6032
      %v6470 = vunpack.c.l.b16 %v6033
      %v6471 = vunpack.c.h.b16 %v6033
      %v6472 = vunpack.c.l.b16 %v6034
      %v6473 = vunpack.c.h.b16 %v6034
      %v6474 = vunpack.c.l.b16 %v6035
      %v6475 = vunpack.c.h.b16 %v6035
      %v6476 = vunpack.c.l.b16 %v6036
      %v6477 = vunpack.c.h.b16 %v6036
      %v6478 = vunpack.c.l.b16 %v6037
      %v6479 = vunpack.c.h.b16 %v6037
      %v6480 = vunpack.c.l.b16 %v6038
      %v6481 = vunpack.c.h.b16 %v6038
      %v6482 = vunpack.c.l.b16 %v6039
      %v6483 = vunpack.c.h.b16 %v6039
      %v6484 = vunpack.c.l.b16 %v6040
      %v6485 = vunpack.c.h.b16 %v6040
      %v6486 = vunpack.c.l.b16 %v6041
      %v6487 = vunpack.c.h.b16 %v6041
      %v6488 = vunpack.c.l.b16 %v6042
      %v6489 = vunpack.c.h.b16 %v6042
      %v6490 = vunpack.c.l.b16 %v6043
      %v6491 = vunpack.c.h.b16 %v6043
      %v6492 = vunpack.c.l.b16 %v6044
      %v6493 = vunpack.c.h.b16 %v6044
      %v6494 = vunpack.c.l.b16 %v6045
      %v6495 = vunpack.c.h.b16 %v6045
      %v6496 = vunpack.c.l.b16 %v6046
      %v6497 = vunpack.c.h.b16 %v6046
      %v6498 = vunpack.c.l.b16 %v6047
      %v6499 = vunpack.c.h.b16 %v6047
      %v6500 = vunpack.c.l.b16 %v6048
      %v6501 = vunpack.c.h.b16 %v6048
      %v6502 = vunpack.c.l.b16 %v6049
      %v6503 = vunpack.c.h.b16 %v6049
      %v6504 = vunpack.c.l.b16 %v6050
      %v6505 = vunpack.c.h.b16 %v6050
      %v6506 = vunpack.c.l.b16 %v6051
      %v6507 = vunpack.c.h.b16 %v6051
      %v6508 = vunpack.c.l.b16 %v6052
      %v6509 = vunpack.c.h.b16 %v6052
      %v6510 = vunpack.c.l.b16 %v6053
      %v6511 = vunpack.c.h.b16 %v6053
      %v6512 = vunpack.c.l.b16 %v6054
      %v6513 = vunpack.c.h.b16 %v6054
      %v6514 = vunpack.c.l.b16 %v6055
      %v6515 = vunpack.c.h.b16 %v6055
      %v6516 = vunpack.c.l.b16 %v6056
      %v6517 = vunpack.c.h.b16 %v6056
      %v6518 = vunpack.c.l.b16 %v6057
      %v6519 = vunpack.c.h.b16 %v6057
      %v6520 = vunpack.c.l.b16 %v6058
      %v6521 = vunpack.c.h.b16 %v6058
      %v6522 = vunpack.c.l.b16 %v6059
      %v6523 = vunpack.c.h.b16 %v6059
      %v6524 = vunpack.c.l.b16 %v6060
      %v6525 = vunpack.c.h.b16 %v6060
      %v6526 = vunpack.c.l.b16 %v6061
      %v6527 = vunpack.c.h.b16 %v6061
      %v6528 = vunpack.c.l.b16 %v6062
      %v6529 = vunpack.c.h.b16 %v6062
      %v6530 = vunpack.c.l.b16 %v6063
      %v6531 = vunpack.c.h.b16 %v6063
      %v6532 = vunpack.c.l.b16 %v6064
      %v6533 = vunpack.c.h.b16 %v6064
      %v6534 = vunpack.c.l.b16 %v6065
      %v6535 = vunpack.c.h.b16 %v6065
      %v6536 = vunpack.c.l.b16 %v6066
      %v6537 = vunpack.c.h.b16 %v6066
      %v6538 = vunpack.c.l.b16 %v6067
      %v6539 = vunpack.c.h.b16 %v6067
      %v6540 = vunpack.c.l.b16 %v6068
      %v6541 = vunpack.c.h.b16 %v6068
      %v6542 = vunpack.c.l.b16 %v6069
      %v6543 = vunpack.c.h.b16 %v6069
      %v6544 = vunpack.c.l.b16 %v6070
      %v6545 = vunpack.c.h.b16 %v6070
      %v6546 = vunpack.c.l.b16 %v6071
      %v6547 = vunpack.c.h.b16 %v6071
      %v6548 = vunpack.c.l.b16 %v6072
      %v6549 = vunpack.c.h.b16 %v6072
      %v6550 = vunpack.c.l.b16 %v6073
      %v6551 = vunpack.c.h.b16 %v6073
      %v6552 = vunpack.c.l.b16 %v6074
      %v6553 = vunpack.c.h.b16 %v6074
      %v6554 = vunpack.c.l.b16 %v6075
      %v6555 = vunpack.c.h.b16 %v6075
      %v6556 = vunpack.c.l.b16 %v6076
      %v6557 = vunpack.c.h.b16 %v6076
      %v6558 = vunpack.c.l.b16 %v6077
      %v6559 = vunpack.c.h.b16 %v6077
      %v6560 = vunpack.c.l.b16 %v6078
      %v6561 = vunpack.c.h.b16 %v6078
      %v6562 = vunpack.c.l.b16 %v6079
      %v6563 = vunpack.c.h.b16 %v6079
      %v6564 = vunpack.c.l.b16 %v6080
      %v6565 = vunpack.c.h.b16 %v6080
      %v6566 = vunpack.c.l.b16 %v6081
      %v6567 = vunpack.c.h.b16 %v6081
      %v6568 = vunpack.c.l.b16 %v6082
      %v6569 = vunpack.c.h.b16 %v6082
      %v6570 = vunpack.c.l.b16 %v6083
      %v6571 = vunpack.c.h.b16 %v6083
      %v6572 = vunpack.c.l.b16 %v6084
      %v6573 = vunpack.c.h.b16 %v6084
      %v6574 = vunpack.c.l.b16 %v6085
      %v6575 = vunpack.c.h.b16 %v6085
      %v6576 = vunpack.c.l.b16 %v6086
      %v6577 = vunpack.c.h.b16 %v6086
      %v6578 = vunpack.c.l.b16 %v6087
      %v6579 = vunpack.c.h.b16 %v6087
      %v6580 = vunpack.c.l.b16 %v6088
      %v6581 = vunpack.c.h.b16 %v6088
      %v6582 = vunpack.c.l.b16 %v6089
      %v6583 = vunpack.c.h.b16 %v6089
      %v6584 = vunpack.c.l.b16 %v6090
      %v6585 = vunpack.c.h.b16 %v6090
      %v6586 = vunpack.c.l.b16 %v6091
      %v6587 = vunpack.c.h.b16 %v6091
      %v6588 = vunpack.c.l.b16 %v6092
      %v6589 = vunpack.c.h.b16 %v6092
      %v6590 = vunpack.c.l.b16 %v6093
      %v6591 = vunpack.c.h.b16 %v6093
      %v6592 = vunpack.c.l.b16 %v6094
      %v6593 = vunpack.c.h.b16 %v6094
      %v6594 = vunpack.c.l.b16 %v6095
      %v6595 = vunpack.c.h.b16 %v6095
      %v6596 = vunpack.c.l.b16 %v6096
      %v6597 = vunpack.c.h.b16 %v6096
      %v6598 = vunpack.c.l.b16 %v6097
      %v6599 = vunpack.c.h.b16 %v6097
      %v6600 = vunpack.c.l.b16 %v6098
      %v6601 = vunpack.c.h.b16 %v6098
      %v6602 = vunpack.c.l.b16 %v6099
      %v6603 = vunpack.c.h.b16 %v6099
      %v6604 = vunpack.c.l.b16 %v6100
      %v6605 = vunpack.c.h.b16 %v6100
      %v6606 = vunpack.c.l.b16 %v6101
      %v6607 = vunpack.c.h.b16 %v6101
      %v6608 = vunpack.c.l.b16 %v6102
      %v6609 = vunpack.c.h.b16 %v6102
      %v6610 = vunpack.c.l.b16 %v6103
      %v6611 = vunpack.c.h.b16 %v6103
      %v6612 = vunpack.c.l.b16 %v6104
      %v6613 = vunpack.c.h.b16 %v6104
      %v6614 = vunpack.c.l.b16 %v6105
      %v6615 = vunpack.c.h.b16 %v6105
      %v6616 = vunpack.c.l.b16 %v6106
      %v6617 = vunpack.c.h.b16 %v6106
      %v6618 = vunpack.c.l.b16 %v6107
      %v6619 = vunpack.c.h.b16 %v6107
      %v6620 = vunpack.c.l.b16 %v6108
      %v6621 = vunpack.c.h.b16 %v6108
      %v6622 = vunpack.c.l.b16 %v6109
      %v6623 = vunpack.c.h.b16 %v6109
      %v6624 = vunpack.c.l.b16 %v6110
      %v6625 = vunpack.c.h.b16 %v6110
      %v6626 = vunpack.c.l.b16 %v6111
      %v6627 = vunpack.c.h.b16 %v6111
      %v6628 = vunpack.c.l.b16 %v6112
      %v6629 = vunpack.c.h.b16 %v6112
      %v6630 = vunpack.c.l.b16 %v6113
      %v6631 = vunpack.c.h.b16 %v6113
      %v6632 = vunpack.c.l.b16 %v6114
      %v6633 = vunpack.c.h.b16 %v6114
      %v6634 = vunpack.c.l.b16 %v6115
      %v6635 = vunpack.c.h.b16 %v6115
      %v6636 = vunpack.c.l.b16 %v6116
      %v6637 = vunpack.c.h.b16 %v6116
      %v6638 = vunpack.c.l.b16 %v6117
      %v6639 = vunpack.c.h.b16 %v6117
      %v6640 = vunpack.c.l.b16 %v6118
      %v6641 = vunpack.c.h.b16 %v6118
      %v6642 = vunpack.c.l.b16 %v6119
      %v6643 = vunpack.c.h.b16 %v6119
      %v6644 = vunpack.c.l.b16 %v6120
      %v6645 = vunpack.c.h.b16 %v6120
      %v6646 = vunpack.c.l.b16 %v6121
      %v6647 = vunpack.c.h.b16 %v6121
      %v6648 = vunpack.c.l.b16 %v6122
      %v6649 = vunpack.c.h.b16 %v6122
      %v6650 = vunpack.c.l.b16 %v6123
      %v6651 = vunpack.c.h.b16 %v6123
      %v6652 = vunpack.c.l.b16 %v6124
      %v6653 = vunpack.c.h.b16 %v6124
      %v6654 = vunpack.c.l.b16 %v6125
      %v6655 = vunpack.c.h.b16 %v6125
      %v6656 = vunpack.c.l.b16 %v6126
      %v6657 = vunpack.c.h.b16 %v6126
      %v6658 = vunpack.c.l.b16 %v6127
      %v6659 = vunpack.c.h.b16 %v6127
      %v6660 = vunpack.c.l.b16 %v6128
      %v6661 = vunpack.c.h.b16 %v6128
      %v6662 = vunpack.c.l.b16 %v6129
      %v6663 = vunpack.c.h.b16 %v6129
      %v6664 = vunpack.c.l.b16 %v6130
      %v6665 = vunpack.c.h.b16 %v6130
      %v6666 = vunpack.c.l.b16 %v6131
      %v6667 = vunpack.c.h.b16 %v6131
      %v6668 = vunpack.c.l.b16 %v6132
      %v6669 = vunpack.c.h.b16 %v6132
      %v6670 = vunpack.c.l.b16 %v6133
      %v6671 = vunpack.c.h.b16 %v6133
      %v6672 = vunpack.c.l.b16 %v6134
      %v6673 = vunpack.c.h.b16 %v6134
      %v6674 = vunpack.c.l.b16 %v6135
      %v6675 = vunpack.c.h.b16 %v6135
      %v6676 = vunpack.c.l.b16 %v6136
      %v6677 = vunpack.c.h.b16 %v6136
      %v6678 = vunpack.c.l.b16 %v6137
      %v6679 = vunpack.c.h.b16 %v6137
      %v6680 = vunpack.c.l.b16 %v6138
      %v6681 = vunpack.c.h.b16 %v6138
      %v6682 = vunpack.c.l.b16 %v6139
      %v6683 = vunpack.c.h.b16 %v6139
      %v6684 = vunpack.c.l.b16 %v6140
      %v6685 = vunpack.c.h.b16 %v6140
      %v6686 = vunpack.c.l.b16 %v6141
      %v6687 = vunpack.c.h.b16 %v6141
      %v6688 = vunpack.c.l.b16 %v6142
      %v6689 = vunpack.c.h.b16 %v6142
      %v6690 = vunpack.c.l.b16 %v6143
      %v6691 = vunpack.c.h.b16 %v6143
      %v6692 = vunpack.c.l.b16 %v6144
      %v6693 = vunpack.c.h.b16 %v6144
      %v6694 = vunpack.c.l.b16 %v6145
      %v6695 = vunpack.c.h.b16 %v6145
      %v6696 = vunpack.c.l.b16 %v6146
      %v6697 = vunpack.c.h.b16 %v6146
      %v6698 = vunpack.c.l.b16 %v6147
      %v6699 = vunpack.c.h.b16 %v6147
      %v6700 = vunpack.c.l.b16 %v6148
      %v6701 = vunpack.c.h.b16 %v6148
      %v6702 = vunpack.c.l.b16 %v6149
      %v6703 = vunpack.c.h.b16 %v6149
      %v6704 = vunpack.c.l.b16 %v6150
      %v6705 = vunpack.c.h.b16 %v6150
      %v6706 = vunpack.c.l.b16 %v6151
      %v6707 = vunpack.c.h.b16 %v6151
      %v6708 = vunpack.c.l.b16 %v6152
      %v6709 = vunpack.c.h.b16 %v6152
      %v6710 = vunpack.c.l.b16 %v6153
      %v6711 = vunpack.c.h.b16 %v6153
      %v6712 = vunpack.c.l.b16 %v6154
      %v6713 = vunpack.c.h.b16 %v6154
      %v6714 = vunpack.c.l.b16 %v6155
      %v6715 = vunpack.c.h.b16 %v6155
      %v6716 = vunpack.c.l.b16 %v6156
      %v6717 = vunpack.c.h.b16 %v6156
      %v6718 = vunpack.c.l.b16 %v6157
      %v6719 = vunpack.c.h.b16 %v6157
      %v6720 = vunpack.c.l.b16 %v6158
      %v6721 = vunpack.c.h.b16 %v6158
      %v6722 = vunpack.c.l.b16 %v6159
      %v6723 = vunpack.c.h.b16 %v6159
      %v6724 = vunpack.c.l.b16 %v6160
      %v6725 = vunpack.c.h.b16 %v6160
      %v6726 = vunpack.c.l.b16 %v6161
      %v6727 = vunpack.c.h.b16 %v6161
      %v6728 = vunpack.c.l.b16 %v6162
      %v6729 = vunpack.c.h.b16 %v6162
      %v6730 = vunpack.c.l.b16 %v6163
      %v6731 = vunpack.c.h.b16 %v6163
      %v6732 = vunpack.c.l.b16 %v6164
      %v6733 = vunpack.c.h.b16 %v6164
      %v6734 = vunpack.c.l.b16 %v6165
      %v6735 = vunpack.c.h.b16 %v6165
      %v6736 = vunpack.c.l.b16 %v6166
      %v6737 = vunpack.c.h.b16 %v6166
      %v6738 = vunpack.c.l.b16 %v6167
      %v6739 = vunpack.c.h.b16 %v6167
      %v6740 = vunpack.c.l.b16 %v6168
      %v6741 = vunpack.c.h.b16 %v6168
      %v6742 = vunpack.c.l.b16 %v6169
      %v6743 = vunpack.c.h.b16 %v6169
      %v6744 = vunpack.c.l.b16 %v6170
      %v6745 = vunpack.c.h.b16 %v6170
      %v6746 = vunpack.c.l.b16 %v6171
      %v6747 = vunpack.c.h.b16 %v6171
      %v6748 = vunpack.c.l.b16 %v6172
      %v6749 = vunpack.c.h.b16 %v6172
      %v6750 = vunpack.c.l.b16 %v6173
      %v6751 = vunpack.c.h.b16 %v6173
      %v6752 = vunpack.c.l.b16 %v6174
      %v6753 = vunpack.c.h.b16 %v6174
      %v6754 = vunpack.c.l.b16 %v6175
      %v6755 = vunpack.c.h.b16 %v6175
      %v6756 = vunpack.c.l.b16 %v6176
      %v6757 = vunpack.c.h.b16 %v6176
      %v6758 = vunpack.c.l.b16 %v6177
      %v6759 = vunpack.c.h.b16 %v6177
      %v6760 = vunpack.c.l.b16 %v6178
      %v6761 = vunpack.c.h.b16 %v6178
      %v6762 = vunpack.c.l.b16 %v6179
      %v6763 = vunpack.c.h.b16 %v6179
      %v6764 = vunpack.c.l.b16 %v6180
      %v6765 = vunpack.c.h.b16 %v6180
      %v6766 = vunpack.c.l.b16 %v6181
      %v6767 = vunpack.c.h.b16 %v6181
      %v6768 = vunpack.c.l.b16 %v6182
      %v6769 = vunpack.c.h.b16 %v6182
      %v6770 = vunpack.c.l.b16 %v6183
      %v6771 = vunpack.c.h.b16 %v6183
      %v6772 = vunpack.c.l.b16 %v6184
      %v6773 = vunpack.c.h.b16 %v6184
      %v6774 = vunpack.c.l.b16 %v6185
      %v6775 = vunpack.c.h.b16 %v6185
      %v6776 = vunpack.c.l.b16 %v6186
      %v6777 = vunpack.c.h.b16 %v6186
      %v6778 = vunpack.c.l.b16 %v6187
      %v6779 = vunpack.c.h.b16 %v6187
      %v6780 = vunpack.c.l.b16 %v6188
      %v6781 = vunpack.c.h.b16 %v6188
      %v6782 = vunpack.c.l.b16 %v6189
      %v6783 = vunpack.c.h.b16 %v6189
      %v6784 = vunpack.c.l.b16 %v6190
      %v6785 = vunpack.c.h.b16 %v6190
      %v6786 = vunpack.c.l.b16 %v6191
      %v6787 = vunpack.c.h.b16 %v6191
      %v6788 = vunpack.c.l.b16 %v6192
      %v6789 = vunpack.c.h.b16 %v6192
      %v6790 = vunpack.c.l.b16 %v6193
      %v6791 = vunpack.c.h.b16 %v6193
      %v6792 = vunpack.c.l.b16 %v6194
      %v6793 = vunpack.c.h.b16 %v6194
      %v6794 = vunpack.c.l.b16 %v6195
      %v6795 = vunpack.c.h.b16 %v6195
      %v6796 = vunpack.c.l.b16 %v6196
      %v6797 = vunpack.c.h.b16 %v6196
      %v6798 = vunpack.c.l.b16 %v6197
      %v6799 = vunpack.c.h.b16 %v6197
      %v6800 = vunpack.c.l.b16 %v6198
      %v6801 = vunpack.c.h.b16 %v6198
      %v6802 = vunpack.c.l.b16 %v6199
      %v6803 = vunpack.c.h.b16 %v6199
      %v6804 = vunpack.c.l.b16 %v6200
      %v6805 = vunpack.c.h.b16 %v6200
      %v6806 = vunpack.c.l.b16 %v6201
      %v6807 = vunpack.c.h.b16 %v6201
      %v6808 = vunpack.c.l.b16 %v6202
      %v6809 = vunpack.c.h.b16 %v6202
      %v6810 = vunpack.c.l.b16 %v6203
      %v6811 = vunpack.c.h.b16 %v6203
      %v6812 = vunpack.c.l.b16 %v6204
      %v6813 = vunpack.c.h.b16 %v6204
      %v6814 = vunpack.c.l.b16 %v6205
      %v6815 = vunpack.c.h.b16 %v6205
      %v6816 = vunpack.c.l.b16 %v6206
      %v6817 = vunpack.c.h.b16 %v6206
      %v6818 = vunpack.c.l.b16 %v6207
      %v6819 = vunpack.c.h.b16 %v6207
      %v6820 = vunpack.c.l.b16 %v6208
      %v6821 = vunpack.c.h.b16 %v6208
      %v6822 = vunpack.c.l.b16 %v6209
      %v6823 = vunpack.c.h.b16 %v6209
      %v6824 = vunpack.c.l.b16 %v6210
      %v6825 = vunpack.c.h.b16 %v6210
      %v6826 = vunpack.c.l.b16 %v6211
      %v6827 = vunpack.c.h.b16 %v6211
      %v6828 = vunpack.c.l.b16 %v6212
      %v6829 = vunpack.c.h.b16 %v6212
      %v6830 = vunpack.c.l.b16 %v6213
      %v6831 = vunpack.c.h.b16 %v6213
      %v6832 = vunpack.c.l.b16 %v6214
      %v6833 = vunpack.c.h.b16 %v6214
      %v6834 = vunpack.c.l.b16 %v6215
      %v6835 = vunpack.c.h.b16 %v6215
      %v6836 = vunpack.c.l.b16 %v6216
      %v6837 = vunpack.c.h.b16 %v6216
      %v6838 = vunpack.c.l.b16 %v6217
      %v6839 = vunpack.c.h.b16 %v6217
      %v6840 = vunpack.c.l.b16 %v6218
      %v6841 = vunpack.c.h.b16 %v6218
      %v6842 = vunpack.c.l.b16 %v6219
      %v6843 = vunpack.c.h.b16 %v6219
      %v6844 = vpack.c.b16 %v6460, %v6428
      %v6845 = vpack.c.b16 %v6461, %v6429
      %v6846 = vpack.c.b16 %v6462, %v6430
      %v6847 = vpack.c.b16 %v6463, %v6431
      %v6848 = vpack.c.b16 %v6464, %v6432
      %v6849 = vpack.c.b16 %v6465, %v6433
      %v6850 = vpack.c.b16 %v6466, %v6434
      %v6851 = vpack.c.b16 %v6467, %v6435
      %v6852 = vpack.c.b16 %v6468, %v6436
      %v6853 = vpack.c.b16 %v6469, %v6437
      %v6854 = vpack.c.b16 %v6470, %v6438
      %v6855 = vpack.c.b16 %v6471, %v6439
      %v6856 = vpack.c.b16 %v6472, %v6440
      %v6857 = vpack.c.b16 %v6473, %v6441
      %v6858 = vpack.c.b16 %v6474, %v6442
      %v6859 = vpack.c.b16 %v6475, %v6443
      %v6860 = vpack.c.b16 %v6476, %v6444
      %v6861 = vpack.c.b16 %v6477, %v6445
      %v6862 = vpack.c.b16 %v6478, %v6446
      %v6863 = vpack.c.b16 %v6479, %v6447
      %v6864 = vpack.c.b16 %v6480, %v6448
      %v6865 = vpack.c.b16 %v6481, %v6449
      %v6866 = vpack.c.b16 %v6482, %v6450
      %v6867 = vpack.c.b16 %v6483, %v6451
      %v6868 = vpack.c.b16 %v6484, %v6452
      %v6869 = vpack.c.b16 %v6485, %v6453
      %v6870 = vpack.c.b16 %v6486, %v6454
      %v6871 = vpack.c.b16 %v6487, %v6455
      %v6872 = vpack.c.b16 %v6488, %v6456
      %v6873 = vpack.c.b16 %v6489, %v6457
      %v6874 = vpack.c.b16 %v6490, %v6458
      %v6875 = vpack.c.b16 %v6491, %v6459
      %v6876 = vpack.c.b16 %v6524, %v6492
      %v6877 = vpack.c.b16 %v6525, %v6493
      %v6878 = vpack.c.b16 %v6526, %v6494
      %v6879 = vpack.c.b16 %v6527, %v6495
      %v6880 = vpack.c.b16 %v6528, %v6496
      %v6881 = vpack.c.b16 %v6529, %v6497
      %v6882 = vpack.c.b16 %v6530, %v6498
      %v6883 = vpack.c.b16 %v6531, %v6499
      %v6884 = vpack.c.b16 %v6532, %v6500
      %v6885 = vpack.c.b16 %v6533, %v6501
      %v6886 = vpack.c.b16 %v6534, %v6502
      %v6887 = vpack.c.b16 %v6535, %v6503
      %v6888 = vpack.c.b16 %v6536, %v6504
      %v6889 = vpack.c.b16 %v6537, %v6505
      %v6890 = vpack.c.b16 %v6538, %v6506
      %v6891 = vpack.c.b16 %v6539, %v6507
      %v6892 = vpack.c.b16 %v6540, %v6508
      %v6893 = vpack.c.b16 %v6541, %v6509
      %v6894 = vpack.c.b16 %v6542, %v6510
      %v6895 = vpack.c.b16 %v6543, %v6511
      %v6896 = vpack.c.b16 %v6544, %v6512
      %v6897 = vpack.c.b16 %v6545, %v6513
      %v6898 = vpack.c.b16 %v6546, %v6514
      %v6899 = vpack.c.b16 %v6547, %v6515
      %v6900 = vpack.c.b16 %v6548, %v6516
      %v6901 = vpack.c.b16 %v6549, %v6517
      %v6902 = vpack.c.b16 %v6550, %v6518
      %v6903 = vpack.c.b16 %v6551, %v6519
      %v6904 = vpack.c.b16 %v6552, %v6520
      %v6905 = vpack.c.b16 %v6553, %v6521
      %v6906 = vpack.c.b16 %v6554, %v6522
      %v6907 = vpack.c.b16 %v6555, %v6523
      %v6908 = vpack.c.b16 %v6588, %v6556
      %v6909 = vpack.c.b16 %v6589, %v6557
      %v6910 = vpack.c.b16 %v6590, %v6558
      %v6911 = vpack.c.b16 %v6591, %v6559
      %v6912 = vpack.c.b16 %v6592, %v6560
      %v6913 = vpack.c.b16 %v6593, %v6561
      %v6914 = vpack.c.b16 %v6594, %v6562
      %v6915 = vpack.c.b16 %v6595, %v6563
      %v6916 = vpack.c.b16 %v6596, %v6564
      %v6917 = vpack.c.b16 %v6597, %v6565
      %v6918 = vpack.c.b16 %v6598, %v6566
      %v6919 = vpack.c.b16 %v6599, %v6567
      %v6920 = vpack.c.b16 %v6600, %v6568
      %v6921 = vpack.c.b16 %v6601, %v6569
      %v6922 = vpack.c.b16 %v6602, %v6570
      %v6923 = vpack.c.b16 %v6603, %v6571
      %v6924 = vpack.c.b16 %v6604, %v6572
      %v6925 = vpack.c.b16 %v6605, %v6573
      %v6926 = vpack.c.b16 %v6606, %v6574
      %v6927 = vpack.c.b16 %v6607, %v6575
      %v6928 = vpack.c.b16 %v6608, %v6576
      %v6929 = vpack.c.b16 %v6609, %v6577
      %v6930 = vpack.c.b16 %v6610, %v6578
      %v6931 = vpack.c.b16 %v6611, %v6579
      %v6932 = vpack.c.b16 %v6612, %v6580
      %v6933 = vpack.c.b16 %v6613, %v6581
      %v6934 = vpack.c.b16 %v6614, %v6582
      %v6935 = vpack.c.b16 %v6615, %v6583
      %v6936 = vpack.c.b16 %v6616, %v6584
      %v6937 = vpack.c.b16 %v6617, %v6585
      %v6938 = vpack.c.b16 %v6618, %v6586
      %v6939 = vpack.c.b16 %v6619, %v6587
      %v6940 = vpack.c.b16 %v6652, %v6620
      %v6941 = vpack.c.b16 %v6653, %v6621
      %v6942 = vpack.c.b16 %v6654, %v6622
      %v6943 = vpack.c.b16 %v6655, %v6623
      %v6944 = vpack.c.b16 %v6656, %v6624
      %v6945 = vpack.c.b16 %v6657, %v6625
      %v6946 = vpack.c.b16 %v6658, %v6626
      %v6947 = vpack.c.b16 %v6659, %v6627
      %v6948 = vpack.c.b16 %v6660, %v6628
      %v6949 = vpack.c.b16 %v6661, %v6629
      %v6950 = vpack.c.b16 %v6662, %v6630
      %v6951 = vpack.c.b16 %v6663, %v6631
      %v6952 = vpack.c.b16 %v6664, %v6632
      %v6953 = vpack.c.b16 %v6665, %v6633
      %v6954 = vpack.c.b16 %v6666, %v6634
      %v6955 = vpack.c.b16 %v6667, %v6635
      %v6956 = vpack.c.b16 %v6668, %v6636
      %v6957 = vpack.c.b16 %v6669, %v6637
      %v6958 = vpack.c.b16 %v6670, %v6638
      %v6959 = vpack.c.b16 %v6671, %v6639
      %v6960 = vpack.c.b16 %v6672, %v6640
      %v6961 = vpack.c.b16 %v6673, %v6641
      %v6962 = vpack.c.b16 %v6674, %v6642
      %v6963 = vpack.c.b16 %v6675, %v6643
      %v6964 = vpack.c.b16 %v6676, %v6644
      %v6965 = vpack.c.b16 %v6677, %v6645
      %v6966 = vpack.c.b16 %v6678, %v6646
      %v6967 = vpack.c.b16 %v6679, %v6647
      %v6968 = vpack.c.b16 %v6680, %v6648
      %v6969 = vpack.c.b16 %v6681, %v6649
      %v6970 = vpack.c.b16 %v6682, %v6650
      %v6971 = vpack.c.b16 %v6683, %v6651
      %v6972 = vpack.c.b16 %v6716, %v6684
      %v6973 = vpack.c.b16 %v6717, %v6685
      %v6974 = vpack.c.b16 %v6718, %v6686
      %v6975 = vpack.c.b16 %v6719, %v6687
      %v6976 = vpack.c.b16 %v6720, %v6688
      %v6977 = vpack.c.b16 %v6721, %v6689
      %v6978 = vpack.c.b16 %v6722, %v6690
      %v6979 = vpack.c.b16 %v6723, %v6691
      %v6980 = vpack.c.b16 %v6724, %v6692
      %v6981 = vpack.c.b16 %v6725, %v6693
      %v6982 = vpack.c.b16 %v6726, %v6694
      %v6983 = vpack.c.b16 %v6727, %v6695
      %v6984 = vpack.c.b16 %v6728, %v6696
      %v6985 = vpack.c.b16 %v6729, %v6697
      %v6986 = vpack.c.b16 %v6730, %v6698
      %v6987 = vpack.c.b16 %v6731, %v6699
      %v6988 = vpack.c.b16 %v6732, %v6700
      %v6989 = vpack.c.b16 %v6733, %v6701
      %v6990 = vpack.c.b16 %v6734, %v6702
      %v6991 = vpack.c.b16 %v6735, %v6703
      %v6992 = vpack.c.b16 %v6736, %v6704
      %v6993 = vpack.c.b16 %v6737, %v6705
      %v6994 = vpack.c.b16 %v6738, %v6706
      %v6995 = vpack.c.b16 %v6739, %v6707
      %v6996 = vpack.c.b16 %v6740, %v6708
      %v6997 = vpack.c.b16 %v6741, %v6709
      %v6998 = vpack.c.b16 %v6742, %v6710
      %v6999 = vpack.c.b16 %v6743, %v6711
      %v7000 = vpack.c.b16 %v6744, %v6712
      %v7001 = vpack.c.b16 %v6745, %v6713
      %v7002 = vpack.c.b16 %v6746, %v6714
      %v7003 = vpack.c.b16 %v6747, %v6715
      %v7004 = vpack.c.b16 %v6780, %v6748
      %v7005 = vpack.c.b16 %v6781, %v6749
      %v7006 = vpack.c.b16 %v6782, %v6750
      %v7007 = vpack.c.b16 %v6783, %v6751
      %v7008 = vpack.c.b16 %v6784, %v6752
      %v7009 = vpack.c.b16 %v6785, %v6753
      %v7010 = vpack.c.b16 %v6786, %v6754
      %v7011 = vpack.c.b16 %v6787, %v6755
      %v7012 = vpack.c.b16 %v6788, %v6756
      %v7013 = vpack.c.b16 %v6789, %v6757
      %v7014 = vpack.c.b16 %v6790, %v6758
      %v7015 = vpack.c.b16 %v6791, %v6759
      %v7016 = vpack.c.b16 %v6792, %v6760
      %v7017 = vpack.c.b16 %v6793, %v6761
      %v7018 = vpack.c.b16 %v6794, %v6762
      %v7019 = vpack.c.b16 %v6795, %v6763
      %v7020 = vpack.c.b16 %v6796, %v6764
      %v7021 = vpack.c.b16 %v6797, %v6765
      %v7022 = vpack.c.b16 %v6798, %v6766
      %v7023 = vpack.c.b16 %v6799, %v6767
      %v7024 = vpack.c.b16 %v6800, %v6768
      %v7025 = vpack.c.b16 %v6801, %v6769
      %v7026 = vpack.c.b16 %v6802, %v6770
      %v7027 = vpack.c.b16 %v6803, %v6771
      %v7028 = vpack.c.b16 %v6804, %v6772
      %v7029 = vpack.c.b16 %v6805, %v6773
      %v7030 = vpack.c.b16 %v6806, %v6774
      %v7031 = vpack.c.b16 %v6807, %v6775
      %v7032 = vpack.c.b16 %v6808, %v6776
      %v7033 = vpack.c.b16 %v6809, %v6777
      %v7034 = vpack.c.b16 %v6810, %v6778
      %v7035 = vpack.c.b16 %v6811, %v6779
      %v7036 = vpack.c.b16 %v6812, %v6812
      %v7037 = vpack.c.b16 %v6813, %v6813
      %v7038 = vpack.c.b16 %v6814, %v6814
      %v7039 = vpack.c.b16 %v6815, %v6815
      %v7040 = vpack.c.b16 %v6816, %v6816
      %v7041 = vpack.c.b16 %v6817, %v6817
      %v7042 = vpack.c.b16 %v6818, %v6818
      %v7043 = vpack.c.b16 %v6819, %v6819
      %v7044 = vpack.c.b16 %v6820, %v6820
      %v7045 = vpack.c.b16 %v6821, %v6821
      %v7046 = vpack.c.b16 %v6822, %v6822
      %v7047 = vpack.c.b16 %v6823, %v6823
      %v7048 = vpack.c.b16 %v6824, %v6824
      %v7049 = vpack.c.b16 %v6825, %v6825
      %v7050 = vpack.c.b16 %v6826, %v6826
      %v7051 = vpack.c.b16 %v6827, %v6827
      %v7052 = vpack.c.b16 %v6828, %v6828
      %v7053 = vpack.c.b16 %v6829, %v6829
      %v7054 = vpack.c.b16 %v6830, %v6830
      %v7055 = vpack.c.b16 %v6831, %v6831
      %v7056 = vpack.c.b16 %v6832, %v6832
      %v7057 = vpack.c.b16 %v6833, %v6833
      %v7058 = vpack.c.b16 %v6834, %v6834
      %v7059 = vpack.c.b16 %v6835, %v6835
      %v7060 = vpack.c.b16 %v6836, %v6836
      %v7061 = vpack.c.b16 %v6837, %v6837
      %v7062 = vpack.c.b16 %v6838, %v6838
      %v7063 = vpack.c.b16 %v6839, %v6839
      %v7064 = vpack.c.b16 %v6840, %v6840
      %v7065 = vpack.c.b16 %v6841, %v6841
      %v7066 = vpack.c.b16 %v6842, %v6842
      %v7067 = vpack.c.b16 %v6843, %v6843
      %v7261 = vsel %vm1409, %v6011, 0
      %v7264 = vsel %vm1413, %v7036, 0
      %v7267 = vsel %vm1413, %v7037, 0
      %v7270 = vsel %vm1413, %v7038, 0
      %v7273 = vsel %vm1413, %v7039, 0
      %v7276 = vsel %vm1413, %v7040, 0
      %v7279 = vsel %vm1413, %v7041, 0
      %v7282 = vsel %vm1413, %v7042, 0
      %v7285 = vsel %vm1413, %v7043, 0
      %v7288 = vsel %vm1413, %v7044, 0
      %v7291 = vsel %vm1413, %v7045, 0
      %v7294 = vsel %vm1413, %v7046, 0
      %v7297 = vsel %vm1413, %v7047, 0
      %v7300 = vsel %vm1413, %v7048, 0
      %v7303 = vsel %vm1413, %v7049, 0
      %v7306 = vsel %vm1413, %v7050, 0
      %v7309 = vsel %vm1413, %v7051, 0
      %v7312 = vsel %vm1413, %v7052, 0
      %v7315 = vsel %vm1413, %v7053, 0
      %v7318 = vsel %vm1413, %v7054, 0
      %v7321 = vsel %vm1413, %v7055, 0
      %v7324 = vsel %vm1413, %v7056, 0
      %v7327 = vsel %vm1413, %v7057, 0
      %v7330 = vsel %vm1413, %v7058, 0
      %v7333 = vsel %vm1413, %v7059, 0
      %v7336 = vsel %vm1413, %v7060, 0
      %v7339 = vsel %vm1413, %v7061, 0
      %v7342 = vsel %vm1413, %v7062, 0
      %v7345 = vsel %vm1413, %v7063, 0
      %v7348 = vsel %vm1413, %v7064, 0
      %v7351 = vsel %vm1413, %v7065, 0
      %v7354 = vsel %vm1413, %v7066, 0
      %v7357 = vsel %vm1413, %v7067, 0
      %7359 = vmatpush.bf16.msra.mxu0 0
      %7360 = vmatpush.bf16.msra.mxu0 %v7264
      %7361 = vmatpush.bf16.msra.mxu0 %v7004
      %7362 = vmatpush.bf16.msra.mxu0 %v6972
      %7363 = vmatpush.bf16.msra.mxu0 %v6940
      %7364 = vmatpush.bf16.msra.mxu0 %v6908
      %7365 = vmatpush.bf16.msra.mxu0 %v6876
      %7366 = vmatpush.bf16.msra.mxu0 %v6844
      %7367 = vmatmul.bf16.gmra.mxu0 %v7261
      %v7368 = vpop.f32.mrf.mxu0
      %v7369 = vadd.f32 0.0, %v7368
      %v7370 = vpop.f32.mrf.mxu0
      %7371 = vdwg.mxu0
      %7372 = vmatpush.bf16.msra.mxu0 0
      %7373 = vmatpush.bf16.msra.mxu0 %v7267
      %7374 = vmatpush.bf16.msra.mxu0 %v7005
      %7375 = vmatpush.bf16.msra.mxu0 %v6973
      %7376 = vmatpush.bf16.msra.mxu0 %v6941
      %7377 = vmatpush.bf16.msra.mxu0 %v6909
      %7378 = vmatpush.bf16.msra.mxu0 %v6877
      %7379 = vmatpush.bf16.msra.mxu0 %v6845
      %7380 = vmatmul.bf16.gmra.mxu0 %v7261
      %v7381 = vpop.f32.mrf.mxu0
      %v7382 = vadd.f32 0.0, %v7381
      %v7383 = vpop.f32.mrf.mxu0
      %7384 = vdwg.mxu0
      %7385 = vmatpush.bf16.msra.mxu0 0
      %7386 = vmatpush.bf16.msra.mxu0 %v7270
      %7387 = vmatpush.bf16.msra.mxu0 %v7006
      %7388 = vmatpush.bf16.msra.mxu0 %v6974
      %7389 = vmatpush.bf16.msra.mxu0 %v6942
      %7390 = vmatpush.bf16.msra.mxu0 %v6910
      %7391 = vmatpush.bf16.msra.mxu0 %v6878
      %7392 = vmatpush.bf16.msra.mxu0 %v6846
      %7393 = vmatmul.bf16.gmra.mxu0 %v7261
      %v7394 = vpop.f32.mrf.mxu0
      %v7395 = vadd.f32 0.0, %v7394
      %v7396 = vpop.f32.mrf.mxu0
      %7397 = vdwg.mxu0
      %7398 = vmatpush.bf16.msra.mxu0 0
      %7399 = vmatpush.bf16.msra.mxu0 %v7273
      %7400 = vmatpush.bf16.msra.mxu0 %v7007
      %7401 = vmatpush.bf16.msra.mxu0 %v6975
      %7402 = vmatpush.bf16.msra.mxu0 %v6943
      %7403 = vmatpush.bf16.msra.mxu0 %v6911
      %7404 = vmatpush.bf16.msra.mxu0 %v6879
      %7405 = vmatpush.bf16.msra.mxu0 %v6847
      %7406 = vmatmul.bf16.gmra.mxu0 %v7261
      %v7407 = vpop.f32.mrf.mxu0
      %v7408 = vadd.f32 0.0, %v7407
      %v7409 = vpop.f32.mrf.mxu0
      %7410 = vdwg.mxu0
      %7411 = vmatpush.bf16.msra.mxu0 0
      %7412 = vmatpush.bf16.msra.mxu0 %v7276
      %7413 = vmatpush.bf16.msra.mxu0 %v7008
      %7414 = vmatpush.bf16.msra.mxu0 %v6976
      %7415 = vmatpush.bf16.msra.mxu0 %v6944
      %7416 = vmatpush.bf16.msra.mxu0 %v6912
      %7417 = vmatpush.bf16.msra.mxu0 %v6880
      %7418 = vmatpush.bf16.msra.mxu0 %v6848
      %7419 = vmatmul.bf16.gmra.mxu0 %v7261
      %v7420 = vpop.f32.mrf.mxu0
      %v7421 = vadd.f32 0.0, %v7420
      %v7422 = vpop.f32.mrf.mxu0
      %7423 = vdwg.mxu0
      %7424 = vmatpush.bf16.msra.mxu0 0
      %7425 = vmatpush.bf16.msra.mxu0 %v7279
      %7426 = vmatpush.bf16.msra.mxu0 %v7009
      %7427 = vmatpush.bf16.msra.mxu0 %v6977
      %7428 = vmatpush.bf16.msra.mxu0 %v6945
      %7429 = vmatpush.bf16.msra.mxu0 %v6913
      %7430 = vmatpush.bf16.msra.mxu0 %v6881
      %7431 = vmatpush.bf16.msra.mxu0 %v6849
      %7432 = vmatmul.bf16.gmra.mxu0 %v7261
      %v7433 = vpop.f32.mrf.mxu0
      %v7434 = vadd.f32 0.0, %v7433
      %v7435 = vpop.f32.mrf.mxu0
      %7436 = vdwg.mxu0
      %7437 = vmatpush.bf16.msra.mxu0 0
      %7438 = vmatpush.bf16.msra.mxu0 %v7282
      %7439 = vmatpush.bf16.msra.mxu0 %v7010
      %7440 = vmatpush.bf16.msra.mxu0 %v6978
      %7441 = vmatpush.bf16.msra.mxu0 %v6946
      %7442 = vmatpush.bf16.msra.mxu0 %v6914
      %7443 = vmatpush.bf16.msra.mxu0 %v6882
      %7444 = vmatpush.bf16.msra.mxu0 %v6850
      %7445 = vmatmul.bf16.gmra.mxu0 %v7261
      %v7446 = vpop.f32.mrf.mxu0
      %v7447 = vadd.f32 0.0, %v7446
      %v7448 = vpop.f32.mrf.mxu0
      %7449 = vdwg.mxu0
      %7450 = vmatpush.bf16.msra.mxu0 0
      %7451 = vmatpush.bf16.msra.mxu0 %v7285
      %7452 = vmatpush.bf16.msra.mxu0 %v7011
      %7453 = vmatpush.bf16.msra.mxu0 %v6979
      %7454 = vmatpush.bf16.msra.mxu0 %v6947
      %7455 = vmatpush.bf16.msra.mxu0 %v6915
      %7456 = vmatpush.bf16.msra.mxu0 %v6883
      %7457 = vmatpush.bf16.msra.mxu0 %v6851
      %7458 = vmatmul.bf16.gmra.mxu0 %v7261
      %v7459 = vpop.f32.mrf.mxu0
      %v7460 = vadd.f32 0.0, %v7459
      %v7461 = vpop.f32.mrf.mxu0
      %7462 = vdwg.mxu0
      %7463 = vmatpush.bf16.msra.mxu0 0
      %7464 = vmatpush.bf16.msra.mxu0 %v7288
      %7465 = vmatpush.bf16.msra.mxu0 %v7012
      %7466 = vmatpush.bf16.msra.mxu0 %v6980
      %7467 = vmatpush.bf16.msra.mxu0 %v6948
      %7468 = vmatpush.bf16.msra.mxu0 %v6916
      %7469 = vmatpush.bf16.msra.mxu0 %v6884
      %7470 = vmatpush.bf16.msra.mxu0 %v6852
      %7471 = vmatmul.bf16.gmra.mxu0 %v7261
      %v7472 = vpop.f32.mrf.mxu0
      %v7473 = vadd.f32 0.0, %v7472
      %v7474 = vpop.f32.mrf.mxu0
      %7475 = vdwg.mxu0
      %7476 = vmatpush.bf16.msra.mxu0 0
      %7477 = vmatpush.bf16.msra.mxu0 %v7291
      %7478 = vmatpush.bf16.msra.mxu0 %v7013
      %7479 = vmatpush.bf16.msra.mxu0 %v6981
      %7480 = vmatpush.bf16.msra.mxu0 %v6949
      %7481 = vmatpush.bf16.msra.mxu0 %v6917
      %7482 = vmatpush.bf16.msra.mxu0 %v6885
      %7483 = vmatpush.bf16.msra.mxu0 %v6853
      %7484 = vmatmul.bf16.gmra.mxu0 %v7261
      %v7485 = vpop.f32.mrf.mxu0
      %v7486 = vadd.f32 0.0, %v7485
      %v7487 = vpop.f32.mrf.mxu0
      %7488 = vdwg.mxu0
      %7489 = vmatpush.bf16.msra.mxu0 0
      %7490 = vmatpush.bf16.msra.mxu0 %v7294
      %7491 = vmatpush.bf16.msra.mxu0 %v7014
      %7492 = vmatpush.bf16.msra.mxu0 %v6982
      %7493 = vmatpush.bf16.msra.mxu0 %v6950
      %7494 = vmatpush.bf16.msra.mxu0 %v6918
      %7495 = vmatpush.bf16.msra.mxu0 %v6886
      %7496 = vmatpush.bf16.msra.mxu0 %v6854
      %7497 = vmatmul.bf16.gmra.mxu0 %v7261
      %v7498 = vpop.f32.mrf.mxu0
      %v7499 = vadd.f32 0.0, %v7498
      %v7500 = vpop.f32.mrf.mxu0
      %7501 = vdwg.mxu0
      %7502 = vmatpush.bf16.msra.mxu0 0
      %7503 = vmatpush.bf16.msra.mxu0 %v7297
      %7504 = vmatpush.bf16.msra.mxu0 %v7015
      %7505 = vmatpush.bf16.msra.mxu0 %v6983
      %7506 = vmatpush.bf16.msra.mxu0 %v6951
      %7507 = vmatpush.bf16.msra.mxu0 %v6919
      %7508 = vmatpush.bf16.msra.mxu0 %v6887
      %7509 = vmatpush.bf16.msra.mxu0 %v6855
      %7510 = vmatmul.bf16.gmra.mxu0 %v7261
      %v7511 = vpop.f32.mrf.mxu0
      %v7512 = vadd.f32 0.0, %v7511
      %v7513 = vpop.f32.mrf.mxu0
      %7514 = vdwg.mxu0
      %7515 = vmatpush.bf16.msra.mxu0 0
      %7516 = vmatpush.bf16.msra.mxu0 %v7300
      %7517 = vmatpush.bf16.msra.mxu0 %v7016
      %7518 = vmatpush.bf16.msra.mxu0 %v6984
      %7519 = vmatpush.bf16.msra.mxu0 %v6952
      %7520 = vmatpush.bf16.msra.mxu0 %v6920
      %7521 = vmatpush.bf16.msra.mxu0 %v6888
      %7522 = vmatpush.bf16.msra.mxu0 %v6856
      %7523 = vmatmul.bf16.gmra.mxu0 %v7261
      %v7524 = vpop.f32.mrf.mxu0
      %v7525 = vadd.f32 0.0, %v7524
      %v7526 = vpop.f32.mrf.mxu0
      %7527 = vdwg.mxu0
      %7528 = vmatpush.bf16.msra.mxu0 0
      %7529 = vmatpush.bf16.msra.mxu0 %v7303
      %7530 = vmatpush.bf16.msra.mxu0 %v7017
      %7531 = vmatpush.bf16.msra.mxu0 %v6985
      %7532 = vmatpush.bf16.msra.mxu0 %v6953
      %7533 = vmatpush.bf16.msra.mxu0 %v6921
      %7534 = vmatpush.bf16.msra.mxu0 %v6889
      %7535 = vmatpush.bf16.msra.mxu0 %v6857
      %7536 = vmatmul.bf16.gmra.mxu0 %v7261
      %v7537 = vpop.f32.mrf.mxu0
      %v7538 = vadd.f32 0.0, %v7537
      %v7539 = vpop.f32.mrf.mxu0
      %7540 = vdwg.mxu0
      %7541 = vmatpush.bf16.msra.mxu0 0
      %7542 = vmatpush.bf16.msra.mxu0 %v7306
      %7543 = vmatpush.bf16.msra.mxu0 %v7018
      %7544 = vmatpush.bf16.msra.mxu0 %v6986
      %7545 = vmatpush.bf16.msra.mxu0 %v6954
      %7546 = vmatpush.bf16.msra.mxu0 %v6922
      %7547 = vmatpush.bf16.msra.mxu0 %v6890
      %7548 = vmatpush.bf16.msra.mxu0 %v6858
      %7549 = vmatmul.bf16.gmra.mxu0 %v7261
      %v7550 = vpop.f32.mrf.mxu0
      %v7551 = vadd.f32 0.0, %v7550
      %v7552 = vpop.f32.mrf.mxu0
      %7553 = vdwg.mxu0
      %7554 = vmatpush.bf16.msra.mxu0 0
      %7555 = vmatpush.bf16.msra.mxu0 %v7309
      %7556 = vmatpush.bf16.msra.mxu0 %v7019
      %7557 = vmatpush.bf16.msra.mxu0 %v6987
      %7558 = vmatpush.bf16.msra.mxu0 %v6955
      %7559 = vmatpush.bf16.msra.mxu0 %v6923
      %7560 = vmatpush.bf16.msra.mxu0 %v6891
      %7561 = vmatpush.bf16.msra.mxu0 %v6859
      %7562 = vmatmul.bf16.gmra.mxu0 %v7261
      %v7563 = vpop.f32.mrf.mxu0
      %v7564 = vadd.f32 0.0, %v7563
      %v7565 = vpop.f32.mrf.mxu0
      %7566 = vdwg.mxu0
      %7567 = vmatpush.bf16.msra.mxu0 0
      %7568 = vmatpush.bf16.msra.mxu0 %v7312
      %7569 = vmatpush.bf16.msra.mxu0 %v7020
      %7570 = vmatpush.bf16.msra.mxu0 %v6988
      %7571 = vmatpush.bf16.msra.mxu0 %v6956
      %7572 = vmatpush.bf16.msra.mxu0 %v6924
      %7573 = vmatpush.bf16.msra.mxu0 %v6892
      %7574 = vmatpush.bf16.msra.mxu0 %v6860
      %7575 = vmatmul.bf16.gmra.mxu0 %v7261
      %v7576 = vpop.f32.mrf.mxu0
      %v7577 = vadd.f32 0.0, %v7576
      %v7578 = vpop.f32.mrf.mxu0
      %7579 = vdwg.mxu0
      %7580 = vmatpush.bf16.msra.mxu0 0
      %7581 = vmatpush.bf16.msra.mxu0 %v7315
      %7582 = vmatpush.bf16.msra.mxu0 %v7021
      %7583 = vmatpush.bf16.msra.mxu0 %v6989
      %7584 = vmatpush.bf16.msra.mxu0 %v6957
      %7585 = vmatpush.bf16.msra.mxu0 %v6925
      %7586 = vmatpush.bf16.msra.mxu0 %v6893
      %7587 = vmatpush.bf16.msra.mxu0 %v6861
      %7588 = vmatmul.bf16.gmra.mxu0 %v7261
      %v7589 = vpop.f32.mrf.mxu0
      %v7590 = vadd.f32 0.0, %v7589
      %v7591 = vpop.f32.mrf.mxu0
      %7592 = vdwg.mxu0
      %7593 = vmatpush.bf16.msra.mxu0 0
      %7594 = vmatpush.bf16.msra.mxu0 %v7318
      %7595 = vmatpush.bf16.msra.mxu0 %v7022
      %7596 = vmatpush.bf16.msra.mxu0 %v6990
      %7597 = vmatpush.bf16.msra.mxu0 %v6958
      %7598 = vmatpush.bf16.msra.mxu0 %v6926
      %7599 = vmatpush.bf16.msra.mxu0 %v6894
      %7600 = vmatpush.bf16.msra.mxu0 %v6862
      %7601 = vmatmul.bf16.gmra.mxu0 %v7261
      %v7602 = vpop.f32.mrf.mxu0
      %v7603 = vadd.f32 0.0, %v7602
      %v7604 = vpop.f32.mrf.mxu0
      %7605 = vdwg.mxu0
      %7606 = vmatpush.bf16.msra.mxu0 0
      %7607 = vmatpush.bf16.msra.mxu0 %v7321
      %7608 = vmatpush.bf16.msra.mxu0 %v7023
      %7609 = vmatpush.bf16.msra.mxu0 %v6991
      %7610 = vmatpush.bf16.msra.mxu0 %v6959
      %7611 = vmatpush.bf16.msra.mxu0 %v6927
      %7612 = vmatpush.bf16.msra.mxu0 %v6895
      %7613 = vmatpush.bf16.msra.mxu0 %v6863
      %7614 = vmatmul.bf16.gmra.mxu0 %v7261
      %v7615 = vpop.f32.mrf.mxu0
      %v7616 = vadd.f32 0.0, %v7615
      %v7617 = vpop.f32.mrf.mxu0
      %7618 = vdwg.mxu0
      %7619 = vmatpush.bf16.msra.mxu0 0
      %7620 = vmatpush.bf16.msra.mxu0 %v7324
      %7621 = vmatpush.bf16.msra.mxu0 %v7024
      %7622 = vmatpush.bf16.msra.mxu0 %v6992
      %7623 = vmatpush.bf16.msra.mxu0 %v6960
      %7624 = vmatpush.bf16.msra.mxu0 %v6928
      %7625 = vmatpush.bf16.msra.mxu0 %v6896
      %7626 = vmatpush.bf16.msra.mxu0 %v6864
      %7627 = vmatmul.bf16.gmra.mxu0 %v7261
      %v7628 = vpop.f32.mrf.mxu0
      %v7629 = vadd.f32 0.0, %v7628
      %v7630 = vpop.f32.mrf.mxu0
      %7631 = vdwg.mxu0
      %7632 = vmatpush.bf16.msra.mxu0 0
      %7633 = vmatpush.bf16.msra.mxu0 %v7327
      %7634 = vmatpush.bf16.msra.mxu0 %v7025
      %7635 = vmatpush.bf16.msra.mxu0 %v6993
      %7636 = vmatpush.bf16.msra.mxu0 %v6961
      %7637 = vmatpush.bf16.msra.mxu0 %v6929
      %7638 = vmatpush.bf16.msra.mxu0 %v6897
      %7639 = vmatpush.bf16.msra.mxu0 %v6865
      %7640 = vmatmul.bf16.gmra.mxu0 %v7261
      %v7641 = vpop.f32.mrf.mxu0
      %v7642 = vadd.f32 0.0, %v7641
      %v7643 = vpop.f32.mrf.mxu0
      %7644 = vdwg.mxu0
      %7645 = vmatpush.bf16.msra.mxu0 0
      %7646 = vmatpush.bf16.msra.mxu0 %v7330
      %7647 = vmatpush.bf16.msra.mxu0 %v7026
      %7648 = vmatpush.bf16.msra.mxu0 %v6994
      %7649 = vmatpush.bf16.msra.mxu0 %v6962
      %7650 = vmatpush.bf16.msra.mxu0 %v6930
      %7651 = vmatpush.bf16.msra.mxu0 %v6898
      %7652 = vmatpush.bf16.msra.mxu0 %v6866
      %7653 = vmatmul.bf16.gmra.mxu0 %v7261
      %v7654 = vpop.f32.mrf.mxu0
      %v7655 = vadd.f32 0.0, %v7654
      %v7656 = vpop.f32.mrf.mxu0
      %7657 = vdwg.mxu0
      %7658 = vmatpush.bf16.msra.mxu0 0
      %7659 = vmatpush.bf16.msra.mxu0 %v7333
      %7660 = vmatpush.bf16.msra.mxu0 %v7027
      %7661 = vmatpush.bf16.msra.mxu0 %v6995
      %7662 = vmatpush.bf16.msra.mxu0 %v6963
      %7663 = vmatpush.bf16.msra.mxu0 %v6931
      %7664 = vmatpush.bf16.msra.mxu0 %v6899
      %7665 = vmatpush.bf16.msra.mxu0 %v6867
      %7666 = vmatmul.bf16.gmra.mxu0 %v7261
      %v7667 = vpop.f32.mrf.mxu0
      %v7668 = vadd.f32 0.0, %v7667
      %v7669 = vpop.f32.mrf.mxu0
      %7670 = vdwg.mxu0
      %7671 = vmatpush.bf16.msra.mxu0 0
      %7672 = vmatpush.bf16.msra.mxu0 %v7336
      %7673 = vmatpush.bf16.msra.mxu0 %v7028
      %7674 = vmatpush.bf16.msra.mxu0 %v6996
      %7675 = vmatpush.bf16.msra.mxu0 %v6964
      %7676 = vmatpush.bf16.msra.mxu0 %v6932
      %7677 = vmatpush.bf16.msra.mxu0 %v6900
      %7678 = vmatpush.bf16.msra.mxu0 %v6868
      %7679 = vmatmul.bf16.gmra.mxu0 %v7261
      %v7680 = vpop.f32.mrf.mxu0
      %v7681 = vadd.f32 0.0, %v7680
      %v7682 = vpop.f32.mrf.mxu0
      %7683 = vdwg.mxu0
      %7684 = vmatpush.bf16.msra.mxu0 0
      %7685 = vmatpush.bf16.msra.mxu0 %v7339
      %7686 = vmatpush.bf16.msra.mxu0 %v7029
      %7687 = vmatpush.bf16.msra.mxu0 %v6997
      %7688 = vmatpush.bf16.msra.mxu0 %v6965
      %7689 = vmatpush.bf16.msra.mxu0 %v6933
      %7690 = vmatpush.bf16.msra.mxu0 %v6901
      %7691 = vmatpush.bf16.msra.mxu0 %v6869
      %7692 = vmatmul.bf16.gmra.mxu0 %v7261
      %v7693 = vpop.f32.mrf.mxu0
      %v7694 = vadd.f32 0.0, %v7693
      %v7695 = vpop.f32.mrf.mxu0
      %7696 = vdwg.mxu0
      %7697 = vmatpush.bf16.msra.mxu0 0
      %7698 = vmatpush.bf16.msra.mxu0 %v7342
      %7699 = vmatpush.bf16.msra.mxu0 %v7030
      %7700 = vmatpush.bf16.msra.mxu0 %v6998
      %7701 = vmatpush.bf16.msra.mxu0 %v6966
      %7702 = vmatpush.bf16.msra.mxu0 %v6934
      %7703 = vmatpush.bf16.msra.mxu0 %v6902
      %7704 = vmatpush.bf16.msra.mxu0 %v6870
      %7705 = vmatmul.bf16.gmra.mxu0 %v7261
      %v7706 = vpop.f32.mrf.mxu0
      %v7707 = vadd.f32 0.0, %v7706
      %v7708 = vpop.f32.mrf.mxu0
      %7709 = vdwg.mxu0
      %7710 = vmatpush.bf16.msra.mxu0 0
      %7711 = vmatpush.bf16.msra.mxu0 %v7345
      %7712 = vmatpush.bf16.msra.mxu0 %v7031
      %7713 = vmatpush.bf16.msra.mxu0 %v6999
      %7714 = vmatpush.bf16.msra.mxu0 %v6967
      %7715 = vmatpush.bf16.msra.mxu0 %v6935
      %7716 = vmatpush.bf16.msra.mxu0 %v6903
      %7717 = vmatpush.bf16.msra.mxu0 %v6871
      %7718 = vmatmul.bf16.gmra.mxu0 %v7261
      %v7719 = vpop.f32.mrf.mxu0
      %v7720 = vadd.f32 0.0, %v7719
      %v7721 = vpop.f32.mrf.mxu0
      %7722 = vdwg.mxu0
      %7723 = vmatpush.bf16.msra.mxu0 0
      %7724 = vmatpush.bf16.msra.mxu0 %v7348
      %7725 = vmatpush.bf16.msra.mxu0 %v7032
      %7726 = vmatpush.bf16.msra.mxu0 %v7000
      %7727 = vmatpush.bf16.msra.mxu0 %v6968
      %7728 = vmatpush.bf16.msra.mxu0 %v6936
      %7729 = vmatpush.bf16.msra.mxu0 %v6904
      %7730 = vmatpush.bf16.msra.mxu0 %v6872
      %7731 = vmatmul.bf16.gmra.mxu0 %v7261
      %v7732 = vpop.f32.mrf.mxu0
      %v7733 = vadd.f32 0.0, %v7732
      %v7734 = vpop.f32.mrf.mxu0
      %7735 = vdwg.mxu0
      %7736 = vmatpush.bf16.msra.mxu0 0
      %7737 = vmatpush.bf16.msra.mxu0 %v7351
      %7738 = vmatpush.bf16.msra.mxu0 %v7033
      %7739 = vmatpush.bf16.msra.mxu0 %v7001
      %7740 = vmatpush.bf16.msra.mxu0 %v6969
      %7741 = vmatpush.bf16.msra.mxu0 %v6937
      %7742 = vmatpush.bf16.msra.mxu0 %v6905
      %7743 = vmatpush.bf16.msra.mxu0 %v6873
      %7744 = vmatmul.bf16.gmra.mxu0 %v7261
      %v7745 = vpop.f32.mrf.mxu0
      %v7746 = vadd.f32 0.0, %v7745
      %v7747 = vpop.f32.mrf.mxu0
      %7748 = vdwg.mxu0
      %7749 = vmatpush.bf16.msra.mxu0 0
      %7750 = vmatpush.bf16.msra.mxu0 %v7354
      %7751 = vmatpush.bf16.msra.mxu0 %v7034
      %7752 = vmatpush.bf16.msra.mxu0 %v7002
      %7753 = vmatpush.bf16.msra.mxu0 %v6970
      %7754 = vmatpush.bf16.msra.mxu0 %v6938
      %7755 = vmatpush.bf16.msra.mxu0 %v6906
      %7756 = vmatpush.bf16.msra.mxu0 %v6874
      %7757 = vmatmul.bf16.gmra.mxu0 %v7261
      %v7758 = vpop.f32.mrf.mxu0
      %v7759 = vadd.f32 0.0, %v7758
      %v7760 = vpop.f32.mrf.mxu0
      %7761 = vdwg.mxu0
      %7762 = vmatpush.bf16.msra.mxu0 0
      %7763 = vmatpush.bf16.msra.mxu0 %v7357
      %7764 = vmatpush.bf16.msra.mxu0 %v7035
      %7765 = vmatpush.bf16.msra.mxu0 %v7003
      %7766 = vmatpush.bf16.msra.mxu0 %v6971
      %7767 = vmatpush.bf16.msra.mxu0 %v6939
      %7768 = vmatpush.bf16.msra.mxu0 %v6907
      %7769 = vmatpush.bf16.msra.mxu0 %v6875
      %7770 = vmatmul.bf16.gmra.mxu0 %v7261
      %v7771 = vpop.f32.mrf.mxu0
      %v7772 = vadd.f32 0.0, %v7771
      %v7773 = vpop.f32.mrf.mxu0
      %7774 = vdwg.mxu0
      %v7775 = vadd.f32 %v5978, %v7369
      %v7776 = vadd.f32 %v5979, %v7382
      %v7777 = vadd.f32 %v5980, %v7395
      %v7778 = vadd.f32 %v5981, %v7408
      %v7779 = vadd.f32 %v5982, %v7421
      %v7780 = vadd.f32 %v5983, %v7434
      %v7781 = vadd.f32 %v5984, %v7447
      %v7782 = vadd.f32 %v5985, %v7460
      %v7783 = vadd.f32 %v5986, %v7473
      %v7784 = vadd.f32 %v5987, %v7486
      %v7785 = vadd.f32 %v5988, %v7499
      %v7786 = vadd.f32 %v5989, %v7512
      %v7787 = vadd.f32 %v5990, %v7525
      %v7788 = vadd.f32 %v5991, %v7538
      %v7789 = vadd.f32 %v5992, %v7551
      %v7790 = vadd.f32 %v5993, %v7564
      %v7791 = vadd.f32 %v5994, %v7577
      %v7792 = vadd.f32 %v5995, %v7590
      %v7793 = vadd.f32 %v5996, %v7603
      %v7794 = vadd.f32 %v5997, %v7616
      %v7795 = vadd.f32 %v5998, %v7629
      %v7796 = vadd.f32 %v5999, %v7642
      %v7797 = vadd.f32 %v6000, %v7655
      %v7798 = vadd.f32 %v6001, %v7668
      %v7799 = vadd.f32 %v6002, %v7681
      %v7800 = vadd.f32 %v6003, %v7694
      %v7801 = vadd.f32 %v6004, %v7707
      %v7802 = vadd.f32 %v6005, %v7720
      %v7803 = vadd.f32 %v6006, %v7733
      %v7804 = vadd.f32 %v6007, %v7746
      %v7805 = vadd.f32 %v6008, %v7759
      %v7806 = vadd.f32 %v6009, %v7772
      %v7807 = vadd.f32 %v7775, %v7776
      %v7808 = vadd.f32 %v7807, %v7777
      %v7809 = vadd.f32 %v7808, %v7778
      %v7810 = vadd.f32 %v7809, %v7779
      %v7811 = vadd.f32 %v7810, %v7780
      %v7812 = vadd.f32 %v7811, %v7781
      %v7813 = vadd.f32 %v7812, %v7782
      %v7814 = vadd.f32 %v7813, %v7783
      %v7815 = vadd.f32 %v7814, %v7784
      %v7816 = vadd.f32 %v7815, %v7785
      %v7817 = vadd.f32 %v7816, %v7786
      %v7818 = vadd.f32 %v7817, %v7787
      %v7819 = vadd.f32 %v7818, %v7788
      %v7820 = vadd.f32 %v7819, %v7789
      %v7821 = vadd.f32 %v7820, %v7790
      %v7822 = vadd.f32 %v7821, %v7791
      %v7823 = vadd.f32 %v7822, %v7792
      %v7824 = vadd.f32 %v7823, %v7793
      %v7825 = vadd.f32 %v7824, %v7794
      %v7826 = vadd.f32 %v7825, %v7795
      %v7827 = vadd.f32 %v7826, %v7796
      %v7828 = vadd.f32 %v7827, %v7797
      %v7829 = vadd.f32 %v7828, %v7798
      %v7830 = vadd.f32 %v7829, %v7799
      %v7831 = vadd.f32 %v7830, %v7800
      %v7832 = vadd.f32 %v7831, %v7801
      %v7833 = vadd.f32 %v7832, %v7802
      %v7834 = vadd.f32 %v7833, %v7803
      %v7835 = vadd.f32 %v7834, %v7804
      %v7836 = vadd.f32 %v7835, %v7805
      %v7837 = vadd.f32 %v7836, %v7806
      %7838 = vadd.xlane.f32.xlu0 %v7837
      %v7839 = vpop.xlane.xlu0 %7838
      %v7840 = vmul.f32 %v7839, 0.00024414063
      %v7841 = vsub.f32 %v7775, %v7840
      %v7842 = vsub.f32 %v7776, %v7840
      %v7843 = vsub.f32 %v7777, %v7840
      %v7844 = vsub.f32 %v7778, %v7840
      %v7845 = vsub.f32 %v7779, %v7840
      %v7846 = vsub.f32 %v7780, %v7840
      %v7847 = vsub.f32 %v7781, %v7840
      %v7848 = vsub.f32 %v7782, %v7840
      %v7849 = vsub.f32 %v7783, %v7840
      %v7850 = vsub.f32 %v7784, %v7840
      %v7851 = vsub.f32 %v7785, %v7840
      %v7852 = vsub.f32 %v7786, %v7840
      %v7853 = vsub.f32 %v7787, %v7840
      %v7854 = vsub.f32 %v7788, %v7840
      %v7855 = vsub.f32 %v7789, %v7840
      %v7856 = vsub.f32 %v7790, %v7840
      %v7857 = vsub.f32 %v7791, %v7840
      %v7858 = vsub.f32 %v7792, %v7840
      %v7859 = vsub.f32 %v7793, %v7840
      %v7860 = vsub.f32 %v7794, %v7840
      %v7861 = vsub.f32 %v7795, %v7840
      %v7862 = vsub.f32 %v7796, %v7840
      %v7863 = vsub.f32 %v7797, %v7840
      %v7864 = vsub.f32 %v7798, %v7840
      %v7865 = vsub.f32 %v7799, %v7840
      %v7866 = vsub.f32 %v7800, %v7840
      %v7867 = vsub.f32 %v7801, %v7840
      %v7868 = vsub.f32 %v7802, %v7840
      %v7869 = vsub.f32 %v7803, %v7840
      %v7870 = vsub.f32 %v7804, %v7840
      %v7871 = vsub.f32 %v7805, %v7840
      %v7872 = vsub.f32 %v7806, %v7840
      %v7873 = vmul.f32 %v7841, %v7841
      %v7874 = vmul.f32 %v7842, %v7842
      %v7875 = vmul.f32 %v7843, %v7843
      %v7876 = vmul.f32 %v7844, %v7844
      %v7877 = vmul.f32 %v7845, %v7845
      %v7878 = vmul.f32 %v7846, %v7846
      %v7879 = vmul.f32 %v7847, %v7847
      %v7880 = vmul.f32 %v7848, %v7848
      %v7881 = vmul.f32 %v7849, %v7849
      %v7882 = vmul.f32 %v7850, %v7850
      %v7883 = vmul.f32 %v7851, %v7851
      %v7884 = vmul.f32 %v7852, %v7852
      %v7885 = vmul.f32 %v7853, %v7853
      %v7886 = vmul.f32 %v7854, %v7854
      %v7887 = vmul.f32 %v7855, %v7855
      %v7888 = vmul.f32 %v7856, %v7856
      %v7889 = vmul.f32 %v7857, %v7857
      %v7890 = vmul.f32 %v7858, %v7858
      %v7891 = vmul.f32 %v7859, %v7859
      %v7892 = vmul.f32 %v7860, %v7860
      %v7893 = vmul.f32 %v7861, %v7861
      %v7894 = vmul.f32 %v7862, %v7862
      %v7895 = vmul.f32 %v7863, %v7863
      %v7896 = vmul.f32 %v7864, %v7864
      %v7897 = vmul.f32 %v7865, %v7865
      %v7898 = vmul.f32 %v7866, %v7866
      %v7899 = vmul.f32 %v7867, %v7867
      %v7900 = vmul.f32 %v7868, %v7868
      %v7901 = vmul.f32 %v7869, %v7869
      %v7902 = vmul.f32 %v7870, %v7870
      %v7903 = vmul.f32 %v7871, %v7871
      %v7904 = vmul.f32 %v7872, %v7872
      %v7905 = vadd.f32 %v7873, %v7874
      %v7906 = vadd.f32 %v7905, %v7875
      %v7907 = vadd.f32 %v7906, %v7876
      %v7908 = vadd.f32 %v7907, %v7877
      %v7909 = vadd.f32 %v7908, %v7878
      %v7910 = vadd.f32 %v7909, %v7879
      %v7911 = vadd.f32 %v7910, %v7880
      %v7912 = vadd.f32 %v7911, %v7881
      %v7913 = vadd.f32 %v7912, %v7882
      %v7914 = vadd.f32 %v7913, %v7883
      %v7915 = vadd.f32 %v7914, %v7884
      %v7916 = vadd.f32 %v7915, %v7885
      %v7917 = vadd.f32 %v7916, %v7886
      %v7918 = vadd.f32 %v7917, %v7887
      %v7919 = vadd.f32 %v7918, %v7888
      %v7920 = vadd.f32 %v7919, %v7889
      %v7921 = vadd.f32 %v7920, %v7890
      %v7922 = vadd.f32 %v7921, %v7891
      %v7923 = vadd.f32 %v7922, %v7892
      %v7924 = vadd.f32 %v7923, %v7893
      %v7925 = vadd.f32 %v7924, %v7894
      %v7926 = vadd.f32 %v7925, %v7895
      %v7927 = vadd.f32 %v7926, %v7896
      %v7928 = vadd.f32 %v7927, %v7897
      %v7929 = vadd.f32 %v7928, %v7898
      %v7930 = vadd.f32 %v7929, %v7899
      %v7931 = vadd.f32 %v7930, %v7900
      %v7932 = vadd.f32 %v7931, %v7901
      %v7933 = vadd.f32 %v7932, %v7902
      %v7934 = vadd.f32 %v7933, %v7903
      %v7935 = vadd.f32 %v7934, %v7904
      %7936 = vadd.xlane.f32.xlu0 %v7935
      %v7937 = vpop.xlane.xlu0 %7936
      %v7938 = vmul.f32 %v7937, 0.00024414063
      %v7939 = vadd.f32 %v7938, 1e-05
      %v7940 = vrsqrt.pop %v7939
      %v7941 = vmul.f32 %v7940, %v7939
      %v7942 = vmul.f32 %v7941, %v7940
      %v7943 = vmul.f32 0.5, %v7942
      %v7944 = vsub.f32 1.5, %v7943
      %v7945 = vmul.f32 %v7940, %v7944
      %vm7946 = vweird.f32 %v7939
      %vm7947 = vweird.f32 %v7940
      %vm7948 = vmor %vm7946, %vm7947
      %v7949 = vsel %vm7948, %v7940, %v7945
      %v7950 = vmul.f32 %v7841, %v7949
      %v7951 = vmul.f32 %v7842, %v7949
      %v7952 = vmul.f32 %v7843, %v7949
      %v7953 = vmul.f32 %v7844, %v7949
      %v7954 = vmul.f32 %v7845, %v7949
      %v7955 = vmul.f32 %v7846, %v7949
      %v7956 = vmul.f32 %v7847, %v7949
      %v7957 = vmul.f32 %v7848, %v7949
      %v7958 = vmul.f32 %v7849, %v7949
      %v7959 = vmul.f32 %v7850, %v7949
      %v7960 = vmul.f32 %v7851, %v7949
      %v7961 = vmul.f32 %v7852, %v7949
      %v7962 = vmul.f32 %v7853, %v7949
      %v7963 = vmul.f32 %v7854, %v7949
      %v7964 = vmul.f32 %v7855, %v7949
      %v7965 = vmul.f32 %v7856, %v7949
      %v7966 = vmul.f32 %v7857, %v7949
      %v7967 = vmul.f32 %v7858, %v7949
      %v7968 = vmul.f32 %v7859, %v7949
      %v7969 = vmul.f32 %v7860, %v7949
      %v7970 = vmul.f32 %v7861, %v7949
      %v7971 = vmul.f32 %v7862, %v7949
      %v7972 = vmul.f32 %v7863, %v7949
      %v7973 = vmul.f32 %v7864, %v7949
      %v7974 = vmul.f32 %v7865, %v7949
      %v7975 = vmul.f32 %v7866, %v7949
      %v7976 = vmul.f32 %v7867, %v7949
      %v7977 = vmul.f32 %v7868, %v7949
      %v7978 = vmul.f32 %v7869, %v7949
      %v7979 = vmul.f32 %v7870, %v7949
      %v7980 = vmul.f32 %v7871, %v7949
      %v7981 = vmul.f32 %v7872, %v7949
      %v7982 = vmax.f32 %v7950, 0.0
      %v7983 = vmax.f32 %v7951, 0.0
      %v7984 = vmax.f32 %v7952, 0.0
      %v7985 = vmax.f32 %v7953, 0.0
      %v7986 = vmax.f32 %v7954, 0.0
      %v7987 = vmax.f32 %v7955, 0.0
      %v7988 = vmax.f32 %v7956, 0.0
      %v7989 = vmax.f32 %v7957, 0.0
      %v7990 = vmax.f32 %v7958, 0.0
      %v7991 = vmax.f32 %v7959, 0.0
      %v7992 = vmax.f32 %v7960, 0.0
      %v7993 = vmax.f32 %v7961, 0.0
      %v7994 = vmax.f32 %v7962, 0.0
      %v7995 = vmax.f32 %v7963, 0.0
      %v7996 = vmax.f32 %v7964, 0.0
      %v7997 = vmax.f32 %v7965, 0.0
      %v7998 = vmax.f32 %v7966, 0.0
      %v7999 = vmax.f32 %v7967, 0.0
      %v8000 = vmax.f32 %v7968, 0.0
      %v8001 = vmax.f32 %v7969, 0.0
      %v8002 = vmax.f32 %v7970, 0.0
      %v8003 = vmax.f32 %v7971, 0.0
      %v8004 = vmax.f32 %v7972, 0.0
      %v8005 = vmax.f32 %v7973, 0.0
      %v8006 = vmax.f32 %v7974, 0.0
      %v8007 = vmax.f32 %v7975, 0.0
      %v8008 = vmax.f32 %v7976, 0.0
      %v8009 = vmax.f32 %v7977, 0.0
      %v8010 = vmax.f32 %v7978, 0.0
      %v8011 = vmax.f32 %v7979, 0.0
      %v8012 = vmax.f32 %v7980, 0.0
      %v8013 = vmax.f32 %v7981, 0.0
      %8014 = vst [vmem:[%s143] sm:$0xff] %v7982
      %8015 = vst [vmem:[%s143 + $0x8] sm:$0xff] %v7983
      %8016 = vst [vmem:[%s143 + $0x10] sm:$0xff] %v7984
      %8017 = vst [vmem:[%s143 + $0x18] sm:$0xff] %v7985
      %8018 = vst [vmem:[%s143 + $0x20] sm:$0xff] %v7986
      %8019 = vst [vmem:[%s143 + $0x28] sm:$0xff] %v7987
      %8020 = vst [vmem:[%s143 + $0x30] sm:$0xff] %v7988
      %8021 = vst [vmem:[%s143 + $0x38] sm:$0xff] %v7989
      %8022 = vst [vmem:[%s143 + $0x40] sm:$0xff] %v7990
      %8023 = vst [vmem:[%s143 + $0x48] sm:$0xff] %v7991
      %8024 = vst [vmem:[%s143 + $0x50] sm:$0xff] %v7992
      %8025 = vst [vmem:[%s143 + $0x58] sm:$0xff] %v7993
      %8026 = vst [vmem:[%s143 + $0x60] sm:$0xff] %v7994
      %8027 = vst [vmem:[%s143 + $0x68] sm:$0xff] %v7995
      %8028 = vst [vmem:[%s143 + $0x70] sm:$0xff] %v7996
      %8029 = vst [vmem:[%s143 + $0x78] sm:$0xff] %v7997
      %8030 = vst [vmem:[%s143 + $0x80] sm:$0xff] %v7998
      %8031 = vst [vmem:[%s143 + $0x88] sm:$0xff] %v7999
      %8032 = vst [vmem:[%s143 + $0x90] sm:$0xff] %v8000
      %8033 = vst [vmem:[%s143 + $0x98] sm:$0xff] %v8001
      %8034 = vst [vmem:[%s143 + $0xa0] sm:$0xff] %v8002
      %8035 = vst [vmem:[%s143 + $0xa8] sm:$0xff] %v8003
      %8036 = vst [vmem:[%s143 + $0xb0] sm:$0xff] %v8004
      %8037 = vst [vmem:[%s143 + $0xb8] sm:$0xff] %v8005
      %8038 = vst [vmem:[%s143 + $0xc0] sm:$0xff] %v8006
      %8039 = vst [vmem:[%s143 + $0xc8] sm:$0xff] %v8007
      %8040 = vst [vmem:[%s143 + $0xd0] sm:$0xff] %v8008
      %8041 = vst [vmem:[%s143 + $0xd8] sm:$0xff] %v8009
      %8042 = vst [vmem:[%s143 + $0xe0] sm:$0xff] %v8010
      %8043 = vst [vmem:[%s143 + $0xe8] sm:$0xff] %v8011
      %8044 = vst [vmem:[%s143 + $0xf0] sm:$0xff] %v8012
      %8045 = vst [vmem:[%s143 + $0xf8] sm:$0xff] %v8013
      %p8046 = scmp.lt.s32.totalorder %s13, 1
      %s8047 = scalar_select %p8046, %s13, 1
      %s8048 = smul.addr %s8047, 32
      %s8049 = smul.addr %s8048, 8
      %s8050 = scalar_lea.vmem %s2, %s8049
      // Predicated region
      $region29: #{lu_conv.1} parent=27 // pred_check
        %p8051 = pneg %p78
      $region30: #{lu_conv.1} parent=27 // pred_check_branch
        %8053 = sbr.rel (%p8051) target = $region32
      $region31: #{lu_conv.1} parent=27 // pred_region
        _
      $region32: #{lu_conv.1} parent=27 // pred_fallthru
        _
    $region28: #{lu_conv.1} parent=5 // pred_fallthru
      _
    %p8054 = scmp.le.s32.totalorder 2, %s8
    // Predicated region
    $region33: #{lu_conv.1} parent=5 // pred_check
      %p8055 = pneg %p8054
    $region34: #{lu_conv.1} parent=5 // pred_check_branch
      %8057 = sbr.rel (%p8055) target = $region36
    $region35: #{lu_conv.1} parent=5 // pred_region
      %s8058 = ssub.s32 %s8, 2
      // Predicated region
      $region37: #{lu_conv.1} parent=35 // pred_check
        %p8059 = pneg %p84
      $region38: #{lu_conv.1} parent=35 // pred_check_branch
        %8061 = sbr.rel (%p8059) target = $region40
      $region39: #{lu_conv.1} parent=35 // pred_region
        %p8062 = scmp.lt.s32.totalorder %s14, 1
        %s8063 = scalar_select %p8062, %s14, 1
        %s8064 = smul.addr %s8063, 32
        %s8065 = smul.addr %s8064, 8
        %s8066 = scalar_lea.vmem %s2, %s8065
      $region40: #{lu_conv.1} parent=35 // pred_fallthru
        _
    $region36: #{lu_conv.1} parent=5 // pred_fallthru
      _
  $region6: #{lu_conv.1} parent=0 // loop_footer
    %s12 = sadd.s32 1, %s8
  $region7: #{lu_conv.1} parent=0 // loop_footer_branch
    %7 = sbr.rel target = $region3
  $region8: #{lu_conv.1} parent=0 // loop_exit
    _

</llo_original>
